<compile_context>
chip_gen: v5e
topology: v5e:2x2
jax: 0.10.0
libtpu: 0.0.40
codegen_flags: <defaults>
</compile_context>

<pallas_src>
import functools

import jax
import jax.numpy as jnp
from jax.experimental import pallas as pl
from jax.experimental.pallas import tpu as pltpu

CHANS = (1, 16, 32, 64, 128, 256)
NUM_LAYERS = 5
K = 3            # conv kernel size
CPAD = 128       # padded channel width for intermediate activations


def _tap_views(a, img_w, pad_rows):
    """9 tap-shifted views of a flattened-frame activation.

    `a` is (H*W, C): spatial frame flattened row-major on the sublane axis,
    channels on the lane axis.  Returns views v_t (t = dy*3 + dx) with
        v_t[h*W + w, c] == a[(h+dy)*W + (w+dx), c]
    whenever the tap stays inside the frame; rows past the frame read zeros.
    Those rows only feed frame positions outside the current valid region,
    which later layers never consume.
    """
    f, c = a.shape
    zpad = jnp.zeros((pad_rows, c), a.dtype)
    ap = jnp.concatenate([a, zpad], axis=0)          # sublane-aligned concat
    return [ap[dy * img_w + dx: dy * img_w + dx + f, :]
            for dy in range(K) for dx in range(K)]


def _fused_conv5_kernel(x_ref, w1_ref, b1_ref, w2_ref, b2_ref, w3_ref, b3_ref,
                        w4_ref, b4_ref, w5_ref, b5_ref, o_ref, *, img_w):
    """Full 5-layer conv stack for one image, entirely in VMEM."""
    pad_rows = ((2 * img_w + K - 1) + 7) // 8 * 8    # >= max tap shift, 8-aligned

    # ---- layer 1: Cin=1 -> 16(+pad) channels, 9 shifted VPU FMAs (no MXU) ----
    x = x_ref[0]                                     # (F, 1) f32
    xt = _tap_views(x, img_w, pad_rows)              # 9 x (F, 1)
    acc = xt[0] * w1_ref[0]                          # (F,1)*(1,128) -> (F,128)
    for t in range(1, K * K):
        acc = acc + xt[t] * w1_ref[t]
    a = jnp.maximum(acc + b1_ref[...], 0.0)          # bias + ReLU on the VPU

    # ---- layers 2..5: one im2col matmul each (contraction = 9*128 = 1152) ----
    layers = ((w2_ref, b2_ref, True), (w3_ref, b3_ref, True),
              (w4_ref, b4_ref, True), (w5_ref, b5_ref, False))
    for w_ref, b_ref, relu in layers:
        taps = _tap_views(a, img_w, pad_rows)        # 9 x (F, 128)
        a_col = jnp.concatenate(taps, axis=1)        # (F, 1152) lane-aligned im2col
        acc = jnp.dot(a_col, w_ref[...],
                      preferred_element_type=jnp.float32)   # MXU, f32 accumulate
        acc = acc + b_ref[...]                       # (1, Cout) bias, lane-dense
        a = jnp.maximum(acc, 0.0) if relu else acc

    o_ref[0] = a                                     # (F, 256) lane-dense store


def _pack_params(params):
    """HWIO f32 params -> kernel layouts (channel-padded, im2col-packed)."""
    packed = []
    w1, b1 = params[0]                                           # (3,3,1,16), (16,)
    w1p = jnp.zeros((K * K, 1, CPAD), jnp.float32)
    w1p = w1p.at[:, 0, :CHANS[1]].set(w1.reshape(K * K, CHANS[1]))
    b1p = jnp.zeros((1, CPAD), jnp.float32).at[0, :CHANS[1]].set(b1)
    packed += [w1p, b1p]
    for i in range(1, NUM_LAYERS):
        w, b = params[i]                                         # (3,3,Cin,Cout), (Cout,)
        cin, cout = CHANS[i], CHANS[i + 1]
        coutp = max(cout, CPAD)
        wp = jnp.zeros((K * K, CPAD, coutp), jnp.float32)
        wp = wp.at[:, :cin, :cout].set(w.reshape(K * K, cin, cout))
        wp = wp.reshape(K * K * CPAD, coutp)                     # row index = tap*128 + ci
        bp = jnp.zeros((1, coutp), jnp.float32).at[0, :cout].set(b)
        packed += [wp, bp]
    return packed


def five_layer_conv(x_nchw, params):
    n, cin, img_h, img_w = x_nchw.shape
    assert cin == CHANS[0] == 1
    f = img_h * img_w
    ho, wo = img_h - 2 * NUM_LAYERS, img_w - 2 * NUM_LAYERS
    cout = CHANS[-1]

    x_flat = x_nchw.reshape(n, f, 1)          # frame on sublanes, channel on lanes
    packed = _pack_params(params)

    def full_spec(arr):
        zeros = (0,) * arr.ndim
        return pl.BlockSpec(arr.shape, lambda i: zeros)   # resident for all steps

    in_specs = ([pl.BlockSpec((1, f, 1), lambda i: (i, 0, 0))]
                + [full_spec(p) for p in packed])
    out_specs = pl.BlockSpec((1, f, cout), lambda i: (i, 0, 0))

    y = pl.pallas_call(
        functools.partial(_fused_conv5_kernel, img_w=img_w),
        out_shape=jax.ShapeDtypeStruct((n, f, cout), jnp.float32),
        grid=(n,),
        in_specs=in_specs,
        out_specs=out_specs,
        compiler_params=pltpu.CompilerParams(
            dimension_semantics=("parallel",),      # batch over v7x's 2 TensorCores
            vmem_limit_bytes=32 * 1024 * 1024),
    )(x_flat, *packed)

    # full-frame (N, H*W, 256) -> valid NCHW output (tiny layout plumbing in XLA)
    return y.reshape(n, img_h, img_w, cout)[:, :ho, :wo, :].transpose(0, 3, 1, 2)


def init_params(key):
    """Deterministic init matching PyTorch Conv2d defaults: U(-1/sqrt(fan_in), +)."""
    params = []
    for i in range(NUM_LAYERS):
        cin, cout = CHANS[i], CHANS[i + 1]
        key, kw, kb = jax.random.split(key, 3)
        bound = 1.0 / (cin * K * K) ** 0.5
        w = jax.random.uniform(kw, (K, K, cin, cout), jnp.float32, -bound, bound)  # HWIO
        b = jax.random.uniform(kb, (cout,), jnp.float32, -bound, bound)
        params.append((w, b))
    return params


def reference_forward(x_nchw, params):
    """Pure-XLA reference (f32, highest precision) for a self-check."""
    y = x_nchw
    for i, (w, b) in enumerate(params):
        y = jax.lax.conv_general_dilated(
            y, w, window_strides=(1, 1), padding="VALID",
            dimension_numbers=("NCHW", "HWIO", "NCHW"),
            precision=jax.lax.Precision.HIGHEST)
        y = y + b.reshape(1, -1, 1, 1)
        if i < NUM_LAYERS - 1:
            y = jnp.maximum(y, 0.0)
    return y


if __name__ == "__main__":
    key = jax.random.PRNGKey(0)
    kx, kp = jax.random.split(key)

    # input: batch=2, 1 channel, 16x16 spatial (NCHW, like the PyTorch module)
    x = jax.random.normal(kx, (2, 1, 16, 16), dtype=jnp.float32)
    params = init_params(kp)

    out = jax.jit(five_layer_conv)(x, params)
    out = jax.block_until_ready(out)

    # 16 -> 14 -> 12 -> 10 -> 8 -> 6 spatial, 256 output channels
    assert out.shape == (2, 256, 6, 6), out.shape
    assert out.dtype == jnp.float32

    ref = jax.jit(reference_forward)(x, params)
    ref = jax.block_until_ready(ref)
    rel_err = float(jnp.max(jnp.abs(out - ref)) / (jnp.max(jnp.abs(ref)) + 1e-8))
    assert rel_err < 2e-2, f"mismatch vs XLA reference: rel_err={rel_err}"

    print("KERNEL_OK")
</pallas_src>

<mosaic_0001>
module attributes {stable_mosaic.version = 11 : i64} {
  func.func @_fused_conv5_kernel(%arg0: i32, %arg1: memref<1x256x1xf32, #tpu.memory_space<vmem>>, %arg2: memref<9x1x128xf32, #tpu.memory_space<vmem>>, %arg3: memref<1x128xf32, #tpu.memory_space<vmem>>, %arg4: memref<1152x128xf32, #tpu.memory_space<vmem>>, %arg5: memref<1x128xf32, #tpu.memory_space<vmem>>, %arg6: memref<1152x128xf32, #tpu.memory_space<vmem>>, %arg7: memref<1x128xf32, #tpu.memory_space<vmem>>, %arg8: memref<1152x128xf32, #tpu.memory_space<vmem>>, %arg9: memref<1x128xf32, #tpu.memory_space<vmem>>, %arg10: memref<1152x256xf32, #tpu.memory_space<vmem>>, %arg11: memref<1x256xf32, #tpu.memory_space<vmem>>, %arg12: memref<1x256x256xf32, #tpu.memory_space<vmem>>) attributes {dimension_semantics = [#tpu.dimension_semantics<parallel>], iteration_bounds = array<i64: 2>, scalar_prefetch = 0 : i64, scratch_operands = 0 : i64, tpu.core_type = #tpu.core_type<tc>, window_params = [{transform_indices = @transform_0, window_bounds = array<i64: 1, 256, 1>}, {pipeline_mode = #tpu.pipeline_mode<synchronous>, transform_indices = @transform_1, window_bounds = array<i64: 9, 1, 128>}, {pipeline_mode = #tpu.pipeline_mode<synchronous>, transform_indices = @transform_2, window_bounds = array<i64: 1, 128>}, {pipeline_mode = #tpu.pipeline_mode<synchronous>, transform_indices = @transform_3, window_bounds = array<i64: 1152, 128>}, {pipeline_mode = #tpu.pipeline_mode<synchronous>, transform_indices = @transform_4, window_bounds = array<i64: 1, 128>}, {pipeline_mode = #tpu.pipeline_mode<synchronous>, transform_indices = @transform_5, window_bounds = array<i64: 1152, 128>}, {pipeline_mode = #tpu.pipeline_mode<synchronous>, transform_indices = @transform_6, window_bounds = array<i64: 1, 128>}, {pipeline_mode = #tpu.pipeline_mode<synchronous>, transform_indices = @transform_7, window_bounds = array<i64: 1152, 128>}, {pipeline_mode = #tpu.pipeline_mode<synchronous>, transform_indices = @transform_8, window_bounds = array<i64: 1, 128>}, {pipeline_mode = #tpu.pipeline_mode<synchronous>, transform_indices = @transform_9, window_bounds = array<i64: 1152, 256>}, {pipeline_mode = #tpu.pipeline_mode<synchronous>, transform_indices = @transform_10, window_bounds = array<i64: 1, 256>}, {transform_indices = @transform_11, window_bounds = array<i64: 1, 256, 256>}]} {
    %c0 = arith.constant 0 : index
    %c0_0 = arith.constant 0 : index
    %c0_1 = arith.constant 0 : index
    %0 = vector.load %arg1[%c0, %c0_0, %c0_1] : memref<1x256x1xf32, #tpu.memory_space<vmem>>, vector<1x256x1xf32>
    %1 = vector.shape_cast %0 : vector<1x256x1xf32> to vector<256x1xf32>
    %cst = arith.constant 0.000000e+00 : f32
    %2 = vector.broadcast %cst : f32 to vector<40x1xf32>
    %3 = tpu.concatenate %1, %2 in 0 : vector<256x1xf32>, vector<40x1xf32> -> vector<296x1xf32>
    %4 = vector.extract_strided_slice %3 {offsets = [0, 0], sizes = [256, 1], strides = [1, 1]} : vector<296x1xf32> to vector<256x1xf32>
    %5 = vector.extract_strided_slice %3 {offsets = [1, 0], sizes = [256, 1], strides = [1, 1]} : vector<296x1xf32> to vector<256x1xf32>
    %6 = vector.extract_strided_slice %3 {offsets = [2, 0], sizes = [256, 1], strides = [1, 1]} : vector<296x1xf32> to vector<256x1xf32>
    %7 = vector.extract_strided_slice %3 {offsets = [16, 0], sizes = [256, 1], strides = [1, 1]} : vector<296x1xf32> to vector<256x1xf32>
    %8 = vector.extract_strided_slice %3 {offsets = [17, 0], sizes = [256, 1], strides = [1, 1]} : vector<296x1xf32> to vector<256x1xf32>
    %9 = vector.extract_strided_slice %3 {offsets = [18, 0], sizes = [256, 1], strides = [1, 1]} : vector<296x1xf32> to vector<256x1xf32>
    %10 = vector.extract_strided_slice %3 {offsets = [32, 0], sizes = [256, 1], strides = [1, 1]} : vector<296x1xf32> to vector<256x1xf32>
    %11 = vector.extract_strided_slice %3 {offsets = [33, 0], sizes = [256, 1], strides = [1, 1]} : vector<296x1xf32> to vector<256x1xf32>
    %12 = vector.extract_strided_slice %3 {offsets = [34, 0], sizes = [256, 1], strides = [1, 1]} : vector<296x1xf32> to vector<256x1xf32>
    %c0_2 = arith.constant 0 : index
    %c0_3 = arith.constant 0 : index
    %c0_4 = arith.constant 0 : index
    %13 = vector.load %arg2[%c0_2, %c0_3, %c0_4] : memref<9x1x128xf32, #tpu.memory_space<vmem>>, vector<1x1x128xf32>
    %14 = vector.shape_cast %13 : vector<1x1x128xf32> to vector<1x128xf32>
    %15 = vector.broadcast %4 : vector<256x1xf32> to vector<256x128xf32>
    %16 = vector.broadcast %14 : vector<1x128xf32> to vector<256x128xf32>
    %17 = arith.mulf %15, %16 : vector<256x128xf32>
    %c1 = arith.constant 1 : index
    %c0_5 = arith.constant 0 : index
    %c0_6 = arith.constant 0 : index
    %18 = vector.load %arg2[%c1, %c0_5, %c0_6] : memref<9x1x128xf32, #tpu.memory_space<vmem>>, vector<1x1x128xf32>
    %19 = vector.shape_cast %18 : vector<1x1x128xf32> to vector<1x128xf32>
    %20 = vector.broadcast %5 : vector<256x1xf32> to vector<256x128xf32>
    %21 = vector.broadcast %19 : vector<1x128xf32> to vector<256x128xf32>
    %22 = arith.mulf %20, %21 : vector<256x128xf32>
    %23 = arith.addf %17, %22 : vector<256x128xf32>
    %c2 = arith.constant 2 : index
    %c0_7 = arith.constant 0 : index
    %c0_8 = arith.constant 0 : index
    %24 = vector.load %arg2[%c2, %c0_7, %c0_8] : memref<9x1x128xf32, #tpu.memory_space<vmem>>, vector<1x1x128xf32>
    %25 = vector.shape_cast %24 : vector<1x1x128xf32> to vector<1x128xf32>
    %26 = vector.broadcast %6 : vector<256x1xf32> to vector<256x128xf32>
    %27 = vector.broadcast %25 : vector<1x128xf32> to vector<256x128xf32>
    %28 = arith.mulf %26, %27 : vector<256x128xf32>
    %29 = arith.addf %23, %28 : vector<256x128xf32>
    %c3 = arith.constant 3 : index
    %c0_9 = arith.constant 0 : index
    %c0_10 = arith.constant 0 : index
    %30 = vector.load %arg2[%c3, %c0_9, %c0_10] : memref<9x1x128xf32, #tpu.memory_space<vmem>>, vector<1x1x128xf32>
    %31 = vector.shape_cast %30 : vector<1x1x128xf32> to vector<1x128xf32>
    %32 = vector.broadcast %7 : vector<256x1xf32> to vector<256x128xf32>
    %33 = vector.broadcast %31 : vector<1x128xf32> to vector<256x128xf32>
    %34 = arith.mulf %32, %33 : vector<256x128xf32>
    %35 = arith.addf %29, %34 : vector<256x128xf32>
    %c4 = arith.constant 4 : index
    %c0_11 = arith.constant 0 : index
    %c0_12 = arith.constant 0 : index
    %36 = vector.load %arg2[%c4, %c0_11, %c0_12] : memref<9x1x128xf32, #tpu.memory_space<vmem>>, vector<1x1x128xf32>
    %37 = vector.shape_cast %36 : vector<1x1x128xf32> to vector<1x128xf32>
    %38 = vector.broadcast %8 : vector<256x1xf32> to vector<256x128xf32>
    %39 = vector.broadcast %37 : vector<1x128xf32> to vector<256x128xf32>
    %40 = arith.mulf %38, %39 : vector<256x128xf32>
    %41 = arith.addf %35, %40 : vector<256x128xf32>
    %c5 = arith.constant 5 : index
    %c0_13 = arith.constant 0 : index
    %c0_14 = arith.constant 0 : index
    %42 = vector.load %arg2[%c5, %c0_13, %c0_14] : memref<9x1x128xf32, #tpu.memory_space<vmem>>, vector<1x1x128xf32>
    %43 = vector.shape_cast %42 : vector<1x1x128xf32> to vector<1x128xf32>
    %44 = vector.broadcast %9 : vector<256x1xf32> to vector<256x128xf32>
    %45 = vector.broadcast %43 : vector<1x128xf32> to vector<256x128xf32>
    %46 = arith.mulf %44, %45 : vector<256x128xf32>
    %47 = arith.addf %41, %46 : vector<256x128xf32>
    %c6 = arith.constant 6 : index
    %c0_15 = arith.constant 0 : index
    %c0_16 = arith.constant 0 : index
    %48 = vector.load %arg2[%c6, %c0_15, %c0_16] : memref<9x1x128xf32, #tpu.memory_space<vmem>>, vector<1x1x128xf32>
    %49 = vector.shape_cast %48 : vector<1x1x128xf32> to vector<1x128xf32>
    %50 = vector.broadcast %10 : vector<256x1xf32> to vector<256x128xf32>
    %51 = vector.broadcast %49 : vector<1x128xf32> to vector<256x128xf32>
    %52 = arith.mulf %50, %51 : vector<256x128xf32>
    %53 = arith.addf %47, %52 : vector<256x128xf32>
    %c7 = arith.constant 7 : index
    %c0_17 = arith.constant 0 : index
    %c0_18 = arith.constant 0 : index
    %54 = vector.load %arg2[%c7, %c0_17, %c0_18] : memref<9x1x128xf32, #tpu.memory_space<vmem>>, vector<1x1x128xf32>
    %55 = vector.shape_cast %54 : vector<1x1x128xf32> to vector<1x128xf32>
    %56 = vector.broadcast %11 : vector<256x1xf32> to vector<256x128xf32>
    %57 = vector.broadcast %55 : vector<1x128xf32> to vector<256x128xf32>
    %58 = arith.mulf %56, %57 : vector<256x128xf32>
    %59 = arith.addf %53, %58 : vector<256x128xf32>
    %c8 = arith.constant 8 : index
    %c0_19 = arith.constant 0 : index
    %c0_20 = arith.constant 0 : index
    %60 = vector.load %arg2[%c8, %c0_19, %c0_20] : memref<9x1x128xf32, #tpu.memory_space<vmem>>, vector<1x1x128xf32>
    %61 = vector.shape_cast %60 : vector<1x1x128xf32> to vector<1x128xf32>
    %62 = vector.broadcast %12 : vector<256x1xf32> to vector<256x128xf32>
    %63 = vector.broadcast %61 : vector<1x128xf32> to vector<256x128xf32>
    %64 = arith.mulf %62, %63 : vector<256x128xf32>
    %65 = arith.addf %59, %64 : vector<256x128xf32>
    %c0_21 = arith.constant 0 : index
    %c0_22 = arith.constant 0 : index
    %66 = vector.load %arg3[%c0_21, %c0_22] : memref<1x128xf32, #tpu.memory_space<vmem>>, vector<1x128xf32>
    %67 = vector.broadcast %66 : vector<1x128xf32> to vector<256x128xf32>
    %68 = arith.addf %65, %67 : vector<256x128xf32>
    %cst_23 = arith.constant 0.000000e+00 : f32
    %69 = vector.broadcast %cst_23 : f32 to vector<256x128xf32>
    %70 = arith.maximumf %68, %69 : vector<256x128xf32>
    %cst_24 = arith.constant 0.000000e+00 : f32
    %71 = vector.broadcast %cst_24 : f32 to vector<40x128xf32>
    %72 = tpu.concatenate %70, %71 in 0 : vector<256x128xf32>, vector<40x128xf32> -> vector<296x128xf32>
    %73 = vector.extract_strided_slice %72 {offsets = [0, 0], sizes = [256, 128], strides = [1, 1]} : vector<296x128xf32> to vector<256x128xf32>
    %74 = vector.extract_strided_slice %72 {offsets = [1, 0], sizes = [256, 128], strides = [1, 1]} : vector<296x128xf32> to vector<256x128xf32>
    %75 = vector.extract_strided_slice %72 {offsets = [2, 0], sizes = [256, 128], strides = [1, 1]} : vector<296x128xf32> to vector<256x128xf32>
    %76 = vector.extract_strided_slice %72 {offsets = [16, 0], sizes = [256, 128], strides = [1, 1]} : vector<296x128xf32> to vector<256x128xf32>
    %77 = vector.extract_strided_slice %72 {offsets = [17, 0], sizes = [256, 128], strides = [1, 1]} : vector<296x128xf32> to vector<256x128xf32>
    %78 = vector.extract_strided_slice %72 {offsets = [18, 0], sizes = [256, 128], strides = [1, 1]} : vector<296x128xf32> to vector<256x128xf32>
    %79 = vector.extract_strided_slice %72 {offsets = [32, 0], sizes = [256, 128], strides = [1, 1]} : vector<296x128xf32> to vector<256x128xf32>
    %80 = vector.extract_strided_slice %72 {offsets = [33, 0], sizes = [256, 128], strides = [1, 1]} : vector<296x128xf32> to vector<256x128xf32>
    %81 = vector.extract_strided_slice %72 {offsets = [34, 0], sizes = [256, 128], strides = [1, 1]} : vector<296x128xf32> to vector<256x128xf32>
    %82 = tpu.concatenate %73, %74, %75, %76, %77, %78, %79, %80, %81 in 1 : vector<256x128xf32>, vector<256x128xf32>, vector<256x128xf32>, vector<256x128xf32>, vector<256x128xf32>, vector<256x128xf32>, vector<256x128xf32>, vector<256x128xf32>, vector<256x128xf32> -> vector<256x1152xf32>
    %c0_25 = arith.constant 0 : index
    %c0_26 = arith.constant 0 : index
    %83 = vector.load %arg4[%c0_25, %c0_26] : memref<1152x128xf32, #tpu.memory_space<vmem>>, vector<1152x128xf32>
    %cst_27 = arith.constant dense<0.000000e+00> : vector<256x128xf32>
    %84 = tpu.matmul %82, %83, %cst_27 {dimension_numbers = #tpu.dot_dimension_numbers<[1], [0], [0], [1], [0, 0, 1, 1], [], []>} : vector<256x1152xf32>, vector<1152x128xf32>, vector<256x128xf32> -> vector<256x128xf32>
    %c0_28 = arith.constant 0 : index
    %c0_29 = arith.constant 0 : index
    %85 = vector.load %arg5[%c0_28, %c0_29] : memref<1x128xf32, #tpu.memory_space<vmem>>, vector<1x128xf32>
    %86 = vector.broadcast %85 : vector<1x128xf32> to vector<256x128xf32>
    %87 = arith.addf %84, %86 : vector<256x128xf32>
    %cst_30 = arith.constant 0.000000e+00 : f32
    %88 = vector.broadcast %cst_30 : f32 to vector<256x128xf32>
    %89 = arith.maximumf %87, %88 : vector<256x128xf32>
    %cst_31 = arith.constant 0.000000e+00 : f32
    %90 = vector.broadcast %cst_31 : f32 to vector<40x128xf32>
    %91 = tpu.concatenate %89, %90 in 0 : vector<256x128xf32>, vector<40x128xf32> -> vector<296x128xf32>
    %92 = vector.extract_strided_slice %91 {offsets = [0, 0], sizes = [256, 128], strides = [1, 1]} : vector<296x128xf32> to vector<256x128xf32>
    %93 = vector.extract_strided_slice %91 {offsets = [1, 0], sizes = [256, 128], strides = [1, 1]} : vector<296x128xf32> to vector<256x128xf32>
    %94 = vector.extract_strided_slice %91 {offsets = [2, 0], sizes = [256, 128], strides = [1, 1]} : vector<296x128xf32> to vector<256x128xf32>
    %95 = vector.extract_strided_slice %91 {offsets = [16, 0], sizes = [256, 128], strides = [1, 1]} : vector<296x128xf32> to vector<256x128xf32>
    %96 = vector.extract_strided_slice %91 {offsets = [17, 0], sizes = [256, 128], strides = [1, 1]} : vector<296x128xf32> to vector<256x128xf32>
    %97 = vector.extract_strided_slice %91 {offsets = [18, 0], sizes = [256, 128], strides = [1, 1]} : vector<296x128xf32> to vector<256x128xf32>
    %98 = vector.extract_strided_slice %91 {offsets = [32, 0], sizes = [256, 128], strides = [1, 1]} : vector<296x128xf32> to vector<256x128xf32>
    %99 = vector.extract_strided_slice %91 {offsets = [33, 0], sizes = [256, 128], strides = [1, 1]} : vector<296x128xf32> to vector<256x128xf32>
    %100 = vector.extract_strided_slice %91 {offsets = [34, 0], sizes = [256, 128], strides = [1, 1]} : vector<296x128xf32> to vector<256x128xf32>
    %101 = tpu.concatenate %92, %93, %94, %95, %96, %97, %98, %99, %100 in 1 : vector<256x128xf32>, vector<256x128xf32>, vector<256x128xf32>, vector<256x128xf32>, vector<256x128xf32>, vector<256x128xf32>, vector<256x128xf32>, vector<256x128xf32>, vector<256x128xf32> -> vector<256x1152xf32>
    %c0_32 = arith.constant 0 : index
    %c0_33 = arith.constant 0 : index
    %102 = vector.load %arg6[%c0_32, %c0_33] : memref<1152x128xf32, #tpu.memory_space<vmem>>, vector<1152x128xf32>
    %cst_34 = arith.constant dense<0.000000e+00> : vector<256x128xf32>
    %103 = tpu.matmul %101, %102, %cst_34 {dimension_numbers = #tpu.dot_dimension_numbers<[1], [0], [0], [1], [0, 0, 1, 1], [], []>} : vector<256x1152xf32>, vector<1152x128xf32>, vector<256x128xf32> -> vector<256x128xf32>
    %c0_35 = arith.constant 0 : index
    %c0_36 = arith.constant 0 : index
    %104 = vector.load %arg7[%c0_35, %c0_36] : memref<1x128xf32, #tpu.memory_space<vmem>>, vector<1x128xf32>
    %105 = vector.broadcast %104 : vector<1x128xf32> to vector<256x128xf32>
    %106 = arith.addf %103, %105 : vector<256x128xf32>
    %cst_37 = arith.constant 0.000000e+00 : f32
    %107 = vector.broadcast %cst_37 : f32 to vector<256x128xf32>
    %108 = arith.maximumf %106, %107 : vector<256x128xf32>
    %cst_38 = arith.constant 0.000000e+00 : f32
    %109 = vector.broadcast %cst_38 : f32 to vector<40x128xf32>
    %110 = tpu.concatenate %108, %109 in 0 : vector<256x128xf32>, vector<40x128xf32> -> vector<296x128xf32>
    %111 = vector.extract_strided_slice %110 {offsets = [0, 0], sizes = [256, 128], strides = [1, 1]} : vector<296x128xf32> to vector<256x128xf32>
    %112 = vector.extract_strided_slice %110 {offsets = [1, 0], sizes = [256, 128], strides = [1, 1]} : vector<296x128xf32> to vector<256x128xf32>
    %113 = vector.extract_strided_slice %110 {offsets = [2, 0], sizes = [256, 128], strides = [1, 1]} : vector<296x128xf32> to vector<256x128xf32>
    %114 = vector.extract_strided_slice %110 {offsets = [16, 0], sizes = [256, 128], strides = [1, 1]} : vector<296x128xf32> to vector<256x128xf32>
    %115 = vector.extract_strided_slice %110 {offsets = [17, 0], sizes = [256, 128], strides = [1, 1]} : vector<296x128xf32> to vector<256x128xf32>
    %116 = vector.extract_strided_slice %110 {offsets = [18, 0], sizes = [256, 128], strides = [1, 1]} : vector<296x128xf32> to vector<256x128xf32>
    %117 = vector.extract_strided_slice %110 {offsets = [32, 0], sizes = [256, 128], strides = [1, 1]} : vector<296x128xf32> to vector<256x128xf32>
    %118 = vector.extract_strided_slice %110 {offsets = [33, 0], sizes = [256, 128], strides = [1, 1]} : vector<296x128xf32> to vector<256x128xf32>
    %119 = vector.extract_strided_slice %110 {offsets = [34, 0], sizes = [256, 128], strides = [1, 1]} : vector<296x128xf32> to vector<256x128xf32>
    %120 = tpu.concatenate %111, %112, %113, %114, %115, %116, %117, %118, %119 in 1 : vector<256x128xf32>, vector<256x128xf32>, vector<256x128xf32>, vector<256x128xf32>, vector<256x128xf32>, vector<256x128xf32>, vector<256x128xf32>, vector<256x128xf32>, vector<256x128xf32> -> vector<256x1152xf32>
    %c0_39 = arith.constant 0 : index
    %c0_40 = arith.constant 0 : index
    %121 = vector.load %arg8[%c0_39, %c0_40] : memref<1152x128xf32, #tpu.memory_space<vmem>>, vector<1152x128xf32>
    %cst_41 = arith.constant dense<0.000000e+00> : vector<256x128xf32>
    %122 = tpu.matmul %120, %121, %cst_41 {dimension_numbers = #tpu.dot_dimension_numbers<[1], [0], [0], [1], [0, 0, 1, 1], [], []>} : vector<256x1152xf32>, vector<1152x128xf32>, vector<256x128xf32> -> vector<256x128xf32>
    %c0_42 = arith.constant 0 : index
    %c0_43 = arith.constant 0 : index
    %123 = vector.load %arg9[%c0_42, %c0_43] : memref<1x128xf32, #tpu.memory_space<vmem>>, vector<1x128xf32>
    %124 = vector.broadcast %123 : vector<1x128xf32> to vector<256x128xf32>
    %125 = arith.addf %122, %124 : vector<256x128xf32>
    %cst_44 = arith.constant 0.000000e+00 : f32
    %126 = vector.broadcast %cst_44 : f32 to vector<256x128xf32>
    %127 = arith.maximumf %125, %126 : vector<256x128xf32>
    %cst_45 = arith.constant 0.000000e+00 : f32
    %128 = vector.broadcast %cst_45 : f32 to vector<40x128xf32>
    %129 = tpu.concatenate %127, %128 in 0 : vector<256x128xf32>, vector<40x128xf32> -> vector<296x128xf32>
    %130 = vector.extract_strided_slice %129 {offsets = [0, 0], sizes = [256, 128], strides = [1, 1]} : vector<296x128xf32> to vector<256x128xf32>
    %131 = vector.extract_strided_slice %129 {offsets = [1, 0], sizes = [256, 128], strides = [1, 1]} : vector<296x128xf32> to vector<256x128xf32>
    %132 = vector.extract_strided_slice %129 {offsets = [2, 0], sizes = [256, 128], strides = [1, 1]} : vector<296x128xf32> to vector<256x128xf32>
    %133 = vector.extract_strided_slice %129 {offsets = [16, 0], sizes = [256, 128], strides = [1, 1]} : vector<296x128xf32> to vector<256x128xf32>
    %134 = vector.extract_strided_slice %129 {offsets = [17, 0], sizes = [256, 128], strides = [1, 1]} : vector<296x128xf32> to vector<256x128xf32>
    %135 = vector.extract_strided_slice %129 {offsets = [18, 0], sizes = [256, 128], strides = [1, 1]} : vector<296x128xf32> to vector<256x128xf32>
    %136 = vector.extract_strided_slice %129 {offsets = [32, 0], sizes = [256, 128], strides = [1, 1]} : vector<296x128xf32> to vector<256x128xf32>
    %137 = vector.extract_strided_slice %129 {offsets = [33, 0], sizes = [256, 128], strides = [1, 1]} : vector<296x128xf32> to vector<256x128xf32>
    %138 = vector.extract_strided_slice %129 {offsets = [34, 0], sizes = [256, 128], strides = [1, 1]} : vector<296x128xf32> to vector<256x128xf32>
    %139 = tpu.concatenate %130, %131, %132, %133, %134, %135, %136, %137, %138 in 1 : vector<256x128xf32>, vector<256x128xf32>, vector<256x128xf32>, vector<256x128xf32>, vector<256x128xf32>, vector<256x128xf32>, vector<256x128xf32>, vector<256x128xf32>, vector<256x128xf32> -> vector<256x1152xf32>
    %c0_46 = arith.constant 0 : index
    %c0_47 = arith.constant 0 : index
    %140 = vector.load %arg10[%c0_46, %c0_47] : memref<1152x256xf32, #tpu.memory_space<vmem>>, vector<1152x256xf32>
    %cst_48 = arith.constant dense<0.000000e+00> : vector<256x256xf32>
    %141 = tpu.matmul %139, %140, %cst_48 {dimension_numbers = #tpu.dot_dimension_numbers<[1], [0], [0], [1], [0, 0, 1, 1], [], []>} : vector<256x1152xf32>, vector<1152x256xf32>, vector<256x256xf32> -> vector<256x256xf32>
    %c0_49 = arith.constant 0 : index
    %c0_50 = arith.constant 0 : index
    %142 = vector.load %arg11[%c0_49, %c0_50] : memref<1x256xf32, #tpu.memory_space<vmem>>, vector<1x256xf32>
    %143 = vector.broadcast %142 : vector<1x256xf32> to vector<256x256xf32>
    %144 = arith.addf %141, %143 : vector<256x256xf32>
    %c0_51 = arith.constant 0 : index
    %c0_52 = arith.constant 0 : index
    %c0_53 = arith.constant 0 : index
    %145 = vector.load %arg12[%c0_51, %c0_52, %c0_53] : memref<1x256x256xf32, #tpu.memory_space<vmem>>, vector<1x256x256xf32>
    %146 = vector.shape_cast %145 : vector<1x256x256xf32> to vector<256x256xf32>
    %147 = vector.shape_cast %144 : vector<256x256xf32> to vector<1x256x256xf32>
    tpu.vector_store %arg12[%c0_51, %c0_52, %c0_53], %147 {strides = array<i32>} : memref<1x256x256xf32, #tpu.memory_space<vmem>>, vector<1x256x256xf32>,
    return
  }
  func.func @transform_0(%arg0: i32) -> (i32, i32, i32) {
    %c0_i32 = arith.constant 0 : i32
    %c0_i32_0 = arith.constant 0 : i32
    %c0_i32_1 = arith.constant 0 : i32
    return %arg0, %c0_i32, %c0_i32_0 : i32, i32, i32
  }
  func.func @transform_1(%arg0: i32) -> (i32, i32, i32) {
    %c0_i32 = arith.constant 0 : i32
    %c0_i32_0 = arith.constant 0 : i32
    %c0_i32_1 = arith.constant 0 : i32
    %c0_i32_2 = arith.constant 0 : i32
    return %c0_i32, %c0_i32_0, %c0_i32_1 : i32, i32, i32
  }
  func.func @transform_2(%arg0: i32) -> (i32, i32) {
    %c0_i32 = arith.constant 0 : i32
    %c0_i32_0 = arith.constant 0 : i32
    %c0_i32_1 = arith.constant 0 : i32
    return %c0_i32, %c0_i32_0 : i32, i32
  }
  func.func @transform_3(%arg0: i32) -> (i32, i32) {
    %c0_i32 = arith.constant 0 : i32
    %c0_i32_0 = arith.constant 0 : i32
    %c0_i32_1 = arith.constant 0 : i32
    return %c0_i32, %c0_i32_0 : i32, i32
  }
  func.func @transform_4(%arg0: i32) -> (i32, i32) {
    %c0_i32 = arith.constant 0 : i32
    %c0_i32_0 = arith.constant 0 : i32
    %c0_i32_1 = arith.constant 0 : i32
    return %c0_i32, %c0_i32_0 : i32, i32
  }
  func.func @transform_5(%arg0: i32) -> (i32, i32) {
    %c0_i32 = arith.constant 0 : i32
    %c0_i32_0 = arith.constant 0 : i32
    %c0_i32_1 = arith.constant 0 : i32
    return %c0_i32, %c0_i32_0 : i32, i32
  }
  func.func @transform_6(%arg0: i32) -> (i32, i32) {
    %c0_i32 = arith.constant 0 : i32
    %c0_i32_0 = arith.constant 0 : i32
    %c0_i32_1 = arith.constant 0 : i32
    return %c0_i32, %c0_i32_0 : i32, i32
  }
  func.func @transform_7(%arg0: i32) -> (i32, i32) {
    %c0_i32 = arith.constant 0 : i32
    %c0_i32_0 = arith.constant 0 : i32
    %c0_i32_1 = arith.constant 0 : i32
    return %c0_i32, %c0_i32_0 : i32, i32
  }
  func.func @transform_8(%arg0: i32) -> (i32, i32) {
    %c0_i32 = arith.constant 0 : i32
    %c0_i32_0 = arith.constant 0 : i32
    %c0_i32_1 = arith.constant 0 : i32
    return %c0_i32, %c0_i32_0 : i32, i32
  }
  func.func @transform_9(%arg0: i32) -> (i32, i32) {
    %c0_i32 = arith.constant 0 : i32
    %c0_i32_0 = arith.constant 0 : i32
    %c0_i32_1 = arith.constant 0 : i32
    return %c0_i32, %c0_i32_0 : i32, i32
  }
  func.func @transform_10(%arg0: i32) -> (i32, i32) {
    %c0_i32 = arith.constant 0 : i32
    %c0_i32_0 = arith.constant 0 : i32
    %c0_i32_1 = arith.constant 0 : i32
    return %c0_i32, %c0_i32_0 : i32, i32
  }
  func.func @transform_11(%arg0: i32) -> (i32, i32, i32) {
    %c0_i32 = arith.constant 0 : i32
    %c0_i32_0 = arith.constant 0 : i32
    %c0_i32_1 = arith.constant 0 : i32
    return %arg0, %c0_i32, %c0_i32_0 : i32, i32, i32
  }
}

</mosaic_0001>

<llo_original>
// kernel: five_layer_conv.1
$region0: #{five_layer_conv.1}
  #allocation0 [shape = 'u32[]', space=smem, size = 0x4, offset = 0x4, fixed_abs, tag = 'smem constant byte address 0x4 - core index']
  #allocation1 [shape = 'u32[72,128]{1,0:T(1,128)}', space=vmem, size = 0x9000, scoped, tag = 'internal scratch']
  %s0 = inlined_call_operand.vmem [shape: f32[2,256,1], index: 0, kind: input, shape index: {}]
  %s1 = inlined_call_operand.vmem [shape: f32[9,1,128], index: 1, kind: input, shape index: {}]
  %s2 = inlined_call_operand.vmem [shape: f32[1,128], index: 2, kind: input, shape index: {}]
  %s3 = inlined_call_operand.vmem [shape: f32[1152,128], index: 3, kind: input, shape index: {}]
  %s4 = inlined_call_operand.vmem [shape: f32[1,128], index: 4, kind: input, shape index: {}]
  %s5 = inlined_call_operand.vmem [shape: f32[1152,128], index: 5, kind: input, shape index: {}]
  %s6 = inlined_call_operand.vmem [shape: f32[1,128], index: 6, kind: input, shape index: {}]
  %s7 = inlined_call_operand.vmem [shape: f32[1152,128], index: 7, kind: input, shape index: {}]
  %s8 = inlined_call_operand.vmem [shape: f32[1,128], index: 8, kind: input, shape index: {}]
  %s9 = inlined_call_operand.vmem [shape: f32[1152,256], index: 9, kind: input, shape index: {}]
  %s10 = inlined_call_operand.vmem [shape: f32[1,256], index: 10, kind: input, shape index: {}]
  %s11 = inlined_call_operand.vmem [shape: f32[2,256,256], index: 11, kind: output, shape index: {}]
  %s12 = sld [smem:[#allocation0]]
  $region77: #{five_layer_conv.1} parent=0
    _
  %s14 = ssub.s32 1, %s12
  %s15 = scalar_select 0, %s14, %s12
  loop: start=0, step=1, limit=4
  $region2: #{five_layer_conv.1} parent=0 // loop_pre_header
    _
  $region3: #{five_layer_conv.1} parent=0 // loop_header
    %s17 = sphi 0, %s21
    %p18 = scmp.ge.s32.totalorder %s17, 4
    %s27 = sphi 0, %s29
    %s30 = sphi 0, %s27
    %s31 = sphi 0, %s30
    %s47 = sphi 0, %s31
    %s51 = sphi 0, %s51
    %s53 = sphi 0, %s51
    %s54 = sphi 0, %s53
    %s68 = sphi 0, %s54
    %s72 = sphi 0, %s72
    %s74 = sphi 0, %s72
    %s75 = sphi 0, %s74
    %s89 = sphi 0, %s75
    %s93 = sphi 0, %s93
    %s95 = sphi 0, %s93
    %s96 = sphi 0, %s95
    %s110 = sphi 0, %s96
    %s114 = sphi 0, %s114
    %s116 = sphi 0, %s114
    %s117 = sphi 0, %s116
    %s131 = sphi 0, %s117
    %s135 = sphi 0, %s135
    %s137 = sphi 0, %s135
    %s138 = sphi 0, %s137
    %s152 = sphi 0, %s138
    %s156 = sphi 0, %s156
    %s158 = sphi 0, %s156
    %s159 = sphi 0, %s158
    %s173 = sphi 0, %s159
    %s177 = sphi 0, %s177
    %s179 = sphi 0, %s177
    %s180 = sphi 0, %s179
    %s194 = sphi 0, %s180
    %s198 = sphi 0, %s198
    %s200 = sphi 0, %s198
    %s201 = sphi 0, %s200
    %s215 = sphi 0, %s201
    %s219 = sphi 0, %s219
    %s221 = sphi 0, %s219
    %s222 = sphi 0, %s221
    %s236 = sphi 0, %s222
    %s240 = sphi 0, %s240
    %s242 = sphi 0, %s240
    %s243 = sphi 0, %s242
    %s257 = sphi 0, %s243
    %s263 = sphi 0, %s265
    %s266 = sphi 0, %s263
    %s267 = sphi 0, %s266
    %s283 = sphi 0, %s267
  $region4: #{five_layer_conv.1} parent=0 // loop_header_branch
    %20 = sbr.rel (%p18) target = $region8
  $region5: #{five_layer_conv.1} parent=0 // loop_body
    %s22 = ssub.s32 %s17, 1
    %s23 = ssub.s32 %s17, 2
    %s24 = sadd.s32 %s17, 1
    %s25 = ssub.s32 %s17, %s24
    %p26 = scmp.eq.s32.totalorder %s25, 0
    %s28 = sadd.s32 %s27, 1
    %s29 = scalar_select %p26, %s27, %s28
    %p32 = pneg %p26
    %p33 = scmp.eq.s32.totalorder %s17, 1
    %p34 = por %p32, %p33
    %p35 = scmp.ne.s32.totalorder %s27, %s30
    %p36 = scmp.eq.s32.totalorder %s17, 0
    %p37 = por %p35, %p36
    %p38 = scmp.ne.s32.totalorder %s27, %s30
    %p39 = scmp.eq.s32.totalorder %s22, 1
    %p40 = por %p38, %p39
    %p41 = scmp.ne.s32.totalorder %s30, %s31
    %p42 = scmp.eq.s32.totalorder %s22, 0
    %p43 = por %p41, %p42
    %p44 = scmp.ne.s32.totalorder %s30, %s31
    %p45 = scmp.eq.s32.totalorder %s23, 1
    %p46 = por %p44, %p45
    %p48 = scmp.ne.s32.totalorder %s31, %s47
    %p49 = scmp.eq.s32.totalorder %s23, 0
    %p50 = por %p48, %p49
    %s52 = sadd.s32 %s51, 1
    %p55 = scmp.eq.s32.totalorder %s17, 1
    %p56 = scmp.ne.s32.totalorder %s51, %s53
    %p57 = scmp.eq.s32.totalorder %s17, 0
    %p58 = por %p56, %p57
    %p59 = scmp.ne.s32.totalorder %s51, %s53
    %p60 = scmp.eq.s32.totalorder %s22, 1
    %p61 = por %p59, %p60
    %p62 = scmp.ne.s32.totalorder %s53, %s54
    %p63 = scmp.eq.s32.totalorder %s22, 0
    %p64 = por %p62, %p63
    %p65 = scmp.ne.s32.totalorder %s53, %s54
    %p66 = scmp.eq.s32.totalorder %s23, 1
    %p67 = por %p65, %p66
    %p69 = scmp.ne.s32.totalorder %s54, %s68
    %p70 = scmp.eq.s32.totalorder %s23, 0
    %p71 = por %p69, %p70
    %s73 = sadd.s32 %s72, 1
    %p76 = scmp.eq.s32.totalorder %s17, 1
    %p77 = scmp.ne.s32.totalorder %s72, %s74
    %p78 = scmp.eq.s32.totalorder %s17, 0
    %p79 = por %p77, %p78
    %p80 = scmp.ne.s32.totalorder %s72, %s74
    %p81 = scmp.eq.s32.totalorder %s22, 1
    %p82 = por %p80, %p81
    %p83 = scmp.ne.s32.totalorder %s74, %s75
    %p84 = scmp.eq.s32.totalorder %s22, 0
    %p85 = por %p83, %p84
    %p86 = scmp.ne.s32.totalorder %s74, %s75
    %p87 = scmp.eq.s32.totalorder %s23, 1
    %p88 = por %p86, %p87
    %p90 = scmp.ne.s32.totalorder %s75, %s89
    %p91 = scmp.eq.s32.totalorder %s23, 0
    %p92 = por %p90, %p91
    %s94 = sadd.s32 %s93, 1
    %p97 = scmp.eq.s32.totalorder %s17, 1
    %p98 = scmp.ne.s32.totalorder %s93, %s95
    %p99 = scmp.eq.s32.totalorder %s17, 0
    %p100 = por %p98, %p99
    %p101 = scmp.ne.s32.totalorder %s93, %s95
    %p102 = scmp.eq.s32.totalorder %s22, 1
    %p103 = por %p101, %p102
    %p104 = scmp.ne.s32.totalorder %s95, %s96
    %p105 = scmp.eq.s32.totalorder %s22, 0
    %p106 = por %p104, %p105
    %p107 = scmp.ne.s32.totalorder %s95, %s96
    %p108 = scmp.eq.s32.totalorder %s23, 1
    %p109 = por %p107, %p108
    %p111 = scmp.ne.s32.totalorder %s96, %s110
    %p112 = scmp.eq.s32.totalorder %s23, 0
    %p113 = por %p111, %p112
    %s115 = sadd.s32 %s114, 1
    %p118 = scmp.eq.s32.totalorder %s17, 1
    %p119 = scmp.ne.s32.totalorder %s114, %s116
    %p120 = scmp.eq.s32.totalorder %s17, 0
    %p121 = por %p119, %p120
    %p122 = scmp.ne.s32.totalorder %s114, %s116
    %p123 = scmp.eq.s32.totalorder %s22, 1
    %p124 = por %p122, %p123
    %p125 = scmp.ne.s32.totalorder %s116, %s117
    %p126 = scmp.eq.s32.totalorder %s22, 0
    %p127 = por %p125, %p126
    %p128 = scmp.ne.s32.totalorder %s116, %s117
    %p129 = scmp.eq.s32.totalorder %s23, 1
    %p130 = por %p128, %p129
    %p132 = scmp.ne.s32.totalorder %s117, %s131
    %p133 = scmp.eq.s32.totalorder %s23, 0
    %p134 = por %p132, %p133
    %s136 = sadd.s32 %s135, 1
    %p139 = scmp.eq.s32.totalorder %s17, 1
    %p140 = scmp.ne.s32.totalorder %s135, %s137
    %p141 = scmp.eq.s32.totalorder %s17, 0
    %p142 = por %p140, %p141
    %p143 = scmp.ne.s32.totalorder %s135, %s137
    %p144 = scmp.eq.s32.totalorder %s22, 1
    %p145 = por %p143, %p144
    %p146 = scmp.ne.s32.totalorder %s137, %s138
    %p147 = scmp.eq.s32.totalorder %s22, 0
    %p148 = por %p146, %p147
    %p149 = scmp.ne.s32.totalorder %s137, %s138
    %p150 = scmp.eq.s32.totalorder %s23, 1
    %p151 = por %p149, %p150
    %p153 = scmp.ne.s32.totalorder %s138, %s152
    %p154 = scmp.eq.s32.totalorder %s23, 0
    %p155 = por %p153, %p154
    %s157 = sadd.s32 %s156, 1
    %p160 = scmp.eq.s32.totalorder %s17, 1
    %p161 = scmp.ne.s32.totalorder %s156, %s158
    %p162 = scmp.eq.s32.totalorder %s17, 0
    %p163 = por %p161, %p162
    %p164 = scmp.ne.s32.totalorder %s156, %s158
    %p165 = scmp.eq.s32.totalorder %s22, 1
    %p166 = por %p164, %p165
    %p167 = scmp.ne.s32.totalorder %s158, %s159
    %p168 = scmp.eq.s32.totalorder %s22, 0
    %p169 = por %p167, %p168
    %p170 = scmp.ne.s32.totalorder %s158, %s159
    %p171 = scmp.eq.s32.totalorder %s23, 1
    %p172 = por %p170, %p171
    %p174 = scmp.ne.s32.totalorder %s159, %s173
    %p175 = scmp.eq.s32.totalorder %s23, 0
    %p176 = por %p174, %p175
    %s178 = sadd.s32 %s177, 1
    %p181 = scmp.eq.s32.totalorder %s17, 1
    %p182 = scmp.ne.s32.totalorder %s177, %s179
    %p183 = scmp.eq.s32.totalorder %s17, 0
    %p184 = por %p182, %p183
    %p185 = scmp.ne.s32.totalorder %s177, %s179
    %p186 = scmp.eq.s32.totalorder %s22, 1
    %p187 = por %p185, %p186
    %p188 = scmp.ne.s32.totalorder %s179, %s180
    %p189 = scmp.eq.s32.totalorder %s22, 0
    %p190 = por %p188, %p189
    %p191 = scmp.ne.s32.totalorder %s179, %s180
    %p192 = scmp.eq.s32.totalorder %s23, 1
    %p193 = por %p191, %p192
    %p195 = scmp.ne.s32.totalorder %s180, %s194
    %p196 = scmp.eq.s32.totalorder %s23, 0
    %p197 = por %p195, %p196
    %s199 = sadd.s32 %s198, 1
    %p202 = scmp.eq.s32.totalorder %s17, 1
    %p203 = scmp.ne.s32.totalorder %s198, %s200
    %p204 = scmp.eq.s32.totalorder %s17, 0
    %p205 = por %p203, %p204
    %p206 = scmp.ne.s32.totalorder %s198, %s200
    %p207 = scmp.eq.s32.totalorder %s22, 1
    %p208 = por %p206, %p207
    %p209 = scmp.ne.s32.totalorder %s200, %s201
    %p210 = scmp.eq.s32.totalorder %s22, 0
    %p211 = por %p209, %p210
    %p212 = scmp.ne.s32.totalorder %s200, %s201
    %p213 = scmp.eq.s32.totalorder %s23, 1
    %p214 = por %p212, %p213
    %p216 = scmp.ne.s32.totalorder %s201, %s215
    %p217 = scmp.eq.s32.totalorder %s23, 0
    %p218 = por %p216, %p217
    %s220 = sadd.s32 %s219, 1
    %p223 = scmp.eq.s32.totalorder %s17, 1
    %p224 = scmp.ne.s32.totalorder %s219, %s221
    %p225 = scmp.eq.s32.totalorder %s17, 0
    %p226 = por %p224, %p225
    %p227 = scmp.ne.s32.totalorder %s219, %s221
    %p228 = scmp.eq.s32.totalorder %s22, 1
    %p229 = por %p227, %p228
    %p230 = scmp.ne.s32.totalorder %s221, %s222
    %p231 = scmp.eq.s32.totalorder %s22, 0
    %p232 = por %p230, %p231
    %p233 = scmp.ne.s32.totalorder %s221, %s222
    %p234 = scmp.eq.s32.totalorder %s23, 1
    %p235 = por %p233, %p234
    %p237 = scmp.ne.s32.totalorder %s222, %s236
    %p238 = scmp.eq.s32.totalorder %s23, 0
    %p239 = por %p237, %p238
    %s241 = sadd.s32 %s240, 1
    %p244 = scmp.eq.s32.totalorder %s17, 1
    %p245 = scmp.ne.s32.totalorder %s240, %s242
    %p246 = scmp.eq.s32.totalorder %s17, 0
    %p247 = por %p245, %p246
    %p248 = scmp.ne.s32.totalorder %s240, %s242
    %p249 = scmp.eq.s32.totalorder %s22, 1
    %p250 = por %p248, %p249
    %p251 = scmp.ne.s32.totalorder %s242, %s243
    %p252 = scmp.eq.s32.totalorder %s22, 0
    %p253 = por %p251, %p252
    %p254 = scmp.ne.s32.totalorder %s242, %s243
    %p255 = scmp.eq.s32.totalorder %s23, 1
    %p256 = por %p254, %p255
    %p258 = scmp.ne.s32.totalorder %s243, %s257
    %p259 = scmp.eq.s32.totalorder %s23, 0
    %p260 = por %p258, %p259
    %s261 = ssub.s32 %s17, %s24
    %p262 = scmp.eq.s32.totalorder %s261, 0
    %s264 = sadd.s32 %s263, 1
    %s265 = scalar_select %p262, %s263, %s264
    %p268 = pneg %p262
    %p269 = scmp.eq.s32.totalorder %s17, 1
    %p270 = por %p268, %p269
    %p271 = scmp.ne.s32.totalorder %s263, %s266
    %p272 = scmp.eq.s32.totalorder %s17, 0
    %p273 = por %p271, %p272
    %p274 = scmp.ne.s32.totalorder %s263, %s266
    %p275 = scmp.eq.s32.totalorder %s22, 1
    %p276 = por %p274, %p275
    %p277 = scmp.ne.s32.totalorder %s266, %s267
    %p278 = scmp.eq.s32.totalorder %s22, 0
    %p279 = por %p277, %p278
    %p280 = scmp.ne.s32.totalorder %s266, %s267
    %p281 = scmp.eq.s32.totalorder %s23, 1
    %p282 = por %p280, %p281
    %p284 = scmp.ne.s32.totalorder %s267, %s283
    %p285 = scmp.eq.s32.totalorder %s23, 0
    %p286 = por %p284, %p285
    %p287 = scmp.le.s32.totalorder 1, %s17
    %p288 = scmp.lt.s32.totalorder %s17, 3
    %p289 = pnand %p287, %p288
    %p290 = pneg %p289
    // Predicated region
    $region9: #{five_layer_conv.1} parent=5 // pred_check
      _
    $region10: #{five_layer_conv.1} parent=5 // pred_check_branch
      %292 = sbr.rel (%p289) target = $region12
    $region11: #{five_layer_conv.1} parent=5 // pred_region
      %s293 = ssub.s32 %s17, 1
      // Predicated region
      $region13: #{five_layer_conv.1} parent=11 // pred_check
        %p294 = pneg %p64
      $region14: #{five_layer_conv.1} parent=11 // pred_check_branch
        %296 = sbr.rel (%p294) target = $region16
      $region15: #{five_layer_conv.1} parent=11 // pred_region
        _
      $region16: #{five_layer_conv.1} parent=11 // pred_fallthru
        _
      // Predicated region
      $region17: #{five_layer_conv.1} parent=11 // pred_check
        %p297 = pneg %p85
      $region18: #{five_layer_conv.1} parent=11 // pred_check_branch
        %299 = sbr.rel (%p297) target = $region20
      $region19: #{five_layer_conv.1} parent=11 // pred_region
        _
      $region20: #{five_layer_conv.1} parent=11 // pred_fallthru
        _
      // Predicated region
      $region21: #{five_layer_conv.1} parent=11 // pred_check
        %p300 = pneg %p106
      $region22: #{five_layer_conv.1} parent=11 // pred_check_branch
        %302 = sbr.rel (%p300) target = $region24
      $region23: #{five_layer_conv.1} parent=11 // pred_region
        _
      $region24: #{five_layer_conv.1} parent=11 // pred_fallthru
        _
      // Predicated region
      $region25: #{five_layer_conv.1} parent=11 // pred_check
        %p303 = pneg %p127
      $region26: #{five_layer_conv.1} parent=11 // pred_check_branch
        %305 = sbr.rel (%p303) target = $region28
      $region27: #{five_layer_conv.1} parent=11 // pred_region
        _
      $region28: #{five_layer_conv.1} parent=11 // pred_fallthru
        _
      // Predicated region
      $region29: #{five_layer_conv.1} parent=11 // pred_check
        %p306 = pneg %p148
      $region30: #{five_layer_conv.1} parent=11 // pred_check_branch
        %308 = sbr.rel (%p306) target = $region32
      $region31: #{five_layer_conv.1} parent=11 // pred_region
        _
      $region32: #{five_layer_conv.1} parent=11 // pred_fallthru
        _
      // Predicated region
      $region33: #{five_layer_conv.1} parent=11 // pred_check
        %p309 = pneg %p169
      $region34: #{five_layer_conv.1} parent=11 // pred_check_branch
        %311 = sbr.rel (%p309) target = $region36
      $region35: #{five_layer_conv.1} parent=11 // pred_region
        _
      $region36: #{five_layer_conv.1} parent=11 // pred_fallthru
        _
      // Predicated region
      $region37: #{five_layer_conv.1} parent=11 // pred_check
        %p312 = pneg %p190
      $region38: #{five_layer_conv.1} parent=11 // pred_check_branch
        %314 = sbr.rel (%p312) target = $region40
      $region39: #{five_layer_conv.1} parent=11 // pred_region
        _
      $region40: #{five_layer_conv.1} parent=11 // pred_fallthru
        _
      // Predicated region
      $region41: #{five_layer_conv.1} parent=11 // pred_check
        %p315 = pneg %p211
      $region42: #{five_layer_conv.1} parent=11 // pred_check_branch
        %317 = sbr.rel (%p315) target = $region44
      $region43: #{five_layer_conv.1} parent=11 // pred_region
        _
      $region44: #{five_layer_conv.1} parent=11 // pred_fallthru
        _
      // Predicated region
      $region45: #{five_layer_conv.1} parent=11 // pred_check
        %p318 = pneg %p232
      $region46: #{five_layer_conv.1} parent=11 // pred_check_branch
        %320 = sbr.rel (%p318) target = $region48
      $region47: #{five_layer_conv.1} parent=11 // pred_region
        _
      $region48: #{five_layer_conv.1} parent=11 // pred_fallthru
        _
      // Predicated region
      $region49: #{five_layer_conv.1} parent=11 // pred_check
        %p321 = pneg %p253
      $region50: #{five_layer_conv.1} parent=11 // pred_check_branch
        %323 = sbr.rel (%p321) target = $region52
      $region51: #{five_layer_conv.1} parent=11 // pred_region
        _
      $region52: #{five_layer_conv.1} parent=11 // pred_fallthru
        _
    $region12: #{five_layer_conv.1} parent=5 // pred_fallthru
      _
    %p324 = scmp.lt.s32.totalorder %s17, 2
    // Predicated region
    $region53: #{five_layer_conv.1} parent=5 // pred_check
      %p325 = pneg %p324
    $region54: #{five_layer_conv.1} parent=5 // pred_check_branch
      %327 = sbr.rel (%p325) target = $region56
    $region55: #{five_layer_conv.1} parent=5 // pred_region
      // Predicated region
      $region57: #{five_layer_conv.1} parent=55 // pred_check
        %p328 = pneg %p37
      $region58: #{five_layer_conv.1} parent=55 // pred_check_branch
        %330 = sbr.rel (%p328) target = $region60
      $region59: #{five_layer_conv.1} parent=55 // pred_region
        %p331 = scmp.lt.s32.totalorder %s17, 1
        %s332 = scalar_select %p331, %s17, 1
        %s333 = smul.addr %s332, 32
        %s334 = smul.addr %s333, 8
        %s335 = scalar_lea.vmem %s0, %s334
      $region60: #{five_layer_conv.1} parent=55 // pred_fallthru
        _
    $region56: #{five_layer_conv.1} parent=5 // pred_fallthru
      _
    %p336 = scmp.le.s32.totalorder 1, %s17
    %p337 = scmp.lt.s32.totalorder %s17, 3
    %p338 = pnand %p336, %p337
    %p339 = pneg %p338
    // Predicated region
    $region61: #{five_layer_conv.1} parent=5 // pred_check
      _
    $region62: #{five_layer_conv.1} parent=5 // pred_check_branch
      %341 = sbr.rel (%p338) target = $region64
    $region63: #{five_layer_conv.1} parent=5 // pred_region
      %s342 = ssub.s32 %s17, 1
      %p343 = scmp.lt.s32.totalorder %s22, 1
      %s344 = scalar_select %p343, %s22, 1
      %s345 = smul.addr %s344, 32
      %s346 = smul.addr %s345, 8
      %s347 = scalar_lea.vmem %s0, %s346
      %p348 = pneg %p43
      %p349 = pneg %p40
      %p350 = pneg %p64
      %p351 = pneg %p61
      %p352 = pneg %p85
      %p353 = pneg %p82
      %p354 = pneg %p106
      %p355 = pneg %p103
      %p356 = pneg %p127
      %p357 = pneg %p124
      %p358 = pneg %p148
      %p359 = pneg %p145
      %p360 = pneg %p169
      %p361 = pneg %p166
      %p362 = pneg %p190
      %p363 = pneg %p187
      %p364 = pneg %p211
      %p365 = pneg %p208
      %p366 = pneg %p232
      %p367 = pneg %p229
      %p368 = pneg %p253
      %p369 = pneg %p250
      %p370 = pneg %p279
      %p371 = pneg %p276
      %p372 = scmp.lt.s32.totalorder %s22, 1
      %s373 = scalar_select %p372, %s22, 1
      %s374 = smul.addr %s373, 64
      %s375 = smul.addr %s374, 8
      %s376 = scalar_lea.vmem %s11, %s375
      %p377 = scmp.lt.s32.totalorder %s22, 1
      %s378 = scalar_select %p377, %s22, 1
      %s379 = smul.addr %s378, 32
      %s380 = smul.addr %s379, 8
      %s381 = scalar_lea.vmem %s0, %s380
      %p382 = scmp.lt.s32.totalorder %s22, 1
      %s383 = scalar_select %p382, %s22, 1
      %s384 = smul.addr %s383, 64
      %s385 = smul.addr %s384, 8
      %s386 = scalar_lea.vmem %s11, %s385
      %v387 = vld [vmem:[%s381] sm:$0xff]
      %v388 = vld [vmem:[%s381 + $0x8] sm:$0xff]
      %v389 = vld [vmem:[%s381 + $0x10] sm:$0xff]
      %v390 = vld [vmem:[%s381 + $0x18] sm:$0xff]
      %v391 = vld [vmem:[%s381 + $0x20] sm:$0xff]
      %v392 = vld [vmem:[%s381 + $0x28] sm:$0xff]
      %v393 = vld [vmem:[%s381 + $0x30] sm:$0xff]
      %v394 = vld [vmem:[%s381 + $0x38] sm:$0xff]
      %v395 = vld [vmem:[%s381 + $0x40] sm:$0xff]
      %v396 = vld [vmem:[%s381 + $0x48] sm:$0xff]
      %v397 = vld [vmem:[%s381 + $0x50] sm:$0xff]
      %v398 = vld [vmem:[%s381 + $0x58] sm:$0xff]
      %v399 = vld [vmem:[%s381 + $0x60] sm:$0xff]
      %v400 = vld [vmem:[%s381 + $0x68] sm:$0xff]
      %v401 = vld [vmem:[%s381 + $0x70] sm:$0xff]
      %v402 = vld [vmem:[%s381 + $0x78] sm:$0xff]
      %v403 = vld [vmem:[%s381 + $0x80] sm:$0xff]
      %v404 = vld [vmem:[%s381 + $0x88] sm:$0xff]
      %v405 = vld [vmem:[%s381 + $0x90] sm:$0xff]
      %v406 = vld [vmem:[%s381 + $0x98] sm:$0xff]
      %v407 = vld [vmem:[%s381 + $0xa0] sm:$0xff]
      %v408 = vld [vmem:[%s381 + $0xa8] sm:$0xff]
      %v409 = vld [vmem:[%s381 + $0xb0] sm:$0xff]
      %v410 = vld [vmem:[%s381 + $0xb8] sm:$0xff]
      %v411 = vld [vmem:[%s381 + $0xc0] sm:$0xff]
      %v412 = vld [vmem:[%s381 + $0xc8] sm:$0xff]
      %v413 = vld [vmem:[%s381 + $0xd0] sm:$0xff]
      %v414 = vld [vmem:[%s381 + $0xd8] sm:$0xff]
      %v415 = vld [vmem:[%s381 + $0xe0] sm:$0xff]
      %v416 = vld [vmem:[%s381 + $0xe8] sm:$0xff]
      %v417 = vld [vmem:[%s381 + $0xf0] sm:$0xff]
      %v418 = vld [vmem:[%s381 + $0xf8] sm:$0xff]
      %v419 = vld [vmem:[%s1] sm:$0x1]
      %421 = vset.pattern.permute.xlu0 0
      %422 = vperm.xlu0 %421, %v387
      %v423 = vpop.permute.xlu0 %422
      %426 = vset.pattern.permute.xlu0 0
      %427 = vperm.xlu0 %426, %v388
      %v428 = vpop.permute.xlu0 %427
      %431 = vset.pattern.permute.xlu0 0
      %432 = vperm.xlu0 %431, %v389
      %v433 = vpop.permute.xlu0 %432
      %436 = vset.pattern.permute.xlu0 0
      %437 = vperm.xlu0 %436, %v390
      %v438 = vpop.permute.xlu0 %437
      %441 = vset.pattern.permute.xlu0 0
      %442 = vperm.xlu0 %441, %v391
      %v443 = vpop.permute.xlu0 %442
      %446 = vset.pattern.permute.xlu0 0
      %447 = vperm.xlu0 %446, %v392
      %v448 = vpop.permute.xlu0 %447
      %451 = vset.pattern.permute.xlu0 0
      %452 = vperm.xlu0 %451, %v393
      %v453 = vpop.permute.xlu0 %452
      %456 = vset.pattern.permute.xlu0 0
      %457 = vperm.xlu0 %456, %v394
      %v458 = vpop.permute.xlu0 %457
      %461 = vset.pattern.permute.xlu0 0
      %462 = vperm.xlu0 %461, %v395
      %v463 = vpop.permute.xlu0 %462
      %466 = vset.pattern.permute.xlu0 0
      %467 = vperm.xlu0 %466, %v396
      %v468 = vpop.permute.xlu0 %467
      %471 = vset.pattern.permute.xlu0 0
      %472 = vperm.xlu0 %471, %v397
      %v473 = vpop.permute.xlu0 %472
      %476 = vset.pattern.permute.xlu0 0
      %477 = vperm.xlu0 %476, %v398
      %v478 = vpop.permute.xlu0 %477
      %481 = vset.pattern.permute.xlu0 0
      %482 = vperm.xlu0 %481, %v399
      %v483 = vpop.permute.xlu0 %482
      %486 = vset.pattern.permute.xlu0 0
      %487 = vperm.xlu0 %486, %v400
      %v488 = vpop.permute.xlu0 %487
      %491 = vset.pattern.permute.xlu0 0
      %492 = vperm.xlu0 %491, %v401
      %v493 = vpop.permute.xlu0 %492
      %496 = vset.pattern.permute.xlu0 0
      %497 = vperm.xlu0 %496, %v402
      %v498 = vpop.permute.xlu0 %497
      %501 = vset.pattern.permute.xlu0 0
      %502 = vperm.xlu0 %501, %v403
      %v503 = vpop.permute.xlu0 %502
      %506 = vset.pattern.permute.xlu0 0
      %507 = vperm.xlu0 %506, %v404
      %v508 = vpop.permute.xlu0 %507
      %511 = vset.pattern.permute.xlu0 0
      %512 = vperm.xlu0 %511, %v405
      %v513 = vpop.permute.xlu0 %512
      %516 = vset.pattern.permute.xlu0 0
      %517 = vperm.xlu0 %516, %v406
      %v518 = vpop.permute.xlu0 %517
      %521 = vset.pattern.permute.xlu0 0
      %522 = vperm.xlu0 %521, %v407
      %v523 = vpop.permute.xlu0 %522
      %526 = vset.pattern.permute.xlu0 0
      %527 = vperm.xlu0 %526, %v408
      %v528 = vpop.permute.xlu0 %527
      %531 = vset.pattern.permute.xlu0 0
      %532 = vperm.xlu0 %531, %v409
      %v533 = vpop.permute.xlu0 %532
      %536 = vset.pattern.permute.xlu0 0
      %537 = vperm.xlu0 %536, %v410
      %v538 = vpop.permute.xlu0 %537
      %541 = vset.pattern.permute.xlu0 0
      %542 = vperm.xlu0 %541, %v411
      %v543 = vpop.permute.xlu0 %542
      %546 = vset.pattern.permute.xlu0 0
      %547 = vperm.xlu0 %546, %v412
      %v548 = vpop.permute.xlu0 %547
      %551 = vset.pattern.permute.xlu0 0
      %552 = vperm.xlu0 %551, %v413
      %v553 = vpop.permute.xlu0 %552
      %556 = vset.pattern.permute.xlu0 0
      %557 = vperm.xlu0 %556, %v414
      %v558 = vpop.permute.xlu0 %557
      %561 = vset.pattern.permute.xlu0 0
      %562 = vperm.xlu0 %561, %v415
      %v563 = vpop.permute.xlu0 %562
      %566 = vset.pattern.permute.xlu0 0
      %567 = vperm.xlu0 %566, %v416
      %v568 = vpop.permute.xlu0 %567
      %571 = vset.pattern.permute.xlu0 0
      %572 = vperm.xlu0 %571, %v417
      %v573 = vpop.permute.xlu0 %572
      %576 = vset.pattern.permute.xlu0 0
      %577 = vperm.xlu0 %576, %v418
      %v578 = vpop.permute.xlu0 %577
      %v581 = vperm.slane %v419, 0
      %v583 = vmul.f32 %v423, %v581
      %v584 = vmul.f32 %v428, %v581
      %v585 = vmul.f32 %v433, %v581
      %v586 = vmul.f32 %v438, %v581
      %v587 = vmul.f32 %v443, %v581
      %v588 = vmul.f32 %v448, %v581
      %v589 = vmul.f32 %v453, %v581
      %v590 = vmul.f32 %v458, %v581
      %v591 = vmul.f32 %v463, %v581
      %v592 = vmul.f32 %v468, %v581
      %v593 = vmul.f32 %v473, %v581
      %v594 = vmul.f32 %v478, %v581
      %v595 = vmul.f32 %v483, %v581
      %v596 = vmul.f32 %v488, %v581
      %v597 = vmul.f32 %v493, %v581
      %v598 = vmul.f32 %v498, %v581
      %v599 = vmul.f32 %v503, %v581
      %v600 = vmul.f32 %v508, %v581
      %v601 = vmul.f32 %v513, %v581
      %v602 = vmul.f32 %v518, %v581
      %v603 = vmul.f32 %v523, %v581
      %v604 = vmul.f32 %v528, %v581
      %v605 = vmul.f32 %v533, %v581
      %v606 = vmul.f32 %v538, %v581
      %v607 = vmul.f32 %v543, %v581
      %v608 = vmul.f32 %v548, %v581
      %v609 = vmul.f32 %v553, %v581
      %v610 = vmul.f32 %v558, %v581
      %v611 = vmul.f32 %v563, %v581
      %v612 = vmul.f32 %v568, %v581
      %v613 = vmul.f32 %v573, %v581
      %v614 = vmul.f32 %v578, %v581
      %s615 = scalar_lea.vmem %s1, 1
      %v616 = vld [vmem:[%s615] sm:$0x1]
      %618 = vset.pattern.permute.xlu0 0
      %619 = vperm.xlu0 %618, 0.0
      %v620 = vpop.permute.xlu0 %619
      %v623 = vperm.slane %v616, 0
      %v625 = vmul.f32 %v423, %v623
      %v626 = vmul.f32 %v428, %v623
      %v627 = vmul.f32 %v433, %v623
      %v628 = vmul.f32 %v438, %v623
      %v629 = vmul.f32 %v443, %v623
      %v630 = vmul.f32 %v448, %v623
      %v631 = vmul.f32 %v453, %v623
      %v632 = vmul.f32 %v458, %v623
      %v633 = vmul.f32 %v463, %v623
      %v634 = vmul.f32 %v468, %v623
      %v635 = vmul.f32 %v473, %v623
      %v636 = vmul.f32 %v478, %v623
      %v637 = vmul.f32 %v483, %v623
      %v638 = vmul.f32 %v488, %v623
      %v639 = vmul.f32 %v493, %v623
      %v640 = vmul.f32 %v498, %v623
      %v641 = vmul.f32 %v503, %v623
      %v642 = vmul.f32 %v508, %v623
      %v643 = vmul.f32 %v513, %v623
      %v644 = vmul.f32 %v518, %v623
      %v645 = vmul.f32 %v523, %v623
      %v646 = vmul.f32 %v528, %v623
      %v647 = vmul.f32 %v533, %v623
      %v648 = vmul.f32 %v538, %v623
      %v649 = vmul.f32 %v543, %v623
      %v650 = vmul.f32 %v548, %v623
      %v651 = vmul.f32 %v553, %v623
      %v652 = vmul.f32 %v558, %v623
      %v653 = vmul.f32 %v563, %v623
      %v654 = vmul.f32 %v568, %v623
      %v655 = vmul.f32 %v573, %v623
      %v656 = vmul.f32 %v578, %v623
      %v657 = vmul.f32 %v620, %v623
      %vm691 = vcmask 1046528
      %v692 = vrot.slane %v625, 1
      %v693 = vrot.slane %v626, 1
      %v694 = vsel %vm691, %v692, %v693
      %v695 = vrot.slane %v627, 1
      %v696 = vsel %vm691, %v693, %v695
      %v697 = vrot.slane %v628, 1
      %v698 = vsel %vm691, %v695, %v697
      %v699 = vrot.slane %v629, 1
      %v700 = vsel %vm691, %v697, %v699
      %v701 = vrot.slane %v630, 1
      %v702 = vsel %vm691, %v699, %v701
      %v703 = vrot.slane %v631, 1
      %v704 = vsel %vm691, %v701, %v703
      %v705 = vrot.slane %v632, 1
      %v706 = vsel %vm691, %v703, %v705
      %v707 = vrot.slane %v633, 1
      %v708 = vsel %vm691, %v705, %v707
      %v709 = vrot.slane %v634, 1
      %v710 = vsel %vm691, %v707, %v709
      %v711 = vrot.slane %v635, 1
      %v712 = vsel %vm691, %v709, %v711
      %v713 = vrot.slane %v636, 1
      %v714 = vsel %vm691, %v711, %v713
      %v715 = vrot.slane %v637, 1
      %v716 = vsel %vm691, %v713, %v715
      %v717 = vrot.slane %v638, 1
      %v718 = vsel %vm691, %v715, %v717
      %v719 = vrot.slane %v639, 1
      %v720 = vsel %vm691, %v717, %v719
      %v721 = vrot.slane %v640, 1
      %v722 = vsel %vm691, %v719, %v721
      %v723 = vrot.slane %v641, 1
      %v724 = vsel %vm691, %v721, %v723
      %v725 = vrot.slane %v642, 1
      %v726 = vsel %vm691, %v723, %v725
      %v727 = vrot.slane %v643, 1
      %v728 = vsel %vm691, %v725, %v727
      %v729 = vrot.slane %v644, 1
      %v730 = vsel %vm691, %v727, %v729
      %v731 = vrot.slane %v645, 1
      %v732 = vsel %vm691, %v729, %v731
      %v733 = vrot.slane %v646, 1
      %v734 = vsel %vm691, %v731, %v733
      %v735 = vrot.slane %v647, 1
      %v736 = vsel %vm691, %v733, %v735
      %v737 = vrot.slane %v648, 1
      %v738 = vsel %vm691, %v735, %v737
      %v739 = vrot.slane %v649, 1
      %v740 = vsel %vm691, %v737, %v739
      %v741 = vrot.slane %v650, 1
      %v742 = vsel %vm691, %v739, %v741
      %v743 = vrot.slane %v651, 1
      %v744 = vsel %vm691, %v741, %v743
      %v745 = vrot.slane %v652, 1
      %v746 = vsel %vm691, %v743, %v745
      %v747 = vrot.slane %v653, 1
      %v748 = vsel %vm691, %v745, %v747
      %v749 = vrot.slane %v654, 1
      %v750 = vsel %vm691, %v747, %v749
      %v751 = vrot.slane %v655, 1
      %v752 = vsel %vm691, %v749, %v751
      %v753 = vrot.slane %v656, 1
      %v754 = vsel %vm691, %v751, %v753
      %v755 = vrot.slane %v657, 1
      %v756 = vsel %vm691, %v753, %v755
      %v789 = vadd.f32 %v583, %v694
      %v790 = vadd.f32 %v584, %v696
      %v791 = vadd.f32 %v585, %v698
      %v792 = vadd.f32 %v586, %v700
      %v793 = vadd.f32 %v587, %v702
      %v794 = vadd.f32 %v588, %v704
      %v795 = vadd.f32 %v589, %v706
      %v796 = vadd.f32 %v590, %v708
      %v797 = vadd.f32 %v591, %v710
      %v798 = vadd.f32 %v592, %v712
      %v799 = vadd.f32 %v593, %v714
      %v800 = vadd.f32 %v594, %v716
      %v801 = vadd.f32 %v595, %v718
      %v802 = vadd.f32 %v596, %v720
      %v803 = vadd.f32 %v597, %v722
      %v804 = vadd.f32 %v598, %v724
      %v805 = vadd.f32 %v599, %v726
      %v806 = vadd.f32 %v600, %v728
      %v807 = vadd.f32 %v601, %v730
      %v808 = vadd.f32 %v602, %v732
      %v809 = vadd.f32 %v603, %v734
      %v810 = vadd.f32 %v604, %v736
      %v811 = vadd.f32 %v605, %v738
      %v812 = vadd.f32 %v606, %v740
      %v813 = vadd.f32 %v607, %v742
      %v814 = vadd.f32 %v608, %v744
      %v815 = vadd.f32 %v609, %v746
      %v816 = vadd.f32 %v610, %v748
      %v817 = vadd.f32 %v611, %v750
      %v818 = vadd.f32 %v612, %v752
      %v819 = vadd.f32 %v613, %v754
      %v820 = vadd.f32 %v614, %v756
      %s821 = scalar_lea.vmem %s1, 2
      %v822 = vld [vmem:[%s821] sm:$0x1]
      %v824 = vperm.slane %v822, 0
      %v826 = vmul.f32 %v423, %v824
      %v827 = vmul.f32 %v428, %v824
      %v828 = vmul.f32 %v433, %v824
      %v829 = vmul.f32 %v438, %v824
      %v830 = vmul.f32 %v443, %v824
      %v831 = vmul.f32 %v448, %v824
      %v832 = vmul.f32 %v453, %v824
      %v833 = vmul.f32 %v458, %v824
      %v834 = vmul.f32 %v463, %v824
      %v835 = vmul.f32 %v468, %v824
      %v836 = vmul.f32 %v473, %v824
      %v837 = vmul.f32 %v478, %v824
      %v838 = vmul.f32 %v483, %v824
      %v839 = vmul.f32 %v488, %v824
      %v840 = vmul.f32 %v493, %v824
      %v841 = vmul.f32 %v498, %v824
      %v842 = vmul.f32 %v503, %v824
      %v843 = vmul.f32 %v508, %v824
      %v844 = vmul.f32 %v513, %v824
      %v845 = vmul.f32 %v518, %v824
      %v846 = vmul.f32 %v523, %v824
      %v847 = vmul.f32 %v528, %v824
      %v848 = vmul.f32 %v533, %v824
      %v849 = vmul.f32 %v538, %v824
      %v850 = vmul.f32 %v543, %v824
      %v851 = vmul.f32 %v548, %v824
      %v852 = vmul.f32 %v553, %v824
      %v853 = vmul.f32 %v558, %v824
      %v854 = vmul.f32 %v563, %v824
      %v855 = vmul.f32 %v568, %v824
      %v856 = vmul.f32 %v573, %v824
      %v857 = vmul.f32 %v578, %v824
      %v858 = vmul.f32 %v620, %v824
      %vm892 = vcmask 1045504
      %v893 = vrot.slane %v826, 2
      %v894 = vrot.slane %v827, 2
      %v895 = vsel %vm892, %v893, %v894
      %v896 = vrot.slane %v828, 2
      %v897 = vsel %vm892, %v894, %v896
      %v898 = vrot.slane %v829, 2
      %v899 = vsel %vm892, %v896, %v898
      %v900 = vrot.slane %v830, 2
      %v901 = vsel %vm892, %v898, %v900
      %v902 = vrot.slane %v831, 2
      %v903 = vsel %vm892, %v900, %v902
      %v904 = vrot.slane %v832, 2
      %v905 = vsel %vm892, %v902, %v904
      %v906 = vrot.slane %v833, 2
      %v907 = vsel %vm892, %v904, %v906
      %v908 = vrot.slane %v834, 2
      %v909 = vsel %vm892, %v906, %v908
      %v910 = vrot.slane %v835, 2
      %v911 = vsel %vm892, %v908, %v910
      %v912 = vrot.slane %v836, 2
      %v913 = vsel %vm892, %v910, %v912
      %v914 = vrot.slane %v837, 2
      %v915 = vsel %vm892, %v912, %v914
      %v916 = vrot.slane %v838, 2
      %v917 = vsel %vm892, %v914, %v916
      %v918 = vrot.slane %v839, 2
      %v919 = vsel %vm892, %v916, %v918
      %v920 = vrot.slane %v840, 2
      %v921 = vsel %vm892, %v918, %v920
      %v922 = vrot.slane %v841, 2
      %v923 = vsel %vm892, %v920, %v922
      %v924 = vrot.slane %v842, 2
      %v925 = vsel %vm892, %v922, %v924
      %v926 = vrot.slane %v843, 2
      %v927 = vsel %vm892, %v924, %v926
      %v928 = vrot.slane %v844, 2
      %v929 = vsel %vm892, %v926, %v928
      %v930 = vrot.slane %v845, 2
      %v931 = vsel %vm892, %v928, %v930
      %v932 = vrot.slane %v846, 2
      %v933 = vsel %vm892, %v930, %v932
      %v934 = vrot.slane %v847, 2
      %v935 = vsel %vm892, %v932, %v934
      %v936 = vrot.slane %v848, 2
      %v937 = vsel %vm892, %v934, %v936
      %v938 = vrot.slane %v849, 2
      %v939 = vsel %vm892, %v936, %v938
      %v940 = vrot.slane %v850, 2
      %v941 = vsel %vm892, %v938, %v940
      %v942 = vrot.slane %v851, 2
      %v943 = vsel %vm892, %v940, %v942
      %v944 = vrot.slane %v852, 2
      %v945 = vsel %vm892, %v942, %v944
      %v946 = vrot.slane %v853, 2
      %v947 = vsel %vm892, %v944, %v946
      %v948 = vrot.slane %v854, 2
      %v949 = vsel %vm892, %v946, %v948
      %v950 = vrot.slane %v855, 2
      %v951 = vsel %vm892, %v948, %v950
      %v952 = vrot.slane %v856, 2
      %v953 = vsel %vm892, %v950, %v952
      %v954 = vrot.slane %v857, 2
      %v955 = vsel %vm892, %v952, %v954
      %v956 = vrot.slane %v858, 2
      %v957 = vsel %vm892, %v954, %v956
      %v990 = vadd.f32 %v789, %v895
      %v991 = vadd.f32 %v790, %v897
      %v992 = vadd.f32 %v791, %v899
      %v993 = vadd.f32 %v792, %v901
      %v994 = vadd.f32 %v793, %v903
      %v995 = vadd.f32 %v794, %v905
      %v996 = vadd.f32 %v795, %v907
      %v997 = vadd.f32 %v796, %v909
      %v998 = vadd.f32 %v797, %v911
      %v999 = vadd.f32 %v798, %v913
      %v1000 = vadd.f32 %v799, %v915
      %v1001 = vadd.f32 %v800, %v917
      %v1002 = vadd.f32 %v801, %v919
      %v1003 = vadd.f32 %v802, %v921
      %v1004 = vadd.f32 %v803, %v923
      %v1005 = vadd.f32 %v804, %v925
      %v1006 = vadd.f32 %v805, %v927
      %v1007 = vadd.f32 %v806, %v929
      %v1008 = vadd.f32 %v807, %v931
      %v1009 = vadd.f32 %v808, %v933
      %v1010 = vadd.f32 %v809, %v935
      %v1011 = vadd.f32 %v810, %v937
      %v1012 = vadd.f32 %v811, %v939
      %v1013 = vadd.f32 %v812, %v941
      %v1014 = vadd.f32 %v813, %v943
      %v1015 = vadd.f32 %v814, %v945
      %v1016 = vadd.f32 %v815, %v947
      %v1017 = vadd.f32 %v816, %v949
      %v1018 = vadd.f32 %v817, %v951
      %v1019 = vadd.f32 %v818, %v953
      %v1020 = vadd.f32 %v819, %v955
      %v1021 = vadd.f32 %v820, %v957
      %s1022 = scalar_lea.vmem %s1, 3
      %v1023 = vld [vmem:[%s1022] sm:$0x1]
      %v1025 = vperm.slane %v1023, 0
      %v1027 = vmul.f32 %v433, %v1025
      %v1028 = vmul.f32 %v438, %v1025
      %v1029 = vmul.f32 %v443, %v1025
      %v1030 = vmul.f32 %v448, %v1025
      %v1031 = vmul.f32 %v453, %v1025
      %v1032 = vmul.f32 %v458, %v1025
      %v1033 = vmul.f32 %v463, %v1025
      %v1034 = vmul.f32 %v468, %v1025
      %v1035 = vmul.f32 %v473, %v1025
      %v1036 = vmul.f32 %v478, %v1025
      %v1037 = vmul.f32 %v483, %v1025
      %v1038 = vmul.f32 %v488, %v1025
      %v1039 = vmul.f32 %v493, %v1025
      %v1040 = vmul.f32 %v498, %v1025
      %v1041 = vmul.f32 %v503, %v1025
      %v1042 = vmul.f32 %v508, %v1025
      %v1043 = vmul.f32 %v513, %v1025
      %v1044 = vmul.f32 %v518, %v1025
      %v1045 = vmul.f32 %v523, %v1025
      %v1046 = vmul.f32 %v528, %v1025
      %v1047 = vmul.f32 %v533, %v1025
      %v1048 = vmul.f32 %v538, %v1025
      %v1049 = vmul.f32 %v543, %v1025
      %v1050 = vmul.f32 %v548, %v1025
      %v1051 = vmul.f32 %v553, %v1025
      %v1052 = vmul.f32 %v558, %v1025
      %v1053 = vmul.f32 %v563, %v1025
      %v1054 = vmul.f32 %v568, %v1025
      %v1055 = vmul.f32 %v573, %v1025
      %v1056 = vmul.f32 %v578, %v1025
      %v1057 = vmul.f32 %v620, %v1025
      %v1058 = vadd.f32 %v990, %v1027
      %v1059 = vadd.f32 %v991, %v1028
      %v1060 = vadd.f32 %v992, %v1029
      %v1061 = vadd.f32 %v993, %v1030
      %v1062 = vadd.f32 %v994, %v1031
      %v1063 = vadd.f32 %v995, %v1032
      %v1064 = vadd.f32 %v996, %v1033
      %v1065 = vadd.f32 %v997, %v1034
      %v1066 = vadd.f32 %v998, %v1035
      %v1067 = vadd.f32 %v999, %v1036
      %v1068 = vadd.f32 %v1000, %v1037
      %v1069 = vadd.f32 %v1001, %v1038
      %v1070 = vadd.f32 %v1002, %v1039
      %v1071 = vadd.f32 %v1003, %v1040
      %v1072 = vadd.f32 %v1004, %v1041
      %v1073 = vadd.f32 %v1005, %v1042
      %v1074 = vadd.f32 %v1006, %v1043
      %v1075 = vadd.f32 %v1007, %v1044
      %v1076 = vadd.f32 %v1008, %v1045
      %v1077 = vadd.f32 %v1009, %v1046
      %v1078 = vadd.f32 %v1010, %v1047
      %v1079 = vadd.f32 %v1011, %v1048
      %v1080 = vadd.f32 %v1012, %v1049
      %v1081 = vadd.f32 %v1013, %v1050
      %v1082 = vadd.f32 %v1014, %v1051
      %v1083 = vadd.f32 %v1015, %v1052
      %v1084 = vadd.f32 %v1016, %v1053
      %v1085 = vadd.f32 %v1017, %v1054
      %v1086 = vadd.f32 %v1018, %v1055
      %v1087 = vadd.f32 %v1019, %v1056
      %v1088 = vadd.f32 %v1020, %v1057
      %v1089 = vadd.f32 %v1021, %v1057
      %s1090 = scalar_lea.vmem %s1, 4
      %v1091 = vld [vmem:[%s1090] sm:$0x1]
      %v1093 = vperm.slane %v1091, 0
      %v1095 = vmul.f32 %v433, %v1093
      %v1096 = vmul.f32 %v438, %v1093
      %v1097 = vmul.f32 %v443, %v1093
      %v1098 = vmul.f32 %v448, %v1093
      %v1099 = vmul.f32 %v453, %v1093
      %v1100 = vmul.f32 %v458, %v1093
      %v1101 = vmul.f32 %v463, %v1093
      %v1102 = vmul.f32 %v468, %v1093
      %v1103 = vmul.f32 %v473, %v1093
      %v1104 = vmul.f32 %v478, %v1093
      %v1105 = vmul.f32 %v483, %v1093
      %v1106 = vmul.f32 %v488, %v1093
      %v1107 = vmul.f32 %v493, %v1093
      %v1108 = vmul.f32 %v498, %v1093
      %v1109 = vmul.f32 %v503, %v1093
      %v1110 = vmul.f32 %v508, %v1093
      %v1111 = vmul.f32 %v513, %v1093
      %v1112 = vmul.f32 %v518, %v1093
      %v1113 = vmul.f32 %v523, %v1093
      %v1114 = vmul.f32 %v528, %v1093
      %v1115 = vmul.f32 %v533, %v1093
      %v1116 = vmul.f32 %v538, %v1093
      %v1117 = vmul.f32 %v543, %v1093
      %v1118 = vmul.f32 %v548, %v1093
      %v1119 = vmul.f32 %v553, %v1093
      %v1120 = vmul.f32 %v558, %v1093
      %v1121 = vmul.f32 %v563, %v1093
      %v1122 = vmul.f32 %v568, %v1093
      %v1123 = vmul.f32 %v573, %v1093
      %v1124 = vmul.f32 %v578, %v1093
      %v1125 = vmul.f32 %v620, %v1093
      %v1157 = vrot.slane %v1095, 1
      %v1158 = vrot.slane %v1096, 1
      %v1159 = vsel %vm691, %v1157, %v1158
      %v1160 = vrot.slane %v1097, 1
      %v1161 = vsel %vm691, %v1158, %v1160
      %v1162 = vrot.slane %v1098, 1
      %v1163 = vsel %vm691, %v1160, %v1162
      %v1164 = vrot.slane %v1099, 1
      %v1165 = vsel %vm691, %v1162, %v1164
      %v1166 = vrot.slane %v1100, 1
      %v1167 = vsel %vm691, %v1164, %v1166
      %v1168 = vrot.slane %v1101, 1
      %v1169 = vsel %vm691, %v1166, %v1168
      %v1170 = vrot.slane %v1102, 1
      %v1171 = vsel %vm691, %v1168, %v1170
      %v1172 = vrot.slane %v1103, 1
      %v1173 = vsel %vm691, %v1170, %v1172
      %v1174 = vrot.slane %v1104, 1
      %v1175 = vsel %vm691, %v1172, %v1174
      %v1176 = vrot.slane %v1105, 1
      %v1177 = vsel %vm691, %v1174, %v1176
      %v1178 = vrot.slane %v1106, 1
      %v1179 = vsel %vm691, %v1176, %v1178
      %v1180 = vrot.slane %v1107, 1
      %v1181 = vsel %vm691, %v1178, %v1180
      %v1182 = vrot.slane %v1108, 1
      %v1183 = vsel %vm691, %v1180, %v1182
      %v1184 = vrot.slane %v1109, 1
      %v1185 = vsel %vm691, %v1182, %v1184
      %v1186 = vrot.slane %v1110, 1
      %v1187 = vsel %vm691, %v1184, %v1186
      %v1188 = vrot.slane %v1111, 1
      %v1189 = vsel %vm691, %v1186, %v1188
      %v1190 = vrot.slane %v1112, 1
      %v1191 = vsel %vm691, %v1188, %v1190
      %v1192 = vrot.slane %v1113, 1
      %v1193 = vsel %vm691, %v1190, %v1192
      %v1194 = vrot.slane %v1114, 1
      %v1195 = vsel %vm691, %v1192, %v1194
      %v1196 = vrot.slane %v1115, 1
      %v1197 = vsel %vm691, %v1194, %v1196
      %v1198 = vrot.slane %v1116, 1
      %v1199 = vsel %vm691, %v1196, %v1198
      %v1200 = vrot.slane %v1117, 1
      %v1201 = vsel %vm691, %v1198, %v1200
      %v1202 = vrot.slane %v1118, 1
      %v1203 = vsel %vm691, %v1200, %v1202
      %v1204 = vrot.slane %v1119, 1
      %v1205 = vsel %vm691, %v1202, %v1204
      %v1206 = vrot.slane %v1120, 1
      %v1207 = vsel %vm691, %v1204, %v1206
      %v1208 = vrot.slane %v1121, 1
      %v1209 = vsel %vm691, %v1206, %v1208
      %v1210 = vrot.slane %v1122, 1
      %v1211 = vsel %vm691, %v1208, %v1210
      %v1212 = vrot.slane %v1123, 1
      %v1213 = vsel %vm691, %v1210, %v1212
      %v1214 = vrot.slane %v1124, 1
      %v1215 = vsel %vm691, %v1212, %v1214
      %v1216 = vrot.slane %v1125, 1
      %v1217 = vsel %vm691, %v1214, %v1216
      %v1218 = vsel %vm691, %v1216, %v1216
      %v1250 = vadd.f32 %v1058, %v1159
      %v1251 = vadd.f32 %v1059, %v1161
      %v1252 = vadd.f32 %v1060, %v1163
      %v1253 = vadd.f32 %v1061, %v1165
      %v1254 = vadd.f32 %v1062, %v1167
      %v1255 = vadd.f32 %v1063, %v1169
      %v1256 = vadd.f32 %v1064, %v1171
      %v1257 = vadd.f32 %v1065, %v1173
      %v1258 = vadd.f32 %v1066, %v1175
      %v1259 = vadd.f32 %v1067, %v1177
      %v1260 = vadd.f32 %v1068, %v1179
      %v1261 = vadd.f32 %v1069, %v1181
      %v1262 = vadd.f32 %v1070, %v1183
      %v1263 = vadd.f32 %v1071, %v1185
      %v1264 = vadd.f32 %v1072, %v1187
      %v1265 = vadd.f32 %v1073, %v1189
      %v1266 = vadd.f32 %v1074, %v1191
      %v1267 = vadd.f32 %v1075, %v1193
      %v1268 = vadd.f32 %v1076, %v1195
      %v1269 = vadd.f32 %v1077, %v1197
      %v1270 = vadd.f32 %v1078, %v1199
      %v1271 = vadd.f32 %v1079, %v1201
      %v1272 = vadd.f32 %v1080, %v1203
      %v1273 = vadd.f32 %v1081, %v1205
      %v1274 = vadd.f32 %v1082, %v1207
      %v1275 = vadd.f32 %v1083, %v1209
      %v1276 = vadd.f32 %v1084, %v1211
      %v1277 = vadd.f32 %v1085, %v1213
      %v1278 = vadd.f32 %v1086, %v1215
      %v1279 = vadd.f32 %v1087, %v1217
      %v1280 = vadd.f32 %v1088, %v1218
      %v1281 = vadd.f32 %v1089, %v1218
      %s1282 = scalar_lea.vmem %s1, 5
      %v1283 = vld [vmem:[%s1282] sm:$0x1]
      %v1285 = vperm.slane %v1283, 0
      %v1287 = vmul.f32 %v433, %v1285
      %v1288 = vmul.f32 %v438, %v1285
      %v1289 = vmul.f32 %v443, %v1285
      %v1290 = vmul.f32 %v448, %v1285
      %v1291 = vmul.f32 %v453, %v1285
      %v1292 = vmul.f32 %v458, %v1285
      %v1293 = vmul.f32 %v463, %v1285
      %v1294 = vmul.f32 %v468, %v1285
      %v1295 = vmul.f32 %v473, %v1285
      %v1296 = vmul.f32 %v478, %v1285
      %v1297 = vmul.f32 %v483, %v1285
      %v1298 = vmul.f32 %v488, %v1285
      %v1299 = vmul.f32 %v493, %v1285
      %v1300 = vmul.f32 %v498, %v1285
      %v1301 = vmul.f32 %v503, %v1285
      %v1302 = vmul.f32 %v508, %v1285
      %v1303 = vmul.f32 %v513, %v1285
      %v1304 = vmul.f32 %v518, %v1285
      %v1305 = vmul.f32 %v523, %v1285
      %v1306 = vmul.f32 %v528, %v1285
      %v1307 = vmul.f32 %v533, %v1285
      %v1308 = vmul.f32 %v538, %v1285
      %v1309 = vmul.f32 %v543, %v1285
      %v1310 = vmul.f32 %v548, %v1285
      %v1311 = vmul.f32 %v553, %v1285
      %v1312 = vmul.f32 %v558, %v1285
      %v1313 = vmul.f32 %v563, %v1285
      %v1314 = vmul.f32 %v568, %v1285
      %v1315 = vmul.f32 %v573, %v1285
      %v1316 = vmul.f32 %v578, %v1285
      %v1317 = vmul.f32 %v620, %v1285
      %v1349 = vrot.slane %v1287, 2
      %v1350 = vrot.slane %v1288, 2
      %v1351 = vsel %vm892, %v1349, %v1350
      %v1352 = vrot.slane %v1289, 2
      %v1353 = vsel %vm892, %v1350, %v1352
      %v1354 = vrot.slane %v1290, 2
      %v1355 = vsel %vm892, %v1352, %v1354
      %v1356 = vrot.slane %v1291, 2
      %v1357 = vsel %vm892, %v1354, %v1356
      %v1358 = vrot.slane %v1292, 2
      %v1359 = vsel %vm892, %v1356, %v1358
      %v1360 = vrot.slane %v1293, 2
      %v1361 = vsel %vm892, %v1358, %v1360
      %v1362 = vrot.slane %v1294, 2
      %v1363 = vsel %vm892, %v1360, %v1362
      %v1364 = vrot.slane %v1295, 2
      %v1365 = vsel %vm892, %v1362, %v1364
      %v1366 = vrot.slane %v1296, 2
      %v1367 = vsel %vm892, %v1364, %v1366
      %v1368 = vrot.slane %v1297, 2
      %v1369 = vsel %vm892, %v1366, %v1368
      %v1370 = vrot.slane %v1298, 2
      %v1371 = vsel %vm892, %v1368, %v1370
      %v1372 = vrot.slane %v1299, 2
      %v1373 = vsel %vm892, %v1370, %v1372
      %v1374 = vrot.slane %v1300, 2
      %v1375 = vsel %vm892, %v1372, %v1374
      %v1376 = vrot.slane %v1301, 2
      %v1377 = vsel %vm892, %v1374, %v1376
      %v1378 = vrot.slane %v1302, 2
      %v1379 = vsel %vm892, %v1376, %v1378
      %v1380 = vrot.slane %v1303, 2
      %v1381 = vsel %vm892, %v1378, %v1380
      %v1382 = vrot.slane %v1304, 2
      %v1383 = vsel %vm892, %v1380, %v1382
      %v1384 = vrot.slane %v1305, 2
      %v1385 = vsel %vm892, %v1382, %v1384
      %v1386 = vrot.slane %v1306, 2
      %v1387 = vsel %vm892, %v1384, %v1386
      %v1388 = vrot.slane %v1307, 2
      %v1389 = vsel %vm892, %v1386, %v1388
      %v1390 = vrot.slane %v1308, 2
      %v1391 = vsel %vm892, %v1388, %v1390
      %v1392 = vrot.slane %v1309, 2
      %v1393 = vsel %vm892, %v1390, %v1392
      %v1394 = vrot.slane %v1310, 2
      %v1395 = vsel %vm892, %v1392, %v1394
      %v1396 = vrot.slane %v1311, 2
      %v1397 = vsel %vm892, %v1394, %v1396
      %v1398 = vrot.slane %v1312, 2
      %v1399 = vsel %vm892, %v1396, %v1398
      %v1400 = vrot.slane %v1313, 2
      %v1401 = vsel %vm892, %v1398, %v1400
      %v1402 = vrot.slane %v1314, 2
      %v1403 = vsel %vm892, %v1400, %v1402
      %v1404 = vrot.slane %v1315, 2
      %v1405 = vsel %vm892, %v1402, %v1404
      %v1406 = vrot.slane %v1316, 2
      %v1407 = vsel %vm892, %v1404, %v1406
      %v1408 = vrot.slane %v1317, 2
      %v1409 = vsel %vm892, %v1406, %v1408
      %v1410 = vsel %vm892, %v1408, %v1408
      %v1442 = vadd.f32 %v1250, %v1351
      %v1443 = vadd.f32 %v1251, %v1353
      %v1444 = vadd.f32 %v1252, %v1355
      %v1445 = vadd.f32 %v1253, %v1357
      %v1446 = vadd.f32 %v1254, %v1359
      %v1447 = vadd.f32 %v1255, %v1361
      %v1448 = vadd.f32 %v1256, %v1363
      %v1449 = vadd.f32 %v1257, %v1365
      %v1450 = vadd.f32 %v1258, %v1367
      %v1451 = vadd.f32 %v1259, %v1369
      %v1452 = vadd.f32 %v1260, %v1371
      %v1453 = vadd.f32 %v1261, %v1373
      %v1454 = vadd.f32 %v1262, %v1375
      %v1455 = vadd.f32 %v1263, %v1377
      %v1456 = vadd.f32 %v1264, %v1379
      %v1457 = vadd.f32 %v1265, %v1381
      %v1458 = vadd.f32 %v1266, %v1383
      %v1459 = vadd.f32 %v1267, %v1385
      %v1460 = vadd.f32 %v1268, %v1387
      %v1461 = vadd.f32 %v1269, %v1389
      %v1462 = vadd.f32 %v1270, %v1391
      %v1463 = vadd.f32 %v1271, %v1393
      %v1464 = vadd.f32 %v1272, %v1395
      %v1465 = vadd.f32 %v1273, %v1397
      %v1466 = vadd.f32 %v1274, %v1399
      %v1467 = vadd.f32 %v1275, %v1401
      %v1468 = vadd.f32 %v1276, %v1403
      %v1469 = vadd.f32 %v1277, %v1405
      %v1470 = vadd.f32 %v1278, %v1407
      %v1471 = vadd.f32 %v1279, %v1409
      %v1472 = vadd.f32 %v1280, %v1410
      %v1473 = vadd.f32 %v1281, %v1410
      %s1474 = scalar_lea.vmem %s1, 6
      %v1475 = vld [vmem:[%s1474] sm:$0x1]
      %v1477 = vperm.slane %v1475, 0
      %v1479 = vmul.f32 %v443, %v1477
      %v1480 = vmul.f32 %v448, %v1477
      %v1481 = vmul.f32 %v453, %v1477
      %v1482 = vmul.f32 %v458, %v1477
      %v1483 = vmul.f32 %v463, %v1477
      %v1484 = vmul.f32 %v468, %v1477
      %v1485 = vmul.f32 %v473, %v1477
      %v1486 = vmul.f32 %v478, %v1477
      %v1487 = vmul.f32 %v483, %v1477
      %v1488 = vmul.f32 %v488, %v1477
      %v1489 = vmul.f32 %v493, %v1477
      %v1490 = vmul.f32 %v498, %v1477
      %v1491 = vmul.f32 %v503, %v1477
      %v1492 = vmul.f32 %v508, %v1477
      %v1493 = vmul.f32 %v513, %v1477
      %v1494 = vmul.f32 %v518, %v1477
      %v1495 = vmul.f32 %v523, %v1477
      %v1496 = vmul.f32 %v528, %v1477
      %v1497 = vmul.f32 %v533, %v1477
      %v1498 = vmul.f32 %v538, %v1477
      %v1499 = vmul.f32 %v543, %v1477
      %v1500 = vmul.f32 %v548, %v1477
      %v1501 = vmul.f32 %v553, %v1477
      %v1502 = vmul.f32 %v558, %v1477
      %v1503 = vmul.f32 %v563, %v1477
      %v1504 = vmul.f32 %v568, %v1477
      %v1505 = vmul.f32 %v573, %v1477
      %v1506 = vmul.f32 %v578, %v1477
      %v1507 = vmul.f32 %v620, %v1477
      %v1508 = vadd.f32 %v1442, %v1479
      %v1509 = vadd.f32 %v1443, %v1480
      %v1510 = vadd.f32 %v1444, %v1481
      %v1511 = vadd.f32 %v1445, %v1482
      %v1512 = vadd.f32 %v1446, %v1483
      %v1513 = vadd.f32 %v1447, %v1484
      %v1514 = vadd.f32 %v1448, %v1485
      %v1515 = vadd.f32 %v1449, %v1486
      %v1516 = vadd.f32 %v1450, %v1487
      %v1517 = vadd.f32 %v1451, %v1488
      %v1518 = vadd.f32 %v1452, %v1489
      %v1519 = vadd.f32 %v1453, %v1490
      %v1520 = vadd.f32 %v1454, %v1491
      %v1521 = vadd.f32 %v1455, %v1492
      %v1522 = vadd.f32 %v1456, %v1493
      %v1523 = vadd.f32 %v1457, %v1494
      %v1524 = vadd.f32 %v1458, %v1495
      %v1525 = vadd.f32 %v1459, %v1496
      %v1526 = vadd.f32 %v1460, %v1497
      %v1527 = vadd.f32 %v1461, %v1498
      %v1528 = vadd.f32 %v1462, %v1499
      %v1529 = vadd.f32 %v1463, %v1500
      %v1530 = vadd.f32 %v1464, %v1501
      %v1531 = vadd.f32 %v1465, %v1502
      %v1532 = vadd.f32 %v1466, %v1503
      %v1533 = vadd.f32 %v1467, %v1504
      %v1534 = vadd.f32 %v1468, %v1505
      %v1535 = vadd.f32 %v1469, %v1506
      %v1536 = vadd.f32 %v1470, %v1507
      %v1537 = vadd.f32 %v1471, %v1507
      %v1538 = vadd.f32 %v1472, %v1507
      %v1539 = vadd.f32 %v1473, %v1507
      %s1540 = scalar_lea.vmem %s1, 7
      %v1541 = vld [vmem:[%s1540] sm:$0x1]
      %v1543 = vperm.slane %v1541, 0
      %v1545 = vmul.f32 %v443, %v1543
      %v1546 = vmul.f32 %v448, %v1543
      %v1547 = vmul.f32 %v453, %v1543
      %v1548 = vmul.f32 %v458, %v1543
      %v1549 = vmul.f32 %v463, %v1543
      %v1550 = vmul.f32 %v468, %v1543
      %v1551 = vmul.f32 %v473, %v1543
      %v1552 = vmul.f32 %v478, %v1543
      %v1553 = vmul.f32 %v483, %v1543
      %v1554 = vmul.f32 %v488, %v1543
      %v1555 = vmul.f32 %v493, %v1543
      %v1556 = vmul.f32 %v498, %v1543
      %v1557 = vmul.f32 %v503, %v1543
      %v1558 = vmul.f32 %v508, %v1543
      %v1559 = vmul.f32 %v513, %v1543
      %v1560 = vmul.f32 %v518, %v1543
      %v1561 = vmul.f32 %v523, %v1543
      %v1562 = vmul.f32 %v528, %v1543
      %v1563 = vmul.f32 %v533, %v1543
      %v1564 = vmul.f32 %v538, %v1543
      %v1565 = vmul.f32 %v543, %v1543
      %v1566 = vmul.f32 %v548, %v1543
      %v1567 = vmul.f32 %v553, %v1543
      %v1568 = vmul.f32 %v558, %v1543
      %v1569 = vmul.f32 %v563, %v1543
      %v1570 = vmul.f32 %v568, %v1543
      %v1571 = vmul.f32 %v573, %v1543
      %v1572 = vmul.f32 %v578, %v1543
      %v1573 = vmul.f32 %v620, %v1543
      %v1603 = vrot.slane %v1545, 1
      %v1604 = vrot.slane %v1546, 1
      %v1605 = vsel %vm691, %v1603, %v1604
      %v1606 = vrot.slane %v1547, 1
      %v1607 = vsel %vm691, %v1604, %v1606
      %v1608 = vrot.slane %v1548, 1
      %v1609 = vsel %vm691, %v1606, %v1608
      %v1610 = vrot.slane %v1549, 1
      %v1611 = vsel %vm691, %v1608, %v1610
      %v1612 = vrot.slane %v1550, 1
      %v1613 = vsel %vm691, %v1610, %v1612
      %v1614 = vrot.slane %v1551, 1
      %v1615 = vsel %vm691, %v1612, %v1614
      %v1616 = vrot.slane %v1552, 1
      %v1617 = vsel %vm691, %v1614, %v1616
      %v1618 = vrot.slane %v1553, 1
      %v1619 = vsel %vm691, %v1616, %v1618
      %v1620 = vrot.slane %v1554, 1
      %v1621 = vsel %vm691, %v1618, %v1620
      %v1622 = vrot.slane %v1555, 1
      %v1623 = vsel %vm691, %v1620, %v1622
      %v1624 = vrot.slane %v1556, 1
      %v1625 = vsel %vm691, %v1622, %v1624
      %v1626 = vrot.slane %v1557, 1
      %v1627 = vsel %vm691, %v1624, %v1626
      %v1628 = vrot.slane %v1558, 1
      %v1629 = vsel %vm691, %v1626, %v1628
      %v1630 = vrot.slane %v1559, 1
      %v1631 = vsel %vm691, %v1628, %v1630
      %v1632 = vrot.slane %v1560, 1
      %v1633 = vsel %vm691, %v1630, %v1632
      %v1634 = vrot.slane %v1561, 1
      %v1635 = vsel %vm691, %v1632, %v1634
      %v1636 = vrot.slane %v1562, 1
      %v1637 = vsel %vm691, %v1634, %v1636
      %v1638 = vrot.slane %v1563, 1
      %v1639 = vsel %vm691, %v1636, %v1638
      %v1640 = vrot.slane %v1564, 1
      %v1641 = vsel %vm691, %v1638, %v1640
      %v1642 = vrot.slane %v1565, 1
      %v1643 = vsel %vm691, %v1640, %v1642
      %v1644 = vrot.slane %v1566, 1
      %v1645 = vsel %vm691, %v1642, %v1644
      %v1646 = vrot.slane %v1567, 1
      %v1647 = vsel %vm691, %v1644, %v1646
      %v1648 = vrot.slane %v1568, 1
      %v1649 = vsel %vm691, %v1646, %v1648
      %v1650 = vrot.slane %v1569, 1
      %v1651 = vsel %vm691, %v1648, %v1650
      %v1652 = vrot.slane %v1570, 1
      %v1653 = vsel %vm691, %v1650, %v1652
      %v1654 = vrot.slane %v1571, 1
      %v1655 = vsel %vm691, %v1652, %v1654
      %v1656 = vrot.slane %v1572, 1
      %v1657 = vsel %vm691, %v1654, %v1656
      %v1658 = vrot.slane %v1573, 1
      %v1659 = vsel %vm691, %v1656, %v1658
      %v1660 = vsel %vm691, %v1658, %v1658
      %v1690 = vadd.f32 %v1508, %v1605
      %v1691 = vadd.f32 %v1509, %v1607
      %v1692 = vadd.f32 %v1510, %v1609
      %v1693 = vadd.f32 %v1511, %v1611
      %v1694 = vadd.f32 %v1512, %v1613
      %v1695 = vadd.f32 %v1513, %v1615
      %v1696 = vadd.f32 %v1514, %v1617
      %v1697 = vadd.f32 %v1515, %v1619
      %v1698 = vadd.f32 %v1516, %v1621
      %v1699 = vadd.f32 %v1517, %v1623
      %v1700 = vadd.f32 %v1518, %v1625
      %v1701 = vadd.f32 %v1519, %v1627
      %v1702 = vadd.f32 %v1520, %v1629
      %v1703 = vadd.f32 %v1521, %v1631
      %v1704 = vadd.f32 %v1522, %v1633
      %v1705 = vadd.f32 %v1523, %v1635
      %v1706 = vadd.f32 %v1524, %v1637
      %v1707 = vadd.f32 %v1525, %v1639
      %v1708 = vadd.f32 %v1526, %v1641
      %v1709 = vadd.f32 %v1527, %v1643
      %v1710 = vadd.f32 %v1528, %v1645
      %v1711 = vadd.f32 %v1529, %v1647
      %v1712 = vadd.f32 %v1530, %v1649
      %v1713 = vadd.f32 %v1531, %v1651
      %v1714 = vadd.f32 %v1532, %v1653
      %v1715 = vadd.f32 %v1533, %v1655
      %v1716 = vadd.f32 %v1534, %v1657
      %v1717 = vadd.f32 %v1535, %v1659
      %v1718 = vadd.f32 %v1536, %v1660
      %v1719 = vadd.f32 %v1537, %v1660
      %v1720 = vadd.f32 %v1538, %v1660
      %v1721 = vadd.f32 %v1539, %v1660
      %s1722 = scalar_lea.vmem %s1, 8
      %v1723 = vld [vmem:[%s1722] sm:$0x1]
      %v1725 = vperm.slane %v1723, 0
      %v1727 = vmul.f32 %v443, %v1725
      %v1728 = vmul.f32 %v448, %v1725
      %v1729 = vmul.f32 %v453, %v1725
      %v1730 = vmul.f32 %v458, %v1725
      %v1731 = vmul.f32 %v463, %v1725
      %v1732 = vmul.f32 %v468, %v1725
      %v1733 = vmul.f32 %v473, %v1725
      %v1734 = vmul.f32 %v478, %v1725
      %v1735 = vmul.f32 %v483, %v1725
      %v1736 = vmul.f32 %v488, %v1725
      %v1737 = vmul.f32 %v493, %v1725
      %v1738 = vmul.f32 %v498, %v1725
      %v1739 = vmul.f32 %v503, %v1725
      %v1740 = vmul.f32 %v508, %v1725
      %v1741 = vmul.f32 %v513, %v1725
      %v1742 = vmul.f32 %v518, %v1725
      %v1743 = vmul.f32 %v523, %v1725
      %v1744 = vmul.f32 %v528, %v1725
      %v1745 = vmul.f32 %v533, %v1725
      %v1746 = vmul.f32 %v538, %v1725
      %v1747 = vmul.f32 %v543, %v1725
      %v1748 = vmul.f32 %v548, %v1725
      %v1749 = vmul.f32 %v553, %v1725
      %v1750 = vmul.f32 %v558, %v1725
      %v1751 = vmul.f32 %v563, %v1725
      %v1752 = vmul.f32 %v568, %v1725
      %v1753 = vmul.f32 %v573, %v1725
      %v1754 = vmul.f32 %v578, %v1725
      %v1755 = vmul.f32 %v620, %v1725
      %v1785 = vrot.slane %v1727, 2
      %v1786 = vrot.slane %v1728, 2
      %v1787 = vsel %vm892, %v1785, %v1786
      %v1788 = vrot.slane %v1729, 2
      %v1789 = vsel %vm892, %v1786, %v1788
      %v1790 = vrot.slane %v1730, 2
      %v1791 = vsel %vm892, %v1788, %v1790
      %v1792 = vrot.slane %v1731, 2
      %v1793 = vsel %vm892, %v1790, %v1792
      %v1794 = vrot.slane %v1732, 2
      %v1795 = vsel %vm892, %v1792, %v1794
      %v1796 = vrot.slane %v1733, 2
      %v1797 = vsel %vm892, %v1794, %v1796
      %v1798 = vrot.slane %v1734, 2
      %v1799 = vsel %vm892, %v1796, %v1798
      %v1800 = vrot.slane %v1735, 2
      %v1801 = vsel %vm892, %v1798, %v1800
      %v1802 = vrot.slane %v1736, 2
      %v1803 = vsel %vm892, %v1800, %v1802
      %v1804 = vrot.slane %v1737, 2
      %v1805 = vsel %vm892, %v1802, %v1804
      %v1806 = vrot.slane %v1738, 2
      %v1807 = vsel %vm892, %v1804, %v1806
      %v1808 = vrot.slane %v1739, 2
      %v1809 = vsel %vm892, %v1806, %v1808
      %v1810 = vrot.slane %v1740, 2
      %v1811 = vsel %vm892, %v1808, %v1810
      %v1812 = vrot.slane %v1741, 2
      %v1813 = vsel %vm892, %v1810, %v1812
      %v1814 = vrot.slane %v1742, 2
      %v1815 = vsel %vm892, %v1812, %v1814
      %v1816 = vrot.slane %v1743, 2
      %v1817 = vsel %vm892, %v1814, %v1816
      %v1818 = vrot.slane %v1744, 2
      %v1819 = vsel %vm892, %v1816, %v1818
      %v1820 = vrot.slane %v1745, 2
      %v1821 = vsel %vm892, %v1818, %v1820
      %v1822 = vrot.slane %v1746, 2
      %v1823 = vsel %vm892, %v1820, %v1822
      %v1824 = vrot.slane %v1747, 2
      %v1825 = vsel %vm892, %v1822, %v1824
      %v1826 = vrot.slane %v1748, 2
      %v1827 = vsel %vm892, %v1824, %v1826
      %v1828 = vrot.slane %v1749, 2
      %v1829 = vsel %vm892, %v1826, %v1828
      %v1830 = vrot.slane %v1750, 2
      %v1831 = vsel %vm892, %v1828, %v1830
      %v1832 = vrot.slane %v1751, 2
      %v1833 = vsel %vm892, %v1830, %v1832
      %v1834 = vrot.slane %v1752, 2
      %v1835 = vsel %vm892, %v1832, %v1834
      %v1836 = vrot.slane %v1753, 2
      %v1837 = vsel %vm892, %v1834, %v1836
      %v1838 = vrot.slane %v1754, 2
      %v1839 = vsel %vm892, %v1836, %v1838
      %v1840 = vrot.slane %v1755, 2
      %v1841 = vsel %vm892, %v1838, %v1840
      %v1842 = vsel %vm892, %v1840, %v1840
      %v1872 = vadd.f32 %v1690, %v1787
      %v1873 = vadd.f32 %v1691, %v1789
      %v1874 = vadd.f32 %v1692, %v1791
      %v1875 = vadd.f32 %v1693, %v1793
      %v1876 = vadd.f32 %v1694, %v1795
      %v1877 = vadd.f32 %v1695, %v1797
      %v1878 = vadd.f32 %v1696, %v1799
      %v1879 = vadd.f32 %v1697, %v1801
      %v1880 = vadd.f32 %v1698, %v1803
      %v1881 = vadd.f32 %v1699, %v1805
      %v1882 = vadd.f32 %v1700, %v1807
      %v1883 = vadd.f32 %v1701, %v1809
      %v1884 = vadd.f32 %v1702, %v1811
      %v1885 = vadd.f32 %v1703, %v1813
      %v1886 = vadd.f32 %v1704, %v1815
      %v1887 = vadd.f32 %v1705, %v1817
      %v1888 = vadd.f32 %v1706, %v1819
      %v1889 = vadd.f32 %v1707, %v1821
      %v1890 = vadd.f32 %v1708, %v1823
      %v1891 = vadd.f32 %v1709, %v1825
      %v1892 = vadd.f32 %v1710, %v1827
      %v1893 = vadd.f32 %v1711, %v1829
      %v1894 = vadd.f32 %v1712, %v1831
      %v1895 = vadd.f32 %v1713, %v1833
      %v1896 = vadd.f32 %v1714, %v1835
      %v1897 = vadd.f32 %v1715, %v1837
      %v1898 = vadd.f32 %v1716, %v1839
      %v1899 = vadd.f32 %v1717, %v1841
      %v1900 = vadd.f32 %v1718, %v1842
      %v1901 = vadd.f32 %v1719, %v1842
      %v1902 = vadd.f32 %v1720, %v1842
      %v1903 = vadd.f32 %v1721, %v1842
      %v1904 = vld [vmem:[%s2] sm:$0x1]
      %v1906 = vperm.slane %v1904, 0
      %v1908 = vadd.f32 %v1872, %v1906
      %v1909 = vadd.f32 %v1873, %v1906
      %v1910 = vadd.f32 %v1874, %v1906
      %v1911 = vadd.f32 %v1875, %v1906
      %v1912 = vadd.f32 %v1876, %v1906
      %v1913 = vadd.f32 %v1877, %v1906
      %v1914 = vadd.f32 %v1878, %v1906
      %v1915 = vadd.f32 %v1879, %v1906
      %v1916 = vadd.f32 %v1880, %v1906
      %v1917 = vadd.f32 %v1881, %v1906
      %v1918 = vadd.f32 %v1882, %v1906
      %v1919 = vadd.f32 %v1883, %v1906
      %v1920 = vadd.f32 %v1884, %v1906
      %v1921 = vadd.f32 %v1885, %v1906
      %v1922 = vadd.f32 %v1886, %v1906
      %v1923 = vadd.f32 %v1887, %v1906
      %v1924 = vadd.f32 %v1888, %v1906
      %v1925 = vadd.f32 %v1889, %v1906
      %v1926 = vadd.f32 %v1890, %v1906
      %v1927 = vadd.f32 %v1891, %v1906
      %v1928 = vadd.f32 %v1892, %v1906
      %v1929 = vadd.f32 %v1893, %v1906
      %v1930 = vadd.f32 %v1894, %v1906
      %v1931 = vadd.f32 %v1895, %v1906
      %v1932 = vadd.f32 %v1896, %v1906
      %v1933 = vadd.f32 %v1897, %v1906
      %v1934 = vadd.f32 %v1898, %v1906
      %v1935 = vadd.f32 %v1899, %v1906
      %v1936 = vadd.f32 %v1900, %v1906
      %v1937 = vadd.f32 %v1901, %v1906
      %v1938 = vadd.f32 %v1902, %v1906
      %v1939 = vadd.f32 %v1903, %v1906
      %v1940 = vmax.f32 %v1908, 0.0
      %v1941 = vmax.f32 %v1909, 0.0
      %v1942 = vmax.f32 %v1910, 0.0
      %v1943 = vmax.f32 %v1911, 0.0
      %v1944 = vmax.f32 %v1912, 0.0
      %v1945 = vmax.f32 %v1913, 0.0
      %v1946 = vmax.f32 %v1914, 0.0
      %v1947 = vmax.f32 %v1915, 0.0
      %v1948 = vmax.f32 %v1916, 0.0
      %v1949 = vmax.f32 %v1917, 0.0
      %v1950 = vmax.f32 %v1918, 0.0
      %v1951 = vmax.f32 %v1919, 0.0
      %v1952 = vmax.f32 %v1920, 0.0
      %v1953 = vmax.f32 %v1921, 0.0
      %v1954 = vmax.f32 %v1922, 0.0
      %v1955 = vmax.f32 %v1923, 0.0
      %v1956 = vmax.f32 %v1924, 0.0
      %v1957 = vmax.f32 %v1925, 0.0
      %v1958 = vmax.f32 %v1926, 0.0
      %v1959 = vmax.f32 %v1927, 0.0
      %v1960 = vmax.f32 %v1928, 0.0
      %v1961 = vmax.f32 %v1929, 0.0
      %v1962 = vmax.f32 %v1930, 0.0
      %v1963 = vmax.f32 %v1931, 0.0
      %v1964 = vmax.f32 %v1932, 0.0
      %v1965 = vmax.f32 %v1933, 0.0
      %v1966 = vmax.f32 %v1934, 0.0
      %v1967 = vmax.f32 %v1935, 0.0
      %v1968 = vmax.f32 %v1936, 0.0
      %v1969 = vmax.f32 %v1937, 0.0
      %v1970 = vmax.f32 %v1938, 0.0
      %v1971 = vmax.f32 %v1939, 0.0
      %v2004 = vrot.slane %v1940, 1
      %v2005 = vrot.slane %v1941, 1
      %v2006 = vsel %vm691, %v2004, %v2005
      %v2007 = vrot.slane %v1942, 1
      %v2008 = vsel %vm691, %v2005, %v2007
      %v2009 = vrot.slane %v1943, 1
      %v2010 = vsel %vm691, %v2007, %v2009
      %v2011 = vrot.slane %v1944, 1
      %v2012 = vsel %vm691, %v2009, %v2011
      %v2013 = vrot.slane %v1945, 1
      %v2014 = vsel %vm691, %v2011, %v2013
      %v2015 = vrot.slane %v1946, 1
      %v2016 = vsel %vm691, %v2013, %v2015
      %v2017 = vrot.slane %v1947, 1
      %v2018 = vsel %vm691, %v2015, %v2017
      %v2019 = vrot.slane %v1948, 1
      %v2020 = vsel %vm691, %v2017, %v2019
      %v2021 = vrot.slane %v1949, 1
      %v2022 = vsel %vm691, %v2019, %v2021
      %v2023 = vrot.slane %v1950, 1
      %v2024 = vsel %vm691, %v2021, %v2023
      %v2025 = vrot.slane %v1951, 1
      %v2026 = vsel %vm691, %v2023, %v2025
      %v2027 = vrot.slane %v1952, 1
      %v2028 = vsel %vm691, %v2025, %v2027
      %v2029 = vrot.slane %v1953, 1
      %v2030 = vsel %vm691, %v2027, %v2029
      %v2031 = vrot.slane %v1954, 1
      %v2032 = vsel %vm691, %v2029, %v2031
      %v2033 = vrot.slane %v1955, 1
      %v2034 = vsel %vm691, %v2031, %v2033
      %v2035 = vrot.slane %v1956, 1
      %v2036 = vsel %vm691, %v2033, %v2035
      %v2037 = vrot.slane %v1957, 1
      %v2038 = vsel %vm691, %v2035, %v2037
      %v2039 = vrot.slane %v1958, 1
      %v2040 = vsel %vm691, %v2037, %v2039
      %v2041 = vrot.slane %v1959, 1
      %v2042 = vsel %vm691, %v2039, %v2041
      %v2043 = vrot.slane %v1960, 1
      %v2044 = vsel %vm691, %v2041, %v2043
      %v2045 = vrot.slane %v1961, 1
      %v2046 = vsel %vm691, %v2043, %v2045
      %v2047 = vrot.slane %v1962, 1
      %v2048 = vsel %vm691, %v2045, %v2047
      %v2049 = vrot.slane %v1963, 1
      %v2050 = vsel %vm691, %v2047, %v2049
      %v2051 = vrot.slane %v1964, 1
      %v2052 = vsel %vm691, %v2049, %v2051
      %v2053 = vrot.slane %v1965, 1
      %v2054 = vsel %vm691, %v2051, %v2053
      %v2055 = vrot.slane %v1966, 1
      %v2056 = vsel %vm691, %v2053, %v2055
      %v2057 = vrot.slane %v1967, 1
      %v2058 = vsel %vm691, %v2055, %v2057
      %v2059 = vrot.slane %v1968, 1
      %v2060 = vsel %vm691, %v2057, %v2059
      %v2061 = vrot.slane %v1969, 1
      %v2062 = vsel %vm691, %v2059, %v2061
      %v2063 = vrot.slane %v1970, 1
      %v2064 = vsel %vm691, %v2061, %v2063
      %v2065 = vrot.slane %v1971, 1
      %v2066 = vsel %vm691, %v2063, %v2065
      %v2067 = vrot.slane 0.0, 1
      %v2068 = vsel %vm691, %v2065, %v2067
      %v2101 = vrot.slane %v1940, 2
      %v2102 = vrot.slane %v1941, 2
      %v2103 = vsel %vm892, %v2101, %v2102
      %v2104 = vrot.slane %v1942, 2
      %v2105 = vsel %vm892, %v2102, %v2104
      %v2106 = vrot.slane %v1943, 2
      %v2107 = vsel %vm892, %v2104, %v2106
      %v2108 = vrot.slane %v1944, 2
      %v2109 = vsel %vm892, %v2106, %v2108
      %v2110 = vrot.slane %v1945, 2
      %v2111 = vsel %vm892, %v2108, %v2110
      %v2112 = vrot.slane %v1946, 2
      %v2113 = vsel %vm892, %v2110, %v2112
      %v2114 = vrot.slane %v1947, 2
      %v2115 = vsel %vm892, %v2112, %v2114
      %v2116 = vrot.slane %v1948, 2
      %v2117 = vsel %vm892, %v2114, %v2116
      %v2118 = vrot.slane %v1949, 2
      %v2119 = vsel %vm892, %v2116, %v2118
      %v2120 = vrot.slane %v1950, 2
      %v2121 = vsel %vm892, %v2118, %v2120
      %v2122 = vrot.slane %v1951, 2
      %v2123 = vsel %vm892, %v2120, %v2122
      %v2124 = vrot.slane %v1952, 2
      %v2125 = vsel %vm892, %v2122, %v2124
      %v2126 = vrot.slane %v1953, 2
      %v2127 = vsel %vm892, %v2124, %v2126
      %v2128 = vrot.slane %v1954, 2
      %v2129 = vsel %vm892, %v2126, %v2128
      %v2130 = vrot.slane %v1955, 2
      %v2131 = vsel %vm892, %v2128, %v2130
      %v2132 = vrot.slane %v1956, 2
      %v2133 = vsel %vm892, %v2130, %v2132
      %v2134 = vrot.slane %v1957, 2
      %v2135 = vsel %vm892, %v2132, %v2134
      %v2136 = vrot.slane %v1958, 2
      %v2137 = vsel %vm892, %v2134, %v2136
      %v2138 = vrot.slane %v1959, 2
      %v2139 = vsel %vm892, %v2136, %v2138
      %v2140 = vrot.slane %v1960, 2
      %v2141 = vsel %vm892, %v2138, %v2140
      %v2142 = vrot.slane %v1961, 2
      %v2143 = vsel %vm892, %v2140, %v2142
      %v2144 = vrot.slane %v1962, 2
      %v2145 = vsel %vm892, %v2142, %v2144
      %v2146 = vrot.slane %v1963, 2
      %v2147 = vsel %vm892, %v2144, %v2146
      %v2148 = vrot.slane %v1964, 2
      %v2149 = vsel %vm892, %v2146, %v2148
      %v2150 = vrot.slane %v1965, 2
      %v2151 = vsel %vm892, %v2148, %v2150
      %v2152 = vrot.slane %v1966, 2
      %v2153 = vsel %vm892, %v2150, %v2152
      %v2154 = vrot.slane %v1967, 2
      %v2155 = vsel %vm892, %v2152, %v2154
      %v2156 = vrot.slane %v1968, 2
      %v2157 = vsel %vm892, %v2154, %v2156
      %v2158 = vrot.slane %v1969, 2
      %v2159 = vsel %vm892, %v2156, %v2158
      %v2160 = vrot.slane %v1970, 2
      %v2161 = vsel %vm892, %v2158, %v2160
      %v2162 = vrot.slane %v1971, 2
      %v2163 = vsel %vm892, %v2160, %v2162
      %v2164 = vrot.slane 0.0, 2
      %v2165 = vsel %vm892, %v2162, %v2164
      %v2198 = vsel %vm691, %v2067, %v2067
      %v2200 = vsel %vm892, %v2164, %v2164
      %v2202 = vld [vmem:[%s3] sm:$0xff]
      %v2203 = vld [vmem:[%s3 + $0x8] sm:$0xff]
      %v2204 = vld [vmem:[%s3 + $0x10] sm:$0xff]
      %v2205 = vld [vmem:[%s3 + $0x18] sm:$0xff]
      %v2206 = vld [vmem:[%s3 + $0x20] sm:$0xff]
      %v2207 = vld [vmem:[%s3 + $0x28] sm:$0xff]
      %v2208 = vld [vmem:[%s3 + $0x30] sm:$0xff]
      %v2209 = vld [vmem:[%s3 + $0x38] sm:$0xff]
      %v2210 = vld [vmem:[%s3 + $0x40] sm:$0xff]
      %v2211 = vld [vmem:[%s3 + $0x48] sm:$0xff]
      %v2212 = vld [vmem:[%s3 + $0x50] sm:$0xff]
      %v2213 = vld [vmem:[%s3 + $0x58] sm:$0xff]
      %v2214 = vld [vmem:[%s3 + $0x60] sm:$0xff]
      %v2215 = vld [vmem:[%s3 + $0x68] sm:$0xff]
      %v2216 = vld [vmem:[%s3 + $0x70] sm:$0xff]
      %v2217 = vld [vmem:[%s3 + $0x78] sm:$0xff]
      %v2218 = vld [vmem:[%s3 + $0x80] sm:$0xff]
      %v2219 = vld [vmem:[%s3 + $0x88] sm:$0xff]
      %v2220 = vld [vmem:[%s3 + $0x90] sm:$0xff]
      %v2221 = vld [vmem:[%s3 + $0x98] sm:$0xff]
      %v2222 = vld [vmem:[%s3 + $0xa0] sm:$0xff]
      %v2223 = vld [vmem:[%s3 + $0xa8] sm:$0xff]
      %v2224 = vld [vmem:[%s3 + $0xb0] sm:$0xff]
      %v2225 = vld [vmem:[%s3 + $0xb8] sm:$0xff]
      %v2226 = vld [vmem:[%s3 + $0xc0] sm:$0xff]
      %v2227 = vld [vmem:[%s3 + $0xc8] sm:$0xff]
      %v2228 = vld [vmem:[%s3 + $0xd0] sm:$0xff]
      %v2229 = vld [vmem:[%s3 + $0xd8] sm:$0xff]
      %v2230 = vld [vmem:[%s3 + $0xe0] sm:$0xff]
      %v2231 = vld [vmem:[%s3 + $0xe8] sm:$0xff]
      %v2232 = vld [vmem:[%s3 + $0xf0] sm:$0xff]
      %v2233 = vld [vmem:[%s3 + $0xf8] sm:$0xff]
      %v2234 = vld [vmem:[%s3 + $0x100] sm:$0xff]
      %v2235 = vld [vmem:[%s3 + $0x108] sm:$0xff]
      %v2236 = vld [vmem:[%s3 + $0x110] sm:$0xff]
      %v2237 = vld [vmem:[%s3 + $0x118] sm:$0xff]
      %v2238 = vld [vmem:[%s3 + $0x120] sm:$0xff]
      %v2239 = vld [vmem:[%s3 + $0x128] sm:$0xff]
      %v2240 = vld [vmem:[%s3 + $0x130] sm:$0xff]
      %v2241 = vld [vmem:[%s3 + $0x138] sm:$0xff]
      %v2242 = vld [vmem:[%s3 + $0x140] sm:$0xff]
      %v2243 = vld [vmem:[%s3 + $0x148] sm:$0xff]
      %v2244 = vld [vmem:[%s3 + $0x150] sm:$0xff]
      %v2245 = vld [vmem:[%s3 + $0x158] sm:$0xff]
      %v2246 = vld [vmem:[%s3 + $0x160] sm:$0xff]
      %v2247 = vld [vmem:[%s3 + $0x168] sm:$0xff]
      %v2248 = vld [vmem:[%s3 + $0x170] sm:$0xff]
      %v2249 = vld [vmem:[%s3 + $0x178] sm:$0xff]
      %v2250 = vld [vmem:[%s3 + $0x180] sm:$0xff]
      %v2251 = vld [vmem:[%s3 + $0x188] sm:$0xff]
      %v2252 = vld [vmem:[%s3 + $0x190] sm:$0xff]
      %v2253 = vld [vmem:[%s3 + $0x198] sm:$0xff]
      %v2254 = vld [vmem:[%s3 + $0x1a0] sm:$0xff]
      %v2255 = vld [vmem:[%s3 + $0x1a8] sm:$0xff]
      %v2256 = vld [vmem:[%s3 + $0x1b0] sm:$0xff]
      %v2257 = vld [vmem:[%s3 + $0x1b8] sm:$0xff]
      %v2258 = vld [vmem:[%s3 + $0x1c0] sm:$0xff]
      %v2259 = vld [vmem:[%s3 + $0x1c8] sm:$0xff]
      %v2260 = vld [vmem:[%s3 + $0x1d0] sm:$0xff]
      %v2261 = vld [vmem:[%s3 + $0x1d8] sm:$0xff]
      %v2262 = vld [vmem:[%s3 + $0x1e0] sm:$0xff]
      %v2263 = vld [vmem:[%s3 + $0x1e8] sm:$0xff]
      %v2264 = vld [vmem:[%s3 + $0x1f0] sm:$0xff]
      %v2265 = vld [vmem:[%s3 + $0x1f8] sm:$0xff]
      %v2266 = vld [vmem:[%s3 + $0x200] sm:$0xff]
      %v2267 = vld [vmem:[%s3 + $0x208] sm:$0xff]
      %v2268 = vld [vmem:[%s3 + $0x210] sm:$0xff]
      %v2269 = vld [vmem:[%s3 + $0x218] sm:$0xff]
      %v2270 = vld [vmem:[%s3 + $0x220] sm:$0xff]
      %v2271 = vld [vmem:[%s3 + $0x228] sm:$0xff]
      %v2272 = vld [vmem:[%s3 + $0x230] sm:$0xff]
      %v2273 = vld [vmem:[%s3 + $0x238] sm:$0xff]
      %v2274 = vld [vmem:[%s3 + $0x240] sm:$0xff]
      %v2275 = vld [vmem:[%s3 + $0x248] sm:$0xff]
      %v2276 = vld [vmem:[%s3 + $0x250] sm:$0xff]
      %v2277 = vld [vmem:[%s3 + $0x258] sm:$0xff]
      %v2278 = vld [vmem:[%s3 + $0x260] sm:$0xff]
      %v2279 = vld [vmem:[%s3 + $0x268] sm:$0xff]
      %v2280 = vld [vmem:[%s3 + $0x270] sm:$0xff]
      %v2281 = vld [vmem:[%s3 + $0x278] sm:$0xff]
      %v2282 = vld [vmem:[%s3 + $0x280] sm:$0xff]
      %v2283 = vld [vmem:[%s3 + $0x288] sm:$0xff]
      %v2284 = vld [vmem:[%s3 + $0x290] sm:$0xff]
      %v2285 = vld [vmem:[%s3 + $0x298] sm:$0xff]
      %v2286 = vld [vmem:[%s3 + $0x2a0] sm:$0xff]
      %v2287 = vld [vmem:[%s3 + $0x2a8] sm:$0xff]
      %v2288 = vld [vmem:[%s3 + $0x2b0] sm:$0xff]
      %v2289 = vld [vmem:[%s3 + $0x2b8] sm:$0xff]
      %v2290 = vld [vmem:[%s3 + $0x2c0] sm:$0xff]
      %v2291 = vld [vmem:[%s3 + $0x2c8] sm:$0xff]
      %v2292 = vld [vmem:[%s3 + $0x2d0] sm:$0xff]
      %v2293 = vld [vmem:[%s3 + $0x2d8] sm:$0xff]
      %v2294 = vld [vmem:[%s3 + $0x2e0] sm:$0xff]
      %v2295 = vld [vmem:[%s3 + $0x2e8] sm:$0xff]
      %v2296 = vld [vmem:[%s3 + $0x2f0] sm:$0xff]
      %v2297 = vld [vmem:[%s3 + $0x2f8] sm:$0xff]
      %v2298 = vld [vmem:[%s3 + $0x300] sm:$0xff]
      %v2299 = vld [vmem:[%s3 + $0x308] sm:$0xff]
      %v2300 = vld [vmem:[%s3 + $0x310] sm:$0xff]
      %v2301 = vld [vmem:[%s3 + $0x318] sm:$0xff]
      %v2302 = vld [vmem:[%s3 + $0x320] sm:$0xff]
      %v2303 = vld [vmem:[%s3 + $0x328] sm:$0xff]
      %v2304 = vld [vmem:[%s3 + $0x330] sm:$0xff]
      %v2305 = vld [vmem:[%s3 + $0x338] sm:$0xff]
      %v2306 = vld [vmem:[%s3 + $0x340] sm:$0xff]
      %v2307 = vld [vmem:[%s3 + $0x348] sm:$0xff]
      %v2308 = vld [vmem:[%s3 + $0x350] sm:$0xff]
      %v2309 = vld [vmem:[%s3 + $0x358] sm:$0xff]
      %v2310 = vld [vmem:[%s3 + $0x360] sm:$0xff]
      %v2311 = vld [vmem:[%s3 + $0x368] sm:$0xff]
      %v2312 = vld [vmem:[%s3 + $0x370] sm:$0xff]
      %v2313 = vld [vmem:[%s3 + $0x378] sm:$0xff]
      %v2314 = vld [vmem:[%s3 + $0x380] sm:$0xff]
      %v2315 = vld [vmem:[%s3 + $0x388] sm:$0xff]
      %v2316 = vld [vmem:[%s3 + $0x390] sm:$0xff]
      %v2317 = vld [vmem:[%s3 + $0x398] sm:$0xff]
      %v2318 = vld [vmem:[%s3 + $0x3a0] sm:$0xff]
      %v2319 = vld [vmem:[%s3 + $0x3a8] sm:$0xff]
      %v2320 = vld [vmem:[%s3 + $0x3b0] sm:$0xff]
      %v2321 = vld [vmem:[%s3 + $0x3b8] sm:$0xff]
      %v2322 = vld [vmem:[%s3 + $0x3c0] sm:$0xff]
      %v2323 = vld [vmem:[%s3 + $0x3c8] sm:$0xff]
      %v2324 = vld [vmem:[%s3 + $0x3d0] sm:$0xff]
      %v2325 = vld [vmem:[%s3 + $0x3d8] sm:$0xff]
      %v2326 = vld [vmem:[%s3 + $0x3e0] sm:$0xff]
      %v2327 = vld [vmem:[%s3 + $0x3e8] sm:$0xff]
      %v2328 = vld [vmem:[%s3 + $0x3f0] sm:$0xff]
      %v2329 = vld [vmem:[%s3 + $0x3f8] sm:$0xff]
      %v2330 = vld [vmem:[%s3 + $0x400] sm:$0xff]
      %v2331 = vld [vmem:[%s3 + $0x408] sm:$0xff]
      %v2332 = vld [vmem:[%s3 + $0x410] sm:$0xff]
      %v2333 = vld [vmem:[%s3 + $0x418] sm:$0xff]
      %v2334 = vld [vmem:[%s3 + $0x420] sm:$0xff]
      %v2335 = vld [vmem:[%s3 + $0x428] sm:$0xff]
      %v2336 = vld [vmem:[%s3 + $0x430] sm:$0xff]
      %v2337 = vld [vmem:[%s3 + $0x438] sm:$0xff]
      %v2338 = vld [vmem:[%s3 + $0x440] sm:$0xff]
      %v2339 = vld [vmem:[%s3 + $0x448] sm:$0xff]
      %v2340 = vld [vmem:[%s3 + $0x450] sm:$0xff]
      %v2341 = vld [vmem:[%s3 + $0x458] sm:$0xff]
      %v2342 = vld [vmem:[%s3 + $0x460] sm:$0xff]
      %v2343 = vld [vmem:[%s3 + $0x468] sm:$0xff]
      %v2344 = vld [vmem:[%s3 + $0x470] sm:$0xff]
      %v2345 = vld [vmem:[%s3 + $0x478] sm:$0xff]
      %v2346 = vld [vmem:[%s4] sm:$0x1]
      %v2348 = vperm.slane %v2346, 0
      %2350 = vmatpush.msra.mxu0 %v2217
      %2351 = vmatpush.msra.mxu0 %v2216
      %2352 = vmatpush.msra.mxu0 %v2215
      %2353 = vmatpush.msra.mxu0 %v2214
      %2354 = vmatpush.msra.mxu0 %v2213
      %2355 = vmatpush.msra.mxu0 %v2212
      %2356 = vmatpush.msra.mxu0 %v2211
      %2357 = vmatpush.msra.mxu0 %v2210
      %2358 = vmatpush.msra.mxu0 %v2209
      %2359 = vmatpush.msra.mxu0 %v2208
      %2360 = vmatpush.msra.mxu0 %v2207
      %2361 = vmatpush.msra.mxu0 %v2206
      %2362 = vmatpush.msra.mxu0 %v2205
      %2363 = vmatpush.msra.mxu0 %v2204
      %2364 = vmatpush.msra.mxu0 %v2203
      %2365 = vmatpush.msra.mxu0 %v2202
      %2366 = vmatmul.f32.gmra.mxu0 %v1940
      %v2367 = vpop.f32.mrf.mxu0
      %v2368 = vadd.f32 %v2348, %v2367
      %2369 = vmatmul.f32.gmra.mxu0 %v1941
      %v2370 = vpop.f32.mrf.mxu0
      %v2371 = vadd.f32 %v2348, %v2370
      %2372 = vmatmul.f32.gmra.mxu0 %v1942
      %v2373 = vpop.f32.mrf.mxu0
      %v2374 = vadd.f32 %v2348, %v2373
      %2375 = vmatmul.f32.gmra.mxu0 %v1943
      %v2376 = vpop.f32.mrf.mxu0
      %v2377 = vadd.f32 %v2348, %v2376
      %2378 = vmatmul.f32.gmra.mxu0 %v1944
      %v2379 = vpop.f32.mrf.mxu0
      %v2380 = vadd.f32 %v2348, %v2379
      %2381 = vmatmul.f32.gmra.mxu0 %v1945
      %v2382 = vpop.f32.mrf.mxu0
      %v2383 = vadd.f32 %v2348, %v2382
      %2384 = vmatmul.f32.gmra.mxu0 %v1946
      %v2385 = vpop.f32.mrf.mxu0
      %v2386 = vadd.f32 %v2348, %v2385
      %2387 = vmatmul.f32.gmra.mxu0 %v1947
      %v2388 = vpop.f32.mrf.mxu0
      %v2389 = vadd.f32 %v2348, %v2388
      %2390 = vmatmul.f32.gmra.mxu0 %v1948
      %v2391 = vpop.f32.mrf.mxu0
      %v2392 = vadd.f32 %v2348, %v2391
      %2393 = vmatmul.f32.gmra.mxu0 %v1949
      %v2394 = vpop.f32.mrf.mxu0
      %v2395 = vadd.f32 %v2348, %v2394
      %2396 = vmatmul.f32.gmra.mxu0 %v1950
      %v2397 = vpop.f32.mrf.mxu0
      %v2398 = vadd.f32 %v2348, %v2397
      %2399 = vmatmul.f32.gmra.mxu0 %v1951
      %v2400 = vpop.f32.mrf.mxu0
      %v2401 = vadd.f32 %v2348, %v2400
      %2402 = vmatmul.f32.gmra.mxu0 %v1952
      %v2403 = vpop.f32.mrf.mxu0
      %v2404 = vadd.f32 %v2348, %v2403
      %2405 = vmatmul.f32.gmra.mxu0 %v1953
      %v2406 = vpop.f32.mrf.mxu0
      %v2407 = vadd.f32 %v2348, %v2406
      %2408 = vmatmul.f32.gmra.mxu0 %v1954
      %v2409 = vpop.f32.mrf.mxu0
      %v2410 = vadd.f32 %v2348, %v2409
      %2411 = vmatmul.f32.gmra.mxu0 %v1955
      %v2412 = vpop.f32.mrf.mxu0
      %v2413 = vadd.f32 %v2348, %v2412
      %2414 = vmatmul.f32.gmra.mxu0 %v1956
      %v2415 = vpop.f32.mrf.mxu0
      %v2416 = vadd.f32 %v2348, %v2415
      %2417 = vmatmul.f32.gmra.mxu0 %v1957
      %v2418 = vpop.f32.mrf.mxu0
      %v2419 = vadd.f32 %v2348, %v2418
      %2420 = vmatmul.f32.gmra.mxu0 %v1958
      %v2421 = vpop.f32.mrf.mxu0
      %v2422 = vadd.f32 %v2348, %v2421
      %2423 = vmatmul.f32.gmra.mxu0 %v1959
      %v2424 = vpop.f32.mrf.mxu0
      %v2425 = vadd.f32 %v2348, %v2424
      %2426 = vmatmul.f32.gmra.mxu0 %v1960
      %v2427 = vpop.f32.mrf.mxu0
      %v2428 = vadd.f32 %v2348, %v2427
      %2429 = vmatmul.f32.gmra.mxu0 %v1961
      %v2430 = vpop.f32.mrf.mxu0
      %v2431 = vadd.f32 %v2348, %v2430
      %2432 = vmatmul.f32.gmra.mxu0 %v1962
      %v2433 = vpop.f32.mrf.mxu0
      %v2434 = vadd.f32 %v2348, %v2433
      %2435 = vmatmul.f32.gmra.mxu0 %v1963
      %v2436 = vpop.f32.mrf.mxu0
      %v2437 = vadd.f32 %v2348, %v2436
      %2438 = vmatmul.f32.gmra.mxu0 %v1964
      %v2439 = vpop.f32.mrf.mxu0
      %v2440 = vadd.f32 %v2348, %v2439
      %2441 = vmatmul.f32.gmra.mxu0 %v1965
      %v2442 = vpop.f32.mrf.mxu0
      %v2443 = vadd.f32 %v2348, %v2442
      %2444 = vmatmul.f32.gmra.mxu0 %v1966
      %v2445 = vpop.f32.mrf.mxu0
      %v2446 = vadd.f32 %v2348, %v2445
      %2447 = vmatmul.f32.gmra.mxu0 %v1967
      %v2448 = vpop.f32.mrf.mxu0
      %v2449 = vadd.f32 %v2348, %v2448
      %2450 = vmatmul.f32.gmra.mxu0 %v1968
      %v2451 = vpop.f32.mrf.mxu0
      %v2452 = vadd.f32 %v2348, %v2451
      %2453 = vmatmul.f32.gmra.mxu0 %v1969
      %v2454 = vpop.f32.mrf.mxu0
      %v2455 = vadd.f32 %v2348, %v2454
      %2456 = vmatmul.f32.gmra.mxu0 %v1970
      %v2457 = vpop.f32.mrf.mxu0
      %v2458 = vadd.f32 %v2348, %v2457
      %2459 = vmatmul.f32.gmra.mxu0 %v1971
      %v2460 = vpop.f32.mrf.mxu0
      %v2461 = vadd.f32 %v2348, %v2460
      %2462 = vdwg.mxu0
      %2463 = vmatpush.msra.mxu0 %v2233
      %2464 = vmatpush.msra.mxu0 %v2232
      %2465 = vmatpush.msra.mxu0 %v2231
      %2466 = vmatpush.msra.mxu0 %v2230
      %2467 = vmatpush.msra.mxu0 %v2229
      %2468 = vmatpush.msra.mxu0 %v2228
      %2469 = vmatpush.msra.mxu0 %v2227
      %2470 = vmatpush.msra.mxu0 %v2226
      %2471 = vmatpush.msra.mxu0 %v2225
      %2472 = vmatpush.msra.mxu0 %v2224
      %2473 = vmatpush.msra.mxu0 %v2223
      %2474 = vmatpush.msra.mxu0 %v2222
      %2475 = vmatpush.msra.mxu0 %v2221
      %2476 = vmatpush.msra.mxu0 %v2220
      %2477 = vmatpush.msra.mxu0 %v2219
      %2478 = vmatpush.msra.mxu0 %v2218
      %2479 = vmatmul.f32.gmra.mxu0 %v2006
      %v2480 = vpop.f32.mrf.mxu0
      %v2481 = vadd.f32 %v2368, %v2480
      %2482 = vmatmul.f32.gmra.mxu0 %v2008
      %v2483 = vpop.f32.mrf.mxu0
      %v2484 = vadd.f32 %v2371, %v2483
      %2485 = vmatmul.f32.gmra.mxu0 %v2010
      %v2486 = vpop.f32.mrf.mxu0
      %v2487 = vadd.f32 %v2374, %v2486
      %2488 = vmatmul.f32.gmra.mxu0 %v2012
      %v2489 = vpop.f32.mrf.mxu0
      %v2490 = vadd.f32 %v2377, %v2489
      %2491 = vmatmul.f32.gmra.mxu0 %v2014
      %v2492 = vpop.f32.mrf.mxu0
      %v2493 = vadd.f32 %v2380, %v2492
      %2494 = vmatmul.f32.gmra.mxu0 %v2016
      %v2495 = vpop.f32.mrf.mxu0
      %v2496 = vadd.f32 %v2383, %v2495
      %2497 = vmatmul.f32.gmra.mxu0 %v2018
      %v2498 = vpop.f32.mrf.mxu0
      %v2499 = vadd.f32 %v2386, %v2498
      %2500 = vmatmul.f32.gmra.mxu0 %v2020
      %v2501 = vpop.f32.mrf.mxu0
      %v2502 = vadd.f32 %v2389, %v2501
      %2503 = vmatmul.f32.gmra.mxu0 %v2022
      %v2504 = vpop.f32.mrf.mxu0
      %v2505 = vadd.f32 %v2392, %v2504
      %2506 = vmatmul.f32.gmra.mxu0 %v2024
      %v2507 = vpop.f32.mrf.mxu0
      %v2508 = vadd.f32 %v2395, %v2507
      %2509 = vmatmul.f32.gmra.mxu0 %v2026
      %v2510 = vpop.f32.mrf.mxu0
      %v2511 = vadd.f32 %v2398, %v2510
      %2512 = vmatmul.f32.gmra.mxu0 %v2028
      %v2513 = vpop.f32.mrf.mxu0
      %v2514 = vadd.f32 %v2401, %v2513
      %2515 = vmatmul.f32.gmra.mxu0 %v2030
      %v2516 = vpop.f32.mrf.mxu0
      %v2517 = vadd.f32 %v2404, %v2516
      %2518 = vmatmul.f32.gmra.mxu0 %v2032
      %v2519 = vpop.f32.mrf.mxu0
      %v2520 = vadd.f32 %v2407, %v2519
      %2521 = vmatmul.f32.gmra.mxu0 %v2034
      %v2522 = vpop.f32.mrf.mxu0
      %v2523 = vadd.f32 %v2410, %v2522
      %2524 = vmatmul.f32.gmra.mxu0 %v2036
      %v2525 = vpop.f32.mrf.mxu0
      %v2526 = vadd.f32 %v2413, %v2525
      %2527 = vmatmul.f32.gmra.mxu0 %v2038
      %v2528 = vpop.f32.mrf.mxu0
      %v2529 = vadd.f32 %v2416, %v2528
      %2530 = vmatmul.f32.gmra.mxu0 %v2040
      %v2531 = vpop.f32.mrf.mxu0
      %v2532 = vadd.f32 %v2419, %v2531
      %2533 = vmatmul.f32.gmra.mxu0 %v2042
      %v2534 = vpop.f32.mrf.mxu0
      %v2535 = vadd.f32 %v2422, %v2534
      %2536 = vmatmul.f32.gmra.mxu0 %v2044
      %v2537 = vpop.f32.mrf.mxu0
      %v2538 = vadd.f32 %v2425, %v2537
      %2539 = vmatmul.f32.gmra.mxu0 %v2046
      %v2540 = vpop.f32.mrf.mxu0
      %v2541 = vadd.f32 %v2428, %v2540
      %2542 = vmatmul.f32.gmra.mxu0 %v2048
      %v2543 = vpop.f32.mrf.mxu0
      %v2544 = vadd.f32 %v2431, %v2543
      %2545 = vmatmul.f32.gmra.mxu0 %v2050
      %v2546 = vpop.f32.mrf.mxu0
      %v2547 = vadd.f32 %v2434, %v2546
      %2548 = vmatmul.f32.gmra.mxu0 %v2052
      %v2549 = vpop.f32.mrf.mxu0
      %v2550 = vadd.f32 %v2437, %v2549
      %2551 = vmatmul.f32.gmra.mxu0 %v2054
      %v2552 = vpop.f32.mrf.mxu0
      %v2553 = vadd.f32 %v2440, %v2552
      %2554 = vmatmul.f32.gmra.mxu0 %v2056
      %v2555 = vpop.f32.mrf.mxu0
      %v2556 = vadd.f32 %v2443, %v2555
      %2557 = vmatmul.f32.gmra.mxu0 %v2058
      %v2558 = vpop.f32.mrf.mxu0
      %v2559 = vadd.f32 %v2446, %v2558
      %2560 = vmatmul.f32.gmra.mxu0 %v2060
      %v2561 = vpop.f32.mrf.mxu0
      %v2562 = vadd.f32 %v2449, %v2561
      %2563 = vmatmul.f32.gmra.mxu0 %v2062
      %v2564 = vpop.f32.mrf.mxu0
      %v2565 = vadd.f32 %v2452, %v2564
      %2566 = vmatmul.f32.gmra.mxu0 %v2064
      %v2567 = vpop.f32.mrf.mxu0
      %v2568 = vadd.f32 %v2455, %v2567
      %2569 = vmatmul.f32.gmra.mxu0 %v2066
      %v2570 = vpop.f32.mrf.mxu0
      %v2571 = vadd.f32 %v2458, %v2570
      %2572 = vmatmul.f32.gmra.mxu0 %v2068
      %v2573 = vpop.f32.mrf.mxu0
      %v2574 = vadd.f32 %v2461, %v2573
      %2575 = vdwg.mxu0
      %2576 = vmatpush.msra.mxu0 %v2249
      %2577 = vmatpush.msra.mxu0 %v2248
      %2578 = vmatpush.msra.mxu0 %v2247
      %2579 = vmatpush.msra.mxu0 %v2246
      %2580 = vmatpush.msra.mxu0 %v2245
      %2581 = vmatpush.msra.mxu0 %v2244
      %2582 = vmatpush.msra.mxu0 %v2243
      %2583 = vmatpush.msra.mxu0 %v2242
      %2584 = vmatpush.msra.mxu0 %v2241
      %2585 = vmatpush.msra.mxu0 %v2240
      %2586 = vmatpush.msra.mxu0 %v2239
      %2587 = vmatpush.msra.mxu0 %v2238
      %2588 = vmatpush.msra.mxu0 %v2237
      %2589 = vmatpush.msra.mxu0 %v2236
      %2590 = vmatpush.msra.mxu0 %v2235
      %2591 = vmatpush.msra.mxu0 %v2234
      %2592 = vmatmul.f32.gmra.mxu0 %v2103
      %v2593 = vpop.f32.mrf.mxu0
      %v2594 = vadd.f32 %v2481, %v2593
      %2595 = vmatmul.f32.gmra.mxu0 %v2105
      %v2596 = vpop.f32.mrf.mxu0
      %v2597 = vadd.f32 %v2484, %v2596
      %2598 = vmatmul.f32.gmra.mxu0 %v2107
      %v2599 = vpop.f32.mrf.mxu0
      %v2600 = vadd.f32 %v2487, %v2599
      %2601 = vmatmul.f32.gmra.mxu0 %v2109
      %v2602 = vpop.f32.mrf.mxu0
      %v2603 = vadd.f32 %v2490, %v2602
      %2604 = vmatmul.f32.gmra.mxu0 %v2111
      %v2605 = vpop.f32.mrf.mxu0
      %v2606 = vadd.f32 %v2493, %v2605
      %2607 = vmatmul.f32.gmra.mxu0 %v2113
      %v2608 = vpop.f32.mrf.mxu0
      %v2609 = vadd.f32 %v2496, %v2608
      %2610 = vmatmul.f32.gmra.mxu0 %v2115
      %v2611 = vpop.f32.mrf.mxu0
      %v2612 = vadd.f32 %v2499, %v2611
      %2613 = vmatmul.f32.gmra.mxu0 %v2117
      %v2614 = vpop.f32.mrf.mxu0
      %v2615 = vadd.f32 %v2502, %v2614
      %2616 = vmatmul.f32.gmra.mxu0 %v2119
      %v2617 = vpop.f32.mrf.mxu0
      %v2618 = vadd.f32 %v2505, %v2617
      %2619 = vmatmul.f32.gmra.mxu0 %v2121
      %v2620 = vpop.f32.mrf.mxu0
      %v2621 = vadd.f32 %v2508, %v2620
      %2622 = vmatmul.f32.gmra.mxu0 %v2123
      %v2623 = vpop.f32.mrf.mxu0
      %v2624 = vadd.f32 %v2511, %v2623
      %2625 = vmatmul.f32.gmra.mxu0 %v2125
      %v2626 = vpop.f32.mrf.mxu0
      %v2627 = vadd.f32 %v2514, %v2626
      %2628 = vmatmul.f32.gmra.mxu0 %v2127
      %v2629 = vpop.f32.mrf.mxu0
      %v2630 = vadd.f32 %v2517, %v2629
      %2631 = vmatmul.f32.gmra.mxu0 %v2129
      %v2632 = vpop.f32.mrf.mxu0
      %v2633 = vadd.f32 %v2520, %v2632
      %2634 = vmatmul.f32.gmra.mxu0 %v2131
      %v2635 = vpop.f32.mrf.mxu0
      %v2636 = vadd.f32 %v2523, %v2635
      %2637 = vmatmul.f32.gmra.mxu0 %v2133
      %v2638 = vpop.f32.mrf.mxu0
      %v2639 = vadd.f32 %v2526, %v2638
      %2640 = vmatmul.f32.gmra.mxu0 %v2135
      %v2641 = vpop.f32.mrf.mxu0
      %v2642 = vadd.f32 %v2529, %v2641
      %2643 = vmatmul.f32.gmra.mxu0 %v2137
      %v2644 = vpop.f32.mrf.mxu0
      %v2645 = vadd.f32 %v2532, %v2644
      %2646 = vmatmul.f32.gmra.mxu0 %v2139
      %v2647 = vpop.f32.mrf.mxu0
      %v2648 = vadd.f32 %v2535, %v2647
      %2649 = vmatmul.f32.gmra.mxu0 %v2141
      %v2650 = vpop.f32.mrf.mxu0
      %v2651 = vadd.f32 %v2538, %v2650
      %2652 = vmatmul.f32.gmra.mxu0 %v2143
      %v2653 = vpop.f32.mrf.mxu0
      %v2654 = vadd.f32 %v2541, %v2653
      %2655 = vmatmul.f32.gmra.mxu0 %v2145
      %v2656 = vpop.f32.mrf.mxu0
      %v2657 = vadd.f32 %v2544, %v2656
      %2658 = vmatmul.f32.gmra.mxu0 %v2147
      %v2659 = vpop.f32.mrf.mxu0
      %v2660 = vadd.f32 %v2547, %v2659
      %2661 = vmatmul.f32.gmra.mxu0 %v2149
      %v2662 = vpop.f32.mrf.mxu0
      %v2663 = vadd.f32 %v2550, %v2662
      %2664 = vmatmul.f32.gmra.mxu0 %v2151
      %v2665 = vpop.f32.mrf.mxu0
      %v2666 = vadd.f32 %v2553, %v2665
      %2667 = vmatmul.f32.gmra.mxu0 %v2153
      %v2668 = vpop.f32.mrf.mxu0
      %v2669 = vadd.f32 %v2556, %v2668
      %2670 = vmatmul.f32.gmra.mxu0 %v2155
      %v2671 = vpop.f32.mrf.mxu0
      %v2672 = vadd.f32 %v2559, %v2671
      %2673 = vmatmul.f32.gmra.mxu0 %v2157
      %v2674 = vpop.f32.mrf.mxu0
      %v2675 = vadd.f32 %v2562, %v2674
      %2676 = vmatmul.f32.gmra.mxu0 %v2159
      %v2677 = vpop.f32.mrf.mxu0
      %v2678 = vadd.f32 %v2565, %v2677
      %2679 = vmatmul.f32.gmra.mxu0 %v2161
      %v2680 = vpop.f32.mrf.mxu0
      %v2681 = vadd.f32 %v2568, %v2680
      %2682 = vmatmul.f32.gmra.mxu0 %v2163
      %v2683 = vpop.f32.mrf.mxu0
      %v2684 = vadd.f32 %v2571, %v2683
      %2685 = vmatmul.f32.gmra.mxu0 %v2165
      %v2686 = vpop.f32.mrf.mxu0
      %v2687 = vadd.f32 %v2574, %v2686
      %2688 = vdwg.mxu0
      %2689 = vmatpush.msra.mxu0 %v2265
      %2690 = vmatpush.msra.mxu0 %v2264
      %2691 = vmatpush.msra.mxu0 %v2263
      %2692 = vmatpush.msra.mxu0 %v2262
      %2693 = vmatpush.msra.mxu0 %v2261
      %2694 = vmatpush.msra.mxu0 %v2260
      %2695 = vmatpush.msra.mxu0 %v2259
      %2696 = vmatpush.msra.mxu0 %v2258
      %2697 = vmatpush.msra.mxu0 %v2257
      %2698 = vmatpush.msra.mxu0 %v2256
      %2699 = vmatpush.msra.mxu0 %v2255
      %2700 = vmatpush.msra.mxu0 %v2254
      %2701 = vmatpush.msra.mxu0 %v2253
      %2702 = vmatpush.msra.mxu0 %v2252
      %2703 = vmatpush.msra.mxu0 %v2251
      %2704 = vmatpush.msra.mxu0 %v2250
      %2705 = vmatmul.f32.gmra.mxu0 %v1942
      %v2706 = vpop.f32.mrf.mxu0
      %v2707 = vadd.f32 %v2594, %v2706
      %2708 = vmatmul.f32.gmra.mxu0 %v1943
      %v2709 = vpop.f32.mrf.mxu0
      %v2710 = vadd.f32 %v2597, %v2709
      %2711 = vmatmul.f32.gmra.mxu0 %v1944
      %v2712 = vpop.f32.mrf.mxu0
      %v2713 = vadd.f32 %v2600, %v2712
      %2714 = vmatmul.f32.gmra.mxu0 %v1945
      %v2715 = vpop.f32.mrf.mxu0
      %v2716 = vadd.f32 %v2603, %v2715
      %2717 = vmatmul.f32.gmra.mxu0 %v1946
      %v2718 = vpop.f32.mrf.mxu0
      %v2719 = vadd.f32 %v2606, %v2718
      %2720 = vmatmul.f32.gmra.mxu0 %v1947
      %v2721 = vpop.f32.mrf.mxu0
      %v2722 = vadd.f32 %v2609, %v2721
      %2723 = vmatmul.f32.gmra.mxu0 %v1948
      %v2724 = vpop.f32.mrf.mxu0
      %v2725 = vadd.f32 %v2612, %v2724
      %2726 = vmatmul.f32.gmra.mxu0 %v1949
      %v2727 = vpop.f32.mrf.mxu0
      %v2728 = vadd.f32 %v2615, %v2727
      %2729 = vmatmul.f32.gmra.mxu0 %v1950
      %v2730 = vpop.f32.mrf.mxu0
      %v2731 = vadd.f32 %v2618, %v2730
      %2732 = vmatmul.f32.gmra.mxu0 %v1951
      %v2733 = vpop.f32.mrf.mxu0
      %v2734 = vadd.f32 %v2621, %v2733
      %2735 = vmatmul.f32.gmra.mxu0 %v1952
      %v2736 = vpop.f32.mrf.mxu0
      %v2737 = vadd.f32 %v2624, %v2736
      %2738 = vmatmul.f32.gmra.mxu0 %v1953
      %v2739 = vpop.f32.mrf.mxu0
      %v2740 = vadd.f32 %v2627, %v2739
      %2741 = vmatmul.f32.gmra.mxu0 %v1954
      %v2742 = vpop.f32.mrf.mxu0
      %v2743 = vadd.f32 %v2630, %v2742
      %2744 = vmatmul.f32.gmra.mxu0 %v1955
      %v2745 = vpop.f32.mrf.mxu0
      %v2746 = vadd.f32 %v2633, %v2745
      %2747 = vmatmul.f32.gmra.mxu0 %v1956
      %v2748 = vpop.f32.mrf.mxu0
      %v2749 = vadd.f32 %v2636, %v2748
      %2750 = vmatmul.f32.gmra.mxu0 %v1957
      %v2751 = vpop.f32.mrf.mxu0
      %v2752 = vadd.f32 %v2639, %v2751
      %2753 = vmatmul.f32.gmra.mxu0 %v1958
      %v2754 = vpop.f32.mrf.mxu0
      %v2755 = vadd.f32 %v2642, %v2754
      %2756 = vmatmul.f32.gmra.mxu0 %v1959
      %v2757 = vpop.f32.mrf.mxu0
      %v2758 = vadd.f32 %v2645, %v2757
      %2759 = vmatmul.f32.gmra.mxu0 %v1960
      %v2760 = vpop.f32.mrf.mxu0
      %v2761 = vadd.f32 %v2648, %v2760
      %2762 = vmatmul.f32.gmra.mxu0 %v1961
      %v2763 = vpop.f32.mrf.mxu0
      %v2764 = vadd.f32 %v2651, %v2763
      %2765 = vmatmul.f32.gmra.mxu0 %v1962
      %v2766 = vpop.f32.mrf.mxu0
      %v2767 = vadd.f32 %v2654, %v2766
      %2768 = vmatmul.f32.gmra.mxu0 %v1963
      %v2769 = vpop.f32.mrf.mxu0
      %v2770 = vadd.f32 %v2657, %v2769
      %2771 = vmatmul.f32.gmra.mxu0 %v1964
      %v2772 = vpop.f32.mrf.mxu0
      %v2773 = vadd.f32 %v2660, %v2772
      %2774 = vmatmul.f32.gmra.mxu0 %v1965
      %v2775 = vpop.f32.mrf.mxu0
      %v2776 = vadd.f32 %v2663, %v2775
      %2777 = vmatmul.f32.gmra.mxu0 %v1966
      %v2778 = vpop.f32.mrf.mxu0
      %v2779 = vadd.f32 %v2666, %v2778
      %2780 = vmatmul.f32.gmra.mxu0 %v1967
      %v2781 = vpop.f32.mrf.mxu0
      %v2782 = vadd.f32 %v2669, %v2781
      %2783 = vmatmul.f32.gmra.mxu0 %v1968
      %v2784 = vpop.f32.mrf.mxu0
      %v2785 = vadd.f32 %v2672, %v2784
      %2786 = vmatmul.f32.gmra.mxu0 %v1969
      %v2787 = vpop.f32.mrf.mxu0
      %v2788 = vadd.f32 %v2675, %v2787
      %2789 = vmatmul.f32.gmra.mxu0 %v1970
      %v2790 = vpop.f32.mrf.mxu0
      %v2791 = vadd.f32 %v2678, %v2790
      %2792 = vmatmul.f32.gmra.mxu0 %v1971
      %v2793 = vpop.f32.mrf.mxu0
      %v2794 = vadd.f32 %v2681, %v2793
      %2795 = vmatmul.f32.gmra.mxu0 0.0
      %v2796 = vpop.f32.mrf.mxu0
      %v2797 = vadd.f32 %v2684, %v2796
      %2798 = vmatmul.f32.gmra.mxu0 0.0
      %v2799 = vpop.f32.mrf.mxu0
      %v2800 = vadd.f32 %v2687, %v2799
      %2801 = vdwg.mxu0
      %2802 = vmatpush.msra.mxu0 %v2281
      %2803 = vmatpush.msra.mxu0 %v2280
      %2804 = vmatpush.msra.mxu0 %v2279
      %2805 = vmatpush.msra.mxu0 %v2278
      %2806 = vmatpush.msra.mxu0 %v2277
      %2807 = vmatpush.msra.mxu0 %v2276
      %2808 = vmatpush.msra.mxu0 %v2275
      %2809 = vmatpush.msra.mxu0 %v2274
      %2810 = vmatpush.msra.mxu0 %v2273
      %2811 = vmatpush.msra.mxu0 %v2272
      %2812 = vmatpush.msra.mxu0 %v2271
      %2813 = vmatpush.msra.mxu0 %v2270
      %2814 = vmatpush.msra.mxu0 %v2269
      %2815 = vmatpush.msra.mxu0 %v2268
      %2816 = vmatpush.msra.mxu0 %v2267
      %2817 = vmatpush.msra.mxu0 %v2266
      %2818 = vmatmul.f32.gmra.mxu0 %v2010
      %v2819 = vpop.f32.mrf.mxu0
      %v2820 = vadd.f32 %v2707, %v2819
      %2821 = vmatmul.f32.gmra.mxu0 %v2012
      %v2822 = vpop.f32.mrf.mxu0
      %v2823 = vadd.f32 %v2710, %v2822
      %2824 = vmatmul.f32.gmra.mxu0 %v2014
      %v2825 = vpop.f32.mrf.mxu0
      %v2826 = vadd.f32 %v2713, %v2825
      %2827 = vmatmul.f32.gmra.mxu0 %v2016
      %v2828 = vpop.f32.mrf.mxu0
      %v2829 = vadd.f32 %v2716, %v2828
      %2830 = vmatmul.f32.gmra.mxu0 %v2018
      %v2831 = vpop.f32.mrf.mxu0
      %v2832 = vadd.f32 %v2719, %v2831
      %2833 = vmatmul.f32.gmra.mxu0 %v2020
      %v2834 = vpop.f32.mrf.mxu0
      %v2835 = vadd.f32 %v2722, %v2834
      %2836 = vmatmul.f32.gmra.mxu0 %v2022
      %v2837 = vpop.f32.mrf.mxu0
      %v2838 = vadd.f32 %v2725, %v2837
      %2839 = vmatmul.f32.gmra.mxu0 %v2024
      %v2840 = vpop.f32.mrf.mxu0
      %v2841 = vadd.f32 %v2728, %v2840
      %2842 = vmatmul.f32.gmra.mxu0 %v2026
      %v2843 = vpop.f32.mrf.mxu0
      %v2844 = vadd.f32 %v2731, %v2843
      %2845 = vmatmul.f32.gmra.mxu0 %v2028
      %v2846 = vpop.f32.mrf.mxu0
      %v2847 = vadd.f32 %v2734, %v2846
      %2848 = vmatmul.f32.gmra.mxu0 %v2030
      %v2849 = vpop.f32.mrf.mxu0
      %v2850 = vadd.f32 %v2737, %v2849
      %2851 = vmatmul.f32.gmra.mxu0 %v2032
      %v2852 = vpop.f32.mrf.mxu0
      %v2853 = vadd.f32 %v2740, %v2852
      %2854 = vmatmul.f32.gmra.mxu0 %v2034
      %v2855 = vpop.f32.mrf.mxu0
      %v2856 = vadd.f32 %v2743, %v2855
      %2857 = vmatmul.f32.gmra.mxu0 %v2036
      %v2858 = vpop.f32.mrf.mxu0
      %v2859 = vadd.f32 %v2746, %v2858
      %2860 = vmatmul.f32.gmra.mxu0 %v2038
      %v2861 = vpop.f32.mrf.mxu0
      %v2862 = vadd.f32 %v2749, %v2861
      %2863 = vmatmul.f32.gmra.mxu0 %v2040
      %v2864 = vpop.f32.mrf.mxu0
      %v2865 = vadd.f32 %v2752, %v2864
      %2866 = vmatmul.f32.gmra.mxu0 %v2042
      %v2867 = vpop.f32.mrf.mxu0
      %v2868 = vadd.f32 %v2755, %v2867
      %2869 = vmatmul.f32.gmra.mxu0 %v2044
      %v2870 = vpop.f32.mrf.mxu0
      %v2871 = vadd.f32 %v2758, %v2870
      %2872 = vmatmul.f32.gmra.mxu0 %v2046
      %v2873 = vpop.f32.mrf.mxu0
      %v2874 = vadd.f32 %v2761, %v2873
      %2875 = vmatmul.f32.gmra.mxu0 %v2048
      %v2876 = vpop.f32.mrf.mxu0
      %v2877 = vadd.f32 %v2764, %v2876
      %2878 = vmatmul.f32.gmra.mxu0 %v2050
      %v2879 = vpop.f32.mrf.mxu0
      %v2880 = vadd.f32 %v2767, %v2879
      %2881 = vmatmul.f32.gmra.mxu0 %v2052
      %v2882 = vpop.f32.mrf.mxu0
      %v2883 = vadd.f32 %v2770, %v2882
      %2884 = vmatmul.f32.gmra.mxu0 %v2054
      %v2885 = vpop.f32.mrf.mxu0
      %v2886 = vadd.f32 %v2773, %v2885
      %2887 = vmatmul.f32.gmra.mxu0 %v2056
      %v2888 = vpop.f32.mrf.mxu0
      %v2889 = vadd.f32 %v2776, %v2888
      %2890 = vmatmul.f32.gmra.mxu0 %v2058
      %v2891 = vpop.f32.mrf.mxu0
      %v2892 = vadd.f32 %v2779, %v2891
      %2893 = vmatmul.f32.gmra.mxu0 %v2060
      %v2894 = vpop.f32.mrf.mxu0
      %v2895 = vadd.f32 %v2782, %v2894
      %2896 = vmatmul.f32.gmra.mxu0 %v2062
      %v2897 = vpop.f32.mrf.mxu0
      %v2898 = vadd.f32 %v2785, %v2897
      %2899 = vmatmul.f32.gmra.mxu0 %v2064
      %v2900 = vpop.f32.mrf.mxu0
      %v2901 = vadd.f32 %v2788, %v2900
      %2902 = vmatmul.f32.gmra.mxu0 %v2066
      %v2903 = vpop.f32.mrf.mxu0
      %v2904 = vadd.f32 %v2791, %v2903
      %2905 = vmatmul.f32.gmra.mxu0 %v2068
      %v2906 = vpop.f32.mrf.mxu0
      %v2907 = vadd.f32 %v2794, %v2906
      %2908 = vmatmul.f32.gmra.mxu0 %v2198
      %v2909 = vpop.f32.mrf.mxu0
      %v2910 = vadd.f32 %v2797, %v2909
      %2911 = vmatmul.f32.gmra.mxu0 %v2198
      %v2912 = vpop.f32.mrf.mxu0
      %v2913 = vadd.f32 %v2800, %v2912
      %2914 = vdwg.mxu0
      %2915 = vmatpush.msra.mxu0 %v2297
      %2916 = vmatpush.msra.mxu0 %v2296
      %2917 = vmatpush.msra.mxu0 %v2295
      %2918 = vmatpush.msra.mxu0 %v2294
      %2919 = vmatpush.msra.mxu0 %v2293
      %2920 = vmatpush.msra.mxu0 %v2292
      %2921 = vmatpush.msra.mxu0 %v2291
      %2922 = vmatpush.msra.mxu0 %v2290
      %2923 = vmatpush.msra.mxu0 %v2289
      %2924 = vmatpush.msra.mxu0 %v2288
      %2925 = vmatpush.msra.mxu0 %v2287
      %2926 = vmatpush.msra.mxu0 %v2286
      %2927 = vmatpush.msra.mxu0 %v2285
      %2928 = vmatpush.msra.mxu0 %v2284
      %2929 = vmatpush.msra.mxu0 %v2283
      %2930 = vmatpush.msra.mxu0 %v2282
      %2931 = vmatmul.f32.gmra.mxu0 %v2107
      %v2932 = vpop.f32.mrf.mxu0
      %v2933 = vadd.f32 %v2820, %v2932
      %2934 = vmatmul.f32.gmra.mxu0 %v2109
      %v2935 = vpop.f32.mrf.mxu0
      %v2936 = vadd.f32 %v2823, %v2935
      %2937 = vmatmul.f32.gmra.mxu0 %v2111
      %v2938 = vpop.f32.mrf.mxu0
      %v2939 = vadd.f32 %v2826, %v2938
      %2940 = vmatmul.f32.gmra.mxu0 %v2113
      %v2941 = vpop.f32.mrf.mxu0
      %v2942 = vadd.f32 %v2829, %v2941
      %2943 = vmatmul.f32.gmra.mxu0 %v2115
      %v2944 = vpop.f32.mrf.mxu0
      %v2945 = vadd.f32 %v2832, %v2944
      %2946 = vmatmul.f32.gmra.mxu0 %v2117
      %v2947 = vpop.f32.mrf.mxu0
      %v2948 = vadd.f32 %v2835, %v2947
      %2949 = vmatmul.f32.gmra.mxu0 %v2119
      %v2950 = vpop.f32.mrf.mxu0
      %v2951 = vadd.f32 %v2838, %v2950
      %2952 = vmatmul.f32.gmra.mxu0 %v2121
      %v2953 = vpop.f32.mrf.mxu0
      %v2954 = vadd.f32 %v2841, %v2953
      %2955 = vmatmul.f32.gmra.mxu0 %v2123
      %v2956 = vpop.f32.mrf.mxu0
      %v2957 = vadd.f32 %v2844, %v2956
      %2958 = vmatmul.f32.gmra.mxu0 %v2125
      %v2959 = vpop.f32.mrf.mxu0
      %v2960 = vadd.f32 %v2847, %v2959
      %2961 = vmatmul.f32.gmra.mxu0 %v2127
      %v2962 = vpop.f32.mrf.mxu0
      %v2963 = vadd.f32 %v2850, %v2962
      %2964 = vmatmul.f32.gmra.mxu0 %v2129
      %v2965 = vpop.f32.mrf.mxu0
      %v2966 = vadd.f32 %v2853, %v2965
      %2967 = vmatmul.f32.gmra.mxu0 %v2131
      %v2968 = vpop.f32.mrf.mxu0
      %v2969 = vadd.f32 %v2856, %v2968
      %2970 = vmatmul.f32.gmra.mxu0 %v2133
      %v2971 = vpop.f32.mrf.mxu0
      %v2972 = vadd.f32 %v2859, %v2971
      %2973 = vmatmul.f32.gmra.mxu0 %v2135
      %v2974 = vpop.f32.mrf.mxu0
      %v2975 = vadd.f32 %v2862, %v2974
      %2976 = vmatmul.f32.gmra.mxu0 %v2137
      %v2977 = vpop.f32.mrf.mxu0
      %v2978 = vadd.f32 %v2865, %v2977
      %2979 = vmatmul.f32.gmra.mxu0 %v2139
      %v2980 = vpop.f32.mrf.mxu0
      %v2981 = vadd.f32 %v2868, %v2980
      %2982 = vmatmul.f32.gmra.mxu0 %v2141
      %v2983 = vpop.f32.mrf.mxu0
      %v2984 = vadd.f32 %v2871, %v2983
      %2985 = vmatmul.f32.gmra.mxu0 %v2143
      %v2986 = vpop.f32.mrf.mxu0
      %v2987 = vadd.f32 %v2874, %v2986
      %2988 = vmatmul.f32.gmra.mxu0 %v2145
      %v2989 = vpop.f32.mrf.mxu0
      %v2990 = vadd.f32 %v2877, %v2989
      %2991 = vmatmul.f32.gmra.mxu0 %v2147
      %v2992 = vpop.f32.mrf.mxu0
      %v2993 = vadd.f32 %v2880, %v2992
      %2994 = vmatmul.f32.gmra.mxu0 %v2149
      %v2995 = vpop.f32.mrf.mxu0
      %v2996 = vadd.f32 %v2883, %v2995
      %2997 = vmatmul.f32.gmra.mxu0 %v2151
      %v2998 = vpop.f32.mrf.mxu0
      %v2999 = vadd.f32 %v2886, %v2998
      %3000 = vmatmul.f32.gmra.mxu0 %v2153
      %v3001 = vpop.f32.mrf.mxu0
      %v3002 = vadd.f32 %v2889, %v3001
      %3003 = vmatmul.f32.gmra.mxu0 %v2155
      %v3004 = vpop.f32.mrf.mxu0
      %v3005 = vadd.f32 %v2892, %v3004
      %3006 = vmatmul.f32.gmra.mxu0 %v2157
      %v3007 = vpop.f32.mrf.mxu0
      %v3008 = vadd.f32 %v2895, %v3007
      %3009 = vmatmul.f32.gmra.mxu0 %v2159
      %v3010 = vpop.f32.mrf.mxu0
      %v3011 = vadd.f32 %v2898, %v3010
      %3012 = vmatmul.f32.gmra.mxu0 %v2161
      %v3013 = vpop.f32.mrf.mxu0
      %v3014 = vadd.f32 %v2901, %v3013
      %3015 = vmatmul.f32.gmra.mxu0 %v2163
      %v3016 = vpop.f32.mrf.mxu0
      %v3017 = vadd.f32 %v2904, %v3016
      %3018 = vmatmul.f32.gmra.mxu0 %v2165
      %v3019 = vpop.f32.mrf.mxu0
      %v3020 = vadd.f32 %v2907, %v3019
      %3021 = vmatmul.f32.gmra.mxu0 %v2200
      %v3022 = vpop.f32.mrf.mxu0
      %v3023 = vadd.f32 %v2910, %v3022
      %3024 = vmatmul.f32.gmra.mxu0 %v2200
      %v3025 = vpop.f32.mrf.mxu0
      %v3026 = vadd.f32 %v2913, %v3025
      %3027 = vdwg.mxu0
      %3028 = vmatpush.msra.mxu0 %v2313
      %3029 = vmatpush.msra.mxu0 %v2312
      %3030 = vmatpush.msra.mxu0 %v2311
      %3031 = vmatpush.msra.mxu0 %v2310
      %3032 = vmatpush.msra.mxu0 %v2309
      %3033 = vmatpush.msra.mxu0 %v2308
      %3034 = vmatpush.msra.mxu0 %v2307
      %3035 = vmatpush.msra.mxu0 %v2306
      %3036 = vmatpush.msra.mxu0 %v2305
      %3037 = vmatpush.msra.mxu0 %v2304
      %3038 = vmatpush.msra.mxu0 %v2303
      %3039 = vmatpush.msra.mxu0 %v2302
      %3040 = vmatpush.msra.mxu0 %v2301
      %3041 = vmatpush.msra.mxu0 %v2300
      %3042 = vmatpush.msra.mxu0 %v2299
      %3043 = vmatpush.msra.mxu0 %v2298
      %3044 = vmatmul.f32.gmra.mxu0 %v1944
      %v3045 = vpop.f32.mrf.mxu0
      %v3046 = vadd.f32 %v2933, %v3045
      %3047 = vmatmul.f32.gmra.mxu0 %v1945
      %v3048 = vpop.f32.mrf.mxu0
      %v3049 = vadd.f32 %v2936, %v3048
      %3050 = vmatmul.f32.gmra.mxu0 %v1946
      %v3051 = vpop.f32.mrf.mxu0
      %v3052 = vadd.f32 %v2939, %v3051
      %3053 = vmatmul.f32.gmra.mxu0 %v1947
      %v3054 = vpop.f32.mrf.mxu0
      %v3055 = vadd.f32 %v2942, %v3054
      %3056 = vmatmul.f32.gmra.mxu0 %v1948
      %v3057 = vpop.f32.mrf.mxu0
      %v3058 = vadd.f32 %v2945, %v3057
      %3059 = vmatmul.f32.gmra.mxu0 %v1949
      %v3060 = vpop.f32.mrf.mxu0
      %v3061 = vadd.f32 %v2948, %v3060
      %3062 = vmatmul.f32.gmra.mxu0 %v1950
      %v3063 = vpop.f32.mrf.mxu0
      %v3064 = vadd.f32 %v2951, %v3063
      %3065 = vmatmul.f32.gmra.mxu0 %v1951
      %v3066 = vpop.f32.mrf.mxu0
      %v3067 = vadd.f32 %v2954, %v3066
      %3068 = vmatmul.f32.gmra.mxu0 %v1952
      %v3069 = vpop.f32.mrf.mxu0
      %v3070 = vadd.f32 %v2957, %v3069
      %3071 = vmatmul.f32.gmra.mxu0 %v1953
      %v3072 = vpop.f32.mrf.mxu0
      %v3073 = vadd.f32 %v2960, %v3072
      %3074 = vmatmul.f32.gmra.mxu0 %v1954
      %v3075 = vpop.f32.mrf.mxu0
      %v3076 = vadd.f32 %v2963, %v3075
      %3077 = vmatmul.f32.gmra.mxu0 %v1955
      %v3078 = vpop.f32.mrf.mxu0
      %v3079 = vadd.f32 %v2966, %v3078
      %3080 = vmatmul.f32.gmra.mxu0 %v1956
      %v3081 = vpop.f32.mrf.mxu0
      %v3082 = vadd.f32 %v2969, %v3081
      %3083 = vmatmul.f32.gmra.mxu0 %v1957
      %v3084 = vpop.f32.mrf.mxu0
      %v3085 = vadd.f32 %v2972, %v3084
      %3086 = vmatmul.f32.gmra.mxu0 %v1958
      %v3087 = vpop.f32.mrf.mxu0
      %v3088 = vadd.f32 %v2975, %v3087
      %3089 = vmatmul.f32.gmra.mxu0 %v1959
      %v3090 = vpop.f32.mrf.mxu0
      %v3091 = vadd.f32 %v2978, %v3090
      %3092 = vmatmul.f32.gmra.mxu0 %v1960
      %v3093 = vpop.f32.mrf.mxu0
      %v3094 = vadd.f32 %v2981, %v3093
      %3095 = vmatmul.f32.gmra.mxu0 %v1961
      %v3096 = vpop.f32.mrf.mxu0
      %v3097 = vadd.f32 %v2984, %v3096
      %3098 = vmatmul.f32.gmra.mxu0 %v1962
      %v3099 = vpop.f32.mrf.mxu0
      %v3100 = vadd.f32 %v2987, %v3099
      %3101 = vmatmul.f32.gmra.mxu0 %v1963
      %v3102 = vpop.f32.mrf.mxu0
      %v3103 = vadd.f32 %v2990, %v3102
      %3104 = vmatmul.f32.gmra.mxu0 %v1964
      %v3105 = vpop.f32.mrf.mxu0
      %v3106 = vadd.f32 %v2993, %v3105
      %3107 = vmatmul.f32.gmra.mxu0 %v1965
      %v3108 = vpop.f32.mrf.mxu0
      %v3109 = vadd.f32 %v2996, %v3108
      %3110 = vmatmul.f32.gmra.mxu0 %v1966
      %v3111 = vpop.f32.mrf.mxu0
      %v3112 = vadd.f32 %v2999, %v3111
      %3113 = vmatmul.f32.gmra.mxu0 %v1967
      %v3114 = vpop.f32.mrf.mxu0
      %v3115 = vadd.f32 %v3002, %v3114
      %3116 = vmatmul.f32.gmra.mxu0 %v1968
      %v3117 = vpop.f32.mrf.mxu0
      %v3118 = vadd.f32 %v3005, %v3117
      %3119 = vmatmul.f32.gmra.mxu0 %v1969
      %v3120 = vpop.f32.mrf.mxu0
      %v3121 = vadd.f32 %v3008, %v3120
      %3122 = vmatmul.f32.gmra.mxu0 %v1970
      %v3123 = vpop.f32.mrf.mxu0
      %v3124 = vadd.f32 %v3011, %v3123
      %3125 = vmatmul.f32.gmra.mxu0 %v1971
      %v3126 = vpop.f32.mrf.mxu0
      %v3127 = vadd.f32 %v3014, %v3126
      %3128 = vmatmul.f32.gmra.mxu0 0.0
      %v3129 = vpop.f32.mrf.mxu0
      %v3130 = vadd.f32 %v3017, %v3129
      %3131 = vmatmul.f32.gmra.mxu0 0.0
      %v3132 = vpop.f32.mrf.mxu0
      %v3133 = vadd.f32 %v3020, %v3132
      %3134 = vmatmul.f32.gmra.mxu0 0.0
      %v3135 = vpop.f32.mrf.mxu0
      %v3136 = vadd.f32 %v3023, %v3135
      %3137 = vmatmul.f32.gmra.mxu0 0.0
      %v3138 = vpop.f32.mrf.mxu0
      %v3139 = vadd.f32 %v3026, %v3138
      %3140 = vdwg.mxu0
      %3141 = vmatpush.msra.mxu0 %v2329
      %3142 = vmatpush.msra.mxu0 %v2328
      %3143 = vmatpush.msra.mxu0 %v2327
      %3144 = vmatpush.msra.mxu0 %v2326
      %3145 = vmatpush.msra.mxu0 %v2325
      %3146 = vmatpush.msra.mxu0 %v2324
      %3147 = vmatpush.msra.mxu0 %v2323
      %3148 = vmatpush.msra.mxu0 %v2322
      %3149 = vmatpush.msra.mxu0 %v2321
      %3150 = vmatpush.msra.mxu0 %v2320
      %3151 = vmatpush.msra.mxu0 %v2319
      %3152 = vmatpush.msra.mxu0 %v2318
      %3153 = vmatpush.msra.mxu0 %v2317
      %3154 = vmatpush.msra.mxu0 %v2316
      %3155 = vmatpush.msra.mxu0 %v2315
      %3156 = vmatpush.msra.mxu0 %v2314
      %3157 = vmatmul.f32.gmra.mxu0 %v2014
      %v3158 = vpop.f32.mrf.mxu0
      %v3159 = vadd.f32 %v3046, %v3158
      %3160 = vmatmul.f32.gmra.mxu0 %v2016
      %v3161 = vpop.f32.mrf.mxu0
      %v3162 = vadd.f32 %v3049, %v3161
      %3163 = vmatmul.f32.gmra.mxu0 %v2018
      %v3164 = vpop.f32.mrf.mxu0
      %v3165 = vadd.f32 %v3052, %v3164
      %3166 = vmatmul.f32.gmra.mxu0 %v2020
      %v3167 = vpop.f32.mrf.mxu0
      %v3168 = vadd.f32 %v3055, %v3167
      %3169 = vmatmul.f32.gmra.mxu0 %v2022
      %v3170 = vpop.f32.mrf.mxu0
      %v3171 = vadd.f32 %v3058, %v3170
      %3172 = vmatmul.f32.gmra.mxu0 %v2024
      %v3173 = vpop.f32.mrf.mxu0
      %v3174 = vadd.f32 %v3061, %v3173
      %3175 = vmatmul.f32.gmra.mxu0 %v2026
      %v3176 = vpop.f32.mrf.mxu0
      %v3177 = vadd.f32 %v3064, %v3176
      %3178 = vmatmul.f32.gmra.mxu0 %v2028
      %v3179 = vpop.f32.mrf.mxu0
      %v3180 = vadd.f32 %v3067, %v3179
      %3181 = vmatmul.f32.gmra.mxu0 %v2030
      %v3182 = vpop.f32.mrf.mxu0
      %v3183 = vadd.f32 %v3070, %v3182
      %3184 = vmatmul.f32.gmra.mxu0 %v2032
      %v3185 = vpop.f32.mrf.mxu0
      %v3186 = vadd.f32 %v3073, %v3185
      %3187 = vmatmul.f32.gmra.mxu0 %v2034
      %v3188 = vpop.f32.mrf.mxu0
      %v3189 = vadd.f32 %v3076, %v3188
      %3190 = vmatmul.f32.gmra.mxu0 %v2036
      %v3191 = vpop.f32.mrf.mxu0
      %v3192 = vadd.f32 %v3079, %v3191
      %3193 = vmatmul.f32.gmra.mxu0 %v2038
      %v3194 = vpop.f32.mrf.mxu0
      %v3195 = vadd.f32 %v3082, %v3194
      %3196 = vmatmul.f32.gmra.mxu0 %v2040
      %v3197 = vpop.f32.mrf.mxu0
      %v3198 = vadd.f32 %v3085, %v3197
      %3199 = vmatmul.f32.gmra.mxu0 %v2042
      %v3200 = vpop.f32.mrf.mxu0
      %v3201 = vadd.f32 %v3088, %v3200
      %3202 = vmatmul.f32.gmra.mxu0 %v2044
      %v3203 = vpop.f32.mrf.mxu0
      %v3204 = vadd.f32 %v3091, %v3203
      %3205 = vmatmul.f32.gmra.mxu0 %v2046
      %v3206 = vpop.f32.mrf.mxu0
      %v3207 = vadd.f32 %v3094, %v3206
      %3208 = vmatmul.f32.gmra.mxu0 %v2048
      %v3209 = vpop.f32.mrf.mxu0
      %v3210 = vadd.f32 %v3097, %v3209
      %3211 = vmatmul.f32.gmra.mxu0 %v2050
      %v3212 = vpop.f32.mrf.mxu0
      %v3213 = vadd.f32 %v3100, %v3212
      %3214 = vmatmul.f32.gmra.mxu0 %v2052
      %v3215 = vpop.f32.mrf.mxu0
      %v3216 = vadd.f32 %v3103, %v3215
      %3217 = vmatmul.f32.gmra.mxu0 %v2054
      %v3218 = vpop.f32.mrf.mxu0
      %v3219 = vadd.f32 %v3106, %v3218
      %3220 = vmatmul.f32.gmra.mxu0 %v2056
      %v3221 = vpop.f32.mrf.mxu0
      %v3222 = vadd.f32 %v3109, %v3221
      %3223 = vmatmul.f32.gmra.mxu0 %v2058
      %v3224 = vpop.f32.mrf.mxu0
      %v3225 = vadd.f32 %v3112, %v3224
      %3226 = vmatmul.f32.gmra.mxu0 %v2060
      %v3227 = vpop.f32.mrf.mxu0
      %v3228 = vadd.f32 %v3115, %v3227
      %3229 = vmatmul.f32.gmra.mxu0 %v2062
      %v3230 = vpop.f32.mrf.mxu0
      %v3231 = vadd.f32 %v3118, %v3230
      %3232 = vmatmul.f32.gmra.mxu0 %v2064
      %v3233 = vpop.f32.mrf.mxu0
      %v3234 = vadd.f32 %v3121, %v3233
      %3235 = vmatmul.f32.gmra.mxu0 %v2066
      %v3236 = vpop.f32.mrf.mxu0
      %v3237 = vadd.f32 %v3124, %v3236
      %3238 = vmatmul.f32.gmra.mxu0 %v2068
      %v3239 = vpop.f32.mrf.mxu0
      %v3240 = vadd.f32 %v3127, %v3239
      %3241 = vmatmul.f32.gmra.mxu0 %v2198
      %v3242 = vpop.f32.mrf.mxu0
      %v3243 = vadd.f32 %v3130, %v3242
      %3244 = vmatmul.f32.gmra.mxu0 %v2198
      %v3245 = vpop.f32.mrf.mxu0
      %v3246 = vadd.f32 %v3133, %v3245
      %3247 = vmatmul.f32.gmra.mxu0 %v2198
      %v3248 = vpop.f32.mrf.mxu0
      %v3249 = vadd.f32 %v3136, %v3248
      %3250 = vmatmul.f32.gmra.mxu0 %v2198
      %v3251 = vpop.f32.mrf.mxu0
      %v3252 = vadd.f32 %v3139, %v3251
      %3253 = vdwg.mxu0
      %3254 = vmatpush.msra.mxu0 %v2345
      %3255 = vmatpush.msra.mxu0 %v2344
      %3256 = vmatpush.msra.mxu0 %v2343
      %3257 = vmatpush.msra.mxu0 %v2342
      %3258 = vmatpush.msra.mxu0 %v2341
      %3259 = vmatpush.msra.mxu0 %v2340
      %3260 = vmatpush.msra.mxu0 %v2339
      %3261 = vmatpush.msra.mxu0 %v2338
      %3262 = vmatpush.msra.mxu0 %v2337
      %3263 = vmatpush.msra.mxu0 %v2336
      %3264 = vmatpush.msra.mxu0 %v2335
      %3265 = vmatpush.msra.mxu0 %v2334
      %3266 = vmatpush.msra.mxu0 %v2333
      %3267 = vmatpush.msra.mxu0 %v2332
      %3268 = vmatpush.msra.mxu0 %v2331
      %3269 = vmatpush.msra.mxu0 %v2330
      %3270 = vmatmul.f32.gmra.mxu0 %v2111
      %v3271 = vpop.f32.mrf.mxu0
      %v3272 = vadd.f32 %v3159, %v3271
      %3273 = vmatmul.f32.gmra.mxu0 %v2113
      %v3274 = vpop.f32.mrf.mxu0
      %v3275 = vadd.f32 %v3162, %v3274
      %3276 = vmatmul.f32.gmra.mxu0 %v2115
      %v3277 = vpop.f32.mrf.mxu0
      %v3278 = vadd.f32 %v3165, %v3277
      %3279 = vmatmul.f32.gmra.mxu0 %v2117
      %v3280 = vpop.f32.mrf.mxu0
      %v3281 = vadd.f32 %v3168, %v3280
      %3282 = vmatmul.f32.gmra.mxu0 %v2119
      %v3283 = vpop.f32.mrf.mxu0
      %v3284 = vadd.f32 %v3171, %v3283
      %3285 = vmatmul.f32.gmra.mxu0 %v2121
      %v3286 = vpop.f32.mrf.mxu0
      %v3287 = vadd.f32 %v3174, %v3286
      %3288 = vmatmul.f32.gmra.mxu0 %v2123
      %v3289 = vpop.f32.mrf.mxu0
      %v3290 = vadd.f32 %v3177, %v3289
      %3291 = vmatmul.f32.gmra.mxu0 %v2125
      %v3292 = vpop.f32.mrf.mxu0
      %v3293 = vadd.f32 %v3180, %v3292
      %3294 = vmatmul.f32.gmra.mxu0 %v2127
      %v3295 = vpop.f32.mrf.mxu0
      %v3296 = vadd.f32 %v3183, %v3295
      %3297 = vmatmul.f32.gmra.mxu0 %v2129
      %v3298 = vpop.f32.mrf.mxu0
      %v3299 = vadd.f32 %v3186, %v3298
      %3300 = vmatmul.f32.gmra.mxu0 %v2131
      %v3301 = vpop.f32.mrf.mxu0
      %v3302 = vadd.f32 %v3189, %v3301
      %3303 = vmatmul.f32.gmra.mxu0 %v2133
      %v3304 = vpop.f32.mrf.mxu0
      %v3305 = vadd.f32 %v3192, %v3304
      %3306 = vmatmul.f32.gmra.mxu0 %v2135
      %v3307 = vpop.f32.mrf.mxu0
      %v3308 = vadd.f32 %v3195, %v3307
      %3309 = vmatmul.f32.gmra.mxu0 %v2137
      %v3310 = vpop.f32.mrf.mxu0
      %v3311 = vadd.f32 %v3198, %v3310
      %3312 = vmatmul.f32.gmra.mxu0 %v2139
      %v3313 = vpop.f32.mrf.mxu0
      %v3314 = vadd.f32 %v3201, %v3313
      %3315 = vmatmul.f32.gmra.mxu0 %v2141
      %v3316 = vpop.f32.mrf.mxu0
      %v3317 = vadd.f32 %v3204, %v3316
      %3318 = vmatmul.f32.gmra.mxu0 %v2143
      %v3319 = vpop.f32.mrf.mxu0
      %v3320 = vadd.f32 %v3207, %v3319
      %3321 = vmatmul.f32.gmra.mxu0 %v2145
      %v3322 = vpop.f32.mrf.mxu0
      %v3323 = vadd.f32 %v3210, %v3322
      %3324 = vmatmul.f32.gmra.mxu0 %v2147
      %v3325 = vpop.f32.mrf.mxu0
      %v3326 = vadd.f32 %v3213, %v3325
      %3327 = vmatmul.f32.gmra.mxu0 %v2149
      %v3328 = vpop.f32.mrf.mxu0
      %v3329 = vadd.f32 %v3216, %v3328
      %3330 = vmatmul.f32.gmra.mxu0 %v2151
      %v3331 = vpop.f32.mrf.mxu0
      %v3332 = vadd.f32 %v3219, %v3331
      %3333 = vmatmul.f32.gmra.mxu0 %v2153
      %v3334 = vpop.f32.mrf.mxu0
      %v3335 = vadd.f32 %v3222, %v3334
      %3336 = vmatmul.f32.gmra.mxu0 %v2155
      %v3337 = vpop.f32.mrf.mxu0
      %v3338 = vadd.f32 %v3225, %v3337
      %3339 = vmatmul.f32.gmra.mxu0 %v2157
      %v3340 = vpop.f32.mrf.mxu0
      %v3341 = vadd.f32 %v3228, %v3340
      %3342 = vmatmul.f32.gmra.mxu0 %v2159
      %v3343 = vpop.f32.mrf.mxu0
      %v3344 = vadd.f32 %v3231, %v3343
      %3345 = vmatmul.f32.gmra.mxu0 %v2161
      %v3346 = vpop.f32.mrf.mxu0
      %v3347 = vadd.f32 %v3234, %v3346
      %3348 = vmatmul.f32.gmra.mxu0 %v2163
      %v3349 = vpop.f32.mrf.mxu0
      %v3350 = vadd.f32 %v3237, %v3349
      %3351 = vmatmul.f32.gmra.mxu0 %v2165
      %v3352 = vpop.f32.mrf.mxu0
      %v3353 = vadd.f32 %v3240, %v3352
      %3354 = vmatmul.f32.gmra.mxu0 %v2200
      %v3355 = vpop.f32.mrf.mxu0
      %v3356 = vadd.f32 %v3243, %v3355
      %3357 = vmatmul.f32.gmra.mxu0 %v2200
      %v3358 = vpop.f32.mrf.mxu0
      %v3359 = vadd.f32 %v3246, %v3358
      %3360 = vmatmul.f32.gmra.mxu0 %v2200
      %v3361 = vpop.f32.mrf.mxu0
      %v3362 = vadd.f32 %v3249, %v3361
      %3363 = vmatmul.f32.gmra.mxu0 %v2200
      %v3364 = vpop.f32.mrf.mxu0
      %v3365 = vadd.f32 %v3252, %v3364
      %3366 = vdwg.mxu0
      %v3367 = vmax.f32 %v3272, 0.0
      %v3368 = vmax.f32 %v3275, 0.0
      %v3369 = vmax.f32 %v3278, 0.0
      %v3370 = vmax.f32 %v3281, 0.0
      %v3371 = vmax.f32 %v3284, 0.0
      %v3372 = vmax.f32 %v3287, 0.0
      %v3373 = vmax.f32 %v3290, 0.0
      %v3374 = vmax.f32 %v3293, 0.0
      %v3375 = vmax.f32 %v3296, 0.0
      %v3376 = vmax.f32 %v3299, 0.0
      %v3377 = vmax.f32 %v3302, 0.0
      %v3378 = vmax.f32 %v3305, 0.0
      %v3379 = vmax.f32 %v3308, 0.0
      %v3380 = vmax.f32 %v3311, 0.0
      %v3381 = vmax.f32 %v3314, 0.0
      %v3382 = vmax.f32 %v3317, 0.0
      %v3383 = vmax.f32 %v3320, 0.0
      %v3384 = vmax.f32 %v3323, 0.0
      %v3385 = vmax.f32 %v3326, 0.0
      %v3386 = vmax.f32 %v3329, 0.0
      %v3387 = vmax.f32 %v3332, 0.0
      %v3388 = vmax.f32 %v3335, 0.0
      %v3389 = vmax.f32 %v3338, 0.0
      %v3390 = vmax.f32 %v3341, 0.0
      %v3391 = vmax.f32 %v3344, 0.0
      %v3392 = vmax.f32 %v3347, 0.0
      %v3393 = vmax.f32 %v3350, 0.0
      %v3394 = vmax.f32 %v3353, 0.0
      %v3395 = vmax.f32 %v3356, 0.0
      %v3396 = vmax.f32 %v3359, 0.0
      %v3397 = vmax.f32 %v3362, 0.0
      %v3398 = vmax.f32 %v3365, 0.0
      %v3431 = vrot.slane %v3367, 1
      %v3432 = vrot.slane %v3368, 1
      %v3433 = vsel %vm691, %v3431, %v3432
      %v3434 = vrot.slane %v3369, 1
      %v3435 = vsel %vm691, %v3432, %v3434
      %v3436 = vrot.slane %v3370, 1
      %v3437 = vsel %vm691, %v3434, %v3436
      %v3438 = vrot.slane %v3371, 1
      %v3439 = vsel %vm691, %v3436, %v3438
      %v3440 = vrot.slane %v3372, 1
      %v3441 = vsel %vm691, %v3438, %v3440
      %v3442 = vrot.slane %v3373, 1
      %v3443 = vsel %vm691, %v3440, %v3442
      %v3444 = vrot.slane %v3374, 1
      %v3445 = vsel %vm691, %v3442, %v3444
      %v3446 = vrot.slane %v3375, 1
      %v3447 = vsel %vm691, %v3444, %v3446
      %v3448 = vrot.slane %v3376, 1
      %v3449 = vsel %vm691, %v3446, %v3448
      %v3450 = vrot.slane %v3377, 1
      %v3451 = vsel %vm691, %v3448, %v3450
      %v3452 = vrot.slane %v3378, 1
      %v3453 = vsel %vm691, %v3450, %v3452
      %v3454 = vrot.slane %v3379, 1
      %v3455 = vsel %vm691, %v3452, %v3454
      %v3456 = vrot.slane %v3380, 1
      %v3457 = vsel %vm691, %v3454, %v3456
      %v3458 = vrot.slane %v3381, 1
      %v3459 = vsel %vm691, %v3456, %v3458
      %v3460 = vrot.slane %v3382, 1
      %v3461 = vsel %vm691, %v3458, %v3460
      %v3462 = vrot.slane %v3383, 1
      %v3463 = vsel %vm691, %v3460, %v3462
      %v3464 = vrot.slane %v3384, 1
      %v3465 = vsel %vm691, %v3462, %v3464
      %v3466 = vrot.slane %v3385, 1
      %v3467 = vsel %vm691, %v3464, %v3466
      %v3468 = vrot.slane %v3386, 1
      %v3469 = vsel %vm691, %v3466, %v3468
      %v3470 = vrot.slane %v3387, 1
      %v3471 = vsel %vm691, %v3468, %v3470
      %v3472 = vrot.slane %v3388, 1
      %v3473 = vsel %vm691, %v3470, %v3472
      %v3474 = vrot.slane %v3389, 1
      %v3475 = vsel %vm691, %v3472, %v3474
      %v3476 = vrot.slane %v3390, 1
      %v3477 = vsel %vm691, %v3474, %v3476
      %v3478 = vrot.slane %v3391, 1
      %v3479 = vsel %vm691, %v3476, %v3478
      %v3480 = vrot.slane %v3392, 1
      %v3481 = vsel %vm691, %v3478, %v3480
      %v3482 = vrot.slane %v3393, 1
      %v3483 = vsel %vm691, %v3480, %v3482
      %v3484 = vrot.slane %v3394, 1
      %v3485 = vsel %vm691, %v3482, %v3484
      %v3486 = vrot.slane %v3395, 1
      %v3487 = vsel %vm691, %v3484, %v3486
      %v3488 = vrot.slane %v3396, 1
      %v3489 = vsel %vm691, %v3486, %v3488
      %v3490 = vrot.slane %v3397, 1
      %v3491 = vsel %vm691, %v3488, %v3490
      %v3492 = vrot.slane %v3398, 1
      %v3493 = vsel %vm691, %v3490, %v3492
      %v3494 = vsel %vm691, %v3492, %v2067
      %v3527 = vrot.slane %v3367, 2
      %v3528 = vrot.slane %v3368, 2
      %v3529 = vsel %vm892, %v3527, %v3528
      %v3530 = vrot.slane %v3369, 2
      %v3531 = vsel %vm892, %v3528, %v3530
      %v3532 = vrot.slane %v3370, 2
      %v3533 = vsel %vm892, %v3530, %v3532
      %v3534 = vrot.slane %v3371, 2
      %v3535 = vsel %vm892, %v3532, %v3534
      %v3536 = vrot.slane %v3372, 2
      %v3537 = vsel %vm892, %v3534, %v3536
      %v3538 = vrot.slane %v3373, 2
      %v3539 = vsel %vm892, %v3536, %v3538
      %v3540 = vrot.slane %v3374, 2
      %v3541 = vsel %vm892, %v3538, %v3540
      %v3542 = vrot.slane %v3375, 2
      %v3543 = vsel %vm892, %v3540, %v3542
      %v3544 = vrot.slane %v3376, 2
      %v3545 = vsel %vm892, %v3542, %v3544
      %v3546 = vrot.slane %v3377, 2
      %v3547 = vsel %vm892, %v3544, %v3546
      %v3548 = vrot.slane %v3378, 2
      %v3549 = vsel %vm892, %v3546, %v3548
      %v3550 = vrot.slane %v3379, 2
      %v3551 = vsel %vm892, %v3548, %v3550
      %v3552 = vrot.slane %v3380, 2
      %v3553 = vsel %vm892, %v3550, %v3552
      %v3554 = vrot.slane %v3381, 2
      %v3555 = vsel %vm892, %v3552, %v3554
      %v3556 = vrot.slane %v3382, 2
      %v3557 = vsel %vm892, %v3554, %v3556
      %v3558 = vrot.slane %v3383, 2
      %v3559 = vsel %vm892, %v3556, %v3558
      %v3560 = vrot.slane %v3384, 2
      %v3561 = vsel %vm892, %v3558, %v3560
      %v3562 = vrot.slane %v3385, 2
      %v3563 = vsel %vm892, %v3560, %v3562
      %v3564 = vrot.slane %v3386, 2
      %v3565 = vsel %vm892, %v3562, %v3564
      %v3566 = vrot.slane %v3387, 2
      %v3567 = vsel %vm892, %v3564, %v3566
      %v3568 = vrot.slane %v3388, 2
      %v3569 = vsel %vm892, %v3566, %v3568
      %v3570 = vrot.slane %v3389, 2
      %v3571 = vsel %vm892, %v3568, %v3570
      %v3572 = vrot.slane %v3390, 2
      %v3573 = vsel %vm892, %v3570, %v3572
      %v3574 = vrot.slane %v3391, 2
      %v3575 = vsel %vm892, %v3572, %v3574
      %v3576 = vrot.slane %v3392, 2
      %v3577 = vsel %vm892, %v3574, %v3576
      %v3578 = vrot.slane %v3393, 2
      %v3579 = vsel %vm892, %v3576, %v3578
      %v3580 = vrot.slane %v3394, 2
      %v3581 = vsel %vm892, %v3578, %v3580
      %v3582 = vrot.slane %v3395, 2
      %v3583 = vsel %vm892, %v3580, %v3582
      %v3584 = vrot.slane %v3396, 2
      %v3585 = vsel %vm892, %v3582, %v3584
      %v3586 = vrot.slane %v3397, 2
      %v3587 = vsel %vm892, %v3584, %v3586
      %v3588 = vrot.slane %v3398, 2
      %v3589 = vsel %vm892, %v3586, %v3588
      %v3590 = vsel %vm892, %v3588, %v2164
      %v3623 = vld [vmem:[%s5] sm:$0xff]
      %v3624 = vld [vmem:[%s5 + $0x8] sm:$0xff]
      %v3625 = vld [vmem:[%s5 + $0x10] sm:$0xff]
      %v3626 = vld [vmem:[%s5 + $0x18] sm:$0xff]
      %v3627 = vld [vmem:[%s5 + $0x20] sm:$0xff]
      %v3628 = vld [vmem:[%s5 + $0x28] sm:$0xff]
      %v3629 = vld [vmem:[%s5 + $0x30] sm:$0xff]
      %v3630 = vld [vmem:[%s5 + $0x38] sm:$0xff]
      %v3631 = vld [vmem:[%s5 + $0x40] sm:$0xff]
      %v3632 = vld [vmem:[%s5 + $0x48] sm:$0xff]
      %v3633 = vld [vmem:[%s5 + $0x50] sm:$0xff]
      %v3634 = vld [vmem:[%s5 + $0x58] sm:$0xff]
      %v3635 = vld [vmem:[%s5 + $0x60] sm:$0xff]
      %v3636 = vld [vmem:[%s5 + $0x68] sm:$0xff]
      %v3637 = vld [vmem:[%s5 + $0x70] sm:$0xff]
      %v3638 = vld [vmem:[%s5 + $0x78] sm:$0xff]
      %v3639 = vld [vmem:[%s5 + $0x80] sm:$0xff]
      %v3640 = vld [vmem:[%s5 + $0x88] sm:$0xff]
      %v3641 = vld [vmem:[%s5 + $0x90] sm:$0xff]
      %v3642 = vld [vmem:[%s5 + $0x98] sm:$0xff]
      %v3643 = vld [vmem:[%s5 + $0xa0] sm:$0xff]
      %v3644 = vld [vmem:[%s5 + $0xa8] sm:$0xff]
      %v3645 = vld [vmem:[%s5 + $0xb0] sm:$0xff]
      %v3646 = vld [vmem:[%s5 + $0xb8] sm:$0xff]
      %v3647 = vld [vmem:[%s5 + $0xc0] sm:$0xff]
      %v3648 = vld [vmem:[%s5 + $0xc8] sm:$0xff]
      %v3649 = vld [vmem:[%s5 + $0xd0] sm:$0xff]
      %v3650 = vld [vmem:[%s5 + $0xd8] sm:$0xff]
      %v3651 = vld [vmem:[%s5 + $0xe0] sm:$0xff]
      %v3652 = vld [vmem:[%s5 + $0xe8] sm:$0xff]
      %v3653 = vld [vmem:[%s5 + $0xf0] sm:$0xff]
      %v3654 = vld [vmem:[%s5 + $0xf8] sm:$0xff]
      %v3655 = vld [vmem:[%s5 + $0x100] sm:$0xff]
      %v3656 = vld [vmem:[%s5 + $0x108] sm:$0xff]
      %v3657 = vld [vmem:[%s5 + $0x110] sm:$0xff]
      %v3658 = vld [vmem:[%s5 + $0x118] sm:$0xff]
      %v3659 = vld [vmem:[%s5 + $0x120] sm:$0xff]
      %v3660 = vld [vmem:[%s5 + $0x128] sm:$0xff]
      %v3661 = vld [vmem:[%s5 + $0x130] sm:$0xff]
      %v3662 = vld [vmem:[%s5 + $0x138] sm:$0xff]
      %v3663 = vld [vmem:[%s5 + $0x140] sm:$0xff]
      %v3664 = vld [vmem:[%s5 + $0x148] sm:$0xff]
      %v3665 = vld [vmem:[%s5 + $0x150] sm:$0xff]
      %v3666 = vld [vmem:[%s5 + $0x158] sm:$0xff]
      %v3667 = vld [vmem:[%s5 + $0x160] sm:$0xff]
      %v3668 = vld [vmem:[%s5 + $0x168] sm:$0xff]
      %v3669 = vld [vmem:[%s5 + $0x170] sm:$0xff]
      %v3670 = vld [vmem:[%s5 + $0x178] sm:$0xff]
      %v3671 = vld [vmem:[%s5 + $0x180] sm:$0xff]
      %v3672 = vld [vmem:[%s5 + $0x188] sm:$0xff]
      %v3673 = vld [vmem:[%s5 + $0x190] sm:$0xff]
      %v3674 = vld [vmem:[%s5 + $0x198] sm:$0xff]
      %v3675 = vld [vmem:[%s5 + $0x1a0] sm:$0xff]
      %v3676 = vld [vmem:[%s5 + $0x1a8] sm:$0xff]
      %v3677 = vld [vmem:[%s5 + $0x1b0] sm:$0xff]
      %v3678 = vld [vmem:[%s5 + $0x1b8] sm:$0xff]
      %v3679 = vld [vmem:[%s5 + $0x1c0] sm:$0xff]
      %v3680 = vld [vmem:[%s5 + $0x1c8] sm:$0xff]
      %v3681 = vld [vmem:[%s5 + $0x1d0] sm:$0xff]
      %v3682 = vld [vmem:[%s5 + $0x1d8] sm:$0xff]
      %v3683 = vld [vmem:[%s5 + $0x1e0] sm:$0xff]
      %v3684 = vld [vmem:[%s5 + $0x1e8] sm:$0xff]
      %v3685 = vld [vmem:[%s5 + $0x1f0] sm:$0xff]
      %v3686 = vld [vmem:[%s5 + $0x1f8] sm:$0xff]
      %v3687 = vld [vmem:[%s5 + $0x200] sm:$0xff]
      %v3688 = vld [vmem:[%s5 + $0x208] sm:$0xff]
      %v3689 = vld [vmem:[%s5 + $0x210] sm:$0xff]
      %v3690 = vld [vmem:[%s5 + $0x218] sm:$0xff]
      %v3691 = vld [vmem:[%s5 + $0x220] sm:$0xff]
      %v3692 = vld [vmem:[%s5 + $0x228] sm:$0xff]
      %v3693 = vld [vmem:[%s5 + $0x230] sm:$0xff]
      %v3694 = vld [vmem:[%s5 + $0x238] sm:$0xff]
      %v3695 = vld [vmem:[%s5 + $0x240] sm:$0xff]
      %v3696 = vld [vmem:[%s5 + $0x248] sm:$0xff]
      %v3697 = vld [vmem:[%s5 + $0x250] sm:$0xff]
      %v3698 = vld [vmem:[%s5 + $0x258] sm:$0xff]
      %v3699 = vld [vmem:[%s5 + $0x260] sm:$0xff]
      %v3700 = vld [vmem:[%s5 + $0x268] sm:$0xff]
      %v3701 = vld [vmem:[%s5 + $0x270] sm:$0xff]
      %v3702 = vld [vmem:[%s5 + $0x278] sm:$0xff]
      %v3703 = vld [vmem:[%s5 + $0x280] sm:$0xff]
      %v3704 = vld [vmem:[%s5 + $0x288] sm:$0xff]
      %v3705 = vld [vmem:[%s5 + $0x290] sm:$0xff]
      %v3706 = vld [vmem:[%s5 + $0x298] sm:$0xff]
      %v3707 = vld [vmem:[%s5 + $0x2a0] sm:$0xff]
      %v3708 = vld [vmem:[%s5 + $0x2a8] sm:$0xff]
      %v3709 = vld [vmem:[%s5 + $0x2b0] sm:$0xff]
      %v3710 = vld [vmem:[%s5 + $0x2b8] sm:$0xff]
      %v3711 = vld [vmem:[%s5 + $0x2c0] sm:$0xff]
      %v3712 = vld [vmem:[%s5 + $0x2c8] sm:$0xff]
      %v3713 = vld [vmem:[%s5 + $0x2d0] sm:$0xff]
      %v3714 = vld [vmem:[%s5 + $0x2d8] sm:$0xff]
      %v3715 = vld [vmem:[%s5 + $0x2e0] sm:$0xff]
      %v3716 = vld [vmem:[%s5 + $0x2e8] sm:$0xff]
      %v3717 = vld [vmem:[%s5 + $0x2f0] sm:$0xff]
      %v3718 = vld [vmem:[%s5 + $0x2f8] sm:$0xff]
      %v3719 = vld [vmem:[%s5 + $0x300] sm:$0xff]
      %v3720 = vld [vmem:[%s5 + $0x308] sm:$0xff]
      %v3721 = vld [vmem:[%s5 + $0x310] sm:$0xff]
      %v3722 = vld [vmem:[%s5 + $0x318] sm:$0xff]
      %v3723 = vld [vmem:[%s5 + $0x320] sm:$0xff]
      %v3724 = vld [vmem:[%s5 + $0x328] sm:$0xff]
      %v3725 = vld [vmem:[%s5 + $0x330] sm:$0xff]
      %v3726 = vld [vmem:[%s5 + $0x338] sm:$0xff]
      %v3727 = vld [vmem:[%s5 + $0x340] sm:$0xff]
      %v3728 = vld [vmem:[%s5 + $0x348] sm:$0xff]
      %v3729 = vld [vmem:[%s5 + $0x350] sm:$0xff]
      %v3730 = vld [vmem:[%s5 + $0x358] sm:$0xff]
      %v3731 = vld [vmem:[%s5 + $0x360] sm:$0xff]
      %v3732 = vld [vmem:[%s5 + $0x368] sm:$0xff]
      %v3733 = vld [vmem:[%s5 + $0x370] sm:$0xff]
      %v3734 = vld [vmem:[%s5 + $0x378] sm:$0xff]
      %v3735 = vld [vmem:[%s5 + $0x380] sm:$0xff]
      %v3736 = vld [vmem:[%s5 + $0x388] sm:$0xff]
      %v3737 = vld [vmem:[%s5 + $0x390] sm:$0xff]
      %v3738 = vld [vmem:[%s5 + $0x398] sm:$0xff]
      %v3739 = vld [vmem:[%s5 + $0x3a0] sm:$0xff]
      %v3740 = vld [vmem:[%s5 + $0x3a8] sm:$0xff]
      %v3741 = vld [vmem:[%s5 + $0x3b0] sm:$0xff]
      %v3742 = vld [vmem:[%s5 + $0x3b8] sm:$0xff]
      %v3743 = vld [vmem:[%s5 + $0x3c0] sm:$0xff]
      %v3744 = vld [vmem:[%s5 + $0x3c8] sm:$0xff]
      %v3745 = vld [vmem:[%s5 + $0x3d0] sm:$0xff]
      %v3746 = vld [vmem:[%s5 + $0x3d8] sm:$0xff]
      %v3747 = vld [vmem:[%s5 + $0x3e0] sm:$0xff]
      %v3748 = vld [vmem:[%s5 + $0x3e8] sm:$0xff]
      %v3749 = vld [vmem:[%s5 + $0x3f0] sm:$0xff]
      %v3750 = vld [vmem:[%s5 + $0x3f8] sm:$0xff]
      %v3751 = vld [vmem:[%s5 + $0x400] sm:$0xff]
      %v3752 = vld [vmem:[%s5 + $0x408] sm:$0xff]
      %v3753 = vld [vmem:[%s5 + $0x410] sm:$0xff]
      %v3754 = vld [vmem:[%s5 + $0x418] sm:$0xff]
      %v3755 = vld [vmem:[%s5 + $0x420] sm:$0xff]
      %v3756 = vld [vmem:[%s5 + $0x428] sm:$0xff]
      %v3757 = vld [vmem:[%s5 + $0x430] sm:$0xff]
      %v3758 = vld [vmem:[%s5 + $0x438] sm:$0xff]
      %v3759 = vld [vmem:[%s5 + $0x440] sm:$0xff]
      %v3760 = vld [vmem:[%s5 + $0x448] sm:$0xff]
      %v3761 = vld [vmem:[%s5 + $0x450] sm:$0xff]
      %v3762 = vld [vmem:[%s5 + $0x458] sm:$0xff]
      %v3763 = vld [vmem:[%s5 + $0x460] sm:$0xff]
      %v3764 = vld [vmem:[%s5 + $0x468] sm:$0xff]
      %v3765 = vld [vmem:[%s5 + $0x470] sm:$0xff]
      %v3766 = vld [vmem:[%s5 + $0x478] sm:$0xff]
      %v3767 = vld [vmem:[%s6] sm:$0x1]
      %v3769 = vperm.slane %v3767, 0
      %3771 = vmatpush.msra.mxu0 %v3638
      %3772 = vmatpush.msra.mxu0 %v3637
      %3773 = vmatpush.msra.mxu0 %v3636
      %3774 = vmatpush.msra.mxu0 %v3635
      %3775 = vmatpush.msra.mxu0 %v3634
      %3776 = vmatpush.msra.mxu0 %v3633
      %3777 = vmatpush.msra.mxu0 %v3632
      %3778 = vmatpush.msra.mxu0 %v3631
      %3779 = vmatpush.msra.mxu0 %v3630
      %3780 = vmatpush.msra.mxu0 %v3629
      %3781 = vmatpush.msra.mxu0 %v3628
      %3782 = vmatpush.msra.mxu0 %v3627
      %3783 = vmatpush.msra.mxu0 %v3626
      %3784 = vmatpush.msra.mxu0 %v3625
      %3785 = vmatpush.msra.mxu0 %v3624
      %3786 = vmatpush.msra.mxu0 %v3623
      %3787 = vmatmul.f32.gmra.mxu0 %v3367
      %v3788 = vpop.f32.mrf.mxu0
      %v3789 = vadd.f32 %v3769, %v3788
      %3790 = vmatmul.f32.gmra.mxu0 %v3368
      %v3791 = vpop.f32.mrf.mxu0
      %v3792 = vadd.f32 %v3769, %v3791
      %3793 = vmatmul.f32.gmra.mxu0 %v3369
      %v3794 = vpop.f32.mrf.mxu0
      %v3795 = vadd.f32 %v3769, %v3794
      %3796 = vmatmul.f32.gmra.mxu0 %v3370
      %v3797 = vpop.f32.mrf.mxu0
      %v3798 = vadd.f32 %v3769, %v3797
      %3799 = vmatmul.f32.gmra.mxu0 %v3371
      %v3800 = vpop.f32.mrf.mxu0
      %v3801 = vadd.f32 %v3769, %v3800
      %3802 = vmatmul.f32.gmra.mxu0 %v3372
      %v3803 = vpop.f32.mrf.mxu0
      %v3804 = vadd.f32 %v3769, %v3803
      %3805 = vmatmul.f32.gmra.mxu0 %v3373
      %v3806 = vpop.f32.mrf.mxu0
      %v3807 = vadd.f32 %v3769, %v3806
      %3808 = vmatmul.f32.gmra.mxu0 %v3374
      %v3809 = vpop.f32.mrf.mxu0
      %v3810 = vadd.f32 %v3769, %v3809
      %3811 = vmatmul.f32.gmra.mxu0 %v3375
      %v3812 = vpop.f32.mrf.mxu0
      %v3813 = vadd.f32 %v3769, %v3812
      %3814 = vmatmul.f32.gmra.mxu0 %v3376
      %v3815 = vpop.f32.mrf.mxu0
      %v3816 = vadd.f32 %v3769, %v3815
      %3817 = vmatmul.f32.gmra.mxu0 %v3377
      %v3818 = vpop.f32.mrf.mxu0
      %v3819 = vadd.f32 %v3769, %v3818
      %3820 = vmatmul.f32.gmra.mxu0 %v3378
      %v3821 = vpop.f32.mrf.mxu0
      %v3822 = vadd.f32 %v3769, %v3821
      %3823 = vmatmul.f32.gmra.mxu0 %v3379
      %v3824 = vpop.f32.mrf.mxu0
      %v3825 = vadd.f32 %v3769, %v3824
      %3826 = vmatmul.f32.gmra.mxu0 %v3380
      %v3827 = vpop.f32.mrf.mxu0
      %v3828 = vadd.f32 %v3769, %v3827
      %3829 = vmatmul.f32.gmra.mxu0 %v3381
      %v3830 = vpop.f32.mrf.mxu0
      %v3831 = vadd.f32 %v3769, %v3830
      %3832 = vmatmul.f32.gmra.mxu0 %v3382
      %v3833 = vpop.f32.mrf.mxu0
      %v3834 = vadd.f32 %v3769, %v3833
      %3835 = vmatmul.f32.gmra.mxu0 %v3383
      %v3836 = vpop.f32.mrf.mxu0
      %v3837 = vadd.f32 %v3769, %v3836
      %3838 = vmatmul.f32.gmra.mxu0 %v3384
      %v3839 = vpop.f32.mrf.mxu0
      %v3840 = vadd.f32 %v3769, %v3839
      %3841 = vmatmul.f32.gmra.mxu0 %v3385
      %v3842 = vpop.f32.mrf.mxu0
      %v3843 = vadd.f32 %v3769, %v3842
      %3844 = vmatmul.f32.gmra.mxu0 %v3386
      %v3845 = vpop.f32.mrf.mxu0
      %v3846 = vadd.f32 %v3769, %v3845
      %3847 = vmatmul.f32.gmra.mxu0 %v3387
      %v3848 = vpop.f32.mrf.mxu0
      %v3849 = vadd.f32 %v3769, %v3848
      %3850 = vmatmul.f32.gmra.mxu0 %v3388
      %v3851 = vpop.f32.mrf.mxu0
      %v3852 = vadd.f32 %v3769, %v3851
      %3853 = vmatmul.f32.gmra.mxu0 %v3389
      %v3854 = vpop.f32.mrf.mxu0
      %v3855 = vadd.f32 %v3769, %v3854
      %3856 = vmatmul.f32.gmra.mxu0 %v3390
      %v3857 = vpop.f32.mrf.mxu0
      %v3858 = vadd.f32 %v3769, %v3857
      %3859 = vmatmul.f32.gmra.mxu0 %v3391
      %v3860 = vpop.f32.mrf.mxu0
      %v3861 = vadd.f32 %v3769, %v3860
      %3862 = vmatmul.f32.gmra.mxu0 %v3392
      %v3863 = vpop.f32.mrf.mxu0
      %v3864 = vadd.f32 %v3769, %v3863
      %3865 = vmatmul.f32.gmra.mxu0 %v3393
      %v3866 = vpop.f32.mrf.mxu0
      %v3867 = vadd.f32 %v3769, %v3866
      %3868 = vmatmul.f32.gmra.mxu0 %v3394
      %v3869 = vpop.f32.mrf.mxu0
      %v3870 = vadd.f32 %v3769, %v3869
      %3871 = vmatmul.f32.gmra.mxu0 %v3395
      %v3872 = vpop.f32.mrf.mxu0
      %v3873 = vadd.f32 %v3769, %v3872
      %3874 = vmatmul.f32.gmra.mxu0 %v3396
      %v3875 = vpop.f32.mrf.mxu0
      %v3876 = vadd.f32 %v3769, %v3875
      %3877 = vmatmul.f32.gmra.mxu0 %v3397
      %v3878 = vpop.f32.mrf.mxu0
      %v3879 = vadd.f32 %v3769, %v3878
      %3880 = vmatmul.f32.gmra.mxu0 %v3398
      %v3881 = vpop.f32.mrf.mxu0
      %v3882 = vadd.f32 %v3769, %v3881
      %3883 = vdwg.mxu0
      %3884 = vmatpush.msra.mxu0 %v3654
      %3885 = vmatpush.msra.mxu0 %v3653
      %3886 = vmatpush.msra.mxu0 %v3652
      %3887 = vmatpush.msra.mxu0 %v3651
      %3888 = vmatpush.msra.mxu0 %v3650
      %3889 = vmatpush.msra.mxu0 %v3649
      %3890 = vmatpush.msra.mxu0 %v3648
      %3891 = vmatpush.msra.mxu0 %v3647
      %3892 = vmatpush.msra.mxu0 %v3646
      %3893 = vmatpush.msra.mxu0 %v3645
      %3894 = vmatpush.msra.mxu0 %v3644
      %3895 = vmatpush.msra.mxu0 %v3643
      %3896 = vmatpush.msra.mxu0 %v3642
      %3897 = vmatpush.msra.mxu0 %v3641
      %3898 = vmatpush.msra.mxu0 %v3640
      %3899 = vmatpush.msra.mxu0 %v3639
      %3900 = vmatmul.f32.gmra.mxu0 %v3433
      %v3901 = vpop.f32.mrf.mxu0
      %v3902 = vadd.f32 %v3789, %v3901
      %3903 = vmatmul.f32.gmra.mxu0 %v3435
      %v3904 = vpop.f32.mrf.mxu0
      %v3905 = vadd.f32 %v3792, %v3904
      %3906 = vmatmul.f32.gmra.mxu0 %v3437
      %v3907 = vpop.f32.mrf.mxu0
      %v3908 = vadd.f32 %v3795, %v3907
      %3909 = vmatmul.f32.gmra.mxu0 %v3439
      %v3910 = vpop.f32.mrf.mxu0
      %v3911 = vadd.f32 %v3798, %v3910
      %3912 = vmatmul.f32.gmra.mxu0 %v3441
      %v3913 = vpop.f32.mrf.mxu0
      %v3914 = vadd.f32 %v3801, %v3913
      %3915 = vmatmul.f32.gmra.mxu0 %v3443
      %v3916 = vpop.f32.mrf.mxu0
      %v3917 = vadd.f32 %v3804, %v3916
      %3918 = vmatmul.f32.gmra.mxu0 %v3445
      %v3919 = vpop.f32.mrf.mxu0
      %v3920 = vadd.f32 %v3807, %v3919
      %3921 = vmatmul.f32.gmra.mxu0 %v3447
      %v3922 = vpop.f32.mrf.mxu0
      %v3923 = vadd.f32 %v3810, %v3922
      %3924 = vmatmul.f32.gmra.mxu0 %v3449
      %v3925 = vpop.f32.mrf.mxu0
      %v3926 = vadd.f32 %v3813, %v3925
      %3927 = vmatmul.f32.gmra.mxu0 %v3451
      %v3928 = vpop.f32.mrf.mxu0
      %v3929 = vadd.f32 %v3816, %v3928
      %3930 = vmatmul.f32.gmra.mxu0 %v3453
      %v3931 = vpop.f32.mrf.mxu0
      %v3932 = vadd.f32 %v3819, %v3931
      %3933 = vmatmul.f32.gmra.mxu0 %v3455
      %v3934 = vpop.f32.mrf.mxu0
      %v3935 = vadd.f32 %v3822, %v3934
      %3936 = vmatmul.f32.gmra.mxu0 %v3457
      %v3937 = vpop.f32.mrf.mxu0
      %v3938 = vadd.f32 %v3825, %v3937
      %3939 = vmatmul.f32.gmra.mxu0 %v3459
      %v3940 = vpop.f32.mrf.mxu0
      %v3941 = vadd.f32 %v3828, %v3940
      %3942 = vmatmul.f32.gmra.mxu0 %v3461
      %v3943 = vpop.f32.mrf.mxu0
      %v3944 = vadd.f32 %v3831, %v3943
      %3945 = vmatmul.f32.gmra.mxu0 %v3463
      %v3946 = vpop.f32.mrf.mxu0
      %v3947 = vadd.f32 %v3834, %v3946
      %3948 = vmatmul.f32.gmra.mxu0 %v3465
      %v3949 = vpop.f32.mrf.mxu0
      %v3950 = vadd.f32 %v3837, %v3949
      %3951 = vmatmul.f32.gmra.mxu0 %v3467
      %v3952 = vpop.f32.mrf.mxu0
      %v3953 = vadd.f32 %v3840, %v3952
      %3954 = vmatmul.f32.gmra.mxu0 %v3469
      %v3955 = vpop.f32.mrf.mxu0
      %v3956 = vadd.f32 %v3843, %v3955
      %3957 = vmatmul.f32.gmra.mxu0 %v3471
      %v3958 = vpop.f32.mrf.mxu0
      %v3959 = vadd.f32 %v3846, %v3958
      %3960 = vmatmul.f32.gmra.mxu0 %v3473
      %v3961 = vpop.f32.mrf.mxu0
      %v3962 = vadd.f32 %v3849, %v3961
      %3963 = vmatmul.f32.gmra.mxu0 %v3475
      %v3964 = vpop.f32.mrf.mxu0
      %v3965 = vadd.f32 %v3852, %v3964
      %3966 = vmatmul.f32.gmra.mxu0 %v3477
      %v3967 = vpop.f32.mrf.mxu0
      %v3968 = vadd.f32 %v3855, %v3967
      %3969 = vmatmul.f32.gmra.mxu0 %v3479
      %v3970 = vpop.f32.mrf.mxu0
      %v3971 = vadd.f32 %v3858, %v3970
      %3972 = vmatmul.f32.gmra.mxu0 %v3481
      %v3973 = vpop.f32.mrf.mxu0
      %v3974 = vadd.f32 %v3861, %v3973
      %3975 = vmatmul.f32.gmra.mxu0 %v3483
      %v3976 = vpop.f32.mrf.mxu0
      %v3977 = vadd.f32 %v3864, %v3976
      %3978 = vmatmul.f32.gmra.mxu0 %v3485
      %v3979 = vpop.f32.mrf.mxu0
      %v3980 = vadd.f32 %v3867, %v3979
      %3981 = vmatmul.f32.gmra.mxu0 %v3487
      %v3982 = vpop.f32.mrf.mxu0
      %v3983 = vadd.f32 %v3870, %v3982
      %3984 = vmatmul.f32.gmra.mxu0 %v3489
      %v3985 = vpop.f32.mrf.mxu0
      %v3986 = vadd.f32 %v3873, %v3985
      %3987 = vmatmul.f32.gmra.mxu0 %v3491
      %v3988 = vpop.f32.mrf.mxu0
      %v3989 = vadd.f32 %v3876, %v3988
      %3990 = vmatmul.f32.gmra.mxu0 %v3493
      %v3991 = vpop.f32.mrf.mxu0
      %v3992 = vadd.f32 %v3879, %v3991
      %3993 = vmatmul.f32.gmra.mxu0 %v3494
      %v3994 = vpop.f32.mrf.mxu0
      %v3995 = vadd.f32 %v3882, %v3994
      %3996 = vdwg.mxu0
      %3997 = vmatpush.msra.mxu0 %v3670
      %3998 = vmatpush.msra.mxu0 %v3669
      %3999 = vmatpush.msra.mxu0 %v3668
      %4000 = vmatpush.msra.mxu0 %v3667
      %4001 = vmatpush.msra.mxu0 %v3666
      %4002 = vmatpush.msra.mxu0 %v3665
      %4003 = vmatpush.msra.mxu0 %v3664
      %4004 = vmatpush.msra.mxu0 %v3663
      %4005 = vmatpush.msra.mxu0 %v3662
      %4006 = vmatpush.msra.mxu0 %v3661
      %4007 = vmatpush.msra.mxu0 %v3660
      %4008 = vmatpush.msra.mxu0 %v3659
      %4009 = vmatpush.msra.mxu0 %v3658
      %4010 = vmatpush.msra.mxu0 %v3657
      %4011 = vmatpush.msra.mxu0 %v3656
      %4012 = vmatpush.msra.mxu0 %v3655
      %4013 = vmatmul.f32.gmra.mxu0 %v3529
      %v4014 = vpop.f32.mrf.mxu0
      %v4015 = vadd.f32 %v3902, %v4014
      %4016 = vmatmul.f32.gmra.mxu0 %v3531
      %v4017 = vpop.f32.mrf.mxu0
      %v4018 = vadd.f32 %v3905, %v4017
      %4019 = vmatmul.f32.gmra.mxu0 %v3533
      %v4020 = vpop.f32.mrf.mxu0
      %v4021 = vadd.f32 %v3908, %v4020
      %4022 = vmatmul.f32.gmra.mxu0 %v3535
      %v4023 = vpop.f32.mrf.mxu0
      %v4024 = vadd.f32 %v3911, %v4023
      %4025 = vmatmul.f32.gmra.mxu0 %v3537
      %v4026 = vpop.f32.mrf.mxu0
      %v4027 = vadd.f32 %v3914, %v4026
      %4028 = vmatmul.f32.gmra.mxu0 %v3539
      %v4029 = vpop.f32.mrf.mxu0
      %v4030 = vadd.f32 %v3917, %v4029
      %4031 = vmatmul.f32.gmra.mxu0 %v3541
      %v4032 = vpop.f32.mrf.mxu0
      %v4033 = vadd.f32 %v3920, %v4032
      %4034 = vmatmul.f32.gmra.mxu0 %v3543
      %v4035 = vpop.f32.mrf.mxu0
      %v4036 = vadd.f32 %v3923, %v4035
      %4037 = vmatmul.f32.gmra.mxu0 %v3545
      %v4038 = vpop.f32.mrf.mxu0
      %v4039 = vadd.f32 %v3926, %v4038
      %4040 = vmatmul.f32.gmra.mxu0 %v3547
      %v4041 = vpop.f32.mrf.mxu0
      %v4042 = vadd.f32 %v3929, %v4041
      %4043 = vmatmul.f32.gmra.mxu0 %v3549
      %v4044 = vpop.f32.mrf.mxu0
      %v4045 = vadd.f32 %v3932, %v4044
      %4046 = vmatmul.f32.gmra.mxu0 %v3551
      %v4047 = vpop.f32.mrf.mxu0
      %v4048 = vadd.f32 %v3935, %v4047
      %4049 = vmatmul.f32.gmra.mxu0 %v3553
      %v4050 = vpop.f32.mrf.mxu0
      %v4051 = vadd.f32 %v3938, %v4050
      %4052 = vmatmul.f32.gmra.mxu0 %v3555
      %v4053 = vpop.f32.mrf.mxu0
      %v4054 = vadd.f32 %v3941, %v4053
      %4055 = vmatmul.f32.gmra.mxu0 %v3557
      %v4056 = vpop.f32.mrf.mxu0
      %v4057 = vadd.f32 %v3944, %v4056
      %4058 = vmatmul.f32.gmra.mxu0 %v3559
      %v4059 = vpop.f32.mrf.mxu0
      %v4060 = vadd.f32 %v3947, %v4059
      %4061 = vmatmul.f32.gmra.mxu0 %v3561
      %v4062 = vpop.f32.mrf.mxu0
      %v4063 = vadd.f32 %v3950, %v4062
      %4064 = vmatmul.f32.gmra.mxu0 %v3563
      %v4065 = vpop.f32.mrf.mxu0
      %v4066 = vadd.f32 %v3953, %v4065
      %4067 = vmatmul.f32.gmra.mxu0 %v3565
      %v4068 = vpop.f32.mrf.mxu0
      %v4069 = vadd.f32 %v3956, %v4068
      %4070 = vmatmul.f32.gmra.mxu0 %v3567
      %v4071 = vpop.f32.mrf.mxu0
      %v4072 = vadd.f32 %v3959, %v4071
      %4073 = vmatmul.f32.gmra.mxu0 %v3569
      %v4074 = vpop.f32.mrf.mxu0
      %v4075 = vadd.f32 %v3962, %v4074
      %4076 = vmatmul.f32.gmra.mxu0 %v3571
      %v4077 = vpop.f32.mrf.mxu0
      %v4078 = vadd.f32 %v3965, %v4077
      %4079 = vmatmul.f32.gmra.mxu0 %v3573
      %v4080 = vpop.f32.mrf.mxu0
      %v4081 = vadd.f32 %v3968, %v4080
      %4082 = vmatmul.f32.gmra.mxu0 %v3575
      %v4083 = vpop.f32.mrf.mxu0
      %v4084 = vadd.f32 %v3971, %v4083
      %4085 = vmatmul.f32.gmra.mxu0 %v3577
      %v4086 = vpop.f32.mrf.mxu0
      %v4087 = vadd.f32 %v3974, %v4086
      %4088 = vmatmul.f32.gmra.mxu0 %v3579
      %v4089 = vpop.f32.mrf.mxu0
      %v4090 = vadd.f32 %v3977, %v4089
      %4091 = vmatmul.f32.gmra.mxu0 %v3581
      %v4092 = vpop.f32.mrf.mxu0
      %v4093 = vadd.f32 %v3980, %v4092
      %4094 = vmatmul.f32.gmra.mxu0 %v3583
      %v4095 = vpop.f32.mrf.mxu0
      %v4096 = vadd.f32 %v3983, %v4095
      %4097 = vmatmul.f32.gmra.mxu0 %v3585
      %v4098 = vpop.f32.mrf.mxu0
      %v4099 = vadd.f32 %v3986, %v4098
      %4100 = vmatmul.f32.gmra.mxu0 %v3587
      %v4101 = vpop.f32.mrf.mxu0
      %v4102 = vadd.f32 %v3989, %v4101
      %4103 = vmatmul.f32.gmra.mxu0 %v3589
      %v4104 = vpop.f32.mrf.mxu0
      %v4105 = vadd.f32 %v3992, %v4104
      %4106 = vmatmul.f32.gmra.mxu0 %v3590
      %v4107 = vpop.f32.mrf.mxu0
      %v4108 = vadd.f32 %v3995, %v4107
      %4109 = vdwg.mxu0
      %4110 = vmatpush.msra.mxu0 %v3686
      %4111 = vmatpush.msra.mxu0 %v3685
      %4112 = vmatpush.msra.mxu0 %v3684
      %4113 = vmatpush.msra.mxu0 %v3683
      %4114 = vmatpush.msra.mxu0 %v3682
      %4115 = vmatpush.msra.mxu0 %v3681
      %4116 = vmatpush.msra.mxu0 %v3680
      %4117 = vmatpush.msra.mxu0 %v3679
      %4118 = vmatpush.msra.mxu0 %v3678
      %4119 = vmatpush.msra.mxu0 %v3677
      %4120 = vmatpush.msra.mxu0 %v3676
      %4121 = vmatpush.msra.mxu0 %v3675
      %4122 = vmatpush.msra.mxu0 %v3674
      %4123 = vmatpush.msra.mxu0 %v3673
      %4124 = vmatpush.msra.mxu0 %v3672
      %4125 = vmatpush.msra.mxu0 %v3671
      %4126 = vmatmul.f32.gmra.mxu0 %v3369
      %v4127 = vpop.f32.mrf.mxu0
      %v4128 = vadd.f32 %v4015, %v4127
      %4129 = vmatmul.f32.gmra.mxu0 %v3370
      %v4130 = vpop.f32.mrf.mxu0
      %v4131 = vadd.f32 %v4018, %v4130
      %4132 = vmatmul.f32.gmra.mxu0 %v3371
      %v4133 = vpop.f32.mrf.mxu0
      %v4134 = vadd.f32 %v4021, %v4133
      %4135 = vmatmul.f32.gmra.mxu0 %v3372
      %v4136 = vpop.f32.mrf.mxu0
      %v4137 = vadd.f32 %v4024, %v4136
      %4138 = vmatmul.f32.gmra.mxu0 %v3373
      %v4139 = vpop.f32.mrf.mxu0
      %v4140 = vadd.f32 %v4027, %v4139
      %4141 = vmatmul.f32.gmra.mxu0 %v3374
      %v4142 = vpop.f32.mrf.mxu0
      %v4143 = vadd.f32 %v4030, %v4142
      %4144 = vmatmul.f32.gmra.mxu0 %v3375
      %v4145 = vpop.f32.mrf.mxu0
      %v4146 = vadd.f32 %v4033, %v4145
      %4147 = vmatmul.f32.gmra.mxu0 %v3376
      %v4148 = vpop.f32.mrf.mxu0
      %v4149 = vadd.f32 %v4036, %v4148
      %4150 = vmatmul.f32.gmra.mxu0 %v3377
      %v4151 = vpop.f32.mrf.mxu0
      %v4152 = vadd.f32 %v4039, %v4151
      %4153 = vmatmul.f32.gmra.mxu0 %v3378
      %v4154 = vpop.f32.mrf.mxu0
      %v4155 = vadd.f32 %v4042, %v4154
      %4156 = vmatmul.f32.gmra.mxu0 %v3379
      %v4157 = vpop.f32.mrf.mxu0
      %v4158 = vadd.f32 %v4045, %v4157
      %4159 = vmatmul.f32.gmra.mxu0 %v3380
      %v4160 = vpop.f32.mrf.mxu0
      %v4161 = vadd.f32 %v4048, %v4160
      %4162 = vmatmul.f32.gmra.mxu0 %v3381
      %v4163 = vpop.f32.mrf.mxu0
      %v4164 = vadd.f32 %v4051, %v4163
      %4165 = vmatmul.f32.gmra.mxu0 %v3382
      %v4166 = vpop.f32.mrf.mxu0
      %v4167 = vadd.f32 %v4054, %v4166
      %4168 = vmatmul.f32.gmra.mxu0 %v3383
      %v4169 = vpop.f32.mrf.mxu0
      %v4170 = vadd.f32 %v4057, %v4169
      %4171 = vmatmul.f32.gmra.mxu0 %v3384
      %v4172 = vpop.f32.mrf.mxu0
      %v4173 = vadd.f32 %v4060, %v4172
      %4174 = vmatmul.f32.gmra.mxu0 %v3385
      %v4175 = vpop.f32.mrf.mxu0
      %v4176 = vadd.f32 %v4063, %v4175
      %4177 = vmatmul.f32.gmra.mxu0 %v3386
      %v4178 = vpop.f32.mrf.mxu0
      %v4179 = vadd.f32 %v4066, %v4178
      %4180 = vmatmul.f32.gmra.mxu0 %v3387
      %v4181 = vpop.f32.mrf.mxu0
      %v4182 = vadd.f32 %v4069, %v4181
      %4183 = vmatmul.f32.gmra.mxu0 %v3388
      %v4184 = vpop.f32.mrf.mxu0
      %v4185 = vadd.f32 %v4072, %v4184
      %4186 = vmatmul.f32.gmra.mxu0 %v3389
      %v4187 = vpop.f32.mrf.mxu0
      %v4188 = vadd.f32 %v4075, %v4187
      %4189 = vmatmul.f32.gmra.mxu0 %v3390
      %v4190 = vpop.f32.mrf.mxu0
      %v4191 = vadd.f32 %v4078, %v4190
      %4192 = vmatmul.f32.gmra.mxu0 %v3391
      %v4193 = vpop.f32.mrf.mxu0
      %v4194 = vadd.f32 %v4081, %v4193
      %4195 = vmatmul.f32.gmra.mxu0 %v3392
      %v4196 = vpop.f32.mrf.mxu0
      %v4197 = vadd.f32 %v4084, %v4196
      %4198 = vmatmul.f32.gmra.mxu0 %v3393
      %v4199 = vpop.f32.mrf.mxu0
      %v4200 = vadd.f32 %v4087, %v4199
      %4201 = vmatmul.f32.gmra.mxu0 %v3394
      %v4202 = vpop.f32.mrf.mxu0
      %v4203 = vadd.f32 %v4090, %v4202
      %4204 = vmatmul.f32.gmra.mxu0 %v3395
      %v4205 = vpop.f32.mrf.mxu0
      %v4206 = vadd.f32 %v4093, %v4205
      %4207 = vmatmul.f32.gmra.mxu0 %v3396
      %v4208 = vpop.f32.mrf.mxu0
      %v4209 = vadd.f32 %v4096, %v4208
      %4210 = vmatmul.f32.gmra.mxu0 %v3397
      %v4211 = vpop.f32.mrf.mxu0
      %v4212 = vadd.f32 %v4099, %v4211
      %4213 = vmatmul.f32.gmra.mxu0 %v3398
      %v4214 = vpop.f32.mrf.mxu0
      %v4215 = vadd.f32 %v4102, %v4214
      %4216 = vmatmul.f32.gmra.mxu0 0.0
      %v4217 = vpop.f32.mrf.mxu0
      %v4218 = vadd.f32 %v4105, %v4217
      %4219 = vmatmul.f32.gmra.mxu0 0.0
      %v4220 = vpop.f32.mrf.mxu0
      %v4221 = vadd.f32 %v4108, %v4220
      %4222 = vdwg.mxu0
      %4223 = vmatpush.msra.mxu0 %v3702
      %4224 = vmatpush.msra.mxu0 %v3701
      %4225 = vmatpush.msra.mxu0 %v3700
      %4226 = vmatpush.msra.mxu0 %v3699
      %4227 = vmatpush.msra.mxu0 %v3698
      %4228 = vmatpush.msra.mxu0 %v3697
      %4229 = vmatpush.msra.mxu0 %v3696
      %4230 = vmatpush.msra.mxu0 %v3695
      %4231 = vmatpush.msra.mxu0 %v3694
      %4232 = vmatpush.msra.mxu0 %v3693
      %4233 = vmatpush.msra.mxu0 %v3692
      %4234 = vmatpush.msra.mxu0 %v3691
      %4235 = vmatpush.msra.mxu0 %v3690
      %4236 = vmatpush.msra.mxu0 %v3689
      %4237 = vmatpush.msra.mxu0 %v3688
      %4238 = vmatpush.msra.mxu0 %v3687
      %4239 = vmatmul.f32.gmra.mxu0 %v3437
      %v4240 = vpop.f32.mrf.mxu0
      %v4241 = vadd.f32 %v4128, %v4240
      %4242 = vmatmul.f32.gmra.mxu0 %v3439
      %v4243 = vpop.f32.mrf.mxu0
      %v4244 = vadd.f32 %v4131, %v4243
      %4245 = vmatmul.f32.gmra.mxu0 %v3441
      %v4246 = vpop.f32.mrf.mxu0
      %v4247 = vadd.f32 %v4134, %v4246
      %4248 = vmatmul.f32.gmra.mxu0 %v3443
      %v4249 = vpop.f32.mrf.mxu0
      %v4250 = vadd.f32 %v4137, %v4249
      %4251 = vmatmul.f32.gmra.mxu0 %v3445
      %v4252 = vpop.f32.mrf.mxu0
      %v4253 = vadd.f32 %v4140, %v4252
      %4254 = vmatmul.f32.gmra.mxu0 %v3447
      %v4255 = vpop.f32.mrf.mxu0
      %v4256 = vadd.f32 %v4143, %v4255
      %4257 = vmatmul.f32.gmra.mxu0 %v3449
      %v4258 = vpop.f32.mrf.mxu0
      %v4259 = vadd.f32 %v4146, %v4258
      %4260 = vmatmul.f32.gmra.mxu0 %v3451
      %v4261 = vpop.f32.mrf.mxu0
      %v4262 = vadd.f32 %v4149, %v4261
      %4263 = vmatmul.f32.gmra.mxu0 %v3453
      %v4264 = vpop.f32.mrf.mxu0
      %v4265 = vadd.f32 %v4152, %v4264
      %4266 = vmatmul.f32.gmra.mxu0 %v3455
      %v4267 = vpop.f32.mrf.mxu0
      %v4268 = vadd.f32 %v4155, %v4267
      %4269 = vmatmul.f32.gmra.mxu0 %v3457
      %v4270 = vpop.f32.mrf.mxu0
      %v4271 = vadd.f32 %v4158, %v4270
      %4272 = vmatmul.f32.gmra.mxu0 %v3459
      %v4273 = vpop.f32.mrf.mxu0
      %v4274 = vadd.f32 %v4161, %v4273
      %4275 = vmatmul.f32.gmra.mxu0 %v3461
      %v4276 = vpop.f32.mrf.mxu0
      %v4277 = vadd.f32 %v4164, %v4276
      %4278 = vmatmul.f32.gmra.mxu0 %v3463
      %v4279 = vpop.f32.mrf.mxu0
      %v4280 = vadd.f32 %v4167, %v4279
      %4281 = vmatmul.f32.gmra.mxu0 %v3465
      %v4282 = vpop.f32.mrf.mxu0
      %v4283 = vadd.f32 %v4170, %v4282
      %4284 = vmatmul.f32.gmra.mxu0 %v3467
      %v4285 = vpop.f32.mrf.mxu0
      %v4286 = vadd.f32 %v4173, %v4285
      %4287 = vmatmul.f32.gmra.mxu0 %v3469
      %v4288 = vpop.f32.mrf.mxu0
      %v4289 = vadd.f32 %v4176, %v4288
      %4290 = vmatmul.f32.gmra.mxu0 %v3471
      %v4291 = vpop.f32.mrf.mxu0
      %v4292 = vadd.f32 %v4179, %v4291
      %4293 = vmatmul.f32.gmra.mxu0 %v3473
      %v4294 = vpop.f32.mrf.mxu0
      %v4295 = vadd.f32 %v4182, %v4294
      %4296 = vmatmul.f32.gmra.mxu0 %v3475
      %v4297 = vpop.f32.mrf.mxu0
      %v4298 = vadd.f32 %v4185, %v4297
      %4299 = vmatmul.f32.gmra.mxu0 %v3477
      %v4300 = vpop.f32.mrf.mxu0
      %v4301 = vadd.f32 %v4188, %v4300
      %4302 = vmatmul.f32.gmra.mxu0 %v3479
      %v4303 = vpop.f32.mrf.mxu0
      %v4304 = vadd.f32 %v4191, %v4303
      %4305 = vmatmul.f32.gmra.mxu0 %v3481
      %v4306 = vpop.f32.mrf.mxu0
      %v4307 = vadd.f32 %v4194, %v4306
      %4308 = vmatmul.f32.gmra.mxu0 %v3483
      %v4309 = vpop.f32.mrf.mxu0
      %v4310 = vadd.f32 %v4197, %v4309
      %4311 = vmatmul.f32.gmra.mxu0 %v3485
      %v4312 = vpop.f32.mrf.mxu0
      %v4313 = vadd.f32 %v4200, %v4312
      %4314 = vmatmul.f32.gmra.mxu0 %v3487
      %v4315 = vpop.f32.mrf.mxu0
      %v4316 = vadd.f32 %v4203, %v4315
      %4317 = vmatmul.f32.gmra.mxu0 %v3489
      %v4318 = vpop.f32.mrf.mxu0
      %v4319 = vadd.f32 %v4206, %v4318
      %4320 = vmatmul.f32.gmra.mxu0 %v3491
      %v4321 = vpop.f32.mrf.mxu0
      %v4322 = vadd.f32 %v4209, %v4321
      %4323 = vmatmul.f32.gmra.mxu0 %v3493
      %v4324 = vpop.f32.mrf.mxu0
      %v4325 = vadd.f32 %v4212, %v4324
      %4326 = vmatmul.f32.gmra.mxu0 %v3494
      %v4327 = vpop.f32.mrf.mxu0
      %v4328 = vadd.f32 %v4215, %v4327
      %4329 = vmatmul.f32.gmra.mxu0 %v2198
      %v4330 = vpop.f32.mrf.mxu0
      %v4331 = vadd.f32 %v4218, %v4330
      %4332 = vmatmul.f32.gmra.mxu0 %v2198
      %v4333 = vpop.f32.mrf.mxu0
      %v4334 = vadd.f32 %v4221, %v4333
      %4335 = vdwg.mxu0
      %4336 = vmatpush.msra.mxu0 %v3718
      %4337 = vmatpush.msra.mxu0 %v3717
      %4338 = vmatpush.msra.mxu0 %v3716
      %4339 = vmatpush.msra.mxu0 %v3715
      %4340 = vmatpush.msra.mxu0 %v3714
      %4341 = vmatpush.msra.mxu0 %v3713
      %4342 = vmatpush.msra.mxu0 %v3712
      %4343 = vmatpush.msra.mxu0 %v3711
      %4344 = vmatpush.msra.mxu0 %v3710
      %4345 = vmatpush.msra.mxu0 %v3709
      %4346 = vmatpush.msra.mxu0 %v3708
      %4347 = vmatpush.msra.mxu0 %v3707
      %4348 = vmatpush.msra.mxu0 %v3706
      %4349 = vmatpush.msra.mxu0 %v3705
      %4350 = vmatpush.msra.mxu0 %v3704
      %4351 = vmatpush.msra.mxu0 %v3703
      %4352 = vmatmul.f32.gmra.mxu0 %v3533
      %v4353 = vpop.f32.mrf.mxu0
      %v4354 = vadd.f32 %v4241, %v4353
      %4355 = vmatmul.f32.gmra.mxu0 %v3535
      %v4356 = vpop.f32.mrf.mxu0
      %v4357 = vadd.f32 %v4244, %v4356
      %4358 = vmatmul.f32.gmra.mxu0 %v3537
      %v4359 = vpop.f32.mrf.mxu0
      %v4360 = vadd.f32 %v4247, %v4359
      %4361 = vmatmul.f32.gmra.mxu0 %v3539
      %v4362 = vpop.f32.mrf.mxu0
      %v4363 = vadd.f32 %v4250, %v4362
      %4364 = vmatmul.f32.gmra.mxu0 %v3541
      %v4365 = vpop.f32.mrf.mxu0
      %v4366 = vadd.f32 %v4253, %v4365
      %4367 = vmatmul.f32.gmra.mxu0 %v3543
      %v4368 = vpop.f32.mrf.mxu0
      %v4369 = vadd.f32 %v4256, %v4368
      %4370 = vmatmul.f32.gmra.mxu0 %v3545
      %v4371 = vpop.f32.mrf.mxu0
      %v4372 = vadd.f32 %v4259, %v4371
      %4373 = vmatmul.f32.gmra.mxu0 %v3547
      %v4374 = vpop.f32.mrf.mxu0
      %v4375 = vadd.f32 %v4262, %v4374
      %4376 = vmatmul.f32.gmra.mxu0 %v3549
      %v4377 = vpop.f32.mrf.mxu0
      %v4378 = vadd.f32 %v4265, %v4377
      %4379 = vmatmul.f32.gmra.mxu0 %v3551
      %v4380 = vpop.f32.mrf.mxu0
      %v4381 = vadd.f32 %v4268, %v4380
      %4382 = vmatmul.f32.gmra.mxu0 %v3553
      %v4383 = vpop.f32.mrf.mxu0
      %v4384 = vadd.f32 %v4271, %v4383
      %4385 = vmatmul.f32.gmra.mxu0 %v3555
      %v4386 = vpop.f32.mrf.mxu0
      %v4387 = vadd.f32 %v4274, %v4386
      %4388 = vmatmul.f32.gmra.mxu0 %v3557
      %v4389 = vpop.f32.mrf.mxu0
      %v4390 = vadd.f32 %v4277, %v4389
      %4391 = vmatmul.f32.gmra.mxu0 %v3559
      %v4392 = vpop.f32.mrf.mxu0
      %v4393 = vadd.f32 %v4280, %v4392
      %4394 = vmatmul.f32.gmra.mxu0 %v3561
      %v4395 = vpop.f32.mrf.mxu0
      %v4396 = vadd.f32 %v4283, %v4395
      %4397 = vmatmul.f32.gmra.mxu0 %v3563
      %v4398 = vpop.f32.mrf.mxu0
      %v4399 = vadd.f32 %v4286, %v4398
      %4400 = vmatmul.f32.gmra.mxu0 %v3565
      %v4401 = vpop.f32.mrf.mxu0
      %v4402 = vadd.f32 %v4289, %v4401
      %4403 = vmatmul.f32.gmra.mxu0 %v3567
      %v4404 = vpop.f32.mrf.mxu0
      %v4405 = vadd.f32 %v4292, %v4404
      %4406 = vmatmul.f32.gmra.mxu0 %v3569
      %v4407 = vpop.f32.mrf.mxu0
      %v4408 = vadd.f32 %v4295, %v4407
      %4409 = vmatmul.f32.gmra.mxu0 %v3571
      %v4410 = vpop.f32.mrf.mxu0
      %v4411 = vadd.f32 %v4298, %v4410
      %4412 = vmatmul.f32.gmra.mxu0 %v3573
      %v4413 = vpop.f32.mrf.mxu0
      %v4414 = vadd.f32 %v4301, %v4413
      %4415 = vmatmul.f32.gmra.mxu0 %v3575
      %v4416 = vpop.f32.mrf.mxu0
      %v4417 = vadd.f32 %v4304, %v4416
      %4418 = vmatmul.f32.gmra.mxu0 %v3577
      %v4419 = vpop.f32.mrf.mxu0
      %v4420 = vadd.f32 %v4307, %v4419
      %4421 = vmatmul.f32.gmra.mxu0 %v3579
      %v4422 = vpop.f32.mrf.mxu0
      %v4423 = vadd.f32 %v4310, %v4422
      %4424 = vmatmul.f32.gmra.mxu0 %v3581
      %v4425 = vpop.f32.mrf.mxu0
      %v4426 = vadd.f32 %v4313, %v4425
      %4427 = vmatmul.f32.gmra.mxu0 %v3583
      %v4428 = vpop.f32.mrf.mxu0
      %v4429 = vadd.f32 %v4316, %v4428
      %4430 = vmatmul.f32.gmra.mxu0 %v3585
      %v4431 = vpop.f32.mrf.mxu0
      %v4432 = vadd.f32 %v4319, %v4431
      %4433 = vmatmul.f32.gmra.mxu0 %v3587
      %v4434 = vpop.f32.mrf.mxu0
      %v4435 = vadd.f32 %v4322, %v4434
      %4436 = vmatmul.f32.gmra.mxu0 %v3589
      %v4437 = vpop.f32.mrf.mxu0
      %v4438 = vadd.f32 %v4325, %v4437
      %4439 = vmatmul.f32.gmra.mxu0 %v3590
      %v4440 = vpop.f32.mrf.mxu0
      %v4441 = vadd.f32 %v4328, %v4440
      %4442 = vmatmul.f32.gmra.mxu0 %v2200
      %v4443 = vpop.f32.mrf.mxu0
      %v4444 = vadd.f32 %v4331, %v4443
      %4445 = vmatmul.f32.gmra.mxu0 %v2200
      %v4446 = vpop.f32.mrf.mxu0
      %v4447 = vadd.f32 %v4334, %v4446
      %4448 = vdwg.mxu0
      %4449 = vmatpush.msra.mxu0 %v3734
      %4450 = vmatpush.msra.mxu0 %v3733
      %4451 = vmatpush.msra.mxu0 %v3732
      %4452 = vmatpush.msra.mxu0 %v3731
      %4453 = vmatpush.msra.mxu0 %v3730
      %4454 = vmatpush.msra.mxu0 %v3729
      %4455 = vmatpush.msra.mxu0 %v3728
      %4456 = vmatpush.msra.mxu0 %v3727
      %4457 = vmatpush.msra.mxu0 %v3726
      %4458 = vmatpush.msra.mxu0 %v3725
      %4459 = vmatpush.msra.mxu0 %v3724
      %4460 = vmatpush.msra.mxu0 %v3723
      %4461 = vmatpush.msra.mxu0 %v3722
      %4462 = vmatpush.msra.mxu0 %v3721
      %4463 = vmatpush.msra.mxu0 %v3720
      %4464 = vmatpush.msra.mxu0 %v3719
      %4465 = vmatmul.f32.gmra.mxu0 %v3371
      %v4466 = vpop.f32.mrf.mxu0
      %v4467 = vadd.f32 %v4354, %v4466
      %4468 = vmatmul.f32.gmra.mxu0 %v3372
      %v4469 = vpop.f32.mrf.mxu0
      %v4470 = vadd.f32 %v4357, %v4469
      %4471 = vmatmul.f32.gmra.mxu0 %v3373
      %v4472 = vpop.f32.mrf.mxu0
      %v4473 = vadd.f32 %v4360, %v4472
      %4474 = vmatmul.f32.gmra.mxu0 %v3374
      %v4475 = vpop.f32.mrf.mxu0
      %v4476 = vadd.f32 %v4363, %v4475
      %4477 = vmatmul.f32.gmra.mxu0 %v3375
      %v4478 = vpop.f32.mrf.mxu0
      %v4479 = vadd.f32 %v4366, %v4478
      %4480 = vmatmul.f32.gmra.mxu0 %v3376
      %v4481 = vpop.f32.mrf.mxu0
      %v4482 = vadd.f32 %v4369, %v4481
      %4483 = vmatmul.f32.gmra.mxu0 %v3377
      %v4484 = vpop.f32.mrf.mxu0
      %v4485 = vadd.f32 %v4372, %v4484
      %4486 = vmatmul.f32.gmra.mxu0 %v3378
      %v4487 = vpop.f32.mrf.mxu0
      %v4488 = vadd.f32 %v4375, %v4487
      %4489 = vmatmul.f32.gmra.mxu0 %v3379
      %v4490 = vpop.f32.mrf.mxu0
      %v4491 = vadd.f32 %v4378, %v4490
      %4492 = vmatmul.f32.gmra.mxu0 %v3380
      %v4493 = vpop.f32.mrf.mxu0
      %v4494 = vadd.f32 %v4381, %v4493
      %4495 = vmatmul.f32.gmra.mxu0 %v3381
      %v4496 = vpop.f32.mrf.mxu0
      %v4497 = vadd.f32 %v4384, %v4496
      %4498 = vmatmul.f32.gmra.mxu0 %v3382
      %v4499 = vpop.f32.mrf.mxu0
      %v4500 = vadd.f32 %v4387, %v4499
      %4501 = vmatmul.f32.gmra.mxu0 %v3383
      %v4502 = vpop.f32.mrf.mxu0
      %v4503 = vadd.f32 %v4390, %v4502
      %4504 = vmatmul.f32.gmra.mxu0 %v3384
      %v4505 = vpop.f32.mrf.mxu0
      %v4506 = vadd.f32 %v4393, %v4505
      %4507 = vmatmul.f32.gmra.mxu0 %v3385
      %v4508 = vpop.f32.mrf.mxu0
      %v4509 = vadd.f32 %v4396, %v4508
      %4510 = vmatmul.f32.gmra.mxu0 %v3386
      %v4511 = vpop.f32.mrf.mxu0
      %v4512 = vadd.f32 %v4399, %v4511
      %4513 = vmatmul.f32.gmra.mxu0 %v3387
      %v4514 = vpop.f32.mrf.mxu0
      %v4515 = vadd.f32 %v4402, %v4514
      %4516 = vmatmul.f32.gmra.mxu0 %v3388
      %v4517 = vpop.f32.mrf.mxu0
      %v4518 = vadd.f32 %v4405, %v4517
      %4519 = vmatmul.f32.gmra.mxu0 %v3389
      %v4520 = vpop.f32.mrf.mxu0
      %v4521 = vadd.f32 %v4408, %v4520
      %4522 = vmatmul.f32.gmra.mxu0 %v3390
      %v4523 = vpop.f32.mrf.mxu0
      %v4524 = vadd.f32 %v4411, %v4523
      %4525 = vmatmul.f32.gmra.mxu0 %v3391
      %v4526 = vpop.f32.mrf.mxu0
      %v4527 = vadd.f32 %v4414, %v4526
      %4528 = vmatmul.f32.gmra.mxu0 %v3392
      %v4529 = vpop.f32.mrf.mxu0
      %v4530 = vadd.f32 %v4417, %v4529
      %4531 = vmatmul.f32.gmra.mxu0 %v3393
      %v4532 = vpop.f32.mrf.mxu0
      %v4533 = vadd.f32 %v4420, %v4532
      %4534 = vmatmul.f32.gmra.mxu0 %v3394
      %v4535 = vpop.f32.mrf.mxu0
      %v4536 = vadd.f32 %v4423, %v4535
      %4537 = vmatmul.f32.gmra.mxu0 %v3395
      %v4538 = vpop.f32.mrf.mxu0
      %v4539 = vadd.f32 %v4426, %v4538
      %4540 = vmatmul.f32.gmra.mxu0 %v3396
      %v4541 = vpop.f32.mrf.mxu0
      %v4542 = vadd.f32 %v4429, %v4541
      %4543 = vmatmul.f32.gmra.mxu0 %v3397
      %v4544 = vpop.f32.mrf.mxu0
      %v4545 = vadd.f32 %v4432, %v4544
      %4546 = vmatmul.f32.gmra.mxu0 %v3398
      %v4547 = vpop.f32.mrf.mxu0
      %v4548 = vadd.f32 %v4435, %v4547
      %4549 = vmatmul.f32.gmra.mxu0 0.0
      %v4550 = vpop.f32.mrf.mxu0
      %v4551 = vadd.f32 %v4438, %v4550
      %4552 = vmatmul.f32.gmra.mxu0 0.0
      %v4553 = vpop.f32.mrf.mxu0
      %v4554 = vadd.f32 %v4441, %v4553
      %4555 = vmatmul.f32.gmra.mxu0 0.0
      %v4556 = vpop.f32.mrf.mxu0
      %v4557 = vadd.f32 %v4444, %v4556
      %4558 = vmatmul.f32.gmra.mxu0 0.0
      %v4559 = vpop.f32.mrf.mxu0
      %v4560 = vadd.f32 %v4447, %v4559
      %4561 = vdwg.mxu0
      %4562 = vmatpush.msra.mxu0 %v3750
      %4563 = vmatpush.msra.mxu0 %v3749
      %4564 = vmatpush.msra.mxu0 %v3748
      %4565 = vmatpush.msra.mxu0 %v3747
      %4566 = vmatpush.msra.mxu0 %v3746
      %4567 = vmatpush.msra.mxu0 %v3745
      %4568 = vmatpush.msra.mxu0 %v3744
      %4569 = vmatpush.msra.mxu0 %v3743
      %4570 = vmatpush.msra.mxu0 %v3742
      %4571 = vmatpush.msra.mxu0 %v3741
      %4572 = vmatpush.msra.mxu0 %v3740
      %4573 = vmatpush.msra.mxu0 %v3739
      %4574 = vmatpush.msra.mxu0 %v3738
      %4575 = vmatpush.msra.mxu0 %v3737
      %4576 = vmatpush.msra.mxu0 %v3736
      %4577 = vmatpush.msra.mxu0 %v3735
      %4578 = vmatmul.f32.gmra.mxu0 %v3441
      %v4579 = vpop.f32.mrf.mxu0
      %v4580 = vadd.f32 %v4467, %v4579
      %4581 = vmatmul.f32.gmra.mxu0 %v3443
      %v4582 = vpop.f32.mrf.mxu0
      %v4583 = vadd.f32 %v4470, %v4582
      %4584 = vmatmul.f32.gmra.mxu0 %v3445
      %v4585 = vpop.f32.mrf.mxu0
      %v4586 = vadd.f32 %v4473, %v4585
      %4587 = vmatmul.f32.gmra.mxu0 %v3447
      %v4588 = vpop.f32.mrf.mxu0
      %v4589 = vadd.f32 %v4476, %v4588
      %4590 = vmatmul.f32.gmra.mxu0 %v3449
      %v4591 = vpop.f32.mrf.mxu0
      %v4592 = vadd.f32 %v4479, %v4591
      %4593 = vmatmul.f32.gmra.mxu0 %v3451
      %v4594 = vpop.f32.mrf.mxu0
      %v4595 = vadd.f32 %v4482, %v4594
      %4596 = vmatmul.f32.gmra.mxu0 %v3453
      %v4597 = vpop.f32.mrf.mxu0
      %v4598 = vadd.f32 %v4485, %v4597
      %4599 = vmatmul.f32.gmra.mxu0 %v3455
      %v4600 = vpop.f32.mrf.mxu0
      %v4601 = vadd.f32 %v4488, %v4600
      %4602 = vmatmul.f32.gmra.mxu0 %v3457
      %v4603 = vpop.f32.mrf.mxu0
      %v4604 = vadd.f32 %v4491, %v4603
      %4605 = vmatmul.f32.gmra.mxu0 %v3459
      %v4606 = vpop.f32.mrf.mxu0
      %v4607 = vadd.f32 %v4494, %v4606
      %4608 = vmatmul.f32.gmra.mxu0 %v3461
      %v4609 = vpop.f32.mrf.mxu0
      %v4610 = vadd.f32 %v4497, %v4609
      %4611 = vmatmul.f32.gmra.mxu0 %v3463
      %v4612 = vpop.f32.mrf.mxu0
      %v4613 = vadd.f32 %v4500, %v4612
      %4614 = vmatmul.f32.gmra.mxu0 %v3465
      %v4615 = vpop.f32.mrf.mxu0
      %v4616 = vadd.f32 %v4503, %v4615
      %4617 = vmatmul.f32.gmra.mxu0 %v3467
      %v4618 = vpop.f32.mrf.mxu0
      %v4619 = vadd.f32 %v4506, %v4618
      %4620 = vmatmul.f32.gmra.mxu0 %v3469
      %v4621 = vpop.f32.mrf.mxu0
      %v4622 = vadd.f32 %v4509, %v4621
      %4623 = vmatmul.f32.gmra.mxu0 %v3471
      %v4624 = vpop.f32.mrf.mxu0
      %v4625 = vadd.f32 %v4512, %v4624
      %4626 = vmatmul.f32.gmra.mxu0 %v3473
      %v4627 = vpop.f32.mrf.mxu0
      %v4628 = vadd.f32 %v4515, %v4627
      %4629 = vmatmul.f32.gmra.mxu0 %v3475
      %v4630 = vpop.f32.mrf.mxu0
      %v4631 = vadd.f32 %v4518, %v4630
      %4632 = vmatmul.f32.gmra.mxu0 %v3477
      %v4633 = vpop.f32.mrf.mxu0
      %v4634 = vadd.f32 %v4521, %v4633
      %4635 = vmatmul.f32.gmra.mxu0 %v3479
      %v4636 = vpop.f32.mrf.mxu0
      %v4637 = vadd.f32 %v4524, %v4636
      %4638 = vmatmul.f32.gmra.mxu0 %v3481
      %v4639 = vpop.f32.mrf.mxu0
      %v4640 = vadd.f32 %v4527, %v4639
      %4641 = vmatmul.f32.gmra.mxu0 %v3483
      %v4642 = vpop.f32.mrf.mxu0
      %v4643 = vadd.f32 %v4530, %v4642
      %4644 = vmatmul.f32.gmra.mxu0 %v3485
      %v4645 = vpop.f32.mrf.mxu0
      %v4646 = vadd.f32 %v4533, %v4645
      %4647 = vmatmul.f32.gmra.mxu0 %v3487
      %v4648 = vpop.f32.mrf.mxu0
      %v4649 = vadd.f32 %v4536, %v4648
      %4650 = vmatmul.f32.gmra.mxu0 %v3489
      %v4651 = vpop.f32.mrf.mxu0
      %v4652 = vadd.f32 %v4539, %v4651
      %4653 = vmatmul.f32.gmra.mxu0 %v3491
      %v4654 = vpop.f32.mrf.mxu0
      %v4655 = vadd.f32 %v4542, %v4654
      %4656 = vmatmul.f32.gmra.mxu0 %v3493
      %v4657 = vpop.f32.mrf.mxu0
      %v4658 = vadd.f32 %v4545, %v4657
      %4659 = vmatmul.f32.gmra.mxu0 %v3494
      %v4660 = vpop.f32.mrf.mxu0
      %v4661 = vadd.f32 %v4548, %v4660
      %4662 = vmatmul.f32.gmra.mxu0 %v2198
      %v4663 = vpop.f32.mrf.mxu0
      %v4664 = vadd.f32 %v4551, %v4663
      %4665 = vmatmul.f32.gmra.mxu0 %v2198
      %v4666 = vpop.f32.mrf.mxu0
      %v4667 = vadd.f32 %v4554, %v4666
      %4668 = vmatmul.f32.gmra.mxu0 %v2198
      %v4669 = vpop.f32.mrf.mxu0
      %v4670 = vadd.f32 %v4557, %v4669
      %4671 = vmatmul.f32.gmra.mxu0 %v2198
      %v4672 = vpop.f32.mrf.mxu0
      %v4673 = vadd.f32 %v4560, %v4672
      %4674 = vdwg.mxu0
      %4675 = vmatpush.msra.mxu0 %v3766
      %4676 = vmatpush.msra.mxu0 %v3765
      %4677 = vmatpush.msra.mxu0 %v3764
      %4678 = vmatpush.msra.mxu0 %v3763
      %4679 = vmatpush.msra.mxu0 %v3762
      %4680 = vmatpush.msra.mxu0 %v3761
      %4681 = vmatpush.msra.mxu0 %v3760
      %4682 = vmatpush.msra.mxu0 %v3759
      %4683 = vmatpush.msra.mxu0 %v3758
      %4684 = vmatpush.msra.mxu0 %v3757
      %4685 = vmatpush.msra.mxu0 %v3756
      %4686 = vmatpush.msra.mxu0 %v3755
      %4687 = vmatpush.msra.mxu0 %v3754
      %4688 = vmatpush.msra.mxu0 %v3753
      %4689 = vmatpush.msra.mxu0 %v3752
      %4690 = vmatpush.msra.mxu0 %v3751
      %4691 = vmatmul.f32.gmra.mxu0 %v3537
      %v4692 = vpop.f32.mrf.mxu0
      %v4693 = vadd.f32 %v4580, %v4692
      %4694 = vmatmul.f32.gmra.mxu0 %v3539
      %v4695 = vpop.f32.mrf.mxu0
      %v4696 = vadd.f32 %v4583, %v4695
      %4697 = vmatmul.f32.gmra.mxu0 %v3541
      %v4698 = vpop.f32.mrf.mxu0
      %v4699 = vadd.f32 %v4586, %v4698
      %4700 = vmatmul.f32.gmra.mxu0 %v3543
      %v4701 = vpop.f32.mrf.mxu0
      %v4702 = vadd.f32 %v4589, %v4701
      %4703 = vmatmul.f32.gmra.mxu0 %v3545
      %v4704 = vpop.f32.mrf.mxu0
      %v4705 = vadd.f32 %v4592, %v4704
      %4706 = vmatmul.f32.gmra.mxu0 %v3547
      %v4707 = vpop.f32.mrf.mxu0
      %v4708 = vadd.f32 %v4595, %v4707
      %4709 = vmatmul.f32.gmra.mxu0 %v3549
      %v4710 = vpop.f32.mrf.mxu0
      %v4711 = vadd.f32 %v4598, %v4710
      %4712 = vmatmul.f32.gmra.mxu0 %v3551
      %v4713 = vpop.f32.mrf.mxu0
      %v4714 = vadd.f32 %v4601, %v4713
      %4715 = vmatmul.f32.gmra.mxu0 %v3553
      %v4716 = vpop.f32.mrf.mxu0
      %v4717 = vadd.f32 %v4604, %v4716
      %4718 = vmatmul.f32.gmra.mxu0 %v3555
      %v4719 = vpop.f32.mrf.mxu0
      %v4720 = vadd.f32 %v4607, %v4719
      %4721 = vmatmul.f32.gmra.mxu0 %v3557
      %v4722 = vpop.f32.mrf.mxu0
      %v4723 = vadd.f32 %v4610, %v4722
      %4724 = vmatmul.f32.gmra.mxu0 %v3559
      %v4725 = vpop.f32.mrf.mxu0
      %v4726 = vadd.f32 %v4613, %v4725
      %4727 = vmatmul.f32.gmra.mxu0 %v3561
      %v4728 = vpop.f32.mrf.mxu0
      %v4729 = vadd.f32 %v4616, %v4728
      %4730 = vmatmul.f32.gmra.mxu0 %v3563
      %v4731 = vpop.f32.mrf.mxu0
      %v4732 = vadd.f32 %v4619, %v4731
      %4733 = vmatmul.f32.gmra.mxu0 %v3565
      %v4734 = vpop.f32.mrf.mxu0
      %v4735 = vadd.f32 %v4622, %v4734
      %4736 = vmatmul.f32.gmra.mxu0 %v3567
      %v4737 = vpop.f32.mrf.mxu0
      %v4738 = vadd.f32 %v4625, %v4737
      %4739 = vmatmul.f32.gmra.mxu0 %v3569
      %v4740 = vpop.f32.mrf.mxu0
      %v4741 = vadd.f32 %v4628, %v4740
      %4742 = vmatmul.f32.gmra.mxu0 %v3571
      %v4743 = vpop.f32.mrf.mxu0
      %v4744 = vadd.f32 %v4631, %v4743
      %4745 = vmatmul.f32.gmra.mxu0 %v3573
      %v4746 = vpop.f32.mrf.mxu0
      %v4747 = vadd.f32 %v4634, %v4746
      %4748 = vmatmul.f32.gmra.mxu0 %v3575
      %v4749 = vpop.f32.mrf.mxu0
      %v4750 = vadd.f32 %v4637, %v4749
      %4751 = vmatmul.f32.gmra.mxu0 %v3577
      %v4752 = vpop.f32.mrf.mxu0
      %v4753 = vadd.f32 %v4640, %v4752
      %4754 = vmatmul.f32.gmra.mxu0 %v3579
      %v4755 = vpop.f32.mrf.mxu0
      %v4756 = vadd.f32 %v4643, %v4755
      %4757 = vmatmul.f32.gmra.mxu0 %v3581
      %v4758 = vpop.f32.mrf.mxu0
      %v4759 = vadd.f32 %v4646, %v4758
      %4760 = vmatmul.f32.gmra.mxu0 %v3583
      %v4761 = vpop.f32.mrf.mxu0
      %v4762 = vadd.f32 %v4649, %v4761
      %4763 = vmatmul.f32.gmra.mxu0 %v3585
      %v4764 = vpop.f32.mrf.mxu0
      %v4765 = vadd.f32 %v4652, %v4764
      %4766 = vmatmul.f32.gmra.mxu0 %v3587
      %v4767 = vpop.f32.mrf.mxu0
      %v4768 = vadd.f32 %v4655, %v4767
      %4769 = vmatmul.f32.gmra.mxu0 %v3589
      %v4770 = vpop.f32.mrf.mxu0
      %v4771 = vadd.f32 %v4658, %v4770
      %4772 = vmatmul.f32.gmra.mxu0 %v3590
      %v4773 = vpop.f32.mrf.mxu0
      %v4774 = vadd.f32 %v4661, %v4773
      %4775 = vmatmul.f32.gmra.mxu0 %v2200
      %v4776 = vpop.f32.mrf.mxu0
      %v4777 = vadd.f32 %v4664, %v4776
      %4778 = vmatmul.f32.gmra.mxu0 %v2200
      %v4779 = vpop.f32.mrf.mxu0
      %v4780 = vadd.f32 %v4667, %v4779
      %4781 = vmatmul.f32.gmra.mxu0 %v2200
      %v4782 = vpop.f32.mrf.mxu0
      %v4783 = vadd.f32 %v4670, %v4782
      %4784 = vmatmul.f32.gmra.mxu0 %v2200
      %v4785 = vpop.f32.mrf.mxu0
      %v4786 = vadd.f32 %v4673, %v4785
      %4787 = vdwg.mxu0
      %v4788 = vmax.f32 %v4693, 0.0
      %v4789 = vmax.f32 %v4696, 0.0
      %v4790 = vmax.f32 %v4699, 0.0
      %v4791 = vmax.f32 %v4702, 0.0
      %v4792 = vmax.f32 %v4705, 0.0
      %v4793 = vmax.f32 %v4708, 0.0
      %v4794 = vmax.f32 %v4711, 0.0
      %v4795 = vmax.f32 %v4714, 0.0
      %v4796 = vmax.f32 %v4717, 0.0
      %v4797 = vmax.f32 %v4720, 0.0
      %v4798 = vmax.f32 %v4723, 0.0
      %v4799 = vmax.f32 %v4726, 0.0
      %v4800 = vmax.f32 %v4729, 0.0
      %v4801 = vmax.f32 %v4732, 0.0
      %v4802 = vmax.f32 %v4735, 0.0
      %v4803 = vmax.f32 %v4738, 0.0
      %v4804 = vmax.f32 %v4741, 0.0
      %v4805 = vmax.f32 %v4744, 0.0
      %v4806 = vmax.f32 %v4747, 0.0
      %v4807 = vmax.f32 %v4750, 0.0
      %v4808 = vmax.f32 %v4753, 0.0
      %v4809 = vmax.f32 %v4756, 0.0
      %v4810 = vmax.f32 %v4759, 0.0
      %v4811 = vmax.f32 %v4762, 0.0
      %v4812 = vmax.f32 %v4765, 0.0
      %v4813 = vmax.f32 %v4768, 0.0
      %v4814 = vmax.f32 %v4771, 0.0
      %v4815 = vmax.f32 %v4774, 0.0
      %v4816 = vmax.f32 %v4777, 0.0
      %v4817 = vmax.f32 %v4780, 0.0
      %v4818 = vmax.f32 %v4783, 0.0
      %v4819 = vmax.f32 %v4786, 0.0
      %v4852 = vrot.slane %v4788, 1
      %v4853 = vrot.slane %v4789, 1
      %v4854 = vsel %vm691, %v4852, %v4853
      %v4855 = vrot.slane %v4790, 1
      %v4856 = vsel %vm691, %v4853, %v4855
      %v4857 = vrot.slane %v4791, 1
      %v4858 = vsel %vm691, %v4855, %v4857
      %v4859 = vrot.slane %v4792, 1
      %v4860 = vsel %vm691, %v4857, %v4859
      %v4861 = vrot.slane %v4793, 1
      %v4862 = vsel %vm691, %v4859, %v4861
      %v4863 = vrot.slane %v4794, 1
      %v4864 = vsel %vm691, %v4861, %v4863
      %v4865 = vrot.slane %v4795, 1
      %v4866 = vsel %vm691, %v4863, %v4865
      %v4867 = vrot.slane %v4796, 1
      %v4868 = vsel %vm691, %v4865, %v4867
      %v4869 = vrot.slane %v4797, 1
      %v4870 = vsel %vm691, %v4867, %v4869
      %v4871 = vrot.slane %v4798, 1
      %v4872 = vsel %vm691, %v4869, %v4871
      %v4873 = vrot.slane %v4799, 1
      %v4874 = vsel %vm691, %v4871, %v4873
      %v4875 = vrot.slane %v4800, 1
      %v4876 = vsel %vm691, %v4873, %v4875
      %v4877 = vrot.slane %v4801, 1
      %v4878 = vsel %vm691, %v4875, %v4877
      %v4879 = vrot.slane %v4802, 1
      %v4880 = vsel %vm691, %v4877, %v4879
      %v4881 = vrot.slane %v4803, 1
      %v4882 = vsel %vm691, %v4879, %v4881
      %v4883 = vrot.slane %v4804, 1
      %v4884 = vsel %vm691, %v4881, %v4883
      %v4885 = vrot.slane %v4805, 1
      %v4886 = vsel %vm691, %v4883, %v4885
      %v4887 = vrot.slane %v4806, 1
      %v4888 = vsel %vm691, %v4885, %v4887
      %v4889 = vrot.slane %v4807, 1
      %v4890 = vsel %vm691, %v4887, %v4889
      %v4891 = vrot.slane %v4808, 1
      %v4892 = vsel %vm691, %v4889, %v4891
      %v4893 = vrot.slane %v4809, 1
      %v4894 = vsel %vm691, %v4891, %v4893
      %v4895 = vrot.slane %v4810, 1
      %v4896 = vsel %vm691, %v4893, %v4895
      %v4897 = vrot.slane %v4811, 1
      %v4898 = vsel %vm691, %v4895, %v4897
      %v4899 = vrot.slane %v4812, 1
      %v4900 = vsel %vm691, %v4897, %v4899
      %v4901 = vrot.slane %v4813, 1
      %v4902 = vsel %vm691, %v4899, %v4901
      %v4903 = vrot.slane %v4814, 1
      %v4904 = vsel %vm691, %v4901, %v4903
      %v4905 = vrot.slane %v4815, 1
      %v4906 = vsel %vm691, %v4903, %v4905
      %v4907 = vrot.slane %v4816, 1
      %v4908 = vsel %vm691, %v4905, %v4907
      %v4909 = vrot.slane %v4817, 1
      %v4910 = vsel %vm691, %v4907, %v4909
      %v4911 = vrot.slane %v4818, 1
      %v4912 = vsel %vm691, %v4909, %v4911
      %v4913 = vrot.slane %v4819, 1
      %v4914 = vsel %vm691, %v4911, %v4913
      %v4915 = vsel %vm691, %v4913, %v2067
      %v4948 = vrot.slane %v4788, 2
      %v4949 = vrot.slane %v4789, 2
      %v4950 = vsel %vm892, %v4948, %v4949
      %v4951 = vrot.slane %v4790, 2
      %v4952 = vsel %vm892, %v4949, %v4951
      %v4953 = vrot.slane %v4791, 2
      %v4954 = vsel %vm892, %v4951, %v4953
      %v4955 = vrot.slane %v4792, 2
      %v4956 = vsel %vm892, %v4953, %v4955
      %v4957 = vrot.slane %v4793, 2
      %v4958 = vsel %vm892, %v4955, %v4957
      %v4959 = vrot.slane %v4794, 2
      %v4960 = vsel %vm892, %v4957, %v4959
      %v4961 = vrot.slane %v4795, 2
      %v4962 = vsel %vm892, %v4959, %v4961
      %v4963 = vrot.slane %v4796, 2
      %v4964 = vsel %vm892, %v4961, %v4963
      %v4965 = vrot.slane %v4797, 2
      %v4966 = vsel %vm892, %v4963, %v4965
      %v4967 = vrot.slane %v4798, 2
      %v4968 = vsel %vm892, %v4965, %v4967
      %v4969 = vrot.slane %v4799, 2
      %v4970 = vsel %vm892, %v4967, %v4969
      %v4971 = vrot.slane %v4800, 2
      %v4972 = vsel %vm892, %v4969, %v4971
      %v4973 = vrot.slane %v4801, 2
      %v4974 = vsel %vm892, %v4971, %v4973
      %v4975 = vrot.slane %v4802, 2
      %v4976 = vsel %vm892, %v4973, %v4975
      %v4977 = vrot.slane %v4803, 2
      %v4978 = vsel %vm892, %v4975, %v4977
      %v4979 = vrot.slane %v4804, 2
      %v4980 = vsel %vm892, %v4977, %v4979
      %v4981 = vrot.slane %v4805, 2
      %v4982 = vsel %vm892, %v4979, %v4981
      %v4983 = vrot.slane %v4806, 2
      %v4984 = vsel %vm892, %v4981, %v4983
      %v4985 = vrot.slane %v4807, 2
      %v4986 = vsel %vm892, %v4983, %v4985
      %v4987 = vrot.slane %v4808, 2
      %v4988 = vsel %vm892, %v4985, %v4987
      %v4989 = vrot.slane %v4809, 2
      %v4990 = vsel %vm892, %v4987, %v4989
      %v4991 = vrot.slane %v4810, 2
      %v4992 = vsel %vm892, %v4989, %v4991
      %v4993 = vrot.slane %v4811, 2
      %v4994 = vsel %vm892, %v4991, %v4993
      %v4995 = vrot.slane %v4812, 2
      %v4996 = vsel %vm892, %v4993, %v4995
      %v4997 = vrot.slane %v4813, 2
      %v4998 = vsel %vm892, %v4995, %v4997
      %v4999 = vrot.slane %v4814, 2
      %v5000 = vsel %vm892, %v4997, %v4999
      %v5001 = vrot.slane %v4815, 2
      %v5002 = vsel %vm892, %v4999, %v5001
      %v5003 = vrot.slane %v4816, 2
      %v5004 = vsel %vm892, %v5001, %v5003
      %v5005 = vrot.slane %v4817, 2
      %v5006 = vsel %vm892, %v5003, %v5005
      %v5007 = vrot.slane %v4818, 2
      %v5008 = vsel %vm892, %v5005, %v5007
      %v5009 = vrot.slane %v4819, 2
      %v5010 = vsel %vm892, %v5007, %v5009
      %v5011 = vsel %vm892, %v5009, %v2164
      %v5044 = vld [vmem:[%s7] sm:$0xff]
      %v5045 = vld [vmem:[%s7 + $0x8] sm:$0xff]
      %v5046 = vld [vmem:[%s7 + $0x10] sm:$0xff]
      %v5047 = vld [vmem:[%s7 + $0x18] sm:$0xff]
      %v5048 = vld [vmem:[%s7 + $0x20] sm:$0xff]
      %v5049 = vld [vmem:[%s7 + $0x28] sm:$0xff]
      %v5050 = vld [vmem:[%s7 + $0x30] sm:$0xff]
      %v5051 = vld [vmem:[%s7 + $0x38] sm:$0xff]
      %v5052 = vld [vmem:[%s7 + $0x40] sm:$0xff]
      %v5053 = vld [vmem:[%s7 + $0x48] sm:$0xff]
      %v5054 = vld [vmem:[%s7 + $0x50] sm:$0xff]
      %v5055 = vld [vmem:[%s7 + $0x58] sm:$0xff]
      %v5056 = vld [vmem:[%s7 + $0x60] sm:$0xff]
      %v5057 = vld [vmem:[%s7 + $0x68] sm:$0xff]
      %v5058 = vld [vmem:[%s7 + $0x70] sm:$0xff]
      %v5059 = vld [vmem:[%s7 + $0x78] sm:$0xff]
      %v5060 = vld [vmem:[%s7 + $0x80] sm:$0xff]
      %v5061 = vld [vmem:[%s7 + $0x88] sm:$0xff]
      %v5062 = vld [vmem:[%s7 + $0x90] sm:$0xff]
      %v5063 = vld [vmem:[%s7 + $0x98] sm:$0xff]
      %v5064 = vld [vmem:[%s7 + $0xa0] sm:$0xff]
      %v5065 = vld [vmem:[%s7 + $0xa8] sm:$0xff]
      %v5066 = vld [vmem:[%s7 + $0xb0] sm:$0xff]
      %v5067 = vld [vmem:[%s7 + $0xb8] sm:$0xff]
      %v5068 = vld [vmem:[%s7 + $0xc0] sm:$0xff]
      %v5069 = vld [vmem:[%s7 + $0xc8] sm:$0xff]
      %v5070 = vld [vmem:[%s7 + $0xd0] sm:$0xff]
      %v5071 = vld [vmem:[%s7 + $0xd8] sm:$0xff]
      %v5072 = vld [vmem:[%s7 + $0xe0] sm:$0xff]
      %v5073 = vld [vmem:[%s7 + $0xe8] sm:$0xff]
      %v5074 = vld [vmem:[%s7 + $0xf0] sm:$0xff]
      %v5075 = vld [vmem:[%s7 + $0xf8] sm:$0xff]
      %v5076 = vld [vmem:[%s7 + $0x100] sm:$0xff]
      %v5077 = vld [vmem:[%s7 + $0x108] sm:$0xff]
      %v5078 = vld [vmem:[%s7 + $0x110] sm:$0xff]
      %v5079 = vld [vmem:[%s7 + $0x118] sm:$0xff]
      %v5080 = vld [vmem:[%s7 + $0x120] sm:$0xff]
      %v5081 = vld [vmem:[%s7 + $0x128] sm:$0xff]
      %v5082 = vld [vmem:[%s7 + $0x130] sm:$0xff]
      %v5083 = vld [vmem:[%s7 + $0x138] sm:$0xff]
      %v5084 = vld [vmem:[%s7 + $0x140] sm:$0xff]
      %v5085 = vld [vmem:[%s7 + $0x148] sm:$0xff]
      %v5086 = vld [vmem:[%s7 + $0x150] sm:$0xff]
      %v5087 = vld [vmem:[%s7 + $0x158] sm:$0xff]
      %v5088 = vld [vmem:[%s7 + $0x160] sm:$0xff]
      %v5089 = vld [vmem:[%s7 + $0x168] sm:$0xff]
      %v5090 = vld [vmem:[%s7 + $0x170] sm:$0xff]
      %v5091 = vld [vmem:[%s7 + $0x178] sm:$0xff]
      %v5092 = vld [vmem:[%s7 + $0x180] sm:$0xff]
      %v5093 = vld [vmem:[%s7 + $0x188] sm:$0xff]
      %v5094 = vld [vmem:[%s7 + $0x190] sm:$0xff]
      %v5095 = vld [vmem:[%s7 + $0x198] sm:$0xff]
      %v5096 = vld [vmem:[%s7 + $0x1a0] sm:$0xff]
      %v5097 = vld [vmem:[%s7 + $0x1a8] sm:$0xff]
      %v5098 = vld [vmem:[%s7 + $0x1b0] sm:$0xff]
      %v5099 = vld [vmem:[%s7 + $0x1b8] sm:$0xff]
      %v5100 = vld [vmem:[%s7 + $0x1c0] sm:$0xff]
      %v5101 = vld [vmem:[%s7 + $0x1c8] sm:$0xff]
      %v5102 = vld [vmem:[%s7 + $0x1d0] sm:$0xff]
      %v5103 = vld [vmem:[%s7 + $0x1d8] sm:$0xff]
      %v5104 = vld [vmem:[%s7 + $0x1e0] sm:$0xff]
      %v5105 = vld [vmem:[%s7 + $0x1e8] sm:$0xff]
      %v5106 = vld [vmem:[%s7 + $0x1f0] sm:$0xff]
      %v5107 = vld [vmem:[%s7 + $0x1f8] sm:$0xff]
      %v5108 = vld [vmem:[%s7 + $0x200] sm:$0xff]
      %v5109 = vld [vmem:[%s7 + $0x208] sm:$0xff]
      %v5110 = vld [vmem:[%s7 + $0x210] sm:$0xff]
      %v5111 = vld [vmem:[%s7 + $0x218] sm:$0xff]
      %v5112 = vld [vmem:[%s7 + $0x220] sm:$0xff]
      %v5113 = vld [vmem:[%s7 + $0x228] sm:$0xff]
      %v5114 = vld [vmem:[%s7 + $0x230] sm:$0xff]
      %v5115 = vld [vmem:[%s7 + $0x238] sm:$0xff]
      %v5116 = vld [vmem:[%s7 + $0x240] sm:$0xff]
      %v5117 = vld [vmem:[%s7 + $0x248] sm:$0xff]
      %v5118 = vld [vmem:[%s7 + $0x250] sm:$0xff]
      %v5119 = vld [vmem:[%s7 + $0x258] sm:$0xff]
      %v5120 = vld [vmem:[%s7 + $0x260] sm:$0xff]
      %v5121 = vld [vmem:[%s7 + $0x268] sm:$0xff]
      %v5122 = vld [vmem:[%s7 + $0x270] sm:$0xff]
      %v5123 = vld [vmem:[%s7 + $0x278] sm:$0xff]
      %v5124 = vld [vmem:[%s7 + $0x280] sm:$0xff]
      %v5125 = vld [vmem:[%s7 + $0x288] sm:$0xff]
      %v5126 = vld [vmem:[%s7 + $0x290] sm:$0xff]
      %v5127 = vld [vmem:[%s7 + $0x298] sm:$0xff]
      %v5128 = vld [vmem:[%s7 + $0x2a0] sm:$0xff]
      %v5129 = vld [vmem:[%s7 + $0x2a8] sm:$0xff]
      %v5130 = vld [vmem:[%s7 + $0x2b0] sm:$0xff]
      %v5131 = vld [vmem:[%s7 + $0x2b8] sm:$0xff]
      %v5132 = vld [vmem:[%s7 + $0x2c0] sm:$0xff]
      %v5133 = vld [vmem:[%s7 + $0x2c8] sm:$0xff]
      %v5134 = vld [vmem:[%s7 + $0x2d0] sm:$0xff]
      %v5135 = vld [vmem:[%s7 + $0x2d8] sm:$0xff]
      %v5136 = vld [vmem:[%s7 + $0x2e0] sm:$0xff]
      %v5137 = vld [vmem:[%s7 + $0x2e8] sm:$0xff]
      %v5138 = vld [vmem:[%s7 + $0x2f0] sm:$0xff]
      %v5139 = vld [vmem:[%s7 + $0x2f8] sm:$0xff]
      %v5140 = vld [vmem:[%s7 + $0x300] sm:$0xff]
      %v5141 = vld [vmem:[%s7 + $0x308] sm:$0xff]
      %v5142 = vld [vmem:[%s7 + $0x310] sm:$0xff]
      %v5143 = vld [vmem:[%s7 + $0x318] sm:$0xff]
      %v5144 = vld [vmem:[%s7 + $0x320] sm:$0xff]
      %v5145 = vld [vmem:[%s7 + $0x328] sm:$0xff]
      %v5146 = vld [vmem:[%s7 + $0x330] sm:$0xff]
      %v5147 = vld [vmem:[%s7 + $0x338] sm:$0xff]
      %v5148 = vld [vmem:[%s7 + $0x340] sm:$0xff]
      %v5149 = vld [vmem:[%s7 + $0x348] sm:$0xff]
      %v5150 = vld [vmem:[%s7 + $0x350] sm:$0xff]
      %v5151 = vld [vmem:[%s7 + $0x358] sm:$0xff]
      %v5152 = vld [vmem:[%s7 + $0x360] sm:$0xff]
      %v5153 = vld [vmem:[%s7 + $0x368] sm:$0xff]
      %v5154 = vld [vmem:[%s7 + $0x370] sm:$0xff]
      %v5155 = vld [vmem:[%s7 + $0x378] sm:$0xff]
      %v5156 = vld [vmem:[%s7 + $0x380] sm:$0xff]
      %v5157 = vld [vmem:[%s7 + $0x388] sm:$0xff]
      %v5158 = vld [vmem:[%s7 + $0x390] sm:$0xff]
      %v5159 = vld [vmem:[%s7 + $0x398] sm:$0xff]
      %v5160 = vld [vmem:[%s7 + $0x3a0] sm:$0xff]
      %v5161 = vld [vmem:[%s7 + $0x3a8] sm:$0xff]
      %v5162 = vld [vmem:[%s7 + $0x3b0] sm:$0xff]
      %v5163 = vld [vmem:[%s7 + $0x3b8] sm:$0xff]
      %v5164 = vld [vmem:[%s7 + $0x3c0] sm:$0xff]
      %v5165 = vld [vmem:[%s7 + $0x3c8] sm:$0xff]
      %v5166 = vld [vmem:[%s7 + $0x3d0] sm:$0xff]
      %v5167 = vld [vmem:[%s7 + $0x3d8] sm:$0xff]
      %v5168 = vld [vmem:[%s7 + $0x3e0] sm:$0xff]
      %v5169 = vld [vmem:[%s7 + $0x3e8] sm:$0xff]
      %v5170 = vld [vmem:[%s7 + $0x3f0] sm:$0xff]
      %v5171 = vld [vmem:[%s7 + $0x3f8] sm:$0xff]
      %v5172 = vld [vmem:[%s7 + $0x400] sm:$0xff]
      %v5173 = vld [vmem:[%s7 + $0x408] sm:$0xff]
      %v5174 = vld [vmem:[%s7 + $0x410] sm:$0xff]
      %v5175 = vld [vmem:[%s7 + $0x418] sm:$0xff]
      %v5176 = vld [vmem:[%s7 + $0x420] sm:$0xff]
      %v5177 = vld [vmem:[%s7 + $0x428] sm:$0xff]
      %v5178 = vld [vmem:[%s7 + $0x430] sm:$0xff]
      %v5179 = vld [vmem:[%s7 + $0x438] sm:$0xff]
      %v5180 = vld [vmem:[%s7 + $0x440] sm:$0xff]
      %v5181 = vld [vmem:[%s7 + $0x448] sm:$0xff]
      %v5182 = vld [vmem:[%s7 + $0x450] sm:$0xff]
      %v5183 = vld [vmem:[%s7 + $0x458] sm:$0xff]
      %v5184 = vld [vmem:[%s7 + $0x460] sm:$0xff]
      %v5185 = vld [vmem:[%s7 + $0x468] sm:$0xff]
      %v5186 = vld [vmem:[%s7 + $0x470] sm:$0xff]
      %v5187 = vld [vmem:[%s7 + $0x478] sm:$0xff]
      %v5188 = vld [vmem:[%s8] sm:$0x1]
      %v5190 = vperm.slane %v5188, 0
      %5192 = vmatpush.msra.mxu0 %v5059
      %5193 = vmatpush.msra.mxu0 %v5058
      %5194 = vmatpush.msra.mxu0 %v5057
      %5195 = vmatpush.msra.mxu0 %v5056
      %5196 = vmatpush.msra.mxu0 %v5055
      %5197 = vmatpush.msra.mxu0 %v5054
      %5198 = vmatpush.msra.mxu0 %v5053
      %5199 = vmatpush.msra.mxu0 %v5052
      %5200 = vmatpush.msra.mxu0 %v5051
      %5201 = vmatpush.msra.mxu0 %v5050
      %5202 = vmatpush.msra.mxu0 %v5049
      %5203 = vmatpush.msra.mxu0 %v5048
      %5204 = vmatpush.msra.mxu0 %v5047
      %5205 = vmatpush.msra.mxu0 %v5046
      %5206 = vmatpush.msra.mxu0 %v5045
      %5207 = vmatpush.msra.mxu0 %v5044
      %5208 = vmatmul.f32.gmra.mxu0 %v4788
      %v5209 = vpop.f32.mrf.mxu0
      %v5210 = vadd.f32 %v5190, %v5209
      %5211 = vmatmul.f32.gmra.mxu0 %v4789
      %v5212 = vpop.f32.mrf.mxu0
      %v5213 = vadd.f32 %v5190, %v5212
      %5214 = vmatmul.f32.gmra.mxu0 %v4790
      %v5215 = vpop.f32.mrf.mxu0
      %v5216 = vadd.f32 %v5190, %v5215
      %5217 = vmatmul.f32.gmra.mxu0 %v4791
      %v5218 = vpop.f32.mrf.mxu0
      %v5219 = vadd.f32 %v5190, %v5218
      %5220 = vmatmul.f32.gmra.mxu0 %v4792
      %v5221 = vpop.f32.mrf.mxu0
      %v5222 = vadd.f32 %v5190, %v5221
      %5223 = vmatmul.f32.gmra.mxu0 %v4793
      %v5224 = vpop.f32.mrf.mxu0
      %v5225 = vadd.f32 %v5190, %v5224
      %5226 = vmatmul.f32.gmra.mxu0 %v4794
      %v5227 = vpop.f32.mrf.mxu0
      %v5228 = vadd.f32 %v5190, %v5227
      %5229 = vmatmul.f32.gmra.mxu0 %v4795
      %v5230 = vpop.f32.mrf.mxu0
      %v5231 = vadd.f32 %v5190, %v5230
      %5232 = vmatmul.f32.gmra.mxu0 %v4796
      %v5233 = vpop.f32.mrf.mxu0
      %v5234 = vadd.f32 %v5190, %v5233
      %5235 = vmatmul.f32.gmra.mxu0 %v4797
      %v5236 = vpop.f32.mrf.mxu0
      %v5237 = vadd.f32 %v5190, %v5236
      %5238 = vmatmul.f32.gmra.mxu0 %v4798
      %v5239 = vpop.f32.mrf.mxu0
      %v5240 = vadd.f32 %v5190, %v5239
      %5241 = vmatmul.f32.gmra.mxu0 %v4799
      %v5242 = vpop.f32.mrf.mxu0
      %v5243 = vadd.f32 %v5190, %v5242
      %5244 = vmatmul.f32.gmra.mxu0 %v4800
      %v5245 = vpop.f32.mrf.mxu0
      %v5246 = vadd.f32 %v5190, %v5245
      %5247 = vmatmul.f32.gmra.mxu0 %v4801
      %v5248 = vpop.f32.mrf.mxu0
      %v5249 = vadd.f32 %v5190, %v5248
      %5250 = vmatmul.f32.gmra.mxu0 %v4802
      %v5251 = vpop.f32.mrf.mxu0
      %v5252 = vadd.f32 %v5190, %v5251
      %5253 = vmatmul.f32.gmra.mxu0 %v4803
      %v5254 = vpop.f32.mrf.mxu0
      %v5255 = vadd.f32 %v5190, %v5254
      %5256 = vmatmul.f32.gmra.mxu0 %v4804
      %v5257 = vpop.f32.mrf.mxu0
      %v5258 = vadd.f32 %v5190, %v5257
      %5259 = vmatmul.f32.gmra.mxu0 %v4805
      %v5260 = vpop.f32.mrf.mxu0
      %v5261 = vadd.f32 %v5190, %v5260
      %5262 = vmatmul.f32.gmra.mxu0 %v4806
      %v5263 = vpop.f32.mrf.mxu0
      %v5264 = vadd.f32 %v5190, %v5263
      %5265 = vmatmul.f32.gmra.mxu0 %v4807
      %v5266 = vpop.f32.mrf.mxu0
      %v5267 = vadd.f32 %v5190, %v5266
      %5268 = vmatmul.f32.gmra.mxu0 %v4808
      %v5269 = vpop.f32.mrf.mxu0
      %v5270 = vadd.f32 %v5190, %v5269
      %5271 = vmatmul.f32.gmra.mxu0 %v4809
      %v5272 = vpop.f32.mrf.mxu0
      %v5273 = vadd.f32 %v5190, %v5272
      %5274 = vmatmul.f32.gmra.mxu0 %v4810
      %v5275 = vpop.f32.mrf.mxu0
      %v5276 = vadd.f32 %v5190, %v5275
      %5277 = vmatmul.f32.gmra.mxu0 %v4811
      %v5278 = vpop.f32.mrf.mxu0
      %v5279 = vadd.f32 %v5190, %v5278
      %5280 = vmatmul.f32.gmra.mxu0 %v4812
      %v5281 = vpop.f32.mrf.mxu0
      %v5282 = vadd.f32 %v5190, %v5281
      %5283 = vmatmul.f32.gmra.mxu0 %v4813
      %v5284 = vpop.f32.mrf.mxu0
      %v5285 = vadd.f32 %v5190, %v5284
      %5286 = vmatmul.f32.gmra.mxu0 %v4814
      %v5287 = vpop.f32.mrf.mxu0
      %v5288 = vadd.f32 %v5190, %v5287
      %5289 = vmatmul.f32.gmra.mxu0 %v4815
      %v5290 = vpop.f32.mrf.mxu0
      %v5291 = vadd.f32 %v5190, %v5290
      %5292 = vmatmul.f32.gmra.mxu0 %v4816
      %v5293 = vpop.f32.mrf.mxu0
      %v5294 = vadd.f32 %v5190, %v5293
      %5295 = vmatmul.f32.gmra.mxu0 %v4817
      %v5296 = vpop.f32.mrf.mxu0
      %v5297 = vadd.f32 %v5190, %v5296
      %5298 = vmatmul.f32.gmra.mxu0 %v4818
      %v5299 = vpop.f32.mrf.mxu0
      %v5300 = vadd.f32 %v5190, %v5299
      %5301 = vmatmul.f32.gmra.mxu0 %v4819
      %v5302 = vpop.f32.mrf.mxu0
      %v5303 = vadd.f32 %v5190, %v5302
      %5304 = vdwg.mxu0
      %5305 = vmatpush.msra.mxu0 %v5075
      %5306 = vmatpush.msra.mxu0 %v5074
      %5307 = vmatpush.msra.mxu0 %v5073
      %5308 = vmatpush.msra.mxu0 %v5072
      %5309 = vmatpush.msra.mxu0 %v5071
      %5310 = vmatpush.msra.mxu0 %v5070
      %5311 = vmatpush.msra.mxu0 %v5069
      %5312 = vmatpush.msra.mxu0 %v5068
      %5313 = vmatpush.msra.mxu0 %v5067
      %5314 = vmatpush.msra.mxu0 %v5066
      %5315 = vmatpush.msra.mxu0 %v5065
      %5316 = vmatpush.msra.mxu0 %v5064
      %5317 = vmatpush.msra.mxu0 %v5063
      %5318 = vmatpush.msra.mxu0 %v5062
      %5319 = vmatpush.msra.mxu0 %v5061
      %5320 = vmatpush.msra.mxu0 %v5060
      %5321 = vmatmul.f32.gmra.mxu0 %v4854
      %v5322 = vpop.f32.mrf.mxu0
      %v5323 = vadd.f32 %v5210, %v5322
      %5324 = vmatmul.f32.gmra.mxu0 %v4856
      %v5325 = vpop.f32.mrf.mxu0
      %v5326 = vadd.f32 %v5213, %v5325
      %5327 = vmatmul.f32.gmra.mxu0 %v4858
      %v5328 = vpop.f32.mrf.mxu0
      %v5329 = vadd.f32 %v5216, %v5328
      %5330 = vmatmul.f32.gmra.mxu0 %v4860
      %v5331 = vpop.f32.mrf.mxu0
      %v5332 = vadd.f32 %v5219, %v5331
      %5333 = vmatmul.f32.gmra.mxu0 %v4862
      %v5334 = vpop.f32.mrf.mxu0
      %v5335 = vadd.f32 %v5222, %v5334
      %5336 = vmatmul.f32.gmra.mxu0 %v4864
      %v5337 = vpop.f32.mrf.mxu0
      %v5338 = vadd.f32 %v5225, %v5337
      %5339 = vmatmul.f32.gmra.mxu0 %v4866
      %v5340 = vpop.f32.mrf.mxu0
      %v5341 = vadd.f32 %v5228, %v5340
      %5342 = vmatmul.f32.gmra.mxu0 %v4868
      %v5343 = vpop.f32.mrf.mxu0
      %v5344 = vadd.f32 %v5231, %v5343
      %5345 = vmatmul.f32.gmra.mxu0 %v4870
      %v5346 = vpop.f32.mrf.mxu0
      %v5347 = vadd.f32 %v5234, %v5346
      %5348 = vmatmul.f32.gmra.mxu0 %v4872
      %v5349 = vpop.f32.mrf.mxu0
      %v5350 = vadd.f32 %v5237, %v5349
      %5351 = vmatmul.f32.gmra.mxu0 %v4874
      %v5352 = vpop.f32.mrf.mxu0
      %v5353 = vadd.f32 %v5240, %v5352
      %5354 = vmatmul.f32.gmra.mxu0 %v4876
      %v5355 = vpop.f32.mrf.mxu0
      %v5356 = vadd.f32 %v5243, %v5355
      %5357 = vmatmul.f32.gmra.mxu0 %v4878
      %v5358 = vpop.f32.mrf.mxu0
      %v5359 = vadd.f32 %v5246, %v5358
      %5360 = vmatmul.f32.gmra.mxu0 %v4880
      %v5361 = vpop.f32.mrf.mxu0
      %v5362 = vadd.f32 %v5249, %v5361
      %5363 = vmatmul.f32.gmra.mxu0 %v4882
      %v5364 = vpop.f32.mrf.mxu0
      %v5365 = vadd.f32 %v5252, %v5364
      %5366 = vmatmul.f32.gmra.mxu0 %v4884
      %v5367 = vpop.f32.mrf.mxu0
      %v5368 = vadd.f32 %v5255, %v5367
      %5369 = vmatmul.f32.gmra.mxu0 %v4886
      %v5370 = vpop.f32.mrf.mxu0
      %v5371 = vadd.f32 %v5258, %v5370
      %5372 = vmatmul.f32.gmra.mxu0 %v4888
      %v5373 = vpop.f32.mrf.mxu0
      %v5374 = vadd.f32 %v5261, %v5373
      %5375 = vmatmul.f32.gmra.mxu0 %v4890
      %v5376 = vpop.f32.mrf.mxu0
      %v5377 = vadd.f32 %v5264, %v5376
      %5378 = vmatmul.f32.gmra.mxu0 %v4892
      %v5379 = vpop.f32.mrf.mxu0
      %v5380 = vadd.f32 %v5267, %v5379
      %5381 = vmatmul.f32.gmra.mxu0 %v4894
      %v5382 = vpop.f32.mrf.mxu0
      %v5383 = vadd.f32 %v5270, %v5382
      %5384 = vmatmul.f32.gmra.mxu0 %v4896
      %v5385 = vpop.f32.mrf.mxu0
      %v5386 = vadd.f32 %v5273, %v5385
      %5387 = vmatmul.f32.gmra.mxu0 %v4898
      %v5388 = vpop.f32.mrf.mxu0
      %v5389 = vadd.f32 %v5276, %v5388
      %5390 = vmatmul.f32.gmra.mxu0 %v4900
      %v5391 = vpop.f32.mrf.mxu0
      %v5392 = vadd.f32 %v5279, %v5391
      %5393 = vmatmul.f32.gmra.mxu0 %v4902
      %v5394 = vpop.f32.mrf.mxu0
      %v5395 = vadd.f32 %v5282, %v5394
      %5396 = vmatmul.f32.gmra.mxu0 %v4904
      %v5397 = vpop.f32.mrf.mxu0
      %v5398 = vadd.f32 %v5285, %v5397
      %5399 = vmatmul.f32.gmra.mxu0 %v4906
      %v5400 = vpop.f32.mrf.mxu0
      %v5401 = vadd.f32 %v5288, %v5400
      %5402 = vmatmul.f32.gmra.mxu0 %v4908
      %v5403 = vpop.f32.mrf.mxu0
      %v5404 = vadd.f32 %v5291, %v5403
      %5405 = vmatmul.f32.gmra.mxu0 %v4910
      %v5406 = vpop.f32.mrf.mxu0
      %v5407 = vadd.f32 %v5294, %v5406
      %5408 = vmatmul.f32.gmra.mxu0 %v4912
      %v5409 = vpop.f32.mrf.mxu0
      %v5410 = vadd.f32 %v5297, %v5409
      %5411 = vmatmul.f32.gmra.mxu0 %v4914
      %v5412 = vpop.f32.mrf.mxu0
      %v5413 = vadd.f32 %v5300, %v5412
      %5414 = vmatmul.f32.gmra.mxu0 %v4915
      %v5415 = vpop.f32.mrf.mxu0
      %v5416 = vadd.f32 %v5303, %v5415
      %5417 = vdwg.mxu0
      %5418 = vmatpush.msra.mxu0 %v5091
      %5419 = vmatpush.msra.mxu0 %v5090
      %5420 = vmatpush.msra.mxu0 %v5089
      %5421 = vmatpush.msra.mxu0 %v5088
      %5422 = vmatpush.msra.mxu0 %v5087
      %5423 = vmatpush.msra.mxu0 %v5086
      %5424 = vmatpush.msra.mxu0 %v5085
      %5425 = vmatpush.msra.mxu0 %v5084
      %5426 = vmatpush.msra.mxu0 %v5083
      %5427 = vmatpush.msra.mxu0 %v5082
      %5428 = vmatpush.msra.mxu0 %v5081
      %5429 = vmatpush.msra.mxu0 %v5080
      %5430 = vmatpush.msra.mxu0 %v5079
      %5431 = vmatpush.msra.mxu0 %v5078
      %5432 = vmatpush.msra.mxu0 %v5077
      %5433 = vmatpush.msra.mxu0 %v5076
      %5434 = vmatmul.f32.gmra.mxu0 %v4950
      %v5435 = vpop.f32.mrf.mxu0
      %v5436 = vadd.f32 %v5323, %v5435
      %5437 = vmatmul.f32.gmra.mxu0 %v4952
      %v5438 = vpop.f32.mrf.mxu0
      %v5439 = vadd.f32 %v5326, %v5438
      %5440 = vmatmul.f32.gmra.mxu0 %v4954
      %v5441 = vpop.f32.mrf.mxu0
      %v5442 = vadd.f32 %v5329, %v5441
      %5443 = vmatmul.f32.gmra.mxu0 %v4956
      %v5444 = vpop.f32.mrf.mxu0
      %v5445 = vadd.f32 %v5332, %v5444
      %5446 = vmatmul.f32.gmra.mxu0 %v4958
      %v5447 = vpop.f32.mrf.mxu0
      %v5448 = vadd.f32 %v5335, %v5447
      %5449 = vmatmul.f32.gmra.mxu0 %v4960
      %v5450 = vpop.f32.mrf.mxu0
      %v5451 = vadd.f32 %v5338, %v5450
      %5452 = vmatmul.f32.gmra.mxu0 %v4962
      %v5453 = vpop.f32.mrf.mxu0
      %v5454 = vadd.f32 %v5341, %v5453
      %5455 = vmatmul.f32.gmra.mxu0 %v4964
      %v5456 = vpop.f32.mrf.mxu0
      %v5457 = vadd.f32 %v5344, %v5456
      %5458 = vmatmul.f32.gmra.mxu0 %v4966
      %v5459 = vpop.f32.mrf.mxu0
      %v5460 = vadd.f32 %v5347, %v5459
      %5461 = vmatmul.f32.gmra.mxu0 %v4968
      %v5462 = vpop.f32.mrf.mxu0
      %v5463 = vadd.f32 %v5350, %v5462
      %5464 = vmatmul.f32.gmra.mxu0 %v4970
      %v5465 = vpop.f32.mrf.mxu0
      %v5466 = vadd.f32 %v5353, %v5465
      %5467 = vmatmul.f32.gmra.mxu0 %v4972
      %v5468 = vpop.f32.mrf.mxu0
      %v5469 = vadd.f32 %v5356, %v5468
      %5470 = vmatmul.f32.gmra.mxu0 %v4974
      %v5471 = vpop.f32.mrf.mxu0
      %v5472 = vadd.f32 %v5359, %v5471
      %5473 = vmatmul.f32.gmra.mxu0 %v4976
      %v5474 = vpop.f32.mrf.mxu0
      %v5475 = vadd.f32 %v5362, %v5474
      %5476 = vmatmul.f32.gmra.mxu0 %v4978
      %v5477 = vpop.f32.mrf.mxu0
      %v5478 = vadd.f32 %v5365, %v5477
      %5479 = vmatmul.f32.gmra.mxu0 %v4980
      %v5480 = vpop.f32.mrf.mxu0
      %v5481 = vadd.f32 %v5368, %v5480
      %5482 = vmatmul.f32.gmra.mxu0 %v4982
      %v5483 = vpop.f32.mrf.mxu0
      %v5484 = vadd.f32 %v5371, %v5483
      %5485 = vmatmul.f32.gmra.mxu0 %v4984
      %v5486 = vpop.f32.mrf.mxu0
      %v5487 = vadd.f32 %v5374, %v5486
      %5488 = vmatmul.f32.gmra.mxu0 %v4986
      %v5489 = vpop.f32.mrf.mxu0
      %v5490 = vadd.f32 %v5377, %v5489
      %5491 = vmatmul.f32.gmra.mxu0 %v4988
      %v5492 = vpop.f32.mrf.mxu0
      %v5493 = vadd.f32 %v5380, %v5492
      %5494 = vmatmul.f32.gmra.mxu0 %v4990
      %v5495 = vpop.f32.mrf.mxu0
      %v5496 = vadd.f32 %v5383, %v5495
      %5497 = vmatmul.f32.gmra.mxu0 %v4992
      %v5498 = vpop.f32.mrf.mxu0
      %v5499 = vadd.f32 %v5386, %v5498
      %5500 = vmatmul.f32.gmra.mxu0 %v4994
      %v5501 = vpop.f32.mrf.mxu0
      %v5502 = vadd.f32 %v5389, %v5501
      %5503 = vmatmul.f32.gmra.mxu0 %v4996
      %v5504 = vpop.f32.mrf.mxu0
      %v5505 = vadd.f32 %v5392, %v5504
      %5506 = vmatmul.f32.gmra.mxu0 %v4998
      %v5507 = vpop.f32.mrf.mxu0
      %v5508 = vadd.f32 %v5395, %v5507
      %5509 = vmatmul.f32.gmra.mxu0 %v5000
      %v5510 = vpop.f32.mrf.mxu0
      %v5511 = vadd.f32 %v5398, %v5510
      %5512 = vmatmul.f32.gmra.mxu0 %v5002
      %v5513 = vpop.f32.mrf.mxu0
      %v5514 = vadd.f32 %v5401, %v5513
      %5515 = vmatmul.f32.gmra.mxu0 %v5004
      %v5516 = vpop.f32.mrf.mxu0
      %v5517 = vadd.f32 %v5404, %v5516
      %5518 = vmatmul.f32.gmra.mxu0 %v5006
      %v5519 = vpop.f32.mrf.mxu0
      %v5520 = vadd.f32 %v5407, %v5519
      %5521 = vmatmul.f32.gmra.mxu0 %v5008
      %v5522 = vpop.f32.mrf.mxu0
      %v5523 = vadd.f32 %v5410, %v5522
      %5524 = vmatmul.f32.gmra.mxu0 %v5010
      %v5525 = vpop.f32.mrf.mxu0
      %v5526 = vadd.f32 %v5413, %v5525
      %5527 = vmatmul.f32.gmra.mxu0 %v5011
      %v5528 = vpop.f32.mrf.mxu0
      %v5529 = vadd.f32 %v5416, %v5528
      %5530 = vdwg.mxu0
      %5531 = vmatpush.msra.mxu0 %v5107
      %5532 = vmatpush.msra.mxu0 %v5106
      %5533 = vmatpush.msra.mxu0 %v5105
      %5534 = vmatpush.msra.mxu0 %v5104
      %5535 = vmatpush.msra.mxu0 %v5103
      %5536 = vmatpush.msra.mxu0 %v5102
      %5537 = vmatpush.msra.mxu0 %v5101
      %5538 = vmatpush.msra.mxu0 %v5100
      %5539 = vmatpush.msra.mxu0 %v5099
      %5540 = vmatpush.msra.mxu0 %v5098
      %5541 = vmatpush.msra.mxu0 %v5097
      %5542 = vmatpush.msra.mxu0 %v5096
      %5543 = vmatpush.msra.mxu0 %v5095
      %5544 = vmatpush.msra.mxu0 %v5094
      %5545 = vmatpush.msra.mxu0 %v5093
      %5546 = vmatpush.msra.mxu0 %v5092
      %5547 = vmatmul.f32.gmra.mxu0 %v4790
      %v5548 = vpop.f32.mrf.mxu0
      %v5549 = vadd.f32 %v5436, %v5548
      %5550 = vmatmul.f32.gmra.mxu0 %v4791
      %v5551 = vpop.f32.mrf.mxu0
      %v5552 = vadd.f32 %v5439, %v5551
      %5553 = vmatmul.f32.gmra.mxu0 %v4792
      %v5554 = vpop.f32.mrf.mxu0
      %v5555 = vadd.f32 %v5442, %v5554
      %5556 = vmatmul.f32.gmra.mxu0 %v4793
      %v5557 = vpop.f32.mrf.mxu0
      %v5558 = vadd.f32 %v5445, %v5557
      %5559 = vmatmul.f32.gmra.mxu0 %v4794
      %v5560 = vpop.f32.mrf.mxu0
      %v5561 = vadd.f32 %v5448, %v5560
      %5562 = vmatmul.f32.gmra.mxu0 %v4795
      %v5563 = vpop.f32.mrf.mxu0
      %v5564 = vadd.f32 %v5451, %v5563
      %5565 = vmatmul.f32.gmra.mxu0 %v4796
      %v5566 = vpop.f32.mrf.mxu0
      %v5567 = vadd.f32 %v5454, %v5566
      %5568 = vmatmul.f32.gmra.mxu0 %v4797
      %v5569 = vpop.f32.mrf.mxu0
      %v5570 = vadd.f32 %v5457, %v5569
      %5571 = vmatmul.f32.gmra.mxu0 %v4798
      %v5572 = vpop.f32.mrf.mxu0
      %v5573 = vadd.f32 %v5460, %v5572
      %5574 = vmatmul.f32.gmra.mxu0 %v4799
      %v5575 = vpop.f32.mrf.mxu0
      %v5576 = vadd.f32 %v5463, %v5575
      %5577 = vmatmul.f32.gmra.mxu0 %v4800
      %v5578 = vpop.f32.mrf.mxu0
      %v5579 = vadd.f32 %v5466, %v5578
      %5580 = vmatmul.f32.gmra.mxu0 %v4801
      %v5581 = vpop.f32.mrf.mxu0
      %v5582 = vadd.f32 %v5469, %v5581
      %5583 = vmatmul.f32.gmra.mxu0 %v4802
      %v5584 = vpop.f32.mrf.mxu0
      %v5585 = vadd.f32 %v5472, %v5584
      %5586 = vmatmul.f32.gmra.mxu0 %v4803
      %v5587 = vpop.f32.mrf.mxu0
      %v5588 = vadd.f32 %v5475, %v5587
      %5589 = vmatmul.f32.gmra.mxu0 %v4804
      %v5590 = vpop.f32.mrf.mxu0
      %v5591 = vadd.f32 %v5478, %v5590
      %5592 = vmatmul.f32.gmra.mxu0 %v4805
      %v5593 = vpop.f32.mrf.mxu0
      %v5594 = vadd.f32 %v5481, %v5593
      %5595 = vmatmul.f32.gmra.mxu0 %v4806
      %v5596 = vpop.f32.mrf.mxu0
      %v5597 = vadd.f32 %v5484, %v5596
      %5598 = vmatmul.f32.gmra.mxu0 %v4807
      %v5599 = vpop.f32.mrf.mxu0
      %v5600 = vadd.f32 %v5487, %v5599
      %5601 = vmatmul.f32.gmra.mxu0 %v4808
      %v5602 = vpop.f32.mrf.mxu0
      %v5603 = vadd.f32 %v5490, %v5602
      %5604 = vmatmul.f32.gmra.mxu0 %v4809
      %v5605 = vpop.f32.mrf.mxu0
      %v5606 = vadd.f32 %v5493, %v5605
      %5607 = vmatmul.f32.gmra.mxu0 %v4810
      %v5608 = vpop.f32.mrf.mxu0
      %v5609 = vadd.f32 %v5496, %v5608
      %5610 = vmatmul.f32.gmra.mxu0 %v4811
      %v5611 = vpop.f32.mrf.mxu0
      %v5612 = vadd.f32 %v5499, %v5611
      %5613 = vmatmul.f32.gmra.mxu0 %v4812
      %v5614 = vpop.f32.mrf.mxu0
      %v5615 = vadd.f32 %v5502, %v5614
      %5616 = vmatmul.f32.gmra.mxu0 %v4813
      %v5617 = vpop.f32.mrf.mxu0
      %v5618 = vadd.f32 %v5505, %v5617
      %5619 = vmatmul.f32.gmra.mxu0 %v4814
      %v5620 = vpop.f32.mrf.mxu0
      %v5621 = vadd.f32 %v5508, %v5620
      %5622 = vmatmul.f32.gmra.mxu0 %v4815
      %v5623 = vpop.f32.mrf.mxu0
      %v5624 = vadd.f32 %v5511, %v5623
      %5625 = vmatmul.f32.gmra.mxu0 %v4816
      %v5626 = vpop.f32.mrf.mxu0
      %v5627 = vadd.f32 %v5514, %v5626
      %5628 = vmatmul.f32.gmra.mxu0 %v4817
      %v5629 = vpop.f32.mrf.mxu0
      %v5630 = vadd.f32 %v5517, %v5629
      %5631 = vmatmul.f32.gmra.mxu0 %v4818
      %v5632 = vpop.f32.mrf.mxu0
      %v5633 = vadd.f32 %v5520, %v5632
      %5634 = vmatmul.f32.gmra.mxu0 %v4819
      %v5635 = vpop.f32.mrf.mxu0
      %v5636 = vadd.f32 %v5523, %v5635
      %5637 = vmatmul.f32.gmra.mxu0 0.0
      %v5638 = vpop.f32.mrf.mxu0
      %v5639 = vadd.f32 %v5526, %v5638
      %5640 = vmatmul.f32.gmra.mxu0 0.0
      %v5641 = vpop.f32.mrf.mxu0
      %v5642 = vadd.f32 %v5529, %v5641
      %5643 = vdwg.mxu0
      %5644 = vmatpush.msra.mxu0 %v5123
      %5645 = vmatpush.msra.mxu0 %v5122
      %5646 = vmatpush.msra.mxu0 %v5121
      %5647 = vmatpush.msra.mxu0 %v5120
      %5648 = vmatpush.msra.mxu0 %v5119
      %5649 = vmatpush.msra.mxu0 %v5118
      %5650 = vmatpush.msra.mxu0 %v5117
      %5651 = vmatpush.msra.mxu0 %v5116
      %5652 = vmatpush.msra.mxu0 %v5115
      %5653 = vmatpush.msra.mxu0 %v5114
      %5654 = vmatpush.msra.mxu0 %v5113
      %5655 = vmatpush.msra.mxu0 %v5112
      %5656 = vmatpush.msra.mxu0 %v5111
      %5657 = vmatpush.msra.mxu0 %v5110
      %5658 = vmatpush.msra.mxu0 %v5109
      %5659 = vmatpush.msra.mxu0 %v5108
      %5660 = vmatmul.f32.gmra.mxu0 %v4858
      %v5661 = vpop.f32.mrf.mxu0
      %v5662 = vadd.f32 %v5549, %v5661
      %5663 = vmatmul.f32.gmra.mxu0 %v4860
      %v5664 = vpop.f32.mrf.mxu0
      %v5665 = vadd.f32 %v5552, %v5664
      %5666 = vmatmul.f32.gmra.mxu0 %v4862
      %v5667 = vpop.f32.mrf.mxu0
      %v5668 = vadd.f32 %v5555, %v5667
      %5669 = vmatmul.f32.gmra.mxu0 %v4864
      %v5670 = vpop.f32.mrf.mxu0
      %v5671 = vadd.f32 %v5558, %v5670
      %5672 = vmatmul.f32.gmra.mxu0 %v4866
      %v5673 = vpop.f32.mrf.mxu0
      %v5674 = vadd.f32 %v5561, %v5673
      %5675 = vmatmul.f32.gmra.mxu0 %v4868
      %v5676 = vpop.f32.mrf.mxu0
      %v5677 = vadd.f32 %v5564, %v5676
      %5678 = vmatmul.f32.gmra.mxu0 %v4870
      %v5679 = vpop.f32.mrf.mxu0
      %v5680 = vadd.f32 %v5567, %v5679
      %5681 = vmatmul.f32.gmra.mxu0 %v4872
      %v5682 = vpop.f32.mrf.mxu0
      %v5683 = vadd.f32 %v5570, %v5682
      %5684 = vmatmul.f32.gmra.mxu0 %v4874
      %v5685 = vpop.f32.mrf.mxu0
      %v5686 = vadd.f32 %v5573, %v5685
      %5687 = vmatmul.f32.gmra.mxu0 %v4876
      %v5688 = vpop.f32.mrf.mxu0
      %v5689 = vadd.f32 %v5576, %v5688
      %5690 = vmatmul.f32.gmra.mxu0 %v4878
      %v5691 = vpop.f32.mrf.mxu0
      %v5692 = vadd.f32 %v5579, %v5691
      %5693 = vmatmul.f32.gmra.mxu0 %v4880
      %v5694 = vpop.f32.mrf.mxu0
      %v5695 = vadd.f32 %v5582, %v5694
      %5696 = vmatmul.f32.gmra.mxu0 %v4882
      %v5697 = vpop.f32.mrf.mxu0
      %v5698 = vadd.f32 %v5585, %v5697
      %5699 = vmatmul.f32.gmra.mxu0 %v4884
      %v5700 = vpop.f32.mrf.mxu0
      %v5701 = vadd.f32 %v5588, %v5700
      %5702 = vmatmul.f32.gmra.mxu0 %v4886
      %v5703 = vpop.f32.mrf.mxu0
      %v5704 = vadd.f32 %v5591, %v5703
      %5705 = vmatmul.f32.gmra.mxu0 %v4888
      %v5706 = vpop.f32.mrf.mxu0
      %v5707 = vadd.f32 %v5594, %v5706
      %5708 = vmatmul.f32.gmra.mxu0 %v4890
      %v5709 = vpop.f32.mrf.mxu0
      %v5710 = vadd.f32 %v5597, %v5709
      %5711 = vmatmul.f32.gmra.mxu0 %v4892
      %v5712 = vpop.f32.mrf.mxu0
      %v5713 = vadd.f32 %v5600, %v5712
      %5714 = vmatmul.f32.gmra.mxu0 %v4894
      %v5715 = vpop.f32.mrf.mxu0
      %v5716 = vadd.f32 %v5603, %v5715
      %5717 = vmatmul.f32.gmra.mxu0 %v4896
      %v5718 = vpop.f32.mrf.mxu0
      %v5719 = vadd.f32 %v5606, %v5718
      %5720 = vmatmul.f32.gmra.mxu0 %v4898
      %v5721 = vpop.f32.mrf.mxu0
      %v5722 = vadd.f32 %v5609, %v5721
      %5723 = vmatmul.f32.gmra.mxu0 %v4900
      %v5724 = vpop.f32.mrf.mxu0
      %v5725 = vadd.f32 %v5612, %v5724
      %5726 = vmatmul.f32.gmra.mxu0 %v4902
      %v5727 = vpop.f32.mrf.mxu0
      %v5728 = vadd.f32 %v5615, %v5727
      %5729 = vmatmul.f32.gmra.mxu0 %v4904
      %v5730 = vpop.f32.mrf.mxu0
      %v5731 = vadd.f32 %v5618, %v5730
      %5732 = vmatmul.f32.gmra.mxu0 %v4906
      %v5733 = vpop.f32.mrf.mxu0
      %v5734 = vadd.f32 %v5621, %v5733
      %5735 = vmatmul.f32.gmra.mxu0 %v4908
      %v5736 = vpop.f32.mrf.mxu0
      %v5737 = vadd.f32 %v5624, %v5736
      %5738 = vmatmul.f32.gmra.mxu0 %v4910
      %v5739 = vpop.f32.mrf.mxu0
      %v5740 = vadd.f32 %v5627, %v5739
      %5741 = vmatmul.f32.gmra.mxu0 %v4912
      %v5742 = vpop.f32.mrf.mxu0
      %v5743 = vadd.f32 %v5630, %v5742
      %5744 = vmatmul.f32.gmra.mxu0 %v4914
      %v5745 = vpop.f32.mrf.mxu0
      %v5746 = vadd.f32 %v5633, %v5745
      %5747 = vmatmul.f32.gmra.mxu0 %v4915
      %v5748 = vpop.f32.mrf.mxu0
      %v5749 = vadd.f32 %v5636, %v5748
      %5750 = vmatmul.f32.gmra.mxu0 %v2198
      %v5751 = vpop.f32.mrf.mxu0
      %v5752 = vadd.f32 %v5639, %v5751
      %5753 = vmatmul.f32.gmra.mxu0 %v2198
      %v5754 = vpop.f32.mrf.mxu0
      %v5755 = vadd.f32 %v5642, %v5754
      %5756 = vdwg.mxu0
      %5757 = vmatpush.msra.mxu0 %v5139
      %5758 = vmatpush.msra.mxu0 %v5138
      %5759 = vmatpush.msra.mxu0 %v5137
      %5760 = vmatpush.msra.mxu0 %v5136
      %5761 = vmatpush.msra.mxu0 %v5135
      %5762 = vmatpush.msra.mxu0 %v5134
      %5763 = vmatpush.msra.mxu0 %v5133
      %5764 = vmatpush.msra.mxu0 %v5132
      %5765 = vmatpush.msra.mxu0 %v5131
      %5766 = vmatpush.msra.mxu0 %v5130
      %5767 = vmatpush.msra.mxu0 %v5129
      %5768 = vmatpush.msra.mxu0 %v5128
      %5769 = vmatpush.msra.mxu0 %v5127
      %5770 = vmatpush.msra.mxu0 %v5126
      %5771 = vmatpush.msra.mxu0 %v5125
      %5772 = vmatpush.msra.mxu0 %v5124
      %5773 = vmatmul.f32.gmra.mxu0 %v4954
      %v5774 = vpop.f32.mrf.mxu0
      %v5775 = vadd.f32 %v5662, %v5774
      %5776 = vmatmul.f32.gmra.mxu0 %v4956
      %v5777 = vpop.f32.mrf.mxu0
      %v5778 = vadd.f32 %v5665, %v5777
      %5779 = vmatmul.f32.gmra.mxu0 %v4958
      %v5780 = vpop.f32.mrf.mxu0
      %v5781 = vadd.f32 %v5668, %v5780
      %5782 = vmatmul.f32.gmra.mxu0 %v4960
      %v5783 = vpop.f32.mrf.mxu0
      %v5784 = vadd.f32 %v5671, %v5783
      %5785 = vmatmul.f32.gmra.mxu0 %v4962
      %v5786 = vpop.f32.mrf.mxu0
      %v5787 = vadd.f32 %v5674, %v5786
      %5788 = vmatmul.f32.gmra.mxu0 %v4964
      %v5789 = vpop.f32.mrf.mxu0
      %v5790 = vadd.f32 %v5677, %v5789
      %5791 = vmatmul.f32.gmra.mxu0 %v4966
      %v5792 = vpop.f32.mrf.mxu0
      %v5793 = vadd.f32 %v5680, %v5792
      %5794 = vmatmul.f32.gmra.mxu0 %v4968
      %v5795 = vpop.f32.mrf.mxu0
      %v5796 = vadd.f32 %v5683, %v5795
      %5797 = vmatmul.f32.gmra.mxu0 %v4970
      %v5798 = vpop.f32.mrf.mxu0
      %v5799 = vadd.f32 %v5686, %v5798
      %5800 = vmatmul.f32.gmra.mxu0 %v4972
      %v5801 = vpop.f32.mrf.mxu0
      %v5802 = vadd.f32 %v5689, %v5801
      %5803 = vmatmul.f32.gmra.mxu0 %v4974
      %v5804 = vpop.f32.mrf.mxu0
      %v5805 = vadd.f32 %v5692, %v5804
      %5806 = vmatmul.f32.gmra.mxu0 %v4976
      %v5807 = vpop.f32.mrf.mxu0
      %v5808 = vadd.f32 %v5695, %v5807
      %5809 = vmatmul.f32.gmra.mxu0 %v4978
      %v5810 = vpop.f32.mrf.mxu0
      %v5811 = vadd.f32 %v5698, %v5810
      %5812 = vmatmul.f32.gmra.mxu0 %v4980
      %v5813 = vpop.f32.mrf.mxu0
      %v5814 = vadd.f32 %v5701, %v5813
      %5815 = vmatmul.f32.gmra.mxu0 %v4982
      %v5816 = vpop.f32.mrf.mxu0
      %v5817 = vadd.f32 %v5704, %v5816
      %5818 = vmatmul.f32.gmra.mxu0 %v4984
      %v5819 = vpop.f32.mrf.mxu0
      %v5820 = vadd.f32 %v5707, %v5819
      %5821 = vmatmul.f32.gmra.mxu0 %v4986
      %v5822 = vpop.f32.mrf.mxu0
      %v5823 = vadd.f32 %v5710, %v5822
      %5824 = vmatmul.f32.gmra.mxu0 %v4988
      %v5825 = vpop.f32.mrf.mxu0
      %v5826 = vadd.f32 %v5713, %v5825
      %5827 = vmatmul.f32.gmra.mxu0 %v4990
      %v5828 = vpop.f32.mrf.mxu0
      %v5829 = vadd.f32 %v5716, %v5828
      %5830 = vmatmul.f32.gmra.mxu0 %v4992
      %v5831 = vpop.f32.mrf.mxu0
      %v5832 = vadd.f32 %v5719, %v5831
      %5833 = vmatmul.f32.gmra.mxu0 %v4994
      %v5834 = vpop.f32.mrf.mxu0
      %v5835 = vadd.f32 %v5722, %v5834
      %5836 = vmatmul.f32.gmra.mxu0 %v4996
      %v5837 = vpop.f32.mrf.mxu0
      %v5838 = vadd.f32 %v5725, %v5837
      %5839 = vmatmul.f32.gmra.mxu0 %v4998
      %v5840 = vpop.f32.mrf.mxu0
      %v5841 = vadd.f32 %v5728, %v5840
      %5842 = vmatmul.f32.gmra.mxu0 %v5000
      %v5843 = vpop.f32.mrf.mxu0
      %v5844 = vadd.f32 %v5731, %v5843
      %5845 = vmatmul.f32.gmra.mxu0 %v5002
      %v5846 = vpop.f32.mrf.mxu0
      %v5847 = vadd.f32 %v5734, %v5846
      %5848 = vmatmul.f32.gmra.mxu0 %v5004
      %v5849 = vpop.f32.mrf.mxu0
      %v5850 = vadd.f32 %v5737, %v5849
      %5851 = vmatmul.f32.gmra.mxu0 %v5006
      %v5852 = vpop.f32.mrf.mxu0
      %v5853 = vadd.f32 %v5740, %v5852
      %5854 = vmatmul.f32.gmra.mxu0 %v5008
      %v5855 = vpop.f32.mrf.mxu0
      %v5856 = vadd.f32 %v5743, %v5855
      %5857 = vmatmul.f32.gmra.mxu0 %v5010
      %v5858 = vpop.f32.mrf.mxu0
      %v5859 = vadd.f32 %v5746, %v5858
      %5860 = vmatmul.f32.gmra.mxu0 %v5011
      %v5861 = vpop.f32.mrf.mxu0
      %v5862 = vadd.f32 %v5749, %v5861
      %5863 = vmatmul.f32.gmra.mxu0 %v2200
      %v5864 = vpop.f32.mrf.mxu0
      %v5865 = vadd.f32 %v5752, %v5864
      %5866 = vmatmul.f32.gmra.mxu0 %v2200
      %v5867 = vpop.f32.mrf.mxu0
      %v5868 = vadd.f32 %v5755, %v5867
      %5869 = vdwg.mxu0
      %5870 = vmatpush.msra.mxu0 %v5155
      %5871 = vmatpush.msra.mxu0 %v5154
      %5872 = vmatpush.msra.mxu0 %v5153
      %5873 = vmatpush.msra.mxu0 %v5152
      %5874 = vmatpush.msra.mxu0 %v5151
      %5875 = vmatpush.msra.mxu0 %v5150
      %5876 = vmatpush.msra.mxu0 %v5149
      %5877 = vmatpush.msra.mxu0 %v5148
      %5878 = vmatpush.msra.mxu0 %v5147
      %5879 = vmatpush.msra.mxu0 %v5146
      %5880 = vmatpush.msra.mxu0 %v5145
      %5881 = vmatpush.msra.mxu0 %v5144
      %5882 = vmatpush.msra.mxu0 %v5143
      %5883 = vmatpush.msra.mxu0 %v5142
      %5884 = vmatpush.msra.mxu0 %v5141
      %5885 = vmatpush.msra.mxu0 %v5140
      %5886 = vmatmul.f32.gmra.mxu0 %v4792
      %v5887 = vpop.f32.mrf.mxu0
      %v5888 = vadd.f32 %v5775, %v5887
      %5889 = vmatmul.f32.gmra.mxu0 %v4793
      %v5890 = vpop.f32.mrf.mxu0
      %v5891 = vadd.f32 %v5778, %v5890
      %5892 = vmatmul.f32.gmra.mxu0 %v4794
      %v5893 = vpop.f32.mrf.mxu0
      %v5894 = vadd.f32 %v5781, %v5893
      %5895 = vmatmul.f32.gmra.mxu0 %v4795
      %v5896 = vpop.f32.mrf.mxu0
      %v5897 = vadd.f32 %v5784, %v5896
      %5898 = vmatmul.f32.gmra.mxu0 %v4796
      %v5899 = vpop.f32.mrf.mxu0
      %v5900 = vadd.f32 %v5787, %v5899
      %5901 = vmatmul.f32.gmra.mxu0 %v4797
      %v5902 = vpop.f32.mrf.mxu0
      %v5903 = vadd.f32 %v5790, %v5902
      %5904 = vmatmul.f32.gmra.mxu0 %v4798
      %v5905 = vpop.f32.mrf.mxu0
      %v5906 = vadd.f32 %v5793, %v5905
      %5907 = vmatmul.f32.gmra.mxu0 %v4799
      %v5908 = vpop.f32.mrf.mxu0
      %v5909 = vadd.f32 %v5796, %v5908
      %5910 = vmatmul.f32.gmra.mxu0 %v4800
      %v5911 = vpop.f32.mrf.mxu0
      %v5912 = vadd.f32 %v5799, %v5911
      %5913 = vmatmul.f32.gmra.mxu0 %v4801
      %v5914 = vpop.f32.mrf.mxu0
      %v5915 = vadd.f32 %v5802, %v5914
      %5916 = vmatmul.f32.gmra.mxu0 %v4802
      %v5917 = vpop.f32.mrf.mxu0
      %v5918 = vadd.f32 %v5805, %v5917
      %5919 = vmatmul.f32.gmra.mxu0 %v4803
      %v5920 = vpop.f32.mrf.mxu0
      %v5921 = vadd.f32 %v5808, %v5920
      %5922 = vmatmul.f32.gmra.mxu0 %v4804
      %v5923 = vpop.f32.mrf.mxu0
      %v5924 = vadd.f32 %v5811, %v5923
      %5925 = vmatmul.f32.gmra.mxu0 %v4805
      %v5926 = vpop.f32.mrf.mxu0
      %v5927 = vadd.f32 %v5814, %v5926
      %5928 = vmatmul.f32.gmra.mxu0 %v4806
      %v5929 = vpop.f32.mrf.mxu0
      %v5930 = vadd.f32 %v5817, %v5929
      %5931 = vmatmul.f32.gmra.mxu0 %v4807
      %v5932 = vpop.f32.mrf.mxu0
      %v5933 = vadd.f32 %v5820, %v5932
      %5934 = vmatmul.f32.gmra.mxu0 %v4808
      %v5935 = vpop.f32.mrf.mxu0
      %v5936 = vadd.f32 %v5823, %v5935
      %5937 = vmatmul.f32.gmra.mxu0 %v4809
      %v5938 = vpop.f32.mrf.mxu0
      %v5939 = vadd.f32 %v5826, %v5938
      %5940 = vmatmul.f32.gmra.mxu0 %v4810
      %v5941 = vpop.f32.mrf.mxu0
      %v5942 = vadd.f32 %v5829, %v5941
      %5943 = vmatmul.f32.gmra.mxu0 %v4811
      %v5944 = vpop.f32.mrf.mxu0
      %v5945 = vadd.f32 %v5832, %v5944
      %5946 = vmatmul.f32.gmra.mxu0 %v4812
      %v5947 = vpop.f32.mrf.mxu0
      %v5948 = vadd.f32 %v5835, %v5947
      %5949 = vmatmul.f32.gmra.mxu0 %v4813
      %v5950 = vpop.f32.mrf.mxu0
      %v5951 = vadd.f32 %v5838, %v5950
      %5952 = vmatmul.f32.gmra.mxu0 %v4814
      %v5953 = vpop.f32.mrf.mxu0
      %v5954 = vadd.f32 %v5841, %v5953
      %5955 = vmatmul.f32.gmra.mxu0 %v4815
      %v5956 = vpop.f32.mrf.mxu0
      %v5957 = vadd.f32 %v5844, %v5956
      %5958 = vmatmul.f32.gmra.mxu0 %v4816
      %v5959 = vpop.f32.mrf.mxu0
      %v5960 = vadd.f32 %v5847, %v5959
      %5961 = vmatmul.f32.gmra.mxu0 %v4817
      %v5962 = vpop.f32.mrf.mxu0
      %v5963 = vadd.f32 %v5850, %v5962
      %5964 = vmatmul.f32.gmra.mxu0 %v4818
      %v5965 = vpop.f32.mrf.mxu0
      %v5966 = vadd.f32 %v5853, %v5965
      %5967 = vmatmul.f32.gmra.mxu0 %v4819
      %v5968 = vpop.f32.mrf.mxu0
      %v5969 = vadd.f32 %v5856, %v5968
      %5970 = vmatmul.f32.gmra.mxu0 0.0
      %v5971 = vpop.f32.mrf.mxu0
      %v5972 = vadd.f32 %v5859, %v5971
      %5973 = vmatmul.f32.gmra.mxu0 0.0
      %v5974 = vpop.f32.mrf.mxu0
      %v5975 = vadd.f32 %v5862, %v5974
      %5976 = vmatmul.f32.gmra.mxu0 0.0
      %v5977 = vpop.f32.mrf.mxu0
      %v5978 = vadd.f32 %v5865, %v5977
      %5979 = vmatmul.f32.gmra.mxu0 0.0
      %v5980 = vpop.f32.mrf.mxu0
      %v5981 = vadd.f32 %v5868, %v5980
      %5982 = vdwg.mxu0
      %5983 = vmatpush.msra.mxu0 %v5171
      %5984 = vmatpush.msra.mxu0 %v5170
      %5985 = vmatpush.msra.mxu0 %v5169
      %5986 = vmatpush.msra.mxu0 %v5168
      %5987 = vmatpush.msra.mxu0 %v5167
      %5988 = vmatpush.msra.mxu0 %v5166
      %5989 = vmatpush.msra.mxu0 %v5165
      %5990 = vmatpush.msra.mxu0 %v5164
      %5991 = vmatpush.msra.mxu0 %v5163
      %5992 = vmatpush.msra.mxu0 %v5162
      %5993 = vmatpush.msra.mxu0 %v5161
      %5994 = vmatpush.msra.mxu0 %v5160
      %5995 = vmatpush.msra.mxu0 %v5159
      %5996 = vmatpush.msra.mxu0 %v5158
      %5997 = vmatpush.msra.mxu0 %v5157
      %5998 = vmatpush.msra.mxu0 %v5156
      %5999 = vmatmul.f32.gmra.mxu0 %v4862
      %v6000 = vpop.f32.mrf.mxu0
      %v6001 = vadd.f32 %v5888, %v6000
      %6002 = vmatmul.f32.gmra.mxu0 %v4864
      %v6003 = vpop.f32.mrf.mxu0
      %v6004 = vadd.f32 %v5891, %v6003
      %6005 = vmatmul.f32.gmra.mxu0 %v4866
      %v6006 = vpop.f32.mrf.mxu0
      %v6007 = vadd.f32 %v5894, %v6006
      %6008 = vmatmul.f32.gmra.mxu0 %v4868
      %v6009 = vpop.f32.mrf.mxu0
      %v6010 = vadd.f32 %v5897, %v6009
      %6011 = vmatmul.f32.gmra.mxu0 %v4870
      %v6012 = vpop.f32.mrf.mxu0
      %v6013 = vadd.f32 %v5900, %v6012
      %6014 = vmatmul.f32.gmra.mxu0 %v4872
      %v6015 = vpop.f32.mrf.mxu0
      %v6016 = vadd.f32 %v5903, %v6015
      %6017 = vmatmul.f32.gmra.mxu0 %v4874
      %v6018 = vpop.f32.mrf.mxu0
      %v6019 = vadd.f32 %v5906, %v6018
      %6020 = vmatmul.f32.gmra.mxu0 %v4876
      %v6021 = vpop.f32.mrf.mxu0
      %v6022 = vadd.f32 %v5909, %v6021
      %6023 = vmatmul.f32.gmra.mxu0 %v4878
      %v6024 = vpop.f32.mrf.mxu0
      %v6025 = vadd.f32 %v5912, %v6024
      %6026 = vmatmul.f32.gmra.mxu0 %v4880
      %v6027 = vpop.f32.mrf.mxu0
      %v6028 = vadd.f32 %v5915, %v6027
      %6029 = vmatmul.f32.gmra.mxu0 %v4882
      %v6030 = vpop.f32.mrf.mxu0
      %v6031 = vadd.f32 %v5918, %v6030
      %6032 = vmatmul.f32.gmra.mxu0 %v4884
      %v6033 = vpop.f32.mrf.mxu0
      %v6034 = vadd.f32 %v5921, %v6033
      %6035 = vmatmul.f32.gmra.mxu0 %v4886
      %v6036 = vpop.f32.mrf.mxu0
      %v6037 = vadd.f32 %v5924, %v6036
      %6038 = vmatmul.f32.gmra.mxu0 %v4888
      %v6039 = vpop.f32.mrf.mxu0
      %v6040 = vadd.f32 %v5927, %v6039
      %6041 = vmatmul.f32.gmra.mxu0 %v4890
      %v6042 = vpop.f32.mrf.mxu0
      %v6043 = vadd.f32 %v5930, %v6042
      %6044 = vmatmul.f32.gmra.mxu0 %v4892
      %v6045 = vpop.f32.mrf.mxu0
      %v6046 = vadd.f32 %v5933, %v6045
      %6047 = vmatmul.f32.gmra.mxu0 %v4894
      %v6048 = vpop.f32.mrf.mxu0
      %v6049 = vadd.f32 %v5936, %v6048
      %6050 = vmatmul.f32.gmra.mxu0 %v4896
      %v6051 = vpop.f32.mrf.mxu0
      %v6052 = vadd.f32 %v5939, %v6051
      %6053 = vmatmul.f32.gmra.mxu0 %v4898
      %v6054 = vpop.f32.mrf.mxu0
      %v6055 = vadd.f32 %v5942, %v6054
      %6056 = vmatmul.f32.gmra.mxu0 %v4900
      %v6057 = vpop.f32.mrf.mxu0
      %v6058 = vadd.f32 %v5945, %v6057
      %6059 = vmatmul.f32.gmra.mxu0 %v4902
      %v6060 = vpop.f32.mrf.mxu0
      %v6061 = vadd.f32 %v5948, %v6060
      %6062 = vmatmul.f32.gmra.mxu0 %v4904
      %v6063 = vpop.f32.mrf.mxu0
      %v6064 = vadd.f32 %v5951, %v6063
      %6065 = vmatmul.f32.gmra.mxu0 %v4906
      %v6066 = vpop.f32.mrf.mxu0
      %v6067 = vadd.f32 %v5954, %v6066
      %6068 = vmatmul.f32.gmra.mxu0 %v4908
      %v6069 = vpop.f32.mrf.mxu0
      %v6070 = vadd.f32 %v5957, %v6069
      %6071 = vmatmul.f32.gmra.mxu0 %v4910
      %v6072 = vpop.f32.mrf.mxu0
      %v6073 = vadd.f32 %v5960, %v6072
      %6074 = vmatmul.f32.gmra.mxu0 %v4912
      %v6075 = vpop.f32.mrf.mxu0
      %v6076 = vadd.f32 %v5963, %v6075
      %6077 = vmatmul.f32.gmra.mxu0 %v4914
      %v6078 = vpop.f32.mrf.mxu0
      %v6079 = vadd.f32 %v5966, %v6078
      %6080 = vmatmul.f32.gmra.mxu0 %v4915
      %v6081 = vpop.f32.mrf.mxu0
      %v6082 = vadd.f32 %v5969, %v6081
      %6083 = vmatmul.f32.gmra.mxu0 %v2198
      %v6084 = vpop.f32.mrf.mxu0
      %v6085 = vadd.f32 %v5972, %v6084
      %6086 = vmatmul.f32.gmra.mxu0 %v2198
      %v6087 = vpop.f32.mrf.mxu0
      %v6088 = vadd.f32 %v5975, %v6087
      %6089 = vmatmul.f32.gmra.mxu0 %v2198
      %v6090 = vpop.f32.mrf.mxu0
      %v6091 = vadd.f32 %v5978, %v6090
      %6092 = vmatmul.f32.gmra.mxu0 %v2198
      %v6093 = vpop.f32.mrf.mxu0
      %v6094 = vadd.f32 %v5981, %v6093
      %6095 = vdwg.mxu0
      %6096 = vmatpush.msra.mxu0 %v5187
      %6097 = vmatpush.msra.mxu0 %v5186
      %6098 = vmatpush.msra.mxu0 %v5185
      %6099 = vmatpush.msra.mxu0 %v5184
      %6100 = vmatpush.msra.mxu0 %v5183
      %6101 = vmatpush.msra.mxu0 %v5182
      %6102 = vmatpush.msra.mxu0 %v5181
      %6103 = vmatpush.msra.mxu0 %v5180
      %6104 = vmatpush.msra.mxu0 %v5179
      %6105 = vmatpush.msra.mxu0 %v5178
      %6106 = vmatpush.msra.mxu0 %v5177
      %6107 = vmatpush.msra.mxu0 %v5176
      %6108 = vmatpush.msra.mxu0 %v5175
      %6109 = vmatpush.msra.mxu0 %v5174
      %6110 = vmatpush.msra.mxu0 %v5173
      %6111 = vmatpush.msra.mxu0 %v5172
      %6112 = vmatmul.f32.gmra.mxu0 %v4958
      %v6113 = vpop.f32.mrf.mxu0
      %v6114 = vadd.f32 %v6001, %v6113
      %6115 = vmatmul.f32.gmra.mxu0 %v4960
      %v6116 = vpop.f32.mrf.mxu0
      %v6117 = vadd.f32 %v6004, %v6116
      %6118 = vmatmul.f32.gmra.mxu0 %v4962
      %v6119 = vpop.f32.mrf.mxu0
      %v6120 = vadd.f32 %v6007, %v6119
      %6121 = vmatmul.f32.gmra.mxu0 %v4964
      %v6122 = vpop.f32.mrf.mxu0
      %v6123 = vadd.f32 %v6010, %v6122
      %6124 = vmatmul.f32.gmra.mxu0 %v4966
      %v6125 = vpop.f32.mrf.mxu0
      %v6126 = vadd.f32 %v6013, %v6125
      %6127 = vmatmul.f32.gmra.mxu0 %v4968
      %v6128 = vpop.f32.mrf.mxu0
      %v6129 = vadd.f32 %v6016, %v6128
      %6130 = vmatmul.f32.gmra.mxu0 %v4970
      %v6131 = vpop.f32.mrf.mxu0
      %v6132 = vadd.f32 %v6019, %v6131
      %6133 = vmatmul.f32.gmra.mxu0 %v4972
      %v6134 = vpop.f32.mrf.mxu0
      %v6135 = vadd.f32 %v6022, %v6134
      %6136 = vmatmul.f32.gmra.mxu0 %v4974
      %v6137 = vpop.f32.mrf.mxu0
      %v6138 = vadd.f32 %v6025, %v6137
      %6139 = vmatmul.f32.gmra.mxu0 %v4976
      %v6140 = vpop.f32.mrf.mxu0
      %v6141 = vadd.f32 %v6028, %v6140
      %6142 = vmatmul.f32.gmra.mxu0 %v4978
      %v6143 = vpop.f32.mrf.mxu0
      %v6144 = vadd.f32 %v6031, %v6143
      %6145 = vmatmul.f32.gmra.mxu0 %v4980
      %v6146 = vpop.f32.mrf.mxu0
      %v6147 = vadd.f32 %v6034, %v6146
      %6148 = vmatmul.f32.gmra.mxu0 %v4982
      %v6149 = vpop.f32.mrf.mxu0
      %v6150 = vadd.f32 %v6037, %v6149
      %6151 = vmatmul.f32.gmra.mxu0 %v4984
      %v6152 = vpop.f32.mrf.mxu0
      %v6153 = vadd.f32 %v6040, %v6152
      %6154 = vmatmul.f32.gmra.mxu0 %v4986
      %v6155 = vpop.f32.mrf.mxu0
      %v6156 = vadd.f32 %v6043, %v6155
      %6157 = vmatmul.f32.gmra.mxu0 %v4988
      %v6158 = vpop.f32.mrf.mxu0
      %v6159 = vadd.f32 %v6046, %v6158
      %6160 = vmatmul.f32.gmra.mxu0 %v4990
      %v6161 = vpop.f32.mrf.mxu0
      %v6162 = vadd.f32 %v6049, %v6161
      %6163 = vmatmul.f32.gmra.mxu0 %v4992
      %v6164 = vpop.f32.mrf.mxu0
      %v6165 = vadd.f32 %v6052, %v6164
      %6166 = vmatmul.f32.gmra.mxu0 %v4994
      %v6167 = vpop.f32.mrf.mxu0
      %v6168 = vadd.f32 %v6055, %v6167
      %6169 = vmatmul.f32.gmra.mxu0 %v4996
      %v6170 = vpop.f32.mrf.mxu0
      %v6171 = vadd.f32 %v6058, %v6170
      %6172 = vmatmul.f32.gmra.mxu0 %v4998
      %v6173 = vpop.f32.mrf.mxu0
      %v6174 = vadd.f32 %v6061, %v6173
      %6175 = vmatmul.f32.gmra.mxu0 %v5000
      %v6176 = vpop.f32.mrf.mxu0
      %v6177 = vadd.f32 %v6064, %v6176
      %6178 = vmatmul.f32.gmra.mxu0 %v5002
      %v6179 = vpop.f32.mrf.mxu0
      %v6180 = vadd.f32 %v6067, %v6179
      %6181 = vmatmul.f32.gmra.mxu0 %v5004
      %v6182 = vpop.f32.mrf.mxu0
      %v6183 = vadd.f32 %v6070, %v6182
      %6184 = vmatmul.f32.gmra.mxu0 %v5006
      %v6185 = vpop.f32.mrf.mxu0
      %v6186 = vadd.f32 %v6073, %v6185
      %6187 = vmatmul.f32.gmra.mxu0 %v5008
      %v6188 = vpop.f32.mrf.mxu0
      %v6189 = vadd.f32 %v6076, %v6188
      %6190 = vmatmul.f32.gmra.mxu0 %v5010
      %v6191 = vpop.f32.mrf.mxu0
      %v6192 = vadd.f32 %v6079, %v6191
      %6193 = vmatmul.f32.gmra.mxu0 %v5011
      %v6194 = vpop.f32.mrf.mxu0
      %v6195 = vadd.f32 %v6082, %v6194
      %6196 = vmatmul.f32.gmra.mxu0 %v2200
      %v6197 = vpop.f32.mrf.mxu0
      %v6198 = vadd.f32 %v6085, %v6197
      %6199 = vmatmul.f32.gmra.mxu0 %v2200
      %v6200 = vpop.f32.mrf.mxu0
      %v6201 = vadd.f32 %v6088, %v6200
      %6202 = vmatmul.f32.gmra.mxu0 %v2200
      %v6203 = vpop.f32.mrf.mxu0
      %v6204 = vadd.f32 %v6091, %v6203
      %6205 = vmatmul.f32.gmra.mxu0 %v2200
      %v6206 = vpop.f32.mrf.mxu0
      %v6207 = vadd.f32 %v6094, %v6206
      %6208 = vdwg.mxu0
      %v6209 = vmax.f32 %v6114, 0.0
      %v6210 = vmax.f32 %v6117, 0.0
      %v6211 = vmax.f32 %v6120, 0.0
      %v6212 = vmax.f32 %v6123, 0.0
      %v6213 = vmax.f32 %v6126, 0.0
      %v6214 = vmax.f32 %v6129, 0.0
      %v6215 = vmax.f32 %v6132, 0.0
      %v6216 = vmax.f32 %v6135, 0.0
      %v6217 = vmax.f32 %v6138, 0.0
      %v6218 = vmax.f32 %v6141, 0.0
      %v6219 = vmax.f32 %v6144, 0.0
      %v6220 = vmax.f32 %v6147, 0.0
      %v6221 = vmax.f32 %v6150, 0.0
      %v6222 = vmax.f32 %v6153, 0.0
      %v6223 = vmax.f32 %v6156, 0.0
      %v6224 = vmax.f32 %v6159, 0.0
      %v6225 = vmax.f32 %v6162, 0.0
      %v6226 = vmax.f32 %v6165, 0.0
      %v6227 = vmax.f32 %v6168, 0.0
      %v6228 = vmax.f32 %v6171, 0.0
      %v6229 = vmax.f32 %v6174, 0.0
      %v6230 = vmax.f32 %v6177, 0.0
      %v6231 = vmax.f32 %v6180, 0.0
      %v6232 = vmax.f32 %v6183, 0.0
      %v6233 = vmax.f32 %v6186, 0.0
      %v6234 = vmax.f32 %v6189, 0.0
      %v6235 = vmax.f32 %v6192, 0.0
      %v6236 = vmax.f32 %v6195, 0.0
      %v6237 = vmax.f32 %v6198, 0.0
      %v6238 = vmax.f32 %v6201, 0.0
      %v6239 = vmax.f32 %v6204, 0.0
      %v6240 = vmax.f32 %v6207, 0.0
      %v6273 = vrot.slane %v6209, 1
      %v6274 = vrot.slane %v6210, 1
      %v6275 = vsel %vm691, %v6273, %v6274
      %v6276 = vrot.slane %v6211, 1
      %v6277 = vsel %vm691, %v6274, %v6276
      %v6278 = vrot.slane %v6212, 1
      %v6279 = vsel %vm691, %v6276, %v6278
      %v6280 = vrot.slane %v6213, 1
      %v6281 = vsel %vm691, %v6278, %v6280
      %v6282 = vrot.slane %v6214, 1
      %v6283 = vsel %vm691, %v6280, %v6282
      %v6284 = vrot.slane %v6215, 1
      %v6285 = vsel %vm691, %v6282, %v6284
      %v6286 = vrot.slane %v6216, 1
      %v6287 = vsel %vm691, %v6284, %v6286
      %v6288 = vrot.slane %v6217, 1
      %v6289 = vsel %vm691, %v6286, %v6288
      %v6290 = vrot.slane %v6218, 1
      %v6291 = vsel %vm691, %v6288, %v6290
      %v6292 = vrot.slane %v6219, 1
      %v6293 = vsel %vm691, %v6290, %v6292
      %v6294 = vrot.slane %v6220, 1
      %v6295 = vsel %vm691, %v6292, %v6294
      %v6296 = vrot.slane %v6221, 1
      %v6297 = vsel %vm691, %v6294, %v6296
      %v6298 = vrot.slane %v6222, 1
      %v6299 = vsel %vm691, %v6296, %v6298
      %v6300 = vrot.slane %v6223, 1
      %v6301 = vsel %vm691, %v6298, %v6300
      %v6302 = vrot.slane %v6224, 1
      %v6303 = vsel %vm691, %v6300, %v6302
      %v6304 = vrot.slane %v6225, 1
      %v6305 = vsel %vm691, %v6302, %v6304
      %v6306 = vrot.slane %v6226, 1
      %v6307 = vsel %vm691, %v6304, %v6306
      %v6308 = vrot.slane %v6227, 1
      %v6309 = vsel %vm691, %v6306, %v6308
      %v6310 = vrot.slane %v6228, 1
      %v6311 = vsel %vm691, %v6308, %v6310
      %v6312 = vrot.slane %v6229, 1
      %v6313 = vsel %vm691, %v6310, %v6312
      %v6314 = vrot.slane %v6230, 1
      %v6315 = vsel %vm691, %v6312, %v6314
      %v6316 = vrot.slane %v6231, 1
      %v6317 = vsel %vm691, %v6314, %v6316
      %v6318 = vrot.slane %v6232, 1
      %v6319 = vsel %vm691, %v6316, %v6318
      %v6320 = vrot.slane %v6233, 1
      %v6321 = vsel %vm691, %v6318, %v6320
      %v6322 = vrot.slane %v6234, 1
      %v6323 = vsel %vm691, %v6320, %v6322
      %v6324 = vrot.slane %v6235, 1
      %v6325 = vsel %vm691, %v6322, %v6324
      %v6326 = vrot.slane %v6236, 1
      %v6327 = vsel %vm691, %v6324, %v6326
      %v6328 = vrot.slane %v6237, 1
      %v6329 = vsel %vm691, %v6326, %v6328
      %v6330 = vrot.slane %v6238, 1
      %v6331 = vsel %vm691, %v6328, %v6330
      %v6332 = vrot.slane %v6239, 1
      %v6333 = vsel %vm691, %v6330, %v6332
      %v6334 = vrot.slane %v6240, 1
      %v6335 = vsel %vm691, %v6332, %v6334
      %v6336 = vsel %vm691, %v6334, %v2067
      %v6369 = vrot.slane %v6209, 2
      %v6370 = vrot.slane %v6210, 2
      %v6371 = vsel %vm892, %v6369, %v6370
      %v6372 = vrot.slane %v6211, 2
      %v6373 = vsel %vm892, %v6370, %v6372
      %v6374 = vrot.slane %v6212, 2
      %v6375 = vsel %vm892, %v6372, %v6374
      %v6376 = vrot.slane %v6213, 2
      %v6377 = vsel %vm892, %v6374, %v6376
      %v6378 = vrot.slane %v6214, 2
      %v6379 = vsel %vm892, %v6376, %v6378
      %v6380 = vrot.slane %v6215, 2
      %v6381 = vsel %vm892, %v6378, %v6380
      %v6382 = vrot.slane %v6216, 2
      %v6383 = vsel %vm892, %v6380, %v6382
      %v6384 = vrot.slane %v6217, 2
      %v6385 = vsel %vm892, %v6382, %v6384
      %v6386 = vrot.slane %v6218, 2
      %v6387 = vsel %vm892, %v6384, %v6386
      %v6388 = vrot.slane %v6219, 2
      %v6389 = vsel %vm892, %v6386, %v6388
      %v6390 = vrot.slane %v6220, 2
      %v6391 = vsel %vm892, %v6388, %v6390
      %v6392 = vrot.slane %v6221, 2
      %v6393 = vsel %vm892, %v6390, %v6392
      %v6394 = vrot.slane %v6222, 2
      %v6395 = vsel %vm892, %v6392, %v6394
      %v6396 = vrot.slane %v6223, 2
      %v6397 = vsel %vm892, %v6394, %v6396
      %v6398 = vrot.slane %v6224, 2
      %v6399 = vsel %vm892, %v6396, %v6398
      %v6400 = vrot.slane %v6225, 2
      %v6401 = vsel %vm892, %v6398, %v6400
      %v6402 = vrot.slane %v6226, 2
      %v6403 = vsel %vm892, %v6400, %v6402
      %v6404 = vrot.slane %v6227, 2
      %v6405 = vsel %vm892, %v6402, %v6404
      %v6406 = vrot.slane %v6228, 2
      %v6407 = vsel %vm892, %v6404, %v6406
      %v6408 = vrot.slane %v6229, 2
      %v6409 = vsel %vm892, %v6406, %v6408
      %v6410 = vrot.slane %v6230, 2
      %v6411 = vsel %vm892, %v6408, %v6410
      %v6412 = vrot.slane %v6231, 2
      %v6413 = vsel %vm892, %v6410, %v6412
      %v6414 = vrot.slane %v6232, 2
      %v6415 = vsel %vm892, %v6412, %v6414
      %v6416 = vrot.slane %v6233, 2
      %v6417 = vsel %vm892, %v6414, %v6416
      %v6418 = vrot.slane %v6234, 2
      %v6419 = vsel %vm892, %v6416, %v6418
      %v6420 = vrot.slane %v6235, 2
      %v6421 = vsel %vm892, %v6418, %v6420
      %v6422 = vrot.slane %v6236, 2
      %v6423 = vsel %vm892, %v6420, %v6422
      %v6424 = vrot.slane %v6237, 2
      %v6425 = vsel %vm892, %v6422, %v6424
      %v6426 = vrot.slane %v6238, 2
      %v6427 = vsel %vm892, %v6424, %v6426
      %v6428 = vrot.slane %v6239, 2
      %v6429 = vsel %vm892, %v6426, %v6428
      %v6430 = vrot.slane %v6240, 2
      %v6431 = vsel %vm892, %v6428, %v6430
      %v6432 = vsel %vm892, %v6430, %v2164
      %v6465 = vld [vmem:[%s9] sm:$0xff]
      %v6466 = vld [vmem:[%s9 + $0x8] sm:$0xff]
      %v6467 = vld [vmem:[%s9 + $0x10] sm:$0xff]
      %v6468 = vld [vmem:[%s9 + $0x18] sm:$0xff]
      %v6469 = vld [vmem:[%s9 + $0x20] sm:$0xff]
      %v6470 = vld [vmem:[%s9 + $0x28] sm:$0xff]
      %v6471 = vld [vmem:[%s9 + $0x30] sm:$0xff]
      %v6472 = vld [vmem:[%s9 + $0x38] sm:$0xff]
      %v6473 = vld [vmem:[%s9 + $0x40] sm:$0xff]
      %v6474 = vld [vmem:[%s9 + $0x48] sm:$0xff]
      %v6475 = vld [vmem:[%s9 + $0x50] sm:$0xff]
      %v6476 = vld [vmem:[%s9 + $0x58] sm:$0xff]
      %v6477 = vld [vmem:[%s9 + $0x60] sm:$0xff]
      %v6478 = vld [vmem:[%s9 + $0x68] sm:$0xff]
      %v6479 = vld [vmem:[%s9 + $0x70] sm:$0xff]
      %v6480 = vld [vmem:[%s9 + $0x78] sm:$0xff]
      %v6481 = vld [vmem:[%s9 + $0x80] sm:$0xff]
      %v6482 = vld [vmem:[%s9 + $0x88] sm:$0xff]
      %v6483 = vld [vmem:[%s9 + $0x90] sm:$0xff]
      %v6484 = vld [vmem:[%s9 + $0x98] sm:$0xff]
      %v6485 = vld [vmem:[%s9 + $0xa0] sm:$0xff]
      %v6486 = vld [vmem:[%s9 + $0xa8] sm:$0xff]
      %v6487 = vld [vmem:[%s9 + $0xb0] sm:$0xff]
      %v6488 = vld [vmem:[%s9 + $0xb8] sm:$0xff]
      %v6489 = vld [vmem:[%s9 + $0xc0] sm:$0xff]
      %v6490 = vld [vmem:[%s9 + $0xc8] sm:$0xff]
      %v6491 = vld [vmem:[%s9 + $0xd0] sm:$0xff]
      %v6492 = vld [vmem:[%s9 + $0xd8] sm:$0xff]
      %v6493 = vld [vmem:[%s9 + $0xe0] sm:$0xff]
      %v6494 = vld [vmem:[%s9 + $0xe8] sm:$0xff]
      %v6495 = vld [vmem:[%s9 + $0xf0] sm:$0xff]
      %v6496 = vld [vmem:[%s9 + $0xf8] sm:$0xff]
      %v6497 = vld [vmem:[%s9 + $0x100] sm:$0xff]
      %v6498 = vld [vmem:[%s9 + $0x108] sm:$0xff]
      %v6499 = vld [vmem:[%s9 + $0x110] sm:$0xff]
      %v6500 = vld [vmem:[%s9 + $0x118] sm:$0xff]
      %v6501 = vld [vmem:[%s9 + $0x120] sm:$0xff]
      %v6502 = vld [vmem:[%s9 + $0x128] sm:$0xff]
      %v6503 = vld [vmem:[%s9 + $0x130] sm:$0xff]
      %v6504 = vld [vmem:[%s9 + $0x138] sm:$0xff]
      %v6505 = vld [vmem:[%s9 + $0x140] sm:$0xff]
      %v6506 = vld [vmem:[%s9 + $0x148] sm:$0xff]
      %v6507 = vld [vmem:[%s9 + $0x150] sm:$0xff]
      %v6508 = vld [vmem:[%s9 + $0x158] sm:$0xff]
      %v6509 = vld [vmem:[%s9 + $0x160] sm:$0xff]
      %v6510 = vld [vmem:[%s9 + $0x168] sm:$0xff]
      %v6511 = vld [vmem:[%s9 + $0x170] sm:$0xff]
      %v6512 = vld [vmem:[%s9 + $0x178] sm:$0xff]
      %v6513 = vld [vmem:[%s9 + $0x180] sm:$0xff]
      %v6514 = vld [vmem:[%s9 + $0x188] sm:$0xff]
      %v6515 = vld [vmem:[%s9 + $0x190] sm:$0xff]
      %v6516 = vld [vmem:[%s9 + $0x198] sm:$0xff]
      %v6517 = vld [vmem:[%s9 + $0x1a0] sm:$0xff]
      %v6518 = vld [vmem:[%s9 + $0x1a8] sm:$0xff]
      %v6519 = vld [vmem:[%s9 + $0x1b0] sm:$0xff]
      %v6520 = vld [vmem:[%s9 + $0x1b8] sm:$0xff]
      %v6521 = vld [vmem:[%s9 + $0x1c0] sm:$0xff]
      %v6522 = vld [vmem:[%s9 + $0x1c8] sm:$0xff]
      %v6523 = vld [vmem:[%s9 + $0x1d0] sm:$0xff]
      %v6524 = vld [vmem:[%s9 + $0x1d8] sm:$0xff]
      %v6525 = vld [vmem:[%s9 + $0x1e0] sm:$0xff]
      %v6526 = vld [vmem:[%s9 + $0x1e8] sm:$0xff]
      %v6527 = vld [vmem:[%s9 + $0x1f0] sm:$0xff]
      %v6528 = vld [vmem:[%s9 + $0x1f8] sm:$0xff]
      %v6529 = vld [vmem:[%s9 + $0x200] sm:$0xff]
      %v6530 = vld [vmem:[%s9 + $0x208] sm:$0xff]
      %v6531 = vld [vmem:[%s9 + $0x210] sm:$0xff]
      %v6532 = vld [vmem:[%s9 + $0x218] sm:$0xff]
      %v6533 = vld [vmem:[%s9 + $0x220] sm:$0xff]
      %v6534 = vld [vmem:[%s9 + $0x228] sm:$0xff]
      %v6535 = vld [vmem:[%s9 + $0x230] sm:$0xff]
      %v6536 = vld [vmem:[%s9 + $0x238] sm:$0xff]
      %v6537 = vld [vmem:[%s9 + $0x240] sm:$0xff]
      %v6538 = vld [vmem:[%s9 + $0x248] sm:$0xff]
      %v6539 = vld [vmem:[%s9 + $0x250] sm:$0xff]
      %v6540 = vld [vmem:[%s9 + $0x258] sm:$0xff]
      %v6541 = vld [vmem:[%s9 + $0x260] sm:$0xff]
      %v6542 = vld [vmem:[%s9 + $0x268] sm:$0xff]
      %v6543 = vld [vmem:[%s9 + $0x270] sm:$0xff]
      %v6544 = vld [vmem:[%s9 + $0x278] sm:$0xff]
      %v6545 = vld [vmem:[%s9 + $0x280] sm:$0xff]
      %v6546 = vld [vmem:[%s9 + $0x288] sm:$0xff]
      %v6547 = vld [vmem:[%s9 + $0x290] sm:$0xff]
      %v6548 = vld [vmem:[%s9 + $0x298] sm:$0xff]
      %v6549 = vld [vmem:[%s9 + $0x2a0] sm:$0xff]
      %v6550 = vld [vmem:[%s9 + $0x2a8] sm:$0xff]
      %v6551 = vld [vmem:[%s9 + $0x2b0] sm:$0xff]
      %v6552 = vld [vmem:[%s9 + $0x2b8] sm:$0xff]
      %v6553 = vld [vmem:[%s9 + $0x2c0] sm:$0xff]
      %v6554 = vld [vmem:[%s9 + $0x2c8] sm:$0xff]
      %v6555 = vld [vmem:[%s9 + $0x2d0] sm:$0xff]
      %v6556 = vld [vmem:[%s9 + $0x2d8] sm:$0xff]
      %v6557 = vld [vmem:[%s9 + $0x2e0] sm:$0xff]
      %v6558 = vld [vmem:[%s9 + $0x2e8] sm:$0xff]
      %v6559 = vld [vmem:[%s9 + $0x2f0] sm:$0xff]
      %v6560 = vld [vmem:[%s9 + $0x2f8] sm:$0xff]
      %v6561 = vld [vmem:[%s9 + $0x300] sm:$0xff]
      %v6562 = vld [vmem:[%s9 + $0x308] sm:$0xff]
      %v6563 = vld [vmem:[%s9 + $0x310] sm:$0xff]
      %v6564 = vld [vmem:[%s9 + $0x318] sm:$0xff]
      %v6565 = vld [vmem:[%s9 + $0x320] sm:$0xff]
      %v6566 = vld [vmem:[%s9 + $0x328] sm:$0xff]
      %v6567 = vld [vmem:[%s9 + $0x330] sm:$0xff]
      %v6568 = vld [vmem:[%s9 + $0x338] sm:$0xff]
      %v6569 = vld [vmem:[%s9 + $0x340] sm:$0xff]
      %v6570 = vld [vmem:[%s9 + $0x348] sm:$0xff]
      %v6571 = vld [vmem:[%s9 + $0x350] sm:$0xff]
      %v6572 = vld [vmem:[%s9 + $0x358] sm:$0xff]
      %v6573 = vld [vmem:[%s9 + $0x360] sm:$0xff]
      %v6574 = vld [vmem:[%s9 + $0x368] sm:$0xff]
      %v6575 = vld [vmem:[%s9 + $0x370] sm:$0xff]
      %v6576 = vld [vmem:[%s9 + $0x378] sm:$0xff]
      %v6577 = vld [vmem:[%s9 + $0x380] sm:$0xff]
      %v6578 = vld [vmem:[%s9 + $0x388] sm:$0xff]
      %v6579 = vld [vmem:[%s9 + $0x390] sm:$0xff]
      %v6580 = vld [vmem:[%s9 + $0x398] sm:$0xff]
      %v6581 = vld [vmem:[%s9 + $0x3a0] sm:$0xff]
      %v6582 = vld [vmem:[%s9 + $0x3a8] sm:$0xff]
      %v6583 = vld [vmem:[%s9 + $0x3b0] sm:$0xff]
      %v6584 = vld [vmem:[%s9 + $0x3b8] sm:$0xff]
      %v6585 = vld [vmem:[%s9 + $0x3c0] sm:$0xff]
      %v6586 = vld [vmem:[%s9 + $0x3c8] sm:$0xff]
      %v6587 = vld [vmem:[%s9 + $0x3d0] sm:$0xff]
      %v6588 = vld [vmem:[%s9 + $0x3d8] sm:$0xff]
      %v6589 = vld [vmem:[%s9 + $0x3e0] sm:$0xff]
      %v6590 = vld [vmem:[%s9 + $0x3e8] sm:$0xff]
      %v6591 = vld [vmem:[%s9 + $0x3f0] sm:$0xff]
      %v6592 = vld [vmem:[%s9 + $0x3f8] sm:$0xff]
      %v6593 = vld [vmem:[%s9 + $0x400] sm:$0xff]
      %v6594 = vld [vmem:[%s9 + $0x408] sm:$0xff]
      %v6595 = vld [vmem:[%s9 + $0x410] sm:$0xff]
      %v6596 = vld [vmem:[%s9 + $0x418] sm:$0xff]
      %v6597 = vld [vmem:[%s9 + $0x420] sm:$0xff]
      %v6598 = vld [vmem:[%s9 + $0x428] sm:$0xff]
      %v6599 = vld [vmem:[%s9 + $0x430] sm:$0xff]
      %v6600 = vld [vmem:[%s9 + $0x438] sm:$0xff]
      %v6601 = vld [vmem:[%s9 + $0x440] sm:$0xff]
      %v6602 = vld [vmem:[%s9 + $0x448] sm:$0xff]
      %v6603 = vld [vmem:[%s9 + $0x450] sm:$0xff]
      %v6604 = vld [vmem:[%s9 + $0x458] sm:$0xff]
      %v6605 = vld [vmem:[%s9 + $0x460] sm:$0xff]
      %v6606 = vld [vmem:[%s9 + $0x468] sm:$0xff]
      %v6607 = vld [vmem:[%s9 + $0x470] sm:$0xff]
      %v6608 = vld [vmem:[%s9 + $0x478] sm:$0xff]
      %v6609 = vld [vmem:[%s9 + $0x480] sm:$0xff]
      %v6610 = vld [vmem:[%s9 + $0x488] sm:$0xff]
      %v6611 = vld [vmem:[%s9 + $0x490] sm:$0xff]
      %v6612 = vld [vmem:[%s9 + $0x498] sm:$0xff]
      %v6613 = vld [vmem:[%s9 + $0x4a0] sm:$0xff]
      %v6614 = vld [vmem:[%s9 + $0x4a8] sm:$0xff]
      %v6615 = vld [vmem:[%s9 + $0x4b0] sm:$0xff]
      %v6616 = vld [vmem:[%s9 + $0x4b8] sm:$0xff]
      %v6617 = vld [vmem:[%s9 + $0x4c0] sm:$0xff]
      %v6618 = vld [vmem:[%s9 + $0x4c8] sm:$0xff]
      %v6619 = vld [vmem:[%s9 + $0x4d0] sm:$0xff]
      %v6620 = vld [vmem:[%s9 + $0x4d8] sm:$0xff]
      %v6621 = vld [vmem:[%s9 + $0x4e0] sm:$0xff]
      %v6622 = vld [vmem:[%s9 + $0x4e8] sm:$0xff]
      %v6623 = vld [vmem:[%s9 + $0x4f0] sm:$0xff]
      %v6624 = vld [vmem:[%s9 + $0x4f8] sm:$0xff]
      %v6625 = vld [vmem:[%s9 + $0x500] sm:$0xff]
      %v6626 = vld [vmem:[%s9 + $0x508] sm:$0xff]
      %v6627 = vld [vmem:[%s9 + $0x510] sm:$0xff]
      %v6628 = vld [vmem:[%s9 + $0x518] sm:$0xff]
      %v6629 = vld [vmem:[%s9 + $0x520] sm:$0xff]
      %v6630 = vld [vmem:[%s9 + $0x528] sm:$0xff]
      %v6631 = vld [vmem:[%s9 + $0x530] sm:$0xff]
      %v6632 = vld [vmem:[%s9 + $0x538] sm:$0xff]
      %v6633 = vld [vmem:[%s9 + $0x540] sm:$0xff]
      %v6634 = vld [vmem:[%s9 + $0x548] sm:$0xff]
      %v6635 = vld [vmem:[%s9 + $0x550] sm:$0xff]
      %v6636 = vld [vmem:[%s9 + $0x558] sm:$0xff]
      %v6637 = vld [vmem:[%s9 + $0x560] sm:$0xff]
      %v6638 = vld [vmem:[%s9 + $0x568] sm:$0xff]
      %v6639 = vld [vmem:[%s9 + $0x570] sm:$0xff]
      %v6640 = vld [vmem:[%s9 + $0x578] sm:$0xff]
      %v6641 = vld [vmem:[%s9 + $0x580] sm:$0xff]
      %v6642 = vld [vmem:[%s9 + $0x588] sm:$0xff]
      %v6643 = vld [vmem:[%s9 + $0x590] sm:$0xff]
      %v6644 = vld [vmem:[%s9 + $0x598] sm:$0xff]
      %v6645 = vld [vmem:[%s9 + $0x5a0] sm:$0xff]
      %v6646 = vld [vmem:[%s9 + $0x5a8] sm:$0xff]
      %v6647 = vld [vmem:[%s9 + $0x5b0] sm:$0xff]
      %v6648 = vld [vmem:[%s9 + $0x5b8] sm:$0xff]
      %v6649 = vld [vmem:[%s9 + $0x5c0] sm:$0xff]
      %v6650 = vld [vmem:[%s9 + $0x5c8] sm:$0xff]
      %v6651 = vld [vmem:[%s9 + $0x5d0] sm:$0xff]
      %v6652 = vld [vmem:[%s9 + $0x5d8] sm:$0xff]
      %v6653 = vld [vmem:[%s9 + $0x5e0] sm:$0xff]
      %v6654 = vld [vmem:[%s9 + $0x5e8] sm:$0xff]
      %v6655 = vld [vmem:[%s9 + $0x5f0] sm:$0xff]
      %v6656 = vld [vmem:[%s9 + $0x5f8] sm:$0xff]
      %v6657 = vld [vmem:[%s9 + $0x600] sm:$0xff]
      %v6658 = vld [vmem:[%s9 + $0x608] sm:$0xff]
      %v6659 = vld [vmem:[%s9 + $0x610] sm:$0xff]
      %v6660 = vld [vmem:[%s9 + $0x618] sm:$0xff]
      %v6661 = vld [vmem:[%s9 + $0x620] sm:$0xff]
      %v6662 = vld [vmem:[%s9 + $0x628] sm:$0xff]
      %v6663 = vld [vmem:[%s9 + $0x630] sm:$0xff]
      %v6664 = vld [vmem:[%s9 + $0x638] sm:$0xff]
      %v6665 = vld [vmem:[%s9 + $0x640] sm:$0xff]
      %v6666 = vld [vmem:[%s9 + $0x648] sm:$0xff]
      %v6667 = vld [vmem:[%s9 + $0x650] sm:$0xff]
      %v6668 = vld [vmem:[%s9 + $0x658] sm:$0xff]
      %v6669 = vld [vmem:[%s9 + $0x660] sm:$0xff]
      %v6670 = vld [vmem:[%s9 + $0x668] sm:$0xff]
      %v6671 = vld [vmem:[%s9 + $0x670] sm:$0xff]
      %v6672 = vld [vmem:[%s9 + $0x678] sm:$0xff]
      %v6673 = vld [vmem:[%s9 + $0x680] sm:$0xff]
      %v6674 = vld [vmem:[%s9 + $0x688] sm:$0xff]
      %v6675 = vld [vmem:[%s9 + $0x690] sm:$0xff]
      %v6676 = vld [vmem:[%s9 + $0x698] sm:$0xff]
      %v6677 = vld [vmem:[%s9 + $0x6a0] sm:$0xff]
      %v6678 = vld [vmem:[%s9 + $0x6a8] sm:$0xff]
      %v6679 = vld [vmem:[%s9 + $0x6b0] sm:$0xff]
      %v6680 = vld [vmem:[%s9 + $0x6b8] sm:$0xff]
      %v6681 = vld [vmem:[%s9 + $0x6c0] sm:$0xff]
      %v6682 = vld [vmem:[%s9 + $0x6c8] sm:$0xff]
      %v6683 = vld [vmem:[%s9 + $0x6d0] sm:$0xff]
      %v6684 = vld [vmem:[%s9 + $0x6d8] sm:$0xff]
      %v6685 = vld [vmem:[%s9 + $0x6e0] sm:$0xff]
      %v6686 = vld [vmem:[%s9 + $0x6e8] sm:$0xff]
      %v6687 = vld [vmem:[%s9 + $0x6f0] sm:$0xff]
      %v6688 = vld [vmem:[%s9 + $0x6f8] sm:$0xff]
      %v6689 = vld [vmem:[%s9 + $0x700] sm:$0xff]
      %v6690 = vld [vmem:[%s9 + $0x708] sm:$0xff]
      %v6691 = vld [vmem:[%s9 + $0x710] sm:$0xff]
      %v6692 = vld [vmem:[%s9 + $0x718] sm:$0xff]
      %v6693 = vld [vmem:[%s9 + $0x720] sm:$0xff]
      %v6694 = vld [vmem:[%s9 + $0x728] sm:$0xff]
      %v6695 = vld [vmem:[%s9 + $0x730] sm:$0xff]
      %v6696 = vld [vmem:[%s9 + $0x738] sm:$0xff]
      %v6697 = vld [vmem:[%s9 + $0x740] sm:$0xff]
      %v6698 = vld [vmem:[%s9 + $0x748] sm:$0xff]
      %v6699 = vld [vmem:[%s9 + $0x750] sm:$0xff]
      %v6700 = vld [vmem:[%s9 + $0x758] sm:$0xff]
      %v6701 = vld [vmem:[%s9 + $0x760] sm:$0xff]
      %v6702 = vld [vmem:[%s9 + $0x768] sm:$0xff]
      %v6703 = vld [vmem:[%s9 + $0x770] sm:$0xff]
      %v6704 = vld [vmem:[%s9 + $0x778] sm:$0xff]
      %v6705 = vld [vmem:[%s9 + $0x780] sm:$0xff]
      %v6706 = vld [vmem:[%s9 + $0x788] sm:$0xff]
      %v6707 = vld [vmem:[%s9 + $0x790] sm:$0xff]
      %v6708 = vld [vmem:[%s9 + $0x798] sm:$0xff]
      %v6709 = vld [vmem:[%s9 + $0x7a0] sm:$0xff]
      %v6710 = vld [vmem:[%s9 + $0x7a8] sm:$0xff]
      %v6711 = vld [vmem:[%s9 + $0x7b0] sm:$0xff]
      %v6712 = vld [vmem:[%s9 + $0x7b8] sm:$0xff]
      %v6713 = vld [vmem:[%s9 + $0x7c0] sm:$0xff]
      %v6714 = vld [vmem:[%s9 + $0x7c8] sm:$0xff]
      %v6715 = vld [vmem:[%s9 + $0x7d0] sm:$0xff]
      %v6716 = vld [vmem:[%s9 + $0x7d8] sm:$0xff]
      %v6717 = vld [vmem:[%s9 + $0x7e0] sm:$0xff]
      %v6718 = vld [vmem:[%s9 + $0x7e8] sm:$0xff]
      %v6719 = vld [vmem:[%s9 + $0x7f0] sm:$0xff]
      %v6720 = vld [vmem:[%s9 + $0x7f8] sm:$0xff]
      %v6721 = vld [vmem:[%s9 + $0x800] sm:$0xff]
      %v6722 = vld [vmem:[%s9 + $0x808] sm:$0xff]
      %v6723 = vld [vmem:[%s9 + $0x810] sm:$0xff]
      %v6724 = vld [vmem:[%s9 + $0x818] sm:$0xff]
      %v6725 = vld [vmem:[%s9 + $0x820] sm:$0xff]
      %v6726 = vld [vmem:[%s9 + $0x828] sm:$0xff]
      %v6727 = vld [vmem:[%s9 + $0x830] sm:$0xff]
      %v6728 = vld [vmem:[%s9 + $0x838] sm:$0xff]
      %v6729 = vld [vmem:[%s9 + $0x840] sm:$0xff]
      %v6730 = vld [vmem:[%s9 + $0x848] sm:$0xff]
      %v6731 = vld [vmem:[%s9 + $0x850] sm:$0xff]
      %v6732 = vld [vmem:[%s9 + $0x858] sm:$0xff]
      %v6733 = vld [vmem:[%s9 + $0x860] sm:$0xff]
      %v6734 = vld [vmem:[%s9 + $0x868] sm:$0xff]
      %v6735 = vld [vmem:[%s9 + $0x870] sm:$0xff]
      %v6736 = vld [vmem:[%s9 + $0x878] sm:$0xff]
      %v6737 = vld [vmem:[%s9 + $0x880] sm:$0xff]
      %v6738 = vld [vmem:[%s9 + $0x888] sm:$0xff]
      %v6739 = vld [vmem:[%s9 + $0x890] sm:$0xff]
      %v6740 = vld [vmem:[%s9 + $0x898] sm:$0xff]
      %v6741 = vld [vmem:[%s9 + $0x8a0] sm:$0xff]
      %v6742 = vld [vmem:[%s9 + $0x8a8] sm:$0xff]
      %v6743 = vld [vmem:[%s9 + $0x8b0] sm:$0xff]
      %v6744 = vld [vmem:[%s9 + $0x8b8] sm:$0xff]
      %v6745 = vld [vmem:[%s9 + $0x8c0] sm:$0xff]
      %v6746 = vld [vmem:[%s9 + $0x8c8] sm:$0xff]
      %v6747 = vld [vmem:[%s9 + $0x8d0] sm:$0xff]
      %v6748 = vld [vmem:[%s9 + $0x8d8] sm:$0xff]
      %v6749 = vld [vmem:[%s9 + $0x8e0] sm:$0xff]
      %v6750 = vld [vmem:[%s9 + $0x8e8] sm:$0xff]
      %v6751 = vld [vmem:[%s9 + $0x8f0] sm:$0xff]
      %v6752 = vld [vmem:[%s9 + $0x8f8] sm:$0xff]
      %v6753 = vld [vmem:[%s10] sm:$0x3]
      %v6755 = vperm.slane %v6753, 0
      %v6756 = vperm.slane %v6753, 1
      %6759 = vmatpush.msra.mxu0 %v6495
      %6760 = vmatpush.msra.mxu0 %v6493
      %6761 = vmatpush.msra.mxu0 %v6491
      %6762 = vmatpush.msra.mxu0 %v6489
      %6763 = vmatpush.msra.mxu0 %v6487
      %6764 = vmatpush.msra.mxu0 %v6485
      %6765 = vmatpush.msra.mxu0 %v6483
      %6766 = vmatpush.msra.mxu0 %v6481
      %6767 = vmatpush.msra.mxu0 %v6479
      %6768 = vmatpush.msra.mxu0 %v6477
      %6769 = vmatpush.msra.mxu0 %v6475
      %6770 = vmatpush.msra.mxu0 %v6473
      %6771 = vmatpush.msra.mxu0 %v6471
      %6772 = vmatpush.msra.mxu0 %v6469
      %6773 = vmatpush.msra.mxu0 %v6467
      %6774 = vmatpush.msra.mxu0 %v6465
      %6775 = vmatmul.f32.gmra.mxu0 %v6209
      %v6776 = vpop.f32.mrf.mxu0
      %v6777 = vadd.f32 %v6755, %v6776
      %6778 = vmatmul.f32.gmra.mxu0 %v6210
      %v6779 = vpop.f32.mrf.mxu0
      %v6780 = vadd.f32 %v6755, %v6779
      %6781 = vmatmul.f32.gmra.mxu0 %v6211
      %v6782 = vpop.f32.mrf.mxu0
      %v6783 = vadd.f32 %v6755, %v6782
      %6784 = vmatmul.f32.gmra.mxu0 %v6212
      %v6785 = vpop.f32.mrf.mxu0
      %v6786 = vadd.f32 %v6755, %v6785
      %6787 = vmatmul.f32.gmra.mxu0 %v6213
      %v6788 = vpop.f32.mrf.mxu0
      %v6789 = vadd.f32 %v6755, %v6788
      %6790 = vmatmul.f32.gmra.mxu0 %v6214
      %v6791 = vpop.f32.mrf.mxu0
      %v6792 = vadd.f32 %v6755, %v6791
      %6793 = vmatmul.f32.gmra.mxu0 %v6215
      %v6794 = vpop.f32.mrf.mxu0
      %v6795 = vadd.f32 %v6755, %v6794
      %6796 = vmatmul.f32.gmra.mxu0 %v6216
      %v6797 = vpop.f32.mrf.mxu0
      %v6798 = vadd.f32 %v6755, %v6797
      %6799 = vmatmul.f32.gmra.mxu0 %v6217
      %v6800 = vpop.f32.mrf.mxu0
      %v6801 = vadd.f32 %v6755, %v6800
      %6802 = vmatmul.f32.gmra.mxu0 %v6218
      %v6803 = vpop.f32.mrf.mxu0
      %v6804 = vadd.f32 %v6755, %v6803
      %6805 = vmatmul.f32.gmra.mxu0 %v6219
      %v6806 = vpop.f32.mrf.mxu0
      %v6807 = vadd.f32 %v6755, %v6806
      %6808 = vmatmul.f32.gmra.mxu0 %v6220
      %v6809 = vpop.f32.mrf.mxu0
      %v6810 = vadd.f32 %v6755, %v6809
      %6811 = vmatmul.f32.gmra.mxu0 %v6221
      %v6812 = vpop.f32.mrf.mxu0
      %v6813 = vadd.f32 %v6755, %v6812
      %6814 = vmatmul.f32.gmra.mxu0 %v6222
      %v6815 = vpop.f32.mrf.mxu0
      %v6816 = vadd.f32 %v6755, %v6815
      %6817 = vmatmul.f32.gmra.mxu0 %v6223
      %v6818 = vpop.f32.mrf.mxu0
      %v6819 = vadd.f32 %v6755, %v6818
      %6820 = vmatmul.f32.gmra.mxu0 %v6224
      %v6821 = vpop.f32.mrf.mxu0
      %v6822 = vadd.f32 %v6755, %v6821
      %6823 = vmatmul.f32.gmra.mxu0 %v6225
      %v6824 = vpop.f32.mrf.mxu0
      %v6825 = vadd.f32 %v6755, %v6824
      %6826 = vmatmul.f32.gmra.mxu0 %v6226
      %v6827 = vpop.f32.mrf.mxu0
      %v6828 = vadd.f32 %v6755, %v6827
      %6829 = vmatmul.f32.gmra.mxu0 %v6227
      %v6830 = vpop.f32.mrf.mxu0
      %v6831 = vadd.f32 %v6755, %v6830
      %6832 = vmatmul.f32.gmra.mxu0 %v6228
      %v6833 = vpop.f32.mrf.mxu0
      %v6834 = vadd.f32 %v6755, %v6833
      %6835 = vmatmul.f32.gmra.mxu0 %v6229
      %v6836 = vpop.f32.mrf.mxu0
      %v6837 = vadd.f32 %v6755, %v6836
      %6838 = vmatmul.f32.gmra.mxu0 %v6230
      %v6839 = vpop.f32.mrf.mxu0
      %v6840 = vadd.f32 %v6755, %v6839
      %6841 = vmatmul.f32.gmra.mxu0 %v6231
      %v6842 = vpop.f32.mrf.mxu0
      %v6843 = vadd.f32 %v6755, %v6842
      %6844 = vmatmul.f32.gmra.mxu0 %v6232
      %v6845 = vpop.f32.mrf.mxu0
      %v6846 = vadd.f32 %v6755, %v6845
      %6847 = vmatmul.f32.gmra.mxu0 %v6233
      %v6848 = vpop.f32.mrf.mxu0
      %v6849 = vadd.f32 %v6755, %v6848
      %6850 = vmatmul.f32.gmra.mxu0 %v6234
      %v6851 = vpop.f32.mrf.mxu0
      %v6852 = vadd.f32 %v6755, %v6851
      %6853 = vmatmul.f32.gmra.mxu0 %v6235
      %v6854 = vpop.f32.mrf.mxu0
      %v6855 = vadd.f32 %v6755, %v6854
      %6856 = vmatmul.f32.gmra.mxu0 %v6236
      %v6857 = vpop.f32.mrf.mxu0
      %v6858 = vadd.f32 %v6755, %v6857
      %6859 = vmatmul.f32.gmra.mxu0 %v6237
      %v6860 = vpop.f32.mrf.mxu0
      %v6861 = vadd.f32 %v6755, %v6860
      %6862 = vmatmul.f32.gmra.mxu0 %v6238
      %v6863 = vpop.f32.mrf.mxu0
      %v6864 = vadd.f32 %v6755, %v6863
      %6865 = vmatmul.f32.gmra.mxu0 %v6239
      %v6866 = vpop.f32.mrf.mxu0
      %v6867 = vadd.f32 %v6755, %v6866
      %6868 = vmatmul.f32.gmra.mxu0 %v6240
      %v6869 = vpop.f32.mrf.mxu0
      %v6870 = vadd.f32 %v6755, %v6869
      %6871 = vdwg.mxu0
      %6872 = vmatpush.msra.mxu0 %v6527
      %6873 = vmatpush.msra.mxu0 %v6525
      %6874 = vmatpush.msra.mxu0 %v6523
      %6875 = vmatpush.msra.mxu0 %v6521
      %6876 = vmatpush.msra.mxu0 %v6519
      %6877 = vmatpush.msra.mxu0 %v6517
      %6878 = vmatpush.msra.mxu0 %v6515
      %6879 = vmatpush.msra.mxu0 %v6513
      %6880 = vmatpush.msra.mxu0 %v6511
      %6881 = vmatpush.msra.mxu0 %v6509
      %6882 = vmatpush.msra.mxu0 %v6507
      %6883 = vmatpush.msra.mxu0 %v6505
      %6884 = vmatpush.msra.mxu0 %v6503
      %6885 = vmatpush.msra.mxu0 %v6501
      %6886 = vmatpush.msra.mxu0 %v6499
      %6887 = vmatpush.msra.mxu0 %v6497
      %6888 = vmatmul.f32.gmra.mxu0 %v6275
      %v6889 = vpop.f32.mrf.mxu0
      %v6890 = vadd.f32 %v6777, %v6889
      %6891 = vmatmul.f32.gmra.mxu0 %v6277
      %v6892 = vpop.f32.mrf.mxu0
      %v6893 = vadd.f32 %v6780, %v6892
      %6894 = vmatmul.f32.gmra.mxu0 %v6279
      %v6895 = vpop.f32.mrf.mxu0
      %v6896 = vadd.f32 %v6783, %v6895
      %6897 = vmatmul.f32.gmra.mxu0 %v6281
      %v6898 = vpop.f32.mrf.mxu0
      %v6899 = vadd.f32 %v6786, %v6898
      %6900 = vmatmul.f32.gmra.mxu0 %v6283
      %v6901 = vpop.f32.mrf.mxu0
      %v6902 = vadd.f32 %v6789, %v6901
      %6903 = vmatmul.f32.gmra.mxu0 %v6285
      %v6904 = vpop.f32.mrf.mxu0
      %v6905 = vadd.f32 %v6792, %v6904
      %6906 = vmatmul.f32.gmra.mxu0 %v6287
      %v6907 = vpop.f32.mrf.mxu0
      %v6908 = vadd.f32 %v6795, %v6907
      %6909 = vmatmul.f32.gmra.mxu0 %v6289
      %v6910 = vpop.f32.mrf.mxu0
      %v6911 = vadd.f32 %v6798, %v6910
      %6912 = vmatmul.f32.gmra.mxu0 %v6291
      %v6913 = vpop.f32.mrf.mxu0
      %v6914 = vadd.f32 %v6801, %v6913
      %6915 = vmatmul.f32.gmra.mxu0 %v6293
      %v6916 = vpop.f32.mrf.mxu0
      %v6917 = vadd.f32 %v6804, %v6916
      %6918 = vmatmul.f32.gmra.mxu0 %v6295
      %v6919 = vpop.f32.mrf.mxu0
      %v6920 = vadd.f32 %v6807, %v6919
      %6921 = vmatmul.f32.gmra.mxu0 %v6297
      %v6922 = vpop.f32.mrf.mxu0
      %v6923 = vadd.f32 %v6810, %v6922
      %6924 = vmatmul.f32.gmra.mxu0 %v6299
      %v6925 = vpop.f32.mrf.mxu0
      %v6926 = vadd.f32 %v6813, %v6925
      %6927 = vmatmul.f32.gmra.mxu0 %v6301
      %v6928 = vpop.f32.mrf.mxu0
      %v6929 = vadd.f32 %v6816, %v6928
      %6930 = vmatmul.f32.gmra.mxu0 %v6303
      %v6931 = vpop.f32.mrf.mxu0
      %v6932 = vadd.f32 %v6819, %v6931
      %6933 = vmatmul.f32.gmra.mxu0 %v6305
      %v6934 = vpop.f32.mrf.mxu0
      %v6935 = vadd.f32 %v6822, %v6934
      %6936 = vmatmul.f32.gmra.mxu0 %v6307
      %v6937 = vpop.f32.mrf.mxu0
      %v6938 = vadd.f32 %v6825, %v6937
      %6939 = vmatmul.f32.gmra.mxu0 %v6309
      %v6940 = vpop.f32.mrf.mxu0
      %v6941 = vadd.f32 %v6828, %v6940
      %6942 = vmatmul.f32.gmra.mxu0 %v6311
      %v6943 = vpop.f32.mrf.mxu0
      %v6944 = vadd.f32 %v6831, %v6943
      %6945 = vmatmul.f32.gmra.mxu0 %v6313
      %v6946 = vpop.f32.mrf.mxu0
      %v6947 = vadd.f32 %v6834, %v6946
      %6948 = vmatmul.f32.gmra.mxu0 %v6315
      %v6949 = vpop.f32.mrf.mxu0
      %v6950 = vadd.f32 %v6837, %v6949
      %6951 = vmatmul.f32.gmra.mxu0 %v6317
      %v6952 = vpop.f32.mrf.mxu0
      %v6953 = vadd.f32 %v6840, %v6952
      %6954 = vmatmul.f32.gmra.mxu0 %v6319
      %v6955 = vpop.f32.mrf.mxu0
      %v6956 = vadd.f32 %v6843, %v6955
      %6957 = vmatmul.f32.gmra.mxu0 %v6321
      %v6958 = vpop.f32.mrf.mxu0
      %v6959 = vadd.f32 %v6846, %v6958
      %6960 = vmatmul.f32.gmra.mxu0 %v6323
      %v6961 = vpop.f32.mrf.mxu0
      %v6962 = vadd.f32 %v6849, %v6961
      %6963 = vmatmul.f32.gmra.mxu0 %v6325
      %v6964 = vpop.f32.mrf.mxu0
      %v6965 = vadd.f32 %v6852, %v6964
      %6966 = vmatmul.f32.gmra.mxu0 %v6327
      %v6967 = vpop.f32.mrf.mxu0
      %v6968 = vadd.f32 %v6855, %v6967
      %6969 = vmatmul.f32.gmra.mxu0 %v6329
      %v6970 = vpop.f32.mrf.mxu0
      %v6971 = vadd.f32 %v6858, %v6970
      %6972 = vmatmul.f32.gmra.mxu0 %v6331
      %v6973 = vpop.f32.mrf.mxu0
      %v6974 = vadd.f32 %v6861, %v6973
      %6975 = vmatmul.f32.gmra.mxu0 %v6333
      %v6976 = vpop.f32.mrf.mxu0
      %v6977 = vadd.f32 %v6864, %v6976
      %6978 = vmatmul.f32.gmra.mxu0 %v6335
      %v6979 = vpop.f32.mrf.mxu0
      %v6980 = vadd.f32 %v6867, %v6979
      %6981 = vmatmul.f32.gmra.mxu0 %v6336
      %v6982 = vpop.f32.mrf.mxu0
      %v6983 = vadd.f32 %v6870, %v6982
      %6984 = vdwg.mxu0
      %6985 = vmatpush.msra.mxu0 %v6559
      %6986 = vmatpush.msra.mxu0 %v6557
      %6987 = vmatpush.msra.mxu0 %v6555
      %6988 = vmatpush.msra.mxu0 %v6553
      %6989 = vmatpush.msra.mxu0 %v6551
      %6990 = vmatpush.msra.mxu0 %v6549
      %6991 = vmatpush.msra.mxu0 %v6547
      %6992 = vmatpush.msra.mxu0 %v6545
      %6993 = vmatpush.msra.mxu0 %v6543
      %6994 = vmatpush.msra.mxu0 %v6541
      %6995 = vmatpush.msra.mxu0 %v6539
      %6996 = vmatpush.msra.mxu0 %v6537
      %6997 = vmatpush.msra.mxu0 %v6535
      %6998 = vmatpush.msra.mxu0 %v6533
      %6999 = vmatpush.msra.mxu0 %v6531
      %7000 = vmatpush.msra.mxu0 %v6529
      %7001 = vmatmul.f32.gmra.mxu0 %v6371
      %v7002 = vpop.f32.mrf.mxu0
      %v7003 = vadd.f32 %v6890, %v7002
      %7004 = vmatmul.f32.gmra.mxu0 %v6373
      %v7005 = vpop.f32.mrf.mxu0
      %v7006 = vadd.f32 %v6893, %v7005
      %7007 = vmatmul.f32.gmra.mxu0 %v6375
      %v7008 = vpop.f32.mrf.mxu0
      %v7009 = vadd.f32 %v6896, %v7008
      %7010 = vmatmul.f32.gmra.mxu0 %v6377
      %v7011 = vpop.f32.mrf.mxu0
      %v7012 = vadd.f32 %v6899, %v7011
      %7013 = vmatmul.f32.gmra.mxu0 %v6379
      %v7014 = vpop.f32.mrf.mxu0
      %v7015 = vadd.f32 %v6902, %v7014
      %7016 = vmatmul.f32.gmra.mxu0 %v6381
      %v7017 = vpop.f32.mrf.mxu0
      %v7018 = vadd.f32 %v6905, %v7017
      %7019 = vmatmul.f32.gmra.mxu0 %v6383
      %v7020 = vpop.f32.mrf.mxu0
      %v7021 = vadd.f32 %v6908, %v7020
      %7022 = vmatmul.f32.gmra.mxu0 %v6385
      %v7023 = vpop.f32.mrf.mxu0
      %v7024 = vadd.f32 %v6911, %v7023
      %7025 = vmatmul.f32.gmra.mxu0 %v6387
      %v7026 = vpop.f32.mrf.mxu0
      %v7027 = vadd.f32 %v6914, %v7026
      %7028 = vmatmul.f32.gmra.mxu0 %v6389
      %v7029 = vpop.f32.mrf.mxu0
      %v7030 = vadd.f32 %v6917, %v7029
      %7031 = vmatmul.f32.gmra.mxu0 %v6391
      %v7032 = vpop.f32.mrf.mxu0
      %v7033 = vadd.f32 %v6920, %v7032
      %7034 = vmatmul.f32.gmra.mxu0 %v6393
      %v7035 = vpop.f32.mrf.mxu0
      %v7036 = vadd.f32 %v6923, %v7035
      %7037 = vmatmul.f32.gmra.mxu0 %v6395
      %v7038 = vpop.f32.mrf.mxu0
      %v7039 = vadd.f32 %v6926, %v7038
      %7040 = vmatmul.f32.gmra.mxu0 %v6397
      %v7041 = vpop.f32.mrf.mxu0
      %v7042 = vadd.f32 %v6929, %v7041
      %7043 = vmatmul.f32.gmra.mxu0 %v6399
      %v7044 = vpop.f32.mrf.mxu0
      %v7045 = vadd.f32 %v6932, %v7044
      %7046 = vmatmul.f32.gmra.mxu0 %v6401
      %v7047 = vpop.f32.mrf.mxu0
      %v7048 = vadd.f32 %v6935, %v7047
      %7049 = vmatmul.f32.gmra.mxu0 %v6403
      %v7050 = vpop.f32.mrf.mxu0
      %v7051 = vadd.f32 %v6938, %v7050
      %7052 = vmatmul.f32.gmra.mxu0 %v6405
      %v7053 = vpop.f32.mrf.mxu0
      %v7054 = vadd.f32 %v6941, %v7053
      %7055 = vmatmul.f32.gmra.mxu0 %v6407
      %v7056 = vpop.f32.mrf.mxu0
      %v7057 = vadd.f32 %v6944, %v7056
      %7058 = vmatmul.f32.gmra.mxu0 %v6409
      %v7059 = vpop.f32.mrf.mxu0
      %v7060 = vadd.f32 %v6947, %v7059
      %7061 = vmatmul.f32.gmra.mxu0 %v6411
      %v7062 = vpop.f32.mrf.mxu0
      %v7063 = vadd.f32 %v6950, %v7062
      %7064 = vmatmul.f32.gmra.mxu0 %v6413
      %v7065 = vpop.f32.mrf.mxu0
      %v7066 = vadd.f32 %v6953, %v7065
      %7067 = vmatmul.f32.gmra.mxu0 %v6415
      %v7068 = vpop.f32.mrf.mxu0
      %v7069 = vadd.f32 %v6956, %v7068
      %7070 = vmatmul.f32.gmra.mxu0 %v6417
      %v7071 = vpop.f32.mrf.mxu0
      %v7072 = vadd.f32 %v6959, %v7071
      %7073 = vmatmul.f32.gmra.mxu0 %v6419
      %v7074 = vpop.f32.mrf.mxu0
      %v7075 = vadd.f32 %v6962, %v7074
      %7076 = vmatmul.f32.gmra.mxu0 %v6421
      %v7077 = vpop.f32.mrf.mxu0
      %v7078 = vadd.f32 %v6965, %v7077
      %7079 = vmatmul.f32.gmra.mxu0 %v6423
      %v7080 = vpop.f32.mrf.mxu0
      %v7081 = vadd.f32 %v6968, %v7080
      %7082 = vmatmul.f32.gmra.mxu0 %v6425
      %v7083 = vpop.f32.mrf.mxu0
      %v7084 = vadd.f32 %v6971, %v7083
      %7085 = vmatmul.f32.gmra.mxu0 %v6427
      %v7086 = vpop.f32.mrf.mxu0
      %v7087 = vadd.f32 %v6974, %v7086
      %7088 = vmatmul.f32.gmra.mxu0 %v6429
      %v7089 = vpop.f32.mrf.mxu0
      %v7090 = vadd.f32 %v6977, %v7089
      %7091 = vmatmul.f32.gmra.mxu0 %v6431
      %v7092 = vpop.f32.mrf.mxu0
      %v7093 = vadd.f32 %v6980, %v7092
      %7094 = vmatmul.f32.gmra.mxu0 %v6432
      %v7095 = vpop.f32.mrf.mxu0
      %v7096 = vadd.f32 %v6983, %v7095
      %7097 = vdwg.mxu0
      %7098 = vmatpush.msra.mxu0 %v6591
      %7099 = vmatpush.msra.mxu0 %v6589
      %7100 = vmatpush.msra.mxu0 %v6587
      %7101 = vmatpush.msra.mxu0 %v6585
      %7102 = vmatpush.msra.mxu0 %v6583
      %7103 = vmatpush.msra.mxu0 %v6581
      %7104 = vmatpush.msra.mxu0 %v6579
      %7105 = vmatpush.msra.mxu0 %v6577
      %7106 = vmatpush.msra.mxu0 %v6575
      %7107 = vmatpush.msra.mxu0 %v6573
      %7108 = vmatpush.msra.mxu0 %v6571
      %7109 = vmatpush.msra.mxu0 %v6569
      %7110 = vmatpush.msra.mxu0 %v6567
      %7111 = vmatpush.msra.mxu0 %v6565
      %7112 = vmatpush.msra.mxu0 %v6563
      %7113 = vmatpush.msra.mxu0 %v6561
      %7114 = vmatmul.f32.gmra.mxu0 %v6211
      %v7115 = vpop.f32.mrf.mxu0
      %v7116 = vadd.f32 %v7003, %v7115
      %7117 = vmatmul.f32.gmra.mxu0 %v6212
      %v7118 = vpop.f32.mrf.mxu0
      %v7119 = vadd.f32 %v7006, %v7118
      %7120 = vmatmul.f32.gmra.mxu0 %v6213
      %v7121 = vpop.f32.mrf.mxu0
      %v7122 = vadd.f32 %v7009, %v7121
      %7123 = vmatmul.f32.gmra.mxu0 %v6214
      %v7124 = vpop.f32.mrf.mxu0
      %v7125 = vadd.f32 %v7012, %v7124
      %7126 = vmatmul.f32.gmra.mxu0 %v6215
      %v7127 = vpop.f32.mrf.mxu0
      %v7128 = vadd.f32 %v7015, %v7127
      %7129 = vmatmul.f32.gmra.mxu0 %v6216
      %v7130 = vpop.f32.mrf.mxu0
      %v7131 = vadd.f32 %v7018, %v7130
      %7132 = vmatmul.f32.gmra.mxu0 %v6217
      %v7133 = vpop.f32.mrf.mxu0
      %v7134 = vadd.f32 %v7021, %v7133
      %7135 = vmatmul.f32.gmra.mxu0 %v6218
      %v7136 = vpop.f32.mrf.mxu0
      %v7137 = vadd.f32 %v7024, %v7136
      %7138 = vmatmul.f32.gmra.mxu0 %v6219
      %v7139 = vpop.f32.mrf.mxu0
      %v7140 = vadd.f32 %v7027, %v7139
      %7141 = vmatmul.f32.gmra.mxu0 %v6220
      %v7142 = vpop.f32.mrf.mxu0
      %v7143 = vadd.f32 %v7030, %v7142
      %7144 = vmatmul.f32.gmra.mxu0 %v6221
      %v7145 = vpop.f32.mrf.mxu0
      %v7146 = vadd.f32 %v7033, %v7145
      %7147 = vmatmul.f32.gmra.mxu0 %v6222
      %v7148 = vpop.f32.mrf.mxu0
      %v7149 = vadd.f32 %v7036, %v7148
      %7150 = vmatmul.f32.gmra.mxu0 %v6223
      %v7151 = vpop.f32.mrf.mxu0
      %v7152 = vadd.f32 %v7039, %v7151
      %7153 = vmatmul.f32.gmra.mxu0 %v6224
      %v7154 = vpop.f32.mrf.mxu0
      %v7155 = vadd.f32 %v7042, %v7154
      %7156 = vmatmul.f32.gmra.mxu0 %v6225
      %v7157 = vpop.f32.mrf.mxu0
      %v7158 = vadd.f32 %v7045, %v7157
      %7159 = vmatmul.f32.gmra.mxu0 %v6226
      %v7160 = vpop.f32.mrf.mxu0
      %v7161 = vadd.f32 %v7048, %v7160
      %7162 = vmatmul.f32.gmra.mxu0 %v6227
      %v7163 = vpop.f32.mrf.mxu0
      %v7164 = vadd.f32 %v7051, %v7163
      %7165 = vmatmul.f32.gmra.mxu0 %v6228
      %v7166 = vpop.f32.mrf.mxu0
      %v7167 = vadd.f32 %v7054, %v7166
      %7168 = vmatmul.f32.gmra.mxu0 %v6229
      %v7169 = vpop.f32.mrf.mxu0
      %v7170 = vadd.f32 %v7057, %v7169
      %7171 = vmatmul.f32.gmra.mxu0 %v6230
      %v7172 = vpop.f32.mrf.mxu0
      %v7173 = vadd.f32 %v7060, %v7172
      %7174 = vmatmul.f32.gmra.mxu0 %v6231
      %v7175 = vpop.f32.mrf.mxu0
      %v7176 = vadd.f32 %v7063, %v7175
      %7177 = vmatmul.f32.gmra.mxu0 %v6232
      %v7178 = vpop.f32.mrf.mxu0
      %v7179 = vadd.f32 %v7066, %v7178
      %7180 = vmatmul.f32.gmra.mxu0 %v6233
      %v7181 = vpop.f32.mrf.mxu0
      %v7182 = vadd.f32 %v7069, %v7181
      %7183 = vmatmul.f32.gmra.mxu0 %v6234
      %v7184 = vpop.f32.mrf.mxu0
      %v7185 = vadd.f32 %v7072, %v7184
      %7186 = vmatmul.f32.gmra.mxu0 %v6235
      %v7187 = vpop.f32.mrf.mxu0
      %v7188 = vadd.f32 %v7075, %v7187
      %7189 = vmatmul.f32.gmra.mxu0 %v6236
      %v7190 = vpop.f32.mrf.mxu0
      %v7191 = vadd.f32 %v7078, %v7190
      %7192 = vmatmul.f32.gmra.mxu0 %v6237
      %v7193 = vpop.f32.mrf.mxu0
      %v7194 = vadd.f32 %v7081, %v7193
      %7195 = vmatmul.f32.gmra.mxu0 %v6238
      %v7196 = vpop.f32.mrf.mxu0
      %v7197 = vadd.f32 %v7084, %v7196
      %7198 = vmatmul.f32.gmra.mxu0 %v6239
      %v7199 = vpop.f32.mrf.mxu0
      %v7200 = vadd.f32 %v7087, %v7199
      %7201 = vmatmul.f32.gmra.mxu0 %v6240
      %v7202 = vpop.f32.mrf.mxu0
      %v7203 = vadd.f32 %v7090, %v7202
      %7204 = vmatmul.f32.gmra.mxu0 0.0
      %v7205 = vpop.f32.mrf.mxu0
      %v7206 = vadd.f32 %v7093, %v7205
      %7207 = vmatmul.f32.gmra.mxu0 0.0
      %v7208 = vpop.f32.mrf.mxu0
      %v7209 = vadd.f32 %v7096, %v7208
      %7210 = vdwg.mxu0
      %7211 = vmatpush.msra.mxu0 %v6623
      %7212 = vmatpush.msra.mxu0 %v6621
      %7213 = vmatpush.msra.mxu0 %v6619
      %7214 = vmatpush.msra.mxu0 %v6617
      %7215 = vmatpush.msra.mxu0 %v6615
      %7216 = vmatpush.msra.mxu0 %v6613
      %7217 = vmatpush.msra.mxu0 %v6611
      %7218 = vmatpush.msra.mxu0 %v6609
      %7219 = vmatpush.msra.mxu0 %v6607
      %7220 = vmatpush.msra.mxu0 %v6605
      %7221 = vmatpush.msra.mxu0 %v6603
      %7222 = vmatpush.msra.mxu0 %v6601
      %7223 = vmatpush.msra.mxu0 %v6599
      %7224 = vmatpush.msra.mxu0 %v6597
      %7225 = vmatpush.msra.mxu0 %v6595
      %7226 = vmatpush.msra.mxu0 %v6593
      %7227 = vmatmul.f32.gmra.mxu0 %v6279
      %v7228 = vpop.f32.mrf.mxu0
      %v7229 = vadd.f32 %v7116, %v7228
      %7230 = vmatmul.f32.gmra.mxu0 %v6281
      %v7231 = vpop.f32.mrf.mxu0
      %v7232 = vadd.f32 %v7119, %v7231
      %7233 = vmatmul.f32.gmra.mxu0 %v6283
      %v7234 = vpop.f32.mrf.mxu0
      %v7235 = vadd.f32 %v7122, %v7234
      %7236 = vmatmul.f32.gmra.mxu0 %v6285
      %v7237 = vpop.f32.mrf.mxu0
      %v7238 = vadd.f32 %v7125, %v7237
      %7239 = vmatmul.f32.gmra.mxu0 %v6287
      %v7240 = vpop.f32.mrf.mxu0
      %v7241 = vadd.f32 %v7128, %v7240
      %7242 = vmatmul.f32.gmra.mxu0 %v6289
      %v7243 = vpop.f32.mrf.mxu0
      %v7244 = vadd.f32 %v7131, %v7243
      %7245 = vmatmul.f32.gmra.mxu0 %v6291
      %v7246 = vpop.f32.mrf.mxu0
      %v7247 = vadd.f32 %v7134, %v7246
      %7248 = vmatmul.f32.gmra.mxu0 %v6293
      %v7249 = vpop.f32.mrf.mxu0
      %v7250 = vadd.f32 %v7137, %v7249
      %7251 = vmatmul.f32.gmra.mxu0 %v6295
      %v7252 = vpop.f32.mrf.mxu0
      %v7253 = vadd.f32 %v7140, %v7252
      %7254 = vmatmul.f32.gmra.mxu0 %v6297
      %v7255 = vpop.f32.mrf.mxu0
      %v7256 = vadd.f32 %v7143, %v7255
      %7257 = vmatmul.f32.gmra.mxu0 %v6299
      %v7258 = vpop.f32.mrf.mxu0
      %v7259 = vadd.f32 %v7146, %v7258
      %7260 = vmatmul.f32.gmra.mxu0 %v6301
      %v7261 = vpop.f32.mrf.mxu0
      %v7262 = vadd.f32 %v7149, %v7261
      %7263 = vmatmul.f32.gmra.mxu0 %v6303
      %v7264 = vpop.f32.mrf.mxu0
      %v7265 = vadd.f32 %v7152, %v7264
      %7266 = vmatmul.f32.gmra.mxu0 %v6305
      %v7267 = vpop.f32.mrf.mxu0
      %v7268 = vadd.f32 %v7155, %v7267
      %7269 = vmatmul.f32.gmra.mxu0 %v6307
      %v7270 = vpop.f32.mrf.mxu0
      %v7271 = vadd.f32 %v7158, %v7270
      %7272 = vmatmul.f32.gmra.mxu0 %v6309
      %v7273 = vpop.f32.mrf.mxu0
      %v7274 = vadd.f32 %v7161, %v7273
      %7275 = vmatmul.f32.gmra.mxu0 %v6311
      %v7276 = vpop.f32.mrf.mxu0
      %v7277 = vadd.f32 %v7164, %v7276
      %7278 = vmatmul.f32.gmra.mxu0 %v6313
      %v7279 = vpop.f32.mrf.mxu0
      %v7280 = vadd.f32 %v7167, %v7279
      %7281 = vmatmul.f32.gmra.mxu0 %v6315
      %v7282 = vpop.f32.mrf.mxu0
      %v7283 = vadd.f32 %v7170, %v7282
      %7284 = vmatmul.f32.gmra.mxu0 %v6317
      %v7285 = vpop.f32.mrf.mxu0
      %v7286 = vadd.f32 %v7173, %v7285
      %7287 = vmatmul.f32.gmra.mxu0 %v6319
      %v7288 = vpop.f32.mrf.mxu0
      %v7289 = vadd.f32 %v7176, %v7288
      %7290 = vmatmul.f32.gmra.mxu0 %v6321
      %v7291 = vpop.f32.mrf.mxu0
      %v7292 = vadd.f32 %v7179, %v7291
      %7293 = vmatmul.f32.gmra.mxu0 %v6323
      %v7294 = vpop.f32.mrf.mxu0
      %v7295 = vadd.f32 %v7182, %v7294
      %7296 = vmatmul.f32.gmra.mxu0 %v6325
      %v7297 = vpop.f32.mrf.mxu0
      %v7298 = vadd.f32 %v7185, %v7297
      %7299 = vmatmul.f32.gmra.mxu0 %v6327
      %v7300 = vpop.f32.mrf.mxu0
      %v7301 = vadd.f32 %v7188, %v7300
      %7302 = vmatmul.f32.gmra.mxu0 %v6329
      %v7303 = vpop.f32.mrf.mxu0
      %v7304 = vadd.f32 %v7191, %v7303
      %7305 = vmatmul.f32.gmra.mxu0 %v6331
      %v7306 = vpop.f32.mrf.mxu0
      %v7307 = vadd.f32 %v7194, %v7306
      %7308 = vmatmul.f32.gmra.mxu0 %v6333
      %v7309 = vpop.f32.mrf.mxu0
      %v7310 = vadd.f32 %v7197, %v7309
      %7311 = vmatmul.f32.gmra.mxu0 %v6335
      %v7312 = vpop.f32.mrf.mxu0
      %v7313 = vadd.f32 %v7200, %v7312
      %7314 = vmatmul.f32.gmra.mxu0 %v6336
      %v7315 = vpop.f32.mrf.mxu0
      %v7316 = vadd.f32 %v7203, %v7315
      %7317 = vmatmul.f32.gmra.mxu0 %v2198
      %v7318 = vpop.f32.mrf.mxu0
      %v7319 = vadd.f32 %v7206, %v7318
      %7320 = vmatmul.f32.gmra.mxu0 %v2198
      %v7321 = vpop.f32.mrf.mxu0
      %v7322 = vadd.f32 %v7209, %v7321
      %7323 = vdwg.mxu0
      %7324 = vmatpush.msra.mxu0 %v6655
      %7325 = vmatpush.msra.mxu0 %v6653
      %7326 = vmatpush.msra.mxu0 %v6651
      %7327 = vmatpush.msra.mxu0 %v6649
      %7328 = vmatpush.msra.mxu0 %v6647
      %7329 = vmatpush.msra.mxu0 %v6645
      %7330 = vmatpush.msra.mxu0 %v6643
      %7331 = vmatpush.msra.mxu0 %v6641
      %7332 = vmatpush.msra.mxu0 %v6639
      %7333 = vmatpush.msra.mxu0 %v6637
      %7334 = vmatpush.msra.mxu0 %v6635
      %7335 = vmatpush.msra.mxu0 %v6633
      %7336 = vmatpush.msra.mxu0 %v6631
      %7337 = vmatpush.msra.mxu0 %v6629
      %7338 = vmatpush.msra.mxu0 %v6627
      %7339 = vmatpush.msra.mxu0 %v6625
      %7340 = vmatmul.f32.gmra.mxu0 %v6375
      %v7341 = vpop.f32.mrf.mxu0
      %v7342 = vadd.f32 %v7229, %v7341
      %7343 = vmatmul.f32.gmra.mxu0 %v6377
      %v7344 = vpop.f32.mrf.mxu0
      %v7345 = vadd.f32 %v7232, %v7344
      %7346 = vmatmul.f32.gmra.mxu0 %v6379
      %v7347 = vpop.f32.mrf.mxu0
      %v7348 = vadd.f32 %v7235, %v7347
      %7349 = vmatmul.f32.gmra.mxu0 %v6381
      %v7350 = vpop.f32.mrf.mxu0
      %v7351 = vadd.f32 %v7238, %v7350
      %7352 = vmatmul.f32.gmra.mxu0 %v6383
      %v7353 = vpop.f32.mrf.mxu0
      %v7354 = vadd.f32 %v7241, %v7353
      %7355 = vmatmul.f32.gmra.mxu0 %v6385
      %v7356 = vpop.f32.mrf.mxu0
      %v7357 = vadd.f32 %v7244, %v7356
      %7358 = vmatmul.f32.gmra.mxu0 %v6387
      %v7359 = vpop.f32.mrf.mxu0
      %v7360 = vadd.f32 %v7247, %v7359
      %7361 = vmatmul.f32.gmra.mxu0 %v6389
      %v7362 = vpop.f32.mrf.mxu0
      %v7363 = vadd.f32 %v7250, %v7362
      %7364 = vmatmul.f32.gmra.mxu0 %v6391
      %v7365 = vpop.f32.mrf.mxu0
      %v7366 = vadd.f32 %v7253, %v7365
      %7367 = vmatmul.f32.gmra.mxu0 %v6393
      %v7368 = vpop.f32.mrf.mxu0
      %v7369 = vadd.f32 %v7256, %v7368
      %7370 = vmatmul.f32.gmra.mxu0 %v6395
      %v7371 = vpop.f32.mrf.mxu0
      %v7372 = vadd.f32 %v7259, %v7371
      %7373 = vmatmul.f32.gmra.mxu0 %v6397
      %v7374 = vpop.f32.mrf.mxu0
      %v7375 = vadd.f32 %v7262, %v7374
      %7376 = vmatmul.f32.gmra.mxu0 %v6399
      %v7377 = vpop.f32.mrf.mxu0
      %v7378 = vadd.f32 %v7265, %v7377
      %7379 = vmatmul.f32.gmra.mxu0 %v6401
      %v7380 = vpop.f32.mrf.mxu0
      %v7381 = vadd.f32 %v7268, %v7380
      %7382 = vmatmul.f32.gmra.mxu0 %v6403
      %v7383 = vpop.f32.mrf.mxu0
      %v7384 = vadd.f32 %v7271, %v7383
      %7385 = vmatmul.f32.gmra.mxu0 %v6405
      %v7386 = vpop.f32.mrf.mxu0
      %v7387 = vadd.f32 %v7274, %v7386
      %7388 = vmatmul.f32.gmra.mxu0 %v6407
      %v7389 = vpop.f32.mrf.mxu0
      %v7390 = vadd.f32 %v7277, %v7389
      %7391 = vmatmul.f32.gmra.mxu0 %v6409
      %v7392 = vpop.f32.mrf.mxu0
      %v7393 = vadd.f32 %v7280, %v7392
      %7394 = vmatmul.f32.gmra.mxu0 %v6411
      %v7395 = vpop.f32.mrf.mxu0
      %v7396 = vadd.f32 %v7283, %v7395
      %7397 = vmatmul.f32.gmra.mxu0 %v6413
      %v7398 = vpop.f32.mrf.mxu0
      %v7399 = vadd.f32 %v7286, %v7398
      %7400 = vmatmul.f32.gmra.mxu0 %v6415
      %v7401 = vpop.f32.mrf.mxu0
      %v7402 = vadd.f32 %v7289, %v7401
      %7403 = vmatmul.f32.gmra.mxu0 %v6417
      %v7404 = vpop.f32.mrf.mxu0
      %v7405 = vadd.f32 %v7292, %v7404
      %7406 = vmatmul.f32.gmra.mxu0 %v6419
      %v7407 = vpop.f32.mrf.mxu0
      %v7408 = vadd.f32 %v7295, %v7407
      %7409 = vmatmul.f32.gmra.mxu0 %v6421
      %v7410 = vpop.f32.mrf.mxu0
      %v7411 = vadd.f32 %v7298, %v7410
      %7412 = vmatmul.f32.gmra.mxu0 %v6423
      %v7413 = vpop.f32.mrf.mxu0
      %v7414 = vadd.f32 %v7301, %v7413
      %7415 = vmatmul.f32.gmra.mxu0 %v6425
      %v7416 = vpop.f32.mrf.mxu0
      %v7417 = vadd.f32 %v7304, %v7416
      %7418 = vmatmul.f32.gmra.mxu0 %v6427
      %v7419 = vpop.f32.mrf.mxu0
      %v7420 = vadd.f32 %v7307, %v7419
      %7421 = vmatmul.f32.gmra.mxu0 %v6429
      %v7422 = vpop.f32.mrf.mxu0
      %v7423 = vadd.f32 %v7310, %v7422
      %7424 = vmatmul.f32.gmra.mxu0 %v6431
      %v7425 = vpop.f32.mrf.mxu0
      %v7426 = vadd.f32 %v7313, %v7425
      %7427 = vmatmul.f32.gmra.mxu0 %v6432
      %v7428 = vpop.f32.mrf.mxu0
      %v7429 = vadd.f32 %v7316, %v7428
      %7430 = vmatmul.f32.gmra.mxu0 %v2200
      %v7431 = vpop.f32.mrf.mxu0
      %v7432 = vadd.f32 %v7319, %v7431
      %7433 = vmatmul.f32.gmra.mxu0 %v2200
      %v7434 = vpop.f32.mrf.mxu0
      %v7435 = vadd.f32 %v7322, %v7434
      %7436 = vdwg.mxu0
      %7437 = vmatpush.msra.mxu0 %v6687
      %7438 = vmatpush.msra.mxu0 %v6685
      %7439 = vmatpush.msra.mxu0 %v6683
      %7440 = vmatpush.msra.mxu0 %v6681
      %7441 = vmatpush.msra.mxu0 %v6679
      %7442 = vmatpush.msra.mxu0 %v6677
      %7443 = vmatpush.msra.mxu0 %v6675
      %7444 = vmatpush.msra.mxu0 %v6673
      %7445 = vmatpush.msra.mxu0 %v6671
      %7446 = vmatpush.msra.mxu0 %v6669
      %7447 = vmatpush.msra.mxu0 %v6667
      %7448 = vmatpush.msra.mxu0 %v6665
      %7449 = vmatpush.msra.mxu0 %v6663
      %7450 = vmatpush.msra.mxu0 %v6661
      %7451 = vmatpush.msra.mxu0 %v6659
      %7452 = vmatpush.msra.mxu0 %v6657
      %7453 = vmatmul.f32.gmra.mxu0 %v6213
      %v7454 = vpop.f32.mrf.mxu0
      %v7455 = vadd.f32 %v7342, %v7454
      %7456 = vmatmul.f32.gmra.mxu0 %v6214
      %v7457 = vpop.f32.mrf.mxu0
      %v7458 = vadd.f32 %v7345, %v7457
      %7459 = vmatmul.f32.gmra.mxu0 %v6215
      %v7460 = vpop.f32.mrf.mxu0
      %v7461 = vadd.f32 %v7348, %v7460
      %7462 = vmatmul.f32.gmra.mxu0 %v6216
      %v7463 = vpop.f32.mrf.mxu0
      %v7464 = vadd.f32 %v7351, %v7463
      %7465 = vmatmul.f32.gmra.mxu0 %v6217
      %v7466 = vpop.f32.mrf.mxu0
      %v7467 = vadd.f32 %v7354, %v7466
      %7468 = vmatmul.f32.gmra.mxu0 %v6218
      %v7469 = vpop.f32.mrf.mxu0
      %v7470 = vadd.f32 %v7357, %v7469
      %7471 = vmatmul.f32.gmra.mxu0 %v6219
      %v7472 = vpop.f32.mrf.mxu0
      %v7473 = vadd.f32 %v7360, %v7472
      %7474 = vmatmul.f32.gmra.mxu0 %v6220
      %v7475 = vpop.f32.mrf.mxu0
      %v7476 = vadd.f32 %v7363, %v7475
      %7477 = vmatmul.f32.gmra.mxu0 %v6221
      %v7478 = vpop.f32.mrf.mxu0
      %v7479 = vadd.f32 %v7366, %v7478
      %7480 = vmatmul.f32.gmra.mxu0 %v6222
      %v7481 = vpop.f32.mrf.mxu0
      %v7482 = vadd.f32 %v7369, %v7481
      %7483 = vmatmul.f32.gmra.mxu0 %v6223
      %v7484 = vpop.f32.mrf.mxu0
      %v7485 = vadd.f32 %v7372, %v7484
      %7486 = vmatmul.f32.gmra.mxu0 %v6224
      %v7487 = vpop.f32.mrf.mxu0
      %v7488 = vadd.f32 %v7375, %v7487
      %7489 = vmatmul.f32.gmra.mxu0 %v6225
      %v7490 = vpop.f32.mrf.mxu0
      %v7491 = vadd.f32 %v7378, %v7490
      %7492 = vmatmul.f32.gmra.mxu0 %v6226
      %v7493 = vpop.f32.mrf.mxu0
      %v7494 = vadd.f32 %v7381, %v7493
      %7495 = vmatmul.f32.gmra.mxu0 %v6227
      %v7496 = vpop.f32.mrf.mxu0
      %v7497 = vadd.f32 %v7384, %v7496
      %7498 = vmatmul.f32.gmra.mxu0 %v6228
      %v7499 = vpop.f32.mrf.mxu0
      %v7500 = vadd.f32 %v7387, %v7499
      %7501 = vmatmul.f32.gmra.mxu0 %v6229
      %v7502 = vpop.f32.mrf.mxu0
      %v7503 = vadd.f32 %v7390, %v7502
      %7504 = vmatmul.f32.gmra.mxu0 %v6230
      %v7505 = vpop.f32.mrf.mxu0
      %v7506 = vadd.f32 %v7393, %v7505
      %7507 = vmatmul.f32.gmra.mxu0 %v6231
      %v7508 = vpop.f32.mrf.mxu0
      %v7509 = vadd.f32 %v7396, %v7508
      %7510 = vmatmul.f32.gmra.mxu0 %v6232
      %v7511 = vpop.f32.mrf.mxu0
      %v7512 = vadd.f32 %v7399, %v7511
      %7513 = vmatmul.f32.gmra.mxu0 %v6233
      %v7514 = vpop.f32.mrf.mxu0
      %v7515 = vadd.f32 %v7402, %v7514
      %7516 = vmatmul.f32.gmra.mxu0 %v6234
      %v7517 = vpop.f32.mrf.mxu0
      %v7518 = vadd.f32 %v7405, %v7517
      %7519 = vmatmul.f32.gmra.mxu0 %v6235
      %v7520 = vpop.f32.mrf.mxu0
      %v7521 = vadd.f32 %v7408, %v7520
      %7522 = vmatmul.f32.gmra.mxu0 %v6236
      %v7523 = vpop.f32.mrf.mxu0
      %v7524 = vadd.f32 %v7411, %v7523
      %7525 = vmatmul.f32.gmra.mxu0 %v6237
      %v7526 = vpop.f32.mrf.mxu0
      %v7527 = vadd.f32 %v7414, %v7526
      %7528 = vmatmul.f32.gmra.mxu0 %v6238
      %v7529 = vpop.f32.mrf.mxu0
      %v7530 = vadd.f32 %v7417, %v7529
      %7531 = vmatmul.f32.gmra.mxu0 %v6239
      %v7532 = vpop.f32.mrf.mxu0
      %v7533 = vadd.f32 %v7420, %v7532
      %7534 = vmatmul.f32.gmra.mxu0 %v6240
      %v7535 = vpop.f32.mrf.mxu0
      %v7536 = vadd.f32 %v7423, %v7535
      %7537 = vmatmul.f32.gmra.mxu0 0.0
      %v7538 = vpop.f32.mrf.mxu0
      %v7539 = vadd.f32 %v7426, %v7538
      %7540 = vmatmul.f32.gmra.mxu0 0.0
      %v7541 = vpop.f32.mrf.mxu0
      %v7542 = vadd.f32 %v7429, %v7541
      %7543 = vmatmul.f32.gmra.mxu0 0.0
      %v7544 = vpop.f32.mrf.mxu0
      %v7545 = vadd.f32 %v7432, %v7544
      %7546 = vmatmul.f32.gmra.mxu0 0.0
      %v7547 = vpop.f32.mrf.mxu0
      %v7548 = vadd.f32 %v7435, %v7547
      %7549 = vdwg.mxu0
      %7550 = vmatpush.msra.mxu0 %v6719
      %7551 = vmatpush.msra.mxu0 %v6717
      %7552 = vmatpush.msra.mxu0 %v6715
      %7553 = vmatpush.msra.mxu0 %v6713
      %7554 = vmatpush.msra.mxu0 %v6711
      %7555 = vmatpush.msra.mxu0 %v6709
      %7556 = vmatpush.msra.mxu0 %v6707
      %7557 = vmatpush.msra.mxu0 %v6705
      %7558 = vmatpush.msra.mxu0 %v6703
      %7559 = vmatpush.msra.mxu0 %v6701
      %7560 = vmatpush.msra.mxu0 %v6699
      %7561 = vmatpush.msra.mxu0 %v6697
      %7562 = vmatpush.msra.mxu0 %v6695
      %7563 = vmatpush.msra.mxu0 %v6693
      %7564 = vmatpush.msra.mxu0 %v6691
      %7565 = vmatpush.msra.mxu0 %v6689
      %7566 = vmatmul.f32.gmra.mxu0 %v6283
      %v7567 = vpop.f32.mrf.mxu0
      %v7568 = vadd.f32 %v7455, %v7567
      %7569 = vmatmul.f32.gmra.mxu0 %v6285
      %v7570 = vpop.f32.mrf.mxu0
      %v7571 = vadd.f32 %v7458, %v7570
      %7572 = vmatmul.f32.gmra.mxu0 %v6287
      %v7573 = vpop.f32.mrf.mxu0
      %v7574 = vadd.f32 %v7461, %v7573
      %7575 = vmatmul.f32.gmra.mxu0 %v6289
      %v7576 = vpop.f32.mrf.mxu0
      %v7577 = vadd.f32 %v7464, %v7576
      %7578 = vmatmul.f32.gmra.mxu0 %v6291
      %v7579 = vpop.f32.mrf.mxu0
      %v7580 = vadd.f32 %v7467, %v7579
      %7581 = vmatmul.f32.gmra.mxu0 %v6293
      %v7582 = vpop.f32.mrf.mxu0
      %v7583 = vadd.f32 %v7470, %v7582
      %7584 = vmatmul.f32.gmra.mxu0 %v6295
      %v7585 = vpop.f32.mrf.mxu0
      %v7586 = vadd.f32 %v7473, %v7585
      %7587 = vmatmul.f32.gmra.mxu0 %v6297
      %v7588 = vpop.f32.mrf.mxu0
      %v7589 = vadd.f32 %v7476, %v7588
      %7590 = vmatmul.f32.gmra.mxu0 %v6299
      %v7591 = vpop.f32.mrf.mxu0
      %v7592 = vadd.f32 %v7479, %v7591
      %7593 = vmatmul.f32.gmra.mxu0 %v6301
      %v7594 = vpop.f32.mrf.mxu0
      %v7595 = vadd.f32 %v7482, %v7594
      %7596 = vmatmul.f32.gmra.mxu0 %v6303
      %v7597 = vpop.f32.mrf.mxu0
      %v7598 = vadd.f32 %v7485, %v7597
      %7599 = vmatmul.f32.gmra.mxu0 %v6305
      %v7600 = vpop.f32.mrf.mxu0
      %v7601 = vadd.f32 %v7488, %v7600
      %7602 = vmatmul.f32.gmra.mxu0 %v6307
      %v7603 = vpop.f32.mrf.mxu0
      %v7604 = vadd.f32 %v7491, %v7603
      %7605 = vmatmul.f32.gmra.mxu0 %v6309
      %v7606 = vpop.f32.mrf.mxu0
      %v7607 = vadd.f32 %v7494, %v7606
      %7608 = vmatmul.f32.gmra.mxu0 %v6311
      %v7609 = vpop.f32.mrf.mxu0
      %v7610 = vadd.f32 %v7497, %v7609
      %7611 = vmatmul.f32.gmra.mxu0 %v6313
      %v7612 = vpop.f32.mrf.mxu0
      %v7613 = vadd.f32 %v7500, %v7612
      %7614 = vmatmul.f32.gmra.mxu0 %v6315
      %v7615 = vpop.f32.mrf.mxu0
      %v7616 = vadd.f32 %v7503, %v7615
      %7617 = vmatmul.f32.gmra.mxu0 %v6317
      %v7618 = vpop.f32.mrf.mxu0
      %v7619 = vadd.f32 %v7506, %v7618
      %7620 = vmatmul.f32.gmra.mxu0 %v6319
      %v7621 = vpop.f32.mrf.mxu0
      %v7622 = vadd.f32 %v7509, %v7621
      %7623 = vmatmul.f32.gmra.mxu0 %v6321
      %v7624 = vpop.f32.mrf.mxu0
      %v7625 = vadd.f32 %v7512, %v7624
      %7626 = vmatmul.f32.gmra.mxu0 %v6323
      %v7627 = vpop.f32.mrf.mxu0
      %v7628 = vadd.f32 %v7515, %v7627
      %7629 = vmatmul.f32.gmra.mxu0 %v6325
      %v7630 = vpop.f32.mrf.mxu0
      %v7631 = vadd.f32 %v7518, %v7630
      %7632 = vmatmul.f32.gmra.mxu0 %v6327
      %v7633 = vpop.f32.mrf.mxu0
      %v7634 = vadd.f32 %v7521, %v7633
      %7635 = vmatmul.f32.gmra.mxu0 %v6329
      %v7636 = vpop.f32.mrf.mxu0
      %v7637 = vadd.f32 %v7524, %v7636
      %7638 = vmatmul.f32.gmra.mxu0 %v6331
      %v7639 = vpop.f32.mrf.mxu0
      %v7640 = vadd.f32 %v7527, %v7639
      %7641 = vmatmul.f32.gmra.mxu0 %v6333
      %v7642 = vpop.f32.mrf.mxu0
      %v7643 = vadd.f32 %v7530, %v7642
      %7644 = vmatmul.f32.gmra.mxu0 %v6335
      %v7645 = vpop.f32.mrf.mxu0
      %v7646 = vadd.f32 %v7533, %v7645
      %7647 = vmatmul.f32.gmra.mxu0 %v6336
      %v7648 = vpop.f32.mrf.mxu0
      %v7649 = vadd.f32 %v7536, %v7648
      %7650 = vmatmul.f32.gmra.mxu0 %v2198
      %v7651 = vpop.f32.mrf.mxu0
      %v7652 = vadd.f32 %v7539, %v7651
      %7653 = vmatmul.f32.gmra.mxu0 %v2198
      %v7654 = vpop.f32.mrf.mxu0
      %v7655 = vadd.f32 %v7542, %v7654
      %7656 = vmatmul.f32.gmra.mxu0 %v2198
      %v7657 = vpop.f32.mrf.mxu0
      %v7658 = vadd.f32 %v7545, %v7657
      %7659 = vmatmul.f32.gmra.mxu0 %v2198
      %v7660 = vpop.f32.mrf.mxu0
      %v7661 = vadd.f32 %v7548, %v7660
      %7662 = vdwg.mxu0
      %7663 = vmatpush.msra.mxu0 %v6751
      %7664 = vmatpush.msra.mxu0 %v6749
      %7665 = vmatpush.msra.mxu0 %v6747
      %7666 = vmatpush.msra.mxu0 %v6745
      %7667 = vmatpush.msra.mxu0 %v6743
      %7668 = vmatpush.msra.mxu0 %v6741
      %7669 = vmatpush.msra.mxu0 %v6739
      %7670 = vmatpush.msra.mxu0 %v6737
      %7671 = vmatpush.msra.mxu0 %v6735
      %7672 = vmatpush.msra.mxu0 %v6733
      %7673 = vmatpush.msra.mxu0 %v6731
      %7674 = vmatpush.msra.mxu0 %v6729
      %7675 = vmatpush.msra.mxu0 %v6727
      %7676 = vmatpush.msra.mxu0 %v6725
      %7677 = vmatpush.msra.mxu0 %v6723
      %7678 = vmatpush.msra.mxu0 %v6721
      %7679 = vmatmul.f32.gmra.mxu0 %v6379
      %v7680 = vpop.f32.mrf.mxu0
      %v7681 = vadd.f32 %v7568, %v7680
      %7682 = vmatmul.f32.gmra.mxu0 %v6381
      %v7683 = vpop.f32.mrf.mxu0
      %v7684 = vadd.f32 %v7571, %v7683
      %7685 = vmatmul.f32.gmra.mxu0 %v6383
      %v7686 = vpop.f32.mrf.mxu0
      %v7687 = vadd.f32 %v7574, %v7686
      %7688 = vmatmul.f32.gmra.mxu0 %v6385
      %v7689 = vpop.f32.mrf.mxu0
      %v7690 = vadd.f32 %v7577, %v7689
      %7691 = vmatmul.f32.gmra.mxu0 %v6387
      %v7692 = vpop.f32.mrf.mxu0
      %v7693 = vadd.f32 %v7580, %v7692
      %7694 = vmatmul.f32.gmra.mxu0 %v6389
      %v7695 = vpop.f32.mrf.mxu0
      %v7696 = vadd.f32 %v7583, %v7695
      %7697 = vmatmul.f32.gmra.mxu0 %v6391
      %v7698 = vpop.f32.mrf.mxu0
      %v7699 = vadd.f32 %v7586, %v7698
      %7700 = vmatmul.f32.gmra.mxu0 %v6393
      %v7701 = vpop.f32.mrf.mxu0
      %v7702 = vadd.f32 %v7589, %v7701
      %7703 = vmatmul.f32.gmra.mxu0 %v6395
      %v7704 = vpop.f32.mrf.mxu0
      %v7705 = vadd.f32 %v7592, %v7704
      %7706 = vmatmul.f32.gmra.mxu0 %v6397
      %v7707 = vpop.f32.mrf.mxu0
      %v7708 = vadd.f32 %v7595, %v7707
      %7709 = vmatmul.f32.gmra.mxu0 %v6399
      %v7710 = vpop.f32.mrf.mxu0
      %v7711 = vadd.f32 %v7598, %v7710
      %7712 = vmatmul.f32.gmra.mxu0 %v6401
      %v7713 = vpop.f32.mrf.mxu0
      %v7714 = vadd.f32 %v7601, %v7713
      %7715 = vmatmul.f32.gmra.mxu0 %v6403
      %v7716 = vpop.f32.mrf.mxu0
      %v7717 = vadd.f32 %v7604, %v7716
      %7718 = vmatmul.f32.gmra.mxu0 %v6405
      %v7719 = vpop.f32.mrf.mxu0
      %v7720 = vadd.f32 %v7607, %v7719
      %7721 = vmatmul.f32.gmra.mxu0 %v6407
      %v7722 = vpop.f32.mrf.mxu0
      %v7723 = vadd.f32 %v7610, %v7722
      %7724 = vmatmul.f32.gmra.mxu0 %v6409
      %v7725 = vpop.f32.mrf.mxu0
      %v7726 = vadd.f32 %v7613, %v7725
      %7727 = vmatmul.f32.gmra.mxu0 %v6411
      %v7728 = vpop.f32.mrf.mxu0
      %v7729 = vadd.f32 %v7616, %v7728
      %7730 = vmatmul.f32.gmra.mxu0 %v6413
      %v7731 = vpop.f32.mrf.mxu0
      %v7732 = vadd.f32 %v7619, %v7731
      %7733 = vmatmul.f32.gmra.mxu0 %v6415
      %v7734 = vpop.f32.mrf.mxu0
      %v7735 = vadd.f32 %v7622, %v7734
      %7736 = vmatmul.f32.gmra.mxu0 %v6417
      %v7737 = vpop.f32.mrf.mxu0
      %v7738 = vadd.f32 %v7625, %v7737
      %7739 = vmatmul.f32.gmra.mxu0 %v6419
      %v7740 = vpop.f32.mrf.mxu0
      %v7741 = vadd.f32 %v7628, %v7740
      %7742 = vmatmul.f32.gmra.mxu0 %v6421
      %v7743 = vpop.f32.mrf.mxu0
      %v7744 = vadd.f32 %v7631, %v7743
      %7745 = vmatmul.f32.gmra.mxu0 %v6423
      %v7746 = vpop.f32.mrf.mxu0
      %v7747 = vadd.f32 %v7634, %v7746
      %7748 = vmatmul.f32.gmra.mxu0 %v6425
      %v7749 = vpop.f32.mrf.mxu0
      %v7750 = vadd.f32 %v7637, %v7749
      %7751 = vmatmul.f32.gmra.mxu0 %v6427
      %v7752 = vpop.f32.mrf.mxu0
      %v7753 = vadd.f32 %v7640, %v7752
      %7754 = vmatmul.f32.gmra.mxu0 %v6429
      %v7755 = vpop.f32.mrf.mxu0
      %v7756 = vadd.f32 %v7643, %v7755
      %7757 = vmatmul.f32.gmra.mxu0 %v6431
      %v7758 = vpop.f32.mrf.mxu0
      %v7759 = vadd.f32 %v7646, %v7758
      %7760 = vmatmul.f32.gmra.mxu0 %v6432
      %v7761 = vpop.f32.mrf.mxu0
      %v7762 = vadd.f32 %v7649, %v7761
      %7763 = vmatmul.f32.gmra.mxu0 %v2200
      %v7764 = vpop.f32.mrf.mxu0
      %v7765 = vadd.f32 %v7652, %v7764
      %7766 = vmatmul.f32.gmra.mxu0 %v2200
      %v7767 = vpop.f32.mrf.mxu0
      %v7768 = vadd.f32 %v7655, %v7767
      %7769 = vmatmul.f32.gmra.mxu0 %v2200
      %v7770 = vpop.f32.mrf.mxu0
      %v7771 = vadd.f32 %v7658, %v7770
      %7772 = vmatmul.f32.gmra.mxu0 %v2200
      %v7773 = vpop.f32.mrf.mxu0
      %v7774 = vadd.f32 %v7661, %v7773
      %7775 = vdwg.mxu0
      %7776 = vmatpush.msra.mxu0 %v6496
      %7777 = vmatpush.msra.mxu0 %v6494
      %7778 = vmatpush.msra.mxu0 %v6492
      %7779 = vmatpush.msra.mxu0 %v6490
      %7780 = vmatpush.msra.mxu0 %v6488
      %7781 = vmatpush.msra.mxu0 %v6486
      %7782 = vmatpush.msra.mxu0 %v6484
      %7783 = vmatpush.msra.mxu0 %v6482
      %7784 = vmatpush.msra.mxu0 %v6480
      %7785 = vmatpush.msra.mxu0 %v6478
      %7786 = vmatpush.msra.mxu0 %v6476
      %7787 = vmatpush.msra.mxu0 %v6474
      %7788 = vmatpush.msra.mxu0 %v6472
      %7789 = vmatpush.msra.mxu0 %v6470
      %7790 = vmatpush.msra.mxu0 %v6468
      %7791 = vmatpush.msra.mxu0 %v6466
      %7792 = vmatmul.f32.gmra.mxu0 %v6209
      %v7793 = vpop.f32.mrf.mxu0
      %v7794 = vadd.f32 %v6756, %v7793
      %7795 = vmatmul.f32.gmra.mxu0 %v6210
      %v7796 = vpop.f32.mrf.mxu0
      %v7797 = vadd.f32 %v6756, %v7796
      %7798 = vmatmul.f32.gmra.mxu0 %v6211
      %v7799 = vpop.f32.mrf.mxu0
      %v7800 = vadd.f32 %v6756, %v7799
      %7801 = vmatmul.f32.gmra.mxu0 %v6212
      %v7802 = vpop.f32.mrf.mxu0
      %v7803 = vadd.f32 %v6756, %v7802
      %7804 = vmatmul.f32.gmra.mxu0 %v6213
      %v7805 = vpop.f32.mrf.mxu0
      %v7806 = vadd.f32 %v6756, %v7805
      %7807 = vmatmul.f32.gmra.mxu0 %v6214
      %v7808 = vpop.f32.mrf.mxu0
      %v7809 = vadd.f32 %v6756, %v7808
      %7810 = vmatmul.f32.gmra.mxu0 %v6215
      %v7811 = vpop.f32.mrf.mxu0
      %v7812 = vadd.f32 %v6756, %v7811
      %7813 = vmatmul.f32.gmra.mxu0 %v6216
      %v7814 = vpop.f32.mrf.mxu0
      %v7815 = vadd.f32 %v6756, %v7814
      %7816 = vmatmul.f32.gmra.mxu0 %v6217
      %v7817 = vpop.f32.mrf.mxu0
      %v7818 = vadd.f32 %v6756, %v7817
      %7819 = vmatmul.f32.gmra.mxu0 %v6218
      %v7820 = vpop.f32.mrf.mxu0
      %v7821 = vadd.f32 %v6756, %v7820
      %7822 = vmatmul.f32.gmra.mxu0 %v6219
      %v7823 = vpop.f32.mrf.mxu0
      %v7824 = vadd.f32 %v6756, %v7823
      %7825 = vmatmul.f32.gmra.mxu0 %v6220
      %v7826 = vpop.f32.mrf.mxu0
      %v7827 = vadd.f32 %v6756, %v7826
      %7828 = vmatmul.f32.gmra.mxu0 %v6221
      %v7829 = vpop.f32.mrf.mxu0
      %v7830 = vadd.f32 %v6756, %v7829
      %7831 = vmatmul.f32.gmra.mxu0 %v6222
      %v7832 = vpop.f32.mrf.mxu0
      %v7833 = vadd.f32 %v6756, %v7832
      %7834 = vmatmul.f32.gmra.mxu0 %v6223
      %v7835 = vpop.f32.mrf.mxu0
      %v7836 = vadd.f32 %v6756, %v7835
      %7837 = vmatmul.f32.gmra.mxu0 %v6224
      %v7838 = vpop.f32.mrf.mxu0
      %v7839 = vadd.f32 %v6756, %v7838
      %7840 = vmatmul.f32.gmra.mxu0 %v6225
      %v7841 = vpop.f32.mrf.mxu0
      %v7842 = vadd.f32 %v6756, %v7841
      %7843 = vmatmul.f32.gmra.mxu0 %v6226
      %v7844 = vpop.f32.mrf.mxu0
      %v7845 = vadd.f32 %v6756, %v7844
      %7846 = vmatmul.f32.gmra.mxu0 %v6227
      %v7847 = vpop.f32.mrf.mxu0
      %v7848 = vadd.f32 %v6756, %v7847
      %7849 = vmatmul.f32.gmra.mxu0 %v6228
      %v7850 = vpop.f32.mrf.mxu0
      %v7851 = vadd.f32 %v6756, %v7850
      %7852 = vmatmul.f32.gmra.mxu0 %v6229
      %v7853 = vpop.f32.mrf.mxu0
      %v7854 = vadd.f32 %v6756, %v7853
      %7855 = vmatmul.f32.gmra.mxu0 %v6230
      %v7856 = vpop.f32.mrf.mxu0
      %v7857 = vadd.f32 %v6756, %v7856
      %7858 = vmatmul.f32.gmra.mxu0 %v6231
      %v7859 = vpop.f32.mrf.mxu0
      %v7860 = vadd.f32 %v6756, %v7859
      %7861 = vmatmul.f32.gmra.mxu0 %v6232
      %v7862 = vpop.f32.mrf.mxu0
      %v7863 = vadd.f32 %v6756, %v7862
      %7864 = vmatmul.f32.gmra.mxu0 %v6233
      %v7865 = vpop.f32.mrf.mxu0
      %v7866 = vadd.f32 %v6756, %v7865
      %7867 = vmatmul.f32.gmra.mxu0 %v6234
      %v7868 = vpop.f32.mrf.mxu0
      %v7869 = vadd.f32 %v6756, %v7868
      %7870 = vmatmul.f32.gmra.mxu0 %v6235
      %v7871 = vpop.f32.mrf.mxu0
      %v7872 = vadd.f32 %v6756, %v7871
      %7873 = vmatmul.f32.gmra.mxu0 %v6236
      %v7874 = vpop.f32.mrf.mxu0
      %v7875 = vadd.f32 %v6756, %v7874
      %7876 = vmatmul.f32.gmra.mxu0 %v6237
      %v7877 = vpop.f32.mrf.mxu0
      %v7878 = vadd.f32 %v6756, %v7877
      %7879 = vmatmul.f32.gmra.mxu0 %v6238
      %v7880 = vpop.f32.mrf.mxu0
      %v7881 = vadd.f32 %v6756, %v7880
      %7882 = vmatmul.f32.gmra.mxu0 %v6239
      %v7883 = vpop.f32.mrf.mxu0
      %v7884 = vadd.f32 %v6756, %v7883
      %7885 = vmatmul.f32.gmra.mxu0 %v6240
      %v7886 = vpop.f32.mrf.mxu0
      %v7887 = vadd.f32 %v6756, %v7886
      %7888 = vdwg.mxu0
      %7889 = vmatpush.msra.mxu0 %v6528
      %7890 = vmatpush.msra.mxu0 %v6526
      %7891 = vmatpush.msra.mxu0 %v6524
      %7892 = vmatpush.msra.mxu0 %v6522
      %7893 = vmatpush.msra.mxu0 %v6520
      %7894 = vmatpush.msra.mxu0 %v6518
      %7895 = vmatpush.msra.mxu0 %v6516
      %7896 = vmatpush.msra.mxu0 %v6514
      %7897 = vmatpush.msra.mxu0 %v6512
      %7898 = vmatpush.msra.mxu0 %v6510
      %7899 = vmatpush.msra.mxu0 %v6508
      %7900 = vmatpush.msra.mxu0 %v6506
      %7901 = vmatpush.msra.mxu0 %v6504
      %7902 = vmatpush.msra.mxu0 %v6502
      %7903 = vmatpush.msra.mxu0 %v6500
      %7904 = vmatpush.msra.mxu0 %v6498
      %7905 = vmatmul.f32.gmra.mxu0 %v6275
      %v7906 = vpop.f32.mrf.mxu0
      %v7907 = vadd.f32 %v7794, %v7906
      %7908 = vmatmul.f32.gmra.mxu0 %v6277
      %v7909 = vpop.f32.mrf.mxu0
      %v7910 = vadd.f32 %v7797, %v7909
      %7911 = vmatmul.f32.gmra.mxu0 %v6279
      %v7912 = vpop.f32.mrf.mxu0
      %v7913 = vadd.f32 %v7800, %v7912
      %7914 = vmatmul.f32.gmra.mxu0 %v6281
      %v7915 = vpop.f32.mrf.mxu0
      %v7916 = vadd.f32 %v7803, %v7915
      %7917 = vmatmul.f32.gmra.mxu0 %v6283
      %v7918 = vpop.f32.mrf.mxu0
      %v7919 = vadd.f32 %v7806, %v7918
      %7920 = vmatmul.f32.gmra.mxu0 %v6285
      %v7921 = vpop.f32.mrf.mxu0
      %v7922 = vadd.f32 %v7809, %v7921
      %7923 = vmatmul.f32.gmra.mxu0 %v6287
      %v7924 = vpop.f32.mrf.mxu0
      %v7925 = vadd.f32 %v7812, %v7924
      %7926 = vmatmul.f32.gmra.mxu0 %v6289
      %v7927 = vpop.f32.mrf.mxu0
      %v7928 = vadd.f32 %v7815, %v7927
      %7929 = vmatmul.f32.gmra.mxu0 %v6291
      %v7930 = vpop.f32.mrf.mxu0
      %v7931 = vadd.f32 %v7818, %v7930
      %7932 = vmatmul.f32.gmra.mxu0 %v6293
      %v7933 = vpop.f32.mrf.mxu0
      %v7934 = vadd.f32 %v7821, %v7933
      %7935 = vmatmul.f32.gmra.mxu0 %v6295
      %v7936 = vpop.f32.mrf.mxu0
      %v7937 = vadd.f32 %v7824, %v7936
      %7938 = vmatmul.f32.gmra.mxu0 %v6297
      %v7939 = vpop.f32.mrf.mxu0
      %v7940 = vadd.f32 %v7827, %v7939
      %7941 = vmatmul.f32.gmra.mxu0 %v6299
      %v7942 = vpop.f32.mrf.mxu0
      %v7943 = vadd.f32 %v7830, %v7942
      %7944 = vmatmul.f32.gmra.mxu0 %v6301
      %v7945 = vpop.f32.mrf.mxu0
      %v7946 = vadd.f32 %v7833, %v7945
      %7947 = vmatmul.f32.gmra.mxu0 %v6303
      %v7948 = vpop.f32.mrf.mxu0
      %v7949 = vadd.f32 %v7836, %v7948
      %7950 = vmatmul.f32.gmra.mxu0 %v6305
      %v7951 = vpop.f32.mrf.mxu0
      %v7952 = vadd.f32 %v7839, %v7951
      %7953 = vmatmul.f32.gmra.mxu0 %v6307
      %v7954 = vpop.f32.mrf.mxu0
      %v7955 = vadd.f32 %v7842, %v7954
      %7956 = vmatmul.f32.gmra.mxu0 %v6309
      %v7957 = vpop.f32.mrf.mxu0
      %v7958 = vadd.f32 %v7845, %v7957
      %7959 = vmatmul.f32.gmra.mxu0 %v6311
      %v7960 = vpop.f32.mrf.mxu0
      %v7961 = vadd.f32 %v7848, %v7960
      %7962 = vmatmul.f32.gmra.mxu0 %v6313
      %v7963 = vpop.f32.mrf.mxu0
      %v7964 = vadd.f32 %v7851, %v7963
      %7965 = vmatmul.f32.gmra.mxu0 %v6315
      %v7966 = vpop.f32.mrf.mxu0
      %v7967 = vadd.f32 %v7854, %v7966
      %7968 = vmatmul.f32.gmra.mxu0 %v6317
      %v7969 = vpop.f32.mrf.mxu0
      %v7970 = vadd.f32 %v7857, %v7969
      %7971 = vmatmul.f32.gmra.mxu0 %v6319
      %v7972 = vpop.f32.mrf.mxu0
      %v7973 = vadd.f32 %v7860, %v7972
      %7974 = vmatmul.f32.gmra.mxu0 %v6321
      %v7975 = vpop.f32.mrf.mxu0
      %v7976 = vadd.f32 %v7863, %v7975
      %7977 = vmatmul.f32.gmra.mxu0 %v6323
      %v7978 = vpop.f32.mrf.mxu0
      %v7979 = vadd.f32 %v7866, %v7978
      %7980 = vmatmul.f32.gmra.mxu0 %v6325
      %v7981 = vpop.f32.mrf.mxu0
      %v7982 = vadd.f32 %v7869, %v7981
      %7983 = vmatmul.f32.gmra.mxu0 %v6327
      %v7984 = vpop.f32.mrf.mxu0
      %v7985 = vadd.f32 %v7872, %v7984
      %7986 = vmatmul.f32.gmra.mxu0 %v6329
      %v7987 = vpop.f32.mrf.mxu0
      %v7988 = vadd.f32 %v7875, %v7987
      %7989 = vmatmul.f32.gmra.mxu0 %v6331
      %v7990 = vpop.f32.mrf.mxu0
      %v7991 = vadd.f32 %v7878, %v7990
      %7992 = vmatmul.f32.gmra.mxu0 %v6333
      %v7993 = vpop.f32.mrf.mxu0
      %v7994 = vadd.f32 %v7881, %v7993
      %7995 = vmatmul.f32.gmra.mxu0 %v6335
      %v7996 = vpop.f32.mrf.mxu0
      %v7997 = vadd.f32 %v7884, %v7996
      %7998 = vmatmul.f32.gmra.mxu0 %v6336
      %v7999 = vpop.f32.mrf.mxu0
      %v8000 = vadd.f32 %v7887, %v7999
      %8001 = vdwg.mxu0
      %8002 = vmatpush.msra.mxu0 %v6560
      %8003 = vmatpush.msra.mxu0 %v6558
      %8004 = vmatpush.msra.mxu0 %v6556
      %8005 = vmatpush.msra.mxu0 %v6554
      %8006 = vmatpush.msra.mxu0 %v6552
      %8007 = vmatpush.msra.mxu0 %v6550
      %8008 = vmatpush.msra.mxu0 %v6548
      %8009 = vmatpush.msra.mxu0 %v6546
      %8010 = vmatpush.msra.mxu0 %v6544
      %8011 = vmatpush.msra.mxu0 %v6542
      %8012 = vmatpush.msra.mxu0 %v6540
      %8013 = vmatpush.msra.mxu0 %v6538
      %8014 = vmatpush.msra.mxu0 %v6536
      %8015 = vmatpush.msra.mxu0 %v6534
      %8016 = vmatpush.msra.mxu0 %v6532
      %8017 = vmatpush.msra.mxu0 %v6530
      %8018 = vmatmul.f32.gmra.mxu0 %v6371
      %v8019 = vpop.f32.mrf.mxu0
      %v8020 = vadd.f32 %v7907, %v8019
      %8021 = vmatmul.f32.gmra.mxu0 %v6373
      %v8022 = vpop.f32.mrf.mxu0
      %v8023 = vadd.f32 %v7910, %v8022
      %8024 = vmatmul.f32.gmra.mxu0 %v6375
      %v8025 = vpop.f32.mrf.mxu0
      %v8026 = vadd.f32 %v7913, %v8025
      %8027 = vmatmul.f32.gmra.mxu0 %v6377
      %v8028 = vpop.f32.mrf.mxu0
      %v8029 = vadd.f32 %v7916, %v8028
      %8030 = vmatmul.f32.gmra.mxu0 %v6379
      %v8031 = vpop.f32.mrf.mxu0
      %v8032 = vadd.f32 %v7919, %v8031
      %8033 = vmatmul.f32.gmra.mxu0 %v6381
      %v8034 = vpop.f32.mrf.mxu0
      %v8035 = vadd.f32 %v7922, %v8034
      %8036 = vmatmul.f32.gmra.mxu0 %v6383
      %v8037 = vpop.f32.mrf.mxu0
      %v8038 = vadd.f32 %v7925, %v8037
      %8039 = vmatmul.f32.gmra.mxu0 %v6385
      %v8040 = vpop.f32.mrf.mxu0
      %v8041 = vadd.f32 %v7928, %v8040
      %8042 = vmatmul.f32.gmra.mxu0 %v6387
      %v8043 = vpop.f32.mrf.mxu0
      %v8044 = vadd.f32 %v7931, %v8043
      %8045 = vmatmul.f32.gmra.mxu0 %v6389
      %v8046 = vpop.f32.mrf.mxu0
      %v8047 = vadd.f32 %v7934, %v8046
      %8048 = vmatmul.f32.gmra.mxu0 %v6391
      %v8049 = vpop.f32.mrf.mxu0
      %v8050 = vadd.f32 %v7937, %v8049
      %8051 = vmatmul.f32.gmra.mxu0 %v6393
      %v8052 = vpop.f32.mrf.mxu0
      %v8053 = vadd.f32 %v7940, %v8052
      %8054 = vmatmul.f32.gmra.mxu0 %v6395
      %v8055 = vpop.f32.mrf.mxu0
      %v8056 = vadd.f32 %v7943, %v8055
      %8057 = vmatmul.f32.gmra.mxu0 %v6397
      %v8058 = vpop.f32.mrf.mxu0
      %v8059 = vadd.f32 %v7946, %v8058
      %8060 = vmatmul.f32.gmra.mxu0 %v6399
      %v8061 = vpop.f32.mrf.mxu0
      %v8062 = vadd.f32 %v7949, %v8061
      %8063 = vmatmul.f32.gmra.mxu0 %v6401
      %v8064 = vpop.f32.mrf.mxu0
      %v8065 = vadd.f32 %v7952, %v8064
      %8066 = vmatmul.f32.gmra.mxu0 %v6403
      %v8067 = vpop.f32.mrf.mxu0
      %v8068 = vadd.f32 %v7955, %v8067
      %8069 = vmatmul.f32.gmra.mxu0 %v6405
      %v8070 = vpop.f32.mrf.mxu0
      %v8071 = vadd.f32 %v7958, %v8070
      %8072 = vmatmul.f32.gmra.mxu0 %v6407
      %v8073 = vpop.f32.mrf.mxu0
      %v8074 = vadd.f32 %v7961, %v8073
      %8075 = vmatmul.f32.gmra.mxu0 %v6409
      %v8076 = vpop.f32.mrf.mxu0
      %v8077 = vadd.f32 %v7964, %v8076
      %8078 = vmatmul.f32.gmra.mxu0 %v6411
      %v8079 = vpop.f32.mrf.mxu0
      %v8080 = vadd.f32 %v7967, %v8079
      %8081 = vmatmul.f32.gmra.mxu0 %v6413
      %v8082 = vpop.f32.mrf.mxu0
      %v8083 = vadd.f32 %v7970, %v8082
      %8084 = vmatmul.f32.gmra.mxu0 %v6415
      %v8085 = vpop.f32.mrf.mxu0
      %v8086 = vadd.f32 %v7973, %v8085
      %8087 = vmatmul.f32.gmra.mxu0 %v6417
      %v8088 = vpop.f32.mrf.mxu0
      %v8089 = vadd.f32 %v7976, %v8088
      %8090 = vmatmul.f32.gmra.mxu0 %v6419
      %v8091 = vpop.f32.mrf.mxu0
      %v8092 = vadd.f32 %v7979, %v8091
      %8093 = vmatmul.f32.gmra.mxu0 %v6421
      %v8094 = vpop.f32.mrf.mxu0
      %v8095 = vadd.f32 %v7982, %v8094
      %8096 = vmatmul.f32.gmra.mxu0 %v6423
      %v8097 = vpop.f32.mrf.mxu0
      %v8098 = vadd.f32 %v7985, %v8097
      %8099 = vmatmul.f32.gmra.mxu0 %v6425
      %v8100 = vpop.f32.mrf.mxu0
      %v8101 = vadd.f32 %v7988, %v8100
      %8102 = vmatmul.f32.gmra.mxu0 %v6427
      %v8103 = vpop.f32.mrf.mxu0
      %v8104 = vadd.f32 %v7991, %v8103
      %8105 = vmatmul.f32.gmra.mxu0 %v6429
      %v8106 = vpop.f32.mrf.mxu0
      %v8107 = vadd.f32 %v7994, %v8106
      %8108 = vmatmul.f32.gmra.mxu0 %v6431
      %v8109 = vpop.f32.mrf.mxu0
      %v8110 = vadd.f32 %v7997, %v8109
      %8111 = vmatmul.f32.gmra.mxu0 %v6432
      %v8112 = vpop.f32.mrf.mxu0
      %v8113 = vadd.f32 %v8000, %v8112
      %8114 = vdwg.mxu0
      %8115 = vmatpush.msra.mxu0 %v6592
      %8116 = vmatpush.msra.mxu0 %v6590
      %8117 = vmatpush.msra.mxu0 %v6588
      %8118 = vmatpush.msra.mxu0 %v6586
      %8119 = vmatpush.msra.mxu0 %v6584
      %8120 = vmatpush.msra.mxu0 %v6582
      %8121 = vmatpush.msra.mxu0 %v6580
      %8122 = vmatpush.msra.mxu0 %v6578
      %8123 = vmatpush.msra.mxu0 %v6576
      %8124 = vmatpush.msra.mxu0 %v6574
      %8125 = vmatpush.msra.mxu0 %v6572
      %8126 = vmatpush.msra.mxu0 %v6570
      %8127 = vmatpush.msra.mxu0 %v6568
      %8128 = vmatpush.msra.mxu0 %v6566
      %8129 = vmatpush.msra.mxu0 %v6564
      %8130 = vmatpush.msra.mxu0 %v6562
      %8131 = vmatmul.f32.gmra.mxu0 %v6211
      %v8132 = vpop.f32.mrf.mxu0
      %v8133 = vadd.f32 %v8020, %v8132
      %8134 = vmatmul.f32.gmra.mxu0 %v6212
      %v8135 = vpop.f32.mrf.mxu0
      %v8136 = vadd.f32 %v8023, %v8135
      %8137 = vmatmul.f32.gmra.mxu0 %v6213
      %v8138 = vpop.f32.mrf.mxu0
      %v8139 = vadd.f32 %v8026, %v8138
      %8140 = vmatmul.f32.gmra.mxu0 %v6214
      %v8141 = vpop.f32.mrf.mxu0
      %v8142 = vadd.f32 %v8029, %v8141
      %8143 = vmatmul.f32.gmra.mxu0 %v6215
      %v8144 = vpop.f32.mrf.mxu0
      %v8145 = vadd.f32 %v8032, %v8144
      %8146 = vmatmul.f32.gmra.mxu0 %v6216
      %v8147 = vpop.f32.mrf.mxu0
      %v8148 = vadd.f32 %v8035, %v8147
      %8149 = vmatmul.f32.gmra.mxu0 %v6217
      %v8150 = vpop.f32.mrf.mxu0
      %v8151 = vadd.f32 %v8038, %v8150
      %8152 = vmatmul.f32.gmra.mxu0 %v6218
      %v8153 = vpop.f32.mrf.mxu0
      %v8154 = vadd.f32 %v8041, %v8153
      %8155 = vmatmul.f32.gmra.mxu0 %v6219
      %v8156 = vpop.f32.mrf.mxu0
      %v8157 = vadd.f32 %v8044, %v8156
      %8158 = vmatmul.f32.gmra.mxu0 %v6220
      %v8159 = vpop.f32.mrf.mxu0
      %v8160 = vadd.f32 %v8047, %v8159
      %8161 = vmatmul.f32.gmra.mxu0 %v6221
      %v8162 = vpop.f32.mrf.mxu0
      %v8163 = vadd.f32 %v8050, %v8162
      %8164 = vmatmul.f32.gmra.mxu0 %v6222
      %v8165 = vpop.f32.mrf.mxu0
      %v8166 = vadd.f32 %v8053, %v8165
      %8167 = vmatmul.f32.gmra.mxu0 %v6223
      %v8168 = vpop.f32.mrf.mxu0
      %v8169 = vadd.f32 %v8056, %v8168
      %8170 = vmatmul.f32.gmra.mxu0 %v6224
      %v8171 = vpop.f32.mrf.mxu0
      %v8172 = vadd.f32 %v8059, %v8171
      %8173 = vmatmul.f32.gmra.mxu0 %v6225
      %v8174 = vpop.f32.mrf.mxu0
      %v8175 = vadd.f32 %v8062, %v8174
      %8176 = vmatmul.f32.gmra.mxu0 %v6226
      %v8177 = vpop.f32.mrf.mxu0
      %v8178 = vadd.f32 %v8065, %v8177
      %8179 = vmatmul.f32.gmra.mxu0 %v6227
      %v8180 = vpop.f32.mrf.mxu0
      %v8181 = vadd.f32 %v8068, %v8180
      %8182 = vmatmul.f32.gmra.mxu0 %v6228
      %v8183 = vpop.f32.mrf.mxu0
      %v8184 = vadd.f32 %v8071, %v8183
      %8185 = vmatmul.f32.gmra.mxu0 %v6229
      %v8186 = vpop.f32.mrf.mxu0
      %v8187 = vadd.f32 %v8074, %v8186
      %8188 = vmatmul.f32.gmra.mxu0 %v6230
      %v8189 = vpop.f32.mrf.mxu0
      %v8190 = vadd.f32 %v8077, %v8189
      %8191 = vmatmul.f32.gmra.mxu0 %v6231
      %v8192 = vpop.f32.mrf.mxu0
      %v8193 = vadd.f32 %v8080, %v8192
      %8194 = vmatmul.f32.gmra.mxu0 %v6232
      %v8195 = vpop.f32.mrf.mxu0
      %v8196 = vadd.f32 %v8083, %v8195
      %8197 = vmatmul.f32.gmra.mxu0 %v6233
      %v8198 = vpop.f32.mrf.mxu0
      %v8199 = vadd.f32 %v8086, %v8198
      %8200 = vmatmul.f32.gmra.mxu0 %v6234
      %v8201 = vpop.f32.mrf.mxu0
      %v8202 = vadd.f32 %v8089, %v8201
      %8203 = vmatmul.f32.gmra.mxu0 %v6235
      %v8204 = vpop.f32.mrf.mxu0
      %v8205 = vadd.f32 %v8092, %v8204
      %8206 = vmatmul.f32.gmra.mxu0 %v6236
      %v8207 = vpop.f32.mrf.mxu0
      %v8208 = vadd.f32 %v8095, %v8207
      %8209 = vmatmul.f32.gmra.mxu0 %v6237
      %v8210 = vpop.f32.mrf.mxu0
      %v8211 = vadd.f32 %v8098, %v8210
      %8212 = vmatmul.f32.gmra.mxu0 %v6238
      %v8213 = vpop.f32.mrf.mxu0
      %v8214 = vadd.f32 %v8101, %v8213
      %8215 = vmatmul.f32.gmra.mxu0 %v6239
      %v8216 = vpop.f32.mrf.mxu0
      %v8217 = vadd.f32 %v8104, %v8216
      %8218 = vmatmul.f32.gmra.mxu0 %v6240
      %v8219 = vpop.f32.mrf.mxu0
      %v8220 = vadd.f32 %v8107, %v8219
      %8221 = vmatmul.f32.gmra.mxu0 0.0
      %v8222 = vpop.f32.mrf.mxu0
      %v8223 = vadd.f32 %v8110, %v8222
      %8224 = vmatmul.f32.gmra.mxu0 0.0
      %v8225 = vpop.f32.mrf.mxu0
      %v8226 = vadd.f32 %v8113, %v8225
      %8227 = vdwg.mxu0
      %8228 = vmatpush.msra.mxu0 %v6624
      %8229 = vmatpush.msra.mxu0 %v6622
      %8230 = vmatpush.msra.mxu0 %v6620
      %8231 = vmatpush.msra.mxu0 %v6618
      %8232 = vmatpush.msra.mxu0 %v6616
      %8233 = vmatpush.msra.mxu0 %v6614
      %8234 = vmatpush.msra.mxu0 %v6612
      %8235 = vmatpush.msra.mxu0 %v6610
      %8236 = vmatpush.msra.mxu0 %v6608
      %8237 = vmatpush.msra.mxu0 %v6606
      %8238 = vmatpush.msra.mxu0 %v6604
      %8239 = vmatpush.msra.mxu0 %v6602
      %8240 = vmatpush.msra.mxu0 %v6600
      %8241 = vmatpush.msra.mxu0 %v6598
      %8242 = vmatpush.msra.mxu0 %v6596
      %8243 = vmatpush.msra.mxu0 %v6594
      %8244 = vmatmul.f32.gmra.mxu0 %v6279
      %v8245 = vpop.f32.mrf.mxu0
      %v8246 = vadd.f32 %v8133, %v8245
      %8247 = vmatmul.f32.gmra.mxu0 %v6281
      %v8248 = vpop.f32.mrf.mxu0
      %v8249 = vadd.f32 %v8136, %v8248
      %8250 = vmatmul.f32.gmra.mxu0 %v6283
      %v8251 = vpop.f32.mrf.mxu0
      %v8252 = vadd.f32 %v8139, %v8251
      %8253 = vmatmul.f32.gmra.mxu0 %v6285
      %v8254 = vpop.f32.mrf.mxu0
      %v8255 = vadd.f32 %v8142, %v8254
      %8256 = vmatmul.f32.gmra.mxu0 %v6287
      %v8257 = vpop.f32.mrf.mxu0
      %v8258 = vadd.f32 %v8145, %v8257
      %8259 = vmatmul.f32.gmra.mxu0 %v6289
      %v8260 = vpop.f32.mrf.mxu0
      %v8261 = vadd.f32 %v8148, %v8260
      %8262 = vmatmul.f32.gmra.mxu0 %v6291
      %v8263 = vpop.f32.mrf.mxu0
      %v8264 = vadd.f32 %v8151, %v8263
      %8265 = vmatmul.f32.gmra.mxu0 %v6293
      %v8266 = vpop.f32.mrf.mxu0
      %v8267 = vadd.f32 %v8154, %v8266
      %8268 = vmatmul.f32.gmra.mxu0 %v6295
      %v8269 = vpop.f32.mrf.mxu0
      %v8270 = vadd.f32 %v8157, %v8269
      %8271 = vmatmul.f32.gmra.mxu0 %v6297
      %v8272 = vpop.f32.mrf.mxu0
      %v8273 = vadd.f32 %v8160, %v8272
      %8274 = vmatmul.f32.gmra.mxu0 %v6299
      %v8275 = vpop.f32.mrf.mxu0
      %v8276 = vadd.f32 %v8163, %v8275
      %8277 = vmatmul.f32.gmra.mxu0 %v6301
      %v8278 = vpop.f32.mrf.mxu0
      %v8279 = vadd.f32 %v8166, %v8278
      %8280 = vmatmul.f32.gmra.mxu0 %v6303
      %v8281 = vpop.f32.mrf.mxu0
      %v8282 = vadd.f32 %v8169, %v8281
      %8283 = vmatmul.f32.gmra.mxu0 %v6305
      %v8284 = vpop.f32.mrf.mxu0
      %v8285 = vadd.f32 %v8172, %v8284
      %8286 = vmatmul.f32.gmra.mxu0 %v6307
      %v8287 = vpop.f32.mrf.mxu0
      %v8288 = vadd.f32 %v8175, %v8287
      %8289 = vmatmul.f32.gmra.mxu0 %v6309
      %v8290 = vpop.f32.mrf.mxu0
      %v8291 = vadd.f32 %v8178, %v8290
      %8292 = vmatmul.f32.gmra.mxu0 %v6311
      %v8293 = vpop.f32.mrf.mxu0
      %v8294 = vadd.f32 %v8181, %v8293
      %8295 = vmatmul.f32.gmra.mxu0 %v6313
      %v8296 = vpop.f32.mrf.mxu0
      %v8297 = vadd.f32 %v8184, %v8296
      %8298 = vmatmul.f32.gmra.mxu0 %v6315
      %v8299 = vpop.f32.mrf.mxu0
      %v8300 = vadd.f32 %v8187, %v8299
      %8301 = vmatmul.f32.gmra.mxu0 %v6317
      %v8302 = vpop.f32.mrf.mxu0
      %v8303 = vadd.f32 %v8190, %v8302
      %8304 = vmatmul.f32.gmra.mxu0 %v6319
      %v8305 = vpop.f32.mrf.mxu0
      %v8306 = vadd.f32 %v8193, %v8305
      %8307 = vmatmul.f32.gmra.mxu0 %v6321
      %v8308 = vpop.f32.mrf.mxu0
      %v8309 = vadd.f32 %v8196, %v8308
      %8310 = vmatmul.f32.gmra.mxu0 %v6323
      %v8311 = vpop.f32.mrf.mxu0
      %v8312 = vadd.f32 %v8199, %v8311
      %8313 = vmatmul.f32.gmra.mxu0 %v6325
      %v8314 = vpop.f32.mrf.mxu0
      %v8315 = vadd.f32 %v8202, %v8314
      %8316 = vmatmul.f32.gmra.mxu0 %v6327
      %v8317 = vpop.f32.mrf.mxu0
      %v8318 = vadd.f32 %v8205, %v8317
      %8319 = vmatmul.f32.gmra.mxu0 %v6329
      %v8320 = vpop.f32.mrf.mxu0
      %v8321 = vadd.f32 %v8208, %v8320
      %8322 = vmatmul.f32.gmra.mxu0 %v6331
      %v8323 = vpop.f32.mrf.mxu0
      %v8324 = vadd.f32 %v8211, %v8323
      %8325 = vmatmul.f32.gmra.mxu0 %v6333
      %v8326 = vpop.f32.mrf.mxu0
      %v8327 = vadd.f32 %v8214, %v8326
      %8328 = vmatmul.f32.gmra.mxu0 %v6335
      %v8329 = vpop.f32.mrf.mxu0
      %v8330 = vadd.f32 %v8217, %v8329
      %8331 = vmatmul.f32.gmra.mxu0 %v6336
      %v8332 = vpop.f32.mrf.mxu0
      %v8333 = vadd.f32 %v8220, %v8332
      %8334 = vmatmul.f32.gmra.mxu0 %v2198
      %v8335 = vpop.f32.mrf.mxu0
      %v8336 = vadd.f32 %v8223, %v8335
      %8337 = vmatmul.f32.gmra.mxu0 %v2198
      %v8338 = vpop.f32.mrf.mxu0
      %v8339 = vadd.f32 %v8226, %v8338
      %8340 = vdwg.mxu0
      %8341 = vmatpush.msra.mxu0 %v6656
      %8342 = vmatpush.msra.mxu0 %v6654
      %8343 = vmatpush.msra.mxu0 %v6652
      %8344 = vmatpush.msra.mxu0 %v6650
      %8345 = vmatpush.msra.mxu0 %v6648
      %8346 = vmatpush.msra.mxu0 %v6646
      %8347 = vmatpush.msra.mxu0 %v6644
      %8348 = vmatpush.msra.mxu0 %v6642
      %8349 = vmatpush.msra.mxu0 %v6640
      %8350 = vmatpush.msra.mxu0 %v6638
      %8351 = vmatpush.msra.mxu0 %v6636
      %8352 = vmatpush.msra.mxu0 %v6634
      %8353 = vmatpush.msra.mxu0 %v6632
      %8354 = vmatpush.msra.mxu0 %v6630
      %8355 = vmatpush.msra.mxu0 %v6628
      %8356 = vmatpush.msra.mxu0 %v6626
      %8357 = vmatmul.f32.gmra.mxu0 %v6375
      %v8358 = vpop.f32.mrf.mxu0
      %v8359 = vadd.f32 %v8246, %v8358
      %8360 = vmatmul.f32.gmra.mxu0 %v6377
      %v8361 = vpop.f32.mrf.mxu0
      %v8362 = vadd.f32 %v8249, %v8361
      %8363 = vmatmul.f32.gmra.mxu0 %v6379
      %v8364 = vpop.f32.mrf.mxu0
      %v8365 = vadd.f32 %v8252, %v8364
      %8366 = vmatmul.f32.gmra.mxu0 %v6381
      %v8367 = vpop.f32.mrf.mxu0
      %v8368 = vadd.f32 %v8255, %v8367
      %8369 = vmatmul.f32.gmra.mxu0 %v6383
      %v8370 = vpop.f32.mrf.mxu0
      %v8371 = vadd.f32 %v8258, %v8370
      %8372 = vmatmul.f32.gmra.mxu0 %v6385
      %v8373 = vpop.f32.mrf.mxu0
      %v8374 = vadd.f32 %v8261, %v8373
      %8375 = vmatmul.f32.gmra.mxu0 %v6387
      %v8376 = vpop.f32.mrf.mxu0
      %v8377 = vadd.f32 %v8264, %v8376
      %8378 = vmatmul.f32.gmra.mxu0 %v6389
      %v8379 = vpop.f32.mrf.mxu0
      %v8380 = vadd.f32 %v8267, %v8379
      %8381 = vmatmul.f32.gmra.mxu0 %v6391
      %v8382 = vpop.f32.mrf.mxu0
      %v8383 = vadd.f32 %v8270, %v8382
      %8384 = vmatmul.f32.gmra.mxu0 %v6393
      %v8385 = vpop.f32.mrf.mxu0
      %v8386 = vadd.f32 %v8273, %v8385
      %8387 = vmatmul.f32.gmra.mxu0 %v6395
      %v8388 = vpop.f32.mrf.mxu0
      %v8389 = vadd.f32 %v8276, %v8388
      %8390 = vmatmul.f32.gmra.mxu0 %v6397
      %v8391 = vpop.f32.mrf.mxu0
      %v8392 = vadd.f32 %v8279, %v8391
      %8393 = vmatmul.f32.gmra.mxu0 %v6399
      %v8394 = vpop.f32.mrf.mxu0
      %v8395 = vadd.f32 %v8282, %v8394
      %8396 = vmatmul.f32.gmra.mxu0 %v6401
      %v8397 = vpop.f32.mrf.mxu0
      %v8398 = vadd.f32 %v8285, %v8397
      %8399 = vmatmul.f32.gmra.mxu0 %v6403
      %v8400 = vpop.f32.mrf.mxu0
      %v8401 = vadd.f32 %v8288, %v8400
      %8402 = vmatmul.f32.gmra.mxu0 %v6405
      %v8403 = vpop.f32.mrf.mxu0
      %v8404 = vadd.f32 %v8291, %v8403
      %8405 = vmatmul.f32.gmra.mxu0 %v6407
      %v8406 = vpop.f32.mrf.mxu0
      %v8407 = vadd.f32 %v8294, %v8406
      %8408 = vmatmul.f32.gmra.mxu0 %v6409
      %v8409 = vpop.f32.mrf.mxu0
      %v8410 = vadd.f32 %v8297, %v8409
      %8411 = vmatmul.f32.gmra.mxu0 %v6411
      %v8412 = vpop.f32.mrf.mxu0
      %v8413 = vadd.f32 %v8300, %v8412
      %8414 = vmatmul.f32.gmra.mxu0 %v6413
      %v8415 = vpop.f32.mrf.mxu0
      %v8416 = vadd.f32 %v8303, %v8415
      %8417 = vmatmul.f32.gmra.mxu0 %v6415
      %v8418 = vpop.f32.mrf.mxu0
      %v8419 = vadd.f32 %v8306, %v8418
      %8420 = vmatmul.f32.gmra.mxu0 %v6417
      %v8421 = vpop.f32.mrf.mxu0
      %v8422 = vadd.f32 %v8309, %v8421
      %8423 = vmatmul.f32.gmra.mxu0 %v6419
      %v8424 = vpop.f32.mrf.mxu0
      %v8425 = vadd.f32 %v8312, %v8424
      %8426 = vmatmul.f32.gmra.mxu0 %v6421
      %v8427 = vpop.f32.mrf.mxu0
      %v8428 = vadd.f32 %v8315, %v8427
      %8429 = vmatmul.f32.gmra.mxu0 %v6423
      %v8430 = vpop.f32.mrf.mxu0
      %v8431 = vadd.f32 %v8318, %v8430
      %8432 = vmatmul.f32.gmra.mxu0 %v6425
      %v8433 = vpop.f32.mrf.mxu0
      %v8434 = vadd.f32 %v8321, %v8433
      %8435 = vmatmul.f32.gmra.mxu0 %v6427
      %v8436 = vpop.f32.mrf.mxu0
      %v8437 = vadd.f32 %v8324, %v8436
      %8438 = vmatmul.f32.gmra.mxu0 %v6429
      %v8439 = vpop.f32.mrf.mxu0
      %v8440 = vadd.f32 %v8327, %v8439
      %8441 = vmatmul.f32.gmra.mxu0 %v6431
      %v8442 = vpop.f32.mrf.mxu0
      %v8443 = vadd.f32 %v8330, %v8442
      %8444 = vmatmul.f32.gmra.mxu0 %v6432
      %v8445 = vpop.f32.mrf.mxu0
      %v8446 = vadd.f32 %v8333, %v8445
      %8447 = vmatmul.f32.gmra.mxu0 %v2200
      %v8448 = vpop.f32.mrf.mxu0
      %v8449 = vadd.f32 %v8336, %v8448
      %8450 = vmatmul.f32.gmra.mxu0 %v2200
      %v8451 = vpop.f32.mrf.mxu0
      %v8452 = vadd.f32 %v8339, %v8451
      %8453 = vdwg.mxu0
      %8454 = vmatpush.msra.mxu0 %v6688
      %8455 = vmatpush.msra.mxu0 %v6686
      %8456 = vmatpush.msra.mxu0 %v6684
      %8457 = vmatpush.msra.mxu0 %v6682
      %8458 = vmatpush.msra.mxu0 %v6680
      %8459 = vmatpush.msra.mxu0 %v6678
      %8460 = vmatpush.msra.mxu0 %v6676
      %8461 = vmatpush.msra.mxu0 %v6674
      %8462 = vmatpush.msra.mxu0 %v6672
      %8463 = vmatpush.msra.mxu0 %v6670
      %8464 = vmatpush.msra.mxu0 %v6668
      %8465 = vmatpush.msra.mxu0 %v6666
      %8466 = vmatpush.msra.mxu0 %v6664
      %8467 = vmatpush.msra.mxu0 %v6662
      %8468 = vmatpush.msra.mxu0 %v6660
      %8469 = vmatpush.msra.mxu0 %v6658
      %8470 = vmatmul.f32.gmra.mxu0 %v6213
      %v8471 = vpop.f32.mrf.mxu0
      %v8472 = vadd.f32 %v8359, %v8471
      %8473 = vmatmul.f32.gmra.mxu0 %v6214
      %v8474 = vpop.f32.mrf.mxu0
      %v8475 = vadd.f32 %v8362, %v8474
      %8476 = vmatmul.f32.gmra.mxu0 %v6215
      %v8477 = vpop.f32.mrf.mxu0
      %v8478 = vadd.f32 %v8365, %v8477
      %8479 = vmatmul.f32.gmra.mxu0 %v6216
      %v8480 = vpop.f32.mrf.mxu0
      %v8481 = vadd.f32 %v8368, %v8480
      %8482 = vmatmul.f32.gmra.mxu0 %v6217
      %v8483 = vpop.f32.mrf.mxu0
      %v8484 = vadd.f32 %v8371, %v8483
      %8485 = vmatmul.f32.gmra.mxu0 %v6218
      %v8486 = vpop.f32.mrf.mxu0
      %v8487 = vadd.f32 %v8374, %v8486
      %8488 = vmatmul.f32.gmra.mxu0 %v6219
      %v8489 = vpop.f32.mrf.mxu0
      %v8490 = vadd.f32 %v8377, %v8489
      %8491 = vmatmul.f32.gmra.mxu0 %v6220
      %v8492 = vpop.f32.mrf.mxu0
      %v8493 = vadd.f32 %v8380, %v8492
      %8494 = vmatmul.f32.gmra.mxu0 %v6221
      %v8495 = vpop.f32.mrf.mxu0
      %v8496 = vadd.f32 %v8383, %v8495
      %8497 = vmatmul.f32.gmra.mxu0 %v6222
      %v8498 = vpop.f32.mrf.mxu0
      %v8499 = vadd.f32 %v8386, %v8498
      %8500 = vmatmul.f32.gmra.mxu0 %v6223
      %v8501 = vpop.f32.mrf.mxu0
      %v8502 = vadd.f32 %v8389, %v8501
      %8503 = vmatmul.f32.gmra.mxu0 %v6224
      %v8504 = vpop.f32.mrf.mxu0
      %v8505 = vadd.f32 %v8392, %v8504
      %8506 = vmatmul.f32.gmra.mxu0 %v6225
      %v8507 = vpop.f32.mrf.mxu0
      %v8508 = vadd.f32 %v8395, %v8507
      %8509 = vmatmul.f32.gmra.mxu0 %v6226
      %v8510 = vpop.f32.mrf.mxu0
      %v8511 = vadd.f32 %v8398, %v8510
      %8512 = vmatmul.f32.gmra.mxu0 %v6227
      %v8513 = vpop.f32.mrf.mxu0
      %v8514 = vadd.f32 %v8401, %v8513
      %8515 = vmatmul.f32.gmra.mxu0 %v6228
      %v8516 = vpop.f32.mrf.mxu0
      %v8517 = vadd.f32 %v8404, %v8516
      %8518 = vmatmul.f32.gmra.mxu0 %v6229
      %v8519 = vpop.f32.mrf.mxu0
      %v8520 = vadd.f32 %v8407, %v8519
      %8521 = vmatmul.f32.gmra.mxu0 %v6230
      %v8522 = vpop.f32.mrf.mxu0
      %v8523 = vadd.f32 %v8410, %v8522
      %8524 = vmatmul.f32.gmra.mxu0 %v6231
      %v8525 = vpop.f32.mrf.mxu0
      %v8526 = vadd.f32 %v8413, %v8525
      %8527 = vmatmul.f32.gmra.mxu0 %v6232
      %v8528 = vpop.f32.mrf.mxu0
      %v8529 = vadd.f32 %v8416, %v8528
      %8530 = vmatmul.f32.gmra.mxu0 %v6233
      %v8531 = vpop.f32.mrf.mxu0
      %v8532 = vadd.f32 %v8419, %v8531
      %8533 = vmatmul.f32.gmra.mxu0 %v6234
      %v8534 = vpop.f32.mrf.mxu0
      %v8535 = vadd.f32 %v8422, %v8534
      %8536 = vmatmul.f32.gmra.mxu0 %v6235
      %v8537 = vpop.f32.mrf.mxu0
      %v8538 = vadd.f32 %v8425, %v8537
      %8539 = vmatmul.f32.gmra.mxu0 %v6236
      %v8540 = vpop.f32.mrf.mxu0
      %v8541 = vadd.f32 %v8428, %v8540
      %8542 = vmatmul.f32.gmra.mxu0 %v6237
      %v8543 = vpop.f32.mrf.mxu0
      %v8544 = vadd.f32 %v8431, %v8543
      %8545 = vmatmul.f32.gmra.mxu0 %v6238
      %v8546 = vpop.f32.mrf.mxu0
      %v8547 = vadd.f32 %v8434, %v8546
      %8548 = vmatmul.f32.gmra.mxu0 %v6239
      %v8549 = vpop.f32.mrf.mxu0
      %v8550 = vadd.f32 %v8437, %v8549
      %8551 = vmatmul.f32.gmra.mxu0 %v6240
      %v8552 = vpop.f32.mrf.mxu0
      %v8553 = vadd.f32 %v8440, %v8552
      %8554 = vmatmul.f32.gmra.mxu0 0.0
      %v8555 = vpop.f32.mrf.mxu0
      %v8556 = vadd.f32 %v8443, %v8555
      %8557 = vmatmul.f32.gmra.mxu0 0.0
      %v8558 = vpop.f32.mrf.mxu0
      %v8559 = vadd.f32 %v8446, %v8558
      %8560 = vmatmul.f32.gmra.mxu0 0.0
      %v8561 = vpop.f32.mrf.mxu0
      %v8562 = vadd.f32 %v8449, %v8561
      %8563 = vmatmul.f32.gmra.mxu0 0.0
      %v8564 = vpop.f32.mrf.mxu0
      %v8565 = vadd.f32 %v8452, %v8564
      %8566 = vdwg.mxu0
      %8567 = vmatpush.msra.mxu0 %v6720
      %8568 = vmatpush.msra.mxu0 %v6718
      %8569 = vmatpush.msra.mxu0 %v6716
      %8570 = vmatpush.msra.mxu0 %v6714
      %8571 = vmatpush.msra.mxu0 %v6712
      %8572 = vmatpush.msra.mxu0 %v6710
      %8573 = vmatpush.msra.mxu0 %v6708
      %8574 = vmatpush.msra.mxu0 %v6706
      %8575 = vmatpush.msra.mxu0 %v6704
      %8576 = vmatpush.msra.mxu0 %v6702
      %8577 = vmatpush.msra.mxu0 %v6700
      %8578 = vmatpush.msra.mxu0 %v6698
      %8579 = vmatpush.msra.mxu0 %v6696
      %8580 = vmatpush.msra.mxu0 %v6694
      %8581 = vmatpush.msra.mxu0 %v6692
      %8582 = vmatpush.msra.mxu0 %v6690
      %8583 = vmatmul.f32.gmra.mxu0 %v6283
      %v8584 = vpop.f32.mrf.mxu0
      %v8585 = vadd.f32 %v8472, %v8584
      %8586 = vmatmul.f32.gmra.mxu0 %v6285
      %v8587 = vpop.f32.mrf.mxu0
      %v8588 = vadd.f32 %v8475, %v8587
      %8589 = vmatmul.f32.gmra.mxu0 %v6287
      %v8590 = vpop.f32.mrf.mxu0
      %v8591 = vadd.f32 %v8478, %v8590
      %8592 = vmatmul.f32.gmra.mxu0 %v6289
      %v8593 = vpop.f32.mrf.mxu0
      %v8594 = vadd.f32 %v8481, %v8593
      %8595 = vmatmul.f32.gmra.mxu0 %v6291
      %v8596 = vpop.f32.mrf.mxu0
      %v8597 = vadd.f32 %v8484, %v8596
      %8598 = vmatmul.f32.gmra.mxu0 %v6293
      %v8599 = vpop.f32.mrf.mxu0
      %v8600 = vadd.f32 %v8487, %v8599
      %8601 = vmatmul.f32.gmra.mxu0 %v6295
      %v8602 = vpop.f32.mrf.mxu0
      %v8603 = vadd.f32 %v8490, %v8602
      %8604 = vmatmul.f32.gmra.mxu0 %v6297
      %v8605 = vpop.f32.mrf.mxu0
      %v8606 = vadd.f32 %v8493, %v8605
      %8607 = vmatmul.f32.gmra.mxu0 %v6299
      %v8608 = vpop.f32.mrf.mxu0
      %v8609 = vadd.f32 %v8496, %v8608
      %8610 = vmatmul.f32.gmra.mxu0 %v6301
      %v8611 = vpop.f32.mrf.mxu0
      %v8612 = vadd.f32 %v8499, %v8611
      %8613 = vmatmul.f32.gmra.mxu0 %v6303
      %v8614 = vpop.f32.mrf.mxu0
      %v8615 = vadd.f32 %v8502, %v8614
      %8616 = vmatmul.f32.gmra.mxu0 %v6305
      %v8617 = vpop.f32.mrf.mxu0
      %v8618 = vadd.f32 %v8505, %v8617
      %8619 = vmatmul.f32.gmra.mxu0 %v6307
      %v8620 = vpop.f32.mrf.mxu0
      %v8621 = vadd.f32 %v8508, %v8620
      %8622 = vmatmul.f32.gmra.mxu0 %v6309
      %v8623 = vpop.f32.mrf.mxu0
      %v8624 = vadd.f32 %v8511, %v8623
      %8625 = vmatmul.f32.gmra.mxu0 %v6311
      %v8626 = vpop.f32.mrf.mxu0
      %v8627 = vadd.f32 %v8514, %v8626
      %8628 = vmatmul.f32.gmra.mxu0 %v6313
      %v8629 = vpop.f32.mrf.mxu0
      %v8630 = vadd.f32 %v8517, %v8629
      %8631 = vmatmul.f32.gmra.mxu0 %v6315
      %v8632 = vpop.f32.mrf.mxu0
      %v8633 = vadd.f32 %v8520, %v8632
      %8634 = vmatmul.f32.gmra.mxu0 %v6317
      %v8635 = vpop.f32.mrf.mxu0
      %v8636 = vadd.f32 %v8523, %v8635
      %8637 = vmatmul.f32.gmra.mxu0 %v6319
      %v8638 = vpop.f32.mrf.mxu0
      %v8639 = vadd.f32 %v8526, %v8638
      %8640 = vmatmul.f32.gmra.mxu0 %v6321
      %v8641 = vpop.f32.mrf.mxu0
      %v8642 = vadd.f32 %v8529, %v8641
      %8643 = vmatmul.f32.gmra.mxu0 %v6323
      %v8644 = vpop.f32.mrf.mxu0
      %v8645 = vadd.f32 %v8532, %v8644
      %8646 = vmatmul.f32.gmra.mxu0 %v6325
      %v8647 = vpop.f32.mrf.mxu0
      %v8648 = vadd.f32 %v8535, %v8647
      %8649 = vmatmul.f32.gmra.mxu0 %v6327
      %v8650 = vpop.f32.mrf.mxu0
      %v8651 = vadd.f32 %v8538, %v8650
      %8652 = vmatmul.f32.gmra.mxu0 %v6329
      %v8653 = vpop.f32.mrf.mxu0
      %v8654 = vadd.f32 %v8541, %v8653
      %8655 = vmatmul.f32.gmra.mxu0 %v6331
      %v8656 = vpop.f32.mrf.mxu0
      %v8657 = vadd.f32 %v8544, %v8656
      %8658 = vmatmul.f32.gmra.mxu0 %v6333
      %v8659 = vpop.f32.mrf.mxu0
      %v8660 = vadd.f32 %v8547, %v8659
      %8661 = vmatmul.f32.gmra.mxu0 %v6335
      %v8662 = vpop.f32.mrf.mxu0
      %v8663 = vadd.f32 %v8550, %v8662
      %8664 = vmatmul.f32.gmra.mxu0 %v6336
      %v8665 = vpop.f32.mrf.mxu0
      %v8666 = vadd.f32 %v8553, %v8665
      %8667 = vmatmul.f32.gmra.mxu0 %v2198
      %v8668 = vpop.f32.mrf.mxu0
      %v8669 = vadd.f32 %v8556, %v8668
      %8670 = vmatmul.f32.gmra.mxu0 %v2198
      %v8671 = vpop.f32.mrf.mxu0
      %v8672 = vadd.f32 %v8559, %v8671
      %8673 = vmatmul.f32.gmra.mxu0 %v2198
      %v8674 = vpop.f32.mrf.mxu0
      %v8675 = vadd.f32 %v8562, %v8674
      %8676 = vmatmul.f32.gmra.mxu0 %v2198
      %v8677 = vpop.f32.mrf.mxu0
      %v8678 = vadd.f32 %v8565, %v8677
      %8679 = vdwg.mxu0
      %8680 = vmatpush.msra.mxu0 %v6752
      %8681 = vmatpush.msra.mxu0 %v6750
      %8682 = vmatpush.msra.mxu0 %v6748
      %8683 = vmatpush.msra.mxu0 %v6746
      %8684 = vmatpush.msra.mxu0 %v6744
      %8685 = vmatpush.msra.mxu0 %v6742
      %8686 = vmatpush.msra.mxu0 %v6740
      %8687 = vmatpush.msra.mxu0 %v6738
      %8688 = vmatpush.msra.mxu0 %v6736
      %8689 = vmatpush.msra.mxu0 %v6734
      %8690 = vmatpush.msra.mxu0 %v6732
      %8691 = vmatpush.msra.mxu0 %v6730
      %8692 = vmatpush.msra.mxu0 %v6728
      %8693 = vmatpush.msra.mxu0 %v6726
      %8694 = vmatpush.msra.mxu0 %v6724
      %8695 = vmatpush.msra.mxu0 %v6722
      %8696 = vmatmul.f32.gmra.mxu0 %v6379
      %v8697 = vpop.f32.mrf.mxu0
      %v8698 = vadd.f32 %v8585, %v8697
      %8699 = vmatmul.f32.gmra.mxu0 %v6381
      %v8700 = vpop.f32.mrf.mxu0
      %v8701 = vadd.f32 %v8588, %v8700
      %8702 = vmatmul.f32.gmra.mxu0 %v6383
      %v8703 = vpop.f32.mrf.mxu0
      %v8704 = vadd.f32 %v8591, %v8703
      %8705 = vmatmul.f32.gmra.mxu0 %v6385
      %v8706 = vpop.f32.mrf.mxu0
      %v8707 = vadd.f32 %v8594, %v8706
      %8708 = vmatmul.f32.gmra.mxu0 %v6387
      %v8709 = vpop.f32.mrf.mxu0
      %v8710 = vadd.f32 %v8597, %v8709
      %8711 = vmatmul.f32.gmra.mxu0 %v6389
      %v8712 = vpop.f32.mrf.mxu0
      %v8713 = vadd.f32 %v8600, %v8712
      %8714 = vmatmul.f32.gmra.mxu0 %v6391
      %v8715 = vpop.f32.mrf.mxu0
      %v8716 = vadd.f32 %v8603, %v8715
      %8717 = vmatmul.f32.gmra.mxu0 %v6393
      %v8718 = vpop.f32.mrf.mxu0
      %v8719 = vadd.f32 %v8606, %v8718
      %8720 = vmatmul.f32.gmra.mxu0 %v6395
      %v8721 = vpop.f32.mrf.mxu0
      %v8722 = vadd.f32 %v8609, %v8721
      %8723 = vmatmul.f32.gmra.mxu0 %v6397
      %v8724 = vpop.f32.mrf.mxu0
      %v8725 = vadd.f32 %v8612, %v8724
      %8726 = vmatmul.f32.gmra.mxu0 %v6399
      %v8727 = vpop.f32.mrf.mxu0
      %v8728 = vadd.f32 %v8615, %v8727
      %8729 = vmatmul.f32.gmra.mxu0 %v6401
      %v8730 = vpop.f32.mrf.mxu0
      %v8731 = vadd.f32 %v8618, %v8730
      %8732 = vmatmul.f32.gmra.mxu0 %v6403
      %v8733 = vpop.f32.mrf.mxu0
      %v8734 = vadd.f32 %v8621, %v8733
      %8735 = vmatmul.f32.gmra.mxu0 %v6405
      %v8736 = vpop.f32.mrf.mxu0
      %v8737 = vadd.f32 %v8624, %v8736
      %8738 = vmatmul.f32.gmra.mxu0 %v6407
      %v8739 = vpop.f32.mrf.mxu0
      %v8740 = vadd.f32 %v8627, %v8739
      %8741 = vmatmul.f32.gmra.mxu0 %v6409
      %v8742 = vpop.f32.mrf.mxu0
      %v8743 = vadd.f32 %v8630, %v8742
      %8744 = vmatmul.f32.gmra.mxu0 %v6411
      %v8745 = vpop.f32.mrf.mxu0
      %v8746 = vadd.f32 %v8633, %v8745
      %8747 = vmatmul.f32.gmra.mxu0 %v6413
      %v8748 = vpop.f32.mrf.mxu0
      %v8749 = vadd.f32 %v8636, %v8748
      %8750 = vmatmul.f32.gmra.mxu0 %v6415
      %v8751 = vpop.f32.mrf.mxu0
      %v8752 = vadd.f32 %v8639, %v8751
      %8753 = vmatmul.f32.gmra.mxu0 %v6417
      %v8754 = vpop.f32.mrf.mxu0
      %v8755 = vadd.f32 %v8642, %v8754
      %8756 = vmatmul.f32.gmra.mxu0 %v6419
      %v8757 = vpop.f32.mrf.mxu0
      %v8758 = vadd.f32 %v8645, %v8757
      %8759 = vmatmul.f32.gmra.mxu0 %v6421
      %v8760 = vpop.f32.mrf.mxu0
      %v8761 = vadd.f32 %v8648, %v8760
      %8762 = vmatmul.f32.gmra.mxu0 %v6423
      %v8763 = vpop.f32.mrf.mxu0
      %v8764 = vadd.f32 %v8651, %v8763
      %8765 = vmatmul.f32.gmra.mxu0 %v6425
      %v8766 = vpop.f32.mrf.mxu0
      %v8767 = vadd.f32 %v8654, %v8766
      %8768 = vmatmul.f32.gmra.mxu0 %v6427
      %v8769 = vpop.f32.mrf.mxu0
      %v8770 = vadd.f32 %v8657, %v8769
      %8771 = vmatmul.f32.gmra.mxu0 %v6429
      %v8772 = vpop.f32.mrf.mxu0
      %v8773 = vadd.f32 %v8660, %v8772
      %8774 = vmatmul.f32.gmra.mxu0 %v6431
      %v8775 = vpop.f32.mrf.mxu0
      %v8776 = vadd.f32 %v8663, %v8775
      %8777 = vmatmul.f32.gmra.mxu0 %v6432
      %v8778 = vpop.f32.mrf.mxu0
      %v8779 = vadd.f32 %v8666, %v8778
      %8780 = vmatmul.f32.gmra.mxu0 %v2200
      %v8781 = vpop.f32.mrf.mxu0
      %v8782 = vadd.f32 %v8669, %v8781
      %8783 = vmatmul.f32.gmra.mxu0 %v2200
      %v8784 = vpop.f32.mrf.mxu0
      %v8785 = vadd.f32 %v8672, %v8784
      %8786 = vmatmul.f32.gmra.mxu0 %v2200
      %v8787 = vpop.f32.mrf.mxu0
      %v8788 = vadd.f32 %v8675, %v8787
      %8789 = vmatmul.f32.gmra.mxu0 %v2200
      %v8790 = vpop.f32.mrf.mxu0
      %v8791 = vadd.f32 %v8678, %v8790
      %8792 = vdwg.mxu0
      %8793 = vst [vmem:[%s386] sm:$0xff] %v7681
      %8794 = vst [vmem:[%s386 + $0x8] sm:$0xff] %v8698
      %8795 = vst [vmem:[%s386 + $0x10] sm:$0xff] %v7684
      %8796 = vst [vmem:[%s386 + $0x18] sm:$0xff] %v8701
      %8797 = vst [vmem:[%s386 + $0x20] sm:$0xff] %v7687
      %8798 = vst [vmem:[%s386 + $0x28] sm:$0xff] %v8704
      %8799 = vst [vmem:[%s386 + $0x30] sm:$0xff] %v7690
      %8800 = vst [vmem:[%s386 + $0x38] sm:$0xff] %v8707
      %8801 = vst [vmem:[%s386 + $0x40] sm:$0xff] %v7693
      %8802 = vst [vmem:[%s386 + $0x48] sm:$0xff] %v8710
      %8803 = vst [vmem:[%s386 + $0x50] sm:$0xff] %v7696
      %8804 = vst [vmem:[%s386 + $0x58] sm:$0xff] %v8713
      %8805 = vst [vmem:[%s386 + $0x60] sm:$0xff] %v7699
      %8806 = vst [vmem:[%s386 + $0x68] sm:$0xff] %v8716
      %8807 = vst [vmem:[%s386 + $0x70] sm:$0xff] %v7702
      %8808 = vst [vmem:[%s386 + $0x78] sm:$0xff] %v8719
      %8809 = vst [vmem:[%s386 + $0x80] sm:$0xff] %v7705
      %8810 = vst [vmem:[%s386 + $0x88] sm:$0xff] %v8722
      %8811 = vst [vmem:[%s386 + $0x90] sm:$0xff] %v7708
      %8812 = vst [vmem:[%s386 + $0x98] sm:$0xff] %v8725
      %8813 = vst [vmem:[%s386 + $0xa0] sm:$0xff] %v7711
      %8814 = vst [vmem:[%s386 + $0xa8] sm:$0xff] %v8728
      %8815 = vst [vmem:[%s386 + $0xb0] sm:$0xff] %v7714
      %8816 = vst [vmem:[%s386 + $0xb8] sm:$0xff] %v8731
      %8817 = vst [vmem:[%s386 + $0xc0] sm:$0xff] %v7717
      %8818 = vst [vmem:[%s386 + $0xc8] sm:$0xff] %v8734
      %8819 = vst [vmem:[%s386 + $0xd0] sm:$0xff] %v7720
      %8820 = vst [vmem:[%s386 + $0xd8] sm:$0xff] %v8737
      %8821 = vst [vmem:[%s386 + $0xe0] sm:$0xff] %v7723
      %8822 = vst [vmem:[%s386 + $0xe8] sm:$0xff] %v8740
      %8823 = vst [vmem:[%s386 + $0xf0] sm:$0xff] %v7726
      %8824 = vst [vmem:[%s386 + $0xf8] sm:$0xff] %v8743
      %8825 = vst [vmem:[%s386 + $0x100] sm:$0xff] %v7729
      %8826 = vst [vmem:[%s386 + $0x108] sm:$0xff] %v8746
      %8827 = vst [vmem:[%s386 + $0x110] sm:$0xff] %v7732
      %8828 = vst [vmem:[%s386 + $0x118] sm:$0xff] %v8749
      %8829 = vst [vmem:[%s386 + $0x120] sm:$0xff] %v7735
      %8830 = vst [vmem:[%s386 + $0x128] sm:$0xff] %v8752
      %8831 = vst [vmem:[%s386 + $0x130] sm:$0xff] %v7738
      %8832 = vst [vmem:[%s386 + $0x138] sm:$0xff] %v8755
      %8833 = vst [vmem:[%s386 + $0x140] sm:$0xff] %v7741
      %8834 = vst [vmem:[%s386 + $0x148] sm:$0xff] %v8758
      %8835 = vst [vmem:[%s386 + $0x150] sm:$0xff] %v7744
      %8836 = vst [vmem:[%s386 + $0x158] sm:$0xff] %v8761
      %8837 = vst [vmem:[%s386 + $0x160] sm:$0xff] %v7747
      %8838 = vst [vmem:[%s386 + $0x168] sm:$0xff] %v8764
      %8839 = vst [vmem:[%s386 + $0x170] sm:$0xff] %v7750
      %8840 = vst [vmem:[%s386 + $0x178] sm:$0xff] %v8767
      %8841 = vst [vmem:[%s386 + $0x180] sm:$0xff] %v7753
      %8842 = vst [vmem:[%s386 + $0x188] sm:$0xff] %v8770
      %8843 = vst [vmem:[%s386 + $0x190] sm:$0xff] %v7756
      %8844 = vst [vmem:[%s386 + $0x198] sm:$0xff] %v8773
      %8845 = vst [vmem:[%s386 + $0x1a0] sm:$0xff] %v7759
      %8846 = vst [vmem:[%s386 + $0x1a8] sm:$0xff] %v8776
      %8847 = vst [vmem:[%s386 + $0x1b0] sm:$0xff] %v7762
      %8848 = vst [vmem:[%s386 + $0x1b8] sm:$0xff] %v8779
      %8849 = vst [vmem:[%s386 + $0x1c0] sm:$0xff] %v7765
      %8850 = vst [vmem:[%s386 + $0x1c8] sm:$0xff] %v8782
      %8851 = vst [vmem:[%s386 + $0x1d0] sm:$0xff] %v7768
      %8852 = vst [vmem:[%s386 + $0x1d8] sm:$0xff] %v8785
      %8853 = vst [vmem:[%s386 + $0x1e0] sm:$0xff] %v7771
      %8854 = vst [vmem:[%s386 + $0x1e8] sm:$0xff] %v8788
      %8855 = vst [vmem:[%s386 + $0x1f0] sm:$0xff] %v7774
      %8856 = vst [vmem:[%s386 + $0x1f8] sm:$0xff] %v8791
      %p8857 = scmp.lt.s32.totalorder %s22, 1
      %s8858 = scalar_select %p8857, %s22, 1
      %s8859 = smul.addr %s8858, 64
      %s8860 = smul.addr %s8859, 8
      %s8861 = scalar_lea.vmem %s11, %s8860
      // Predicated region
      $region65: #{five_layer_conv.1} parent=63 // pred_check
        %p8862 = pneg %p276
      $region66: #{five_layer_conv.1} parent=63 // pred_check_branch
        %8864 = sbr.rel (%p8862) target = $region68
      $region67: #{five_layer_conv.1} parent=63 // pred_region
        _
      $region68: #{five_layer_conv.1} parent=63 // pred_fallthru
        _
    $region64: #{five_layer_conv.1} parent=5 // pred_fallthru
      _
    %p8865 = scmp.le.s32.totalorder 2, %s17
    // Predicated region
    $region69: #{five_layer_conv.1} parent=5 // pred_check
      %p8866 = pneg %p8865
    $region70: #{five_layer_conv.1} parent=5 // pred_check_branch
      %8868 = sbr.rel (%p8866) target = $region72
    $region71: #{five_layer_conv.1} parent=5 // pred_region
      %s8869 = ssub.s32 %s17, 2
      // Predicated region
      $region73: #{five_layer_conv.1} parent=71 // pred_check
        %p8870 = pneg %p282
      $region74: #{five_layer_conv.1} parent=71 // pred_check_branch
        %8872 = sbr.rel (%p8870) target = $region76
      $region75: #{five_layer_conv.1} parent=71 // pred_region
        %p8873 = scmp.lt.s32.totalorder %s23, 1
        %s8874 = scalar_select %p8873, %s23, 1
        %s8875 = smul.addr %s8874, 64
        %s8876 = smul.addr %s8875, 8
        %s8877 = scalar_lea.vmem %s11, %s8876
      $region76: #{five_layer_conv.1} parent=71 // pred_fallthru
        _
    $region72: #{five_layer_conv.1} parent=5 // pred_fallthru
      _
  $region6: #{five_layer_conv.1} parent=0 // loop_footer
    %s21 = sadd.s32 1, %s17
  $region7: #{five_layer_conv.1} parent=0 // loop_footer_branch
    %16 = sbr.rel target = $region3
  $region8: #{five_layer_conv.1} parent=0 // loop_exit
    _

</llo_original>
